<compile_context>
chip_gen: v7x
topology: tpu7x:2x2x1
jax: 0.10.0
libtpu: 0.0.40
codegen_flags: <defaults>
</compile_context>

<pallas_src>
import functools
import math

import jax
import jax.numpy as jnp
from jax.experimental import pallas as pl
from jax.experimental.pallas import tpu as pltpu


# ----------------------------------------------------------------------------
# Fused sub-decoder kernel (one batch element per grid step)
# ----------------------------------------------------------------------------

def _sub_decoder_kernel(
    x_ref, enc_ref, m0_ref, m1_ref,
    wqkv0_ref, bqkv0_ref, wo0_ref, bo0_ref, g0_ref, be0_ref,
    wq1_ref, bq1_ref, wkv1_ref, bkv1_ref, wo1_ref, bo1_ref, g1_ref, be1_ref,
    w1_ref, b1_ref, w2_ref, b2_ref, g2_ref, be2_ref,
    o_ref,
    *, H, dk, eps):
    D = H * dk
    scale = jnp.float32(1.0 / math.sqrt(dk))

    def matmul(a, w_ref, b_ref, relu=False):
        # bf16 operands on the MXU, f32 accumulation, f32 bias add.
        y = jnp.dot(a.astype(jnp.bfloat16), w_ref[...],
                    preferred_element_type=jnp.float32) + b_ref[...]
        return jnp.maximum(y, 0.0) if relu else y

    def layer_norm(v, g_ref, b_ref):
        # PyTorch LayerNorm semantics: biased variance, eps inside rsqrt, f32.
        mean = jnp.mean(v, axis=-1, keepdims=True)
        c = v - mean
        var = jnp.mean(c * c, axis=-1, keepdims=True)
        return c * jax.lax.rsqrt(var + eps) * g_ref[...] + b_ref[...]

    def attend(q, k, v, m0, m1):
        # q: [Sq, D], k/v: [Sk, D].  Per-head static lane slices; everything
        # stays VMEM/vreg resident.  Scale is already folded into q.
        heads = []
        for h in range(H):
            sl = slice(h * dk, (h + 1) * dk)
            qh = q[:, sl].astype(jnp.bfloat16)
            kh = k[:, sl].astype(jnp.bfloat16)
            vh = v[:, sl].astype(jnp.bfloat16)
            # scores = qh @ kh.T  (contract last dims)
            s = jax.lax.dot_general(qh, kh, (((1,), (1,)), ((), ())),
                                    preferred_element_type=jnp.float32)
            if m0 is not None:
                # masked_fill_(mask[0]==0, -inf): use large finite negative so a
                # fully-masked row can't produce NaN.
                s = jnp.where(m0 != 0.0, s, jnp.float32(-1e30))
            mx = jnp.max(s, axis=-1, keepdims=True)
            e = jnp.exp(s - mx)
            p = e * pl.reciprocal(jnp.sum(e, axis=-1, keepdims=True), approx=True)
            if m1 is not None:
                p = p * m1            # post-softmax zeroing of padded queries
            heads.append(jnp.dot(p.astype(jnp.bfloat16), vh,
                                 preferred_element_type=jnp.float32))
        return jnp.concatenate(heads, axis=-1)      # [Sq, D]

    x = x_ref[...]          # [S, D]      (this batch element)
    enc = enc_ref[...]      # [S_enc, D]
    m0 = m0_ref[...]        # [S, S]
    m1 = m1_ref[...]        # [S, S]

    # --- 1) masked self-attention + residual + LayerNorm ---------------------
    qkv = matmul(x, wqkv0_ref, bqkv0_ref)           # [S, 3D] fused Q|K|V
    q = qkv[:, 0 * D:1 * D] * scale                 # fold 1/sqrt(dk) into Q once
    k = qkv[:, 1 * D:2 * D]
    v = qkv[:, 2 * D:3 * D]
    sa = matmul(attend(q, k, v, m0, m1), wo0_ref, bo0_ref)
    ln1 = layer_norm(sa + x, g0_ref, be0_ref)

    # --- 2) encoder-decoder attention (reference passes no mask) -------------
    q2 = matmul(ln1, wq1_ref, bq1_ref) * scale
    kv = matmul(enc, wkv1_ref, bkv1_ref)            # [S_enc, 2D] fused K|V
    ca = matmul(attend(q2, kv[:, 0 * D:1 * D], kv[:, 1 * D:2 * D], None, None),
                wo1_ref, bo1_ref)
    ln2 = layer_norm(ca + ln1, g1_ref, be1_ref)

    # --- 3) position-wise FFN + residual + LayerNorm --------------------------
    hdn = matmul(ln2, w1_ref, b1_ref, relu=True)    # [S, F]
    ff = matmul(hdn, w2_ref, b2_ref)                # [S, D]
    o_ref[...] = layer_norm(ff + ln2, g2_ref, be2_ref)


# ----------------------------------------------------------------------------
# Wrappers
# ----------------------------------------------------------------------------

def sub_decoder_forward(p, x2d, enc2d, m0, m1, *, B, S, S_enc, H, dk):
    D = H * dk
    F_ = p["w1"].shape[1]
    M = B * S

    kernel = functools.partial(_sub_decoder_kernel, H=H, dk=dk, eps=1e-5)

    def full(shape):
        # whole-array block, same for every grid step (weights / biases)
        return pl.BlockSpec(shape, lambda b, _s=shape: (0,) * len(_s))

    row_spec = pl.BlockSpec((S, D), lambda b: (b, 0))

    return pl.pallas_call(
        kernel,
        out_shape=jax.ShapeDtypeStruct((M, D), jnp.float32),
        grid=(B,),
        in_specs=[
            row_spec,                                          # x
            pl.BlockSpec((S_enc, D), lambda b: (b, 0)),        # encoder output
            pl.BlockSpec((None, S, S), lambda b: (b, 0, 0)),   # mask0
            pl.BlockSpec((None, S, S), lambda b: (b, 0, 0)),   # mask1
            full((D, 3 * D)), full((1, 3 * D)),                # wqkv0, bqkv0
            full((D, D)), full((1, D)),                        # wo0, bo0
            full((1, D)), full((1, D)),                        # ln0 gamma, beta
            full((D, D)), full((1, D)),                        # wq1, bq1
            full((D, 2 * D)), full((1, 2 * D)),                # wkv1, bkv1
            full((D, D)), full((1, D)),                        # wo1, bo1
            full((1, D)), full((1, D)),                        # ln1 gamma, beta
            full((D, F_)), full((1, F_)),                      # w1, b1
            full((F_, D)), full((1, D)),                       # w2, b2
            full((1, D)), full((1, D)),                        # ln2 gamma, beta
        ],
        out_specs=row_spec,
        compiler_params=pltpu.CompilerParams(
            dimension_semantics=("parallel",)),
    )(x2d, enc2d, m0, m1,
      p["wqkv0"], p["bqkv0"], p["wo0"], p["bo0"], p["ln0_g"], p["ln0_b"],
      p["wq1"], p["bq1"], p["wkv1"], p["bkv1"], p["wo1"], p["bo1"],
      p["ln1_g"], p["ln1_b"],
      p["w1"], p["b1"], p["w2"], p["b2"], p["ln2_g"], p["ln2_b"])


def decoder_forward(params_list, x, encoder_output, m0, m1, h):
    B, S, D = x.shape
    S_enc = encoder_output.shape[1]
    dk = D // h
    x2d = x.reshape(B * S, D)
    enc2d = encoder_output.reshape(B * S_enc, D)
    for p in params_list:
        x2d = sub_decoder_forward(p, x2d, enc2d, m0, m1,
                                  B=B, S=S, S_enc=S_enc, H=h, dk=dk)
    return x2d.reshape(B, S, D)


# ----------------------------------------------------------------------------
# Deterministic parameter construction
# ----------------------------------------------------------------------------

def init_sub_decoder_params(key, dim_model, dim_ff):
    D = dim_model
    ks = jax.random.split(key, 14)
    s = 0.05

    def w(k, shape):   # weight matrices stored bf16 (MXU operands)
        return (jax.random.normal(k, shape, jnp.float32) * s).astype(jnp.bfloat16)

    def b(k, n):       # biases kept f32, shaped [1, n] for broadcast in-kernel
        return jax.random.normal(k, (1, n), jnp.float32) * s

    ones = jnp.ones((1, D), jnp.float32)
    zeros = jnp.zeros((1, D), jnp.float32)
    return {
        # self-attention: per-head q/k/v Linears fused along the output axis
        "wqkv0": w(ks[0], (D, 3 * D)), "bqkv0": b(ks[1], 3 * D),
        "wo0": w(ks[2], (D, D)), "bo0": b(ks[3], D),
        "ln0_g": ones, "ln0_b": zeros,
        # cross-attention: Q from decoder stream, fused K|V from encoder output
        "wq1": w(ks[4], (D, D)), "bq1": b(ks[5], D),
        "wkv1": w(ks[6], (D, 2 * D)), "bkv1": b(ks[7], 2 * D),
        "wo1": w(ks[8], (D, D)), "bo1": b(ks[9], D),
        "ln1_g": ones, "ln1_b": zeros,
        # position-wise FFN
        "w1": w(ks[10], (D, dim_ff)), "b1": b(ks[11], dim_ff),
        "w2": w(ks[12], (dim_ff, D)), "b2": b(ks[13], D),
        "ln2_g": ones, "ln2_b": zeros,
    }


# ----------------------------------------------------------------------------
# Main
# ----------------------------------------------------------------------------

if __name__ == "__main__":
    B, S, D, H, F_FF, N_SUB = 2, 8, 32, 4, 64, 2

    key = jax.random.PRNGKey(0)
    k_x, k_enc, k_params = jax.random.split(key, 3)

    x = jax.random.normal(k_x, (B, S, D), jnp.float32)
    encoder_output = jax.random.normal(k_enc, (B, S, D), jnp.float32)

    # padding-style masks (the mask tuple of the reference `attention`):
    #   mask0: pre-softmax, 0 -> score replaced by large negative
    #   mask1: post-softmax multiplicative zeroing of padding positions
    lens = jnp.array([S, S - 3], jnp.int32)
    key_valid = (jnp.arange(S)[None, :] < lens[:, None]).astype(jnp.float32)  # [B, S]
    mask0 = jnp.broadcast_to(key_valid[:, None, :], (B, S, S)).astype(jnp.float32)
    mask1 = (key_valid[:, :, None] * key_valid[:, None, :]).astype(jnp.float32)

    params_list = [
        init_sub_decoder_params(jax.random.fold_in(k_params, i), D, F_FF)
        for i in range(N_SUB)
    ]

    fwd = jax.jit(functools.partial(decoder_forward, h=H))
    out = jax.block_until_ready(fwd(params_list, x, encoder_output, mask0, mask1))

    assert out.shape == (B, S, D)
    assert bool(jnp.all(jnp.isfinite(out)))
    print("KERNEL_OK")
</pallas_src>

<mosaic_0001>
module attributes {stable_mosaic.version = 11 : i64} {
  func.func @_sub_decoder_kernel(%arg0: i32, %arg1: memref<8x32xf32, #tpu.memory_space<vmem>>, %arg2: memref<8x32xf32, #tpu.memory_space<vmem>>, %arg3: memref<1x8x8xf32, #tpu.memory_space<vmem>>, %arg4: memref<1x8x8xf32, #tpu.memory_space<vmem>>, %arg5: memref<32x96xbf16, #tpu.memory_space<vmem>>, %arg6: memref<1x96xf32, #tpu.memory_space<vmem>>, %arg7: memref<32x32xbf16, #tpu.memory_space<vmem>>, %arg8: memref<1x32xf32, #tpu.memory_space<vmem>>, %arg9: memref<1x32xf32, #tpu.memory_space<vmem>>, %arg10: memref<1x32xf32, #tpu.memory_space<vmem>>, %arg11: memref<32x32xbf16, #tpu.memory_space<vmem>>, %arg12: memref<1x32xf32, #tpu.memory_space<vmem>>, %arg13: memref<32x64xbf16, #tpu.memory_space<vmem>>, %arg14: memref<1x64xf32, #tpu.memory_space<vmem>>, %arg15: memref<32x32xbf16, #tpu.memory_space<vmem>>, %arg16: memref<1x32xf32, #tpu.memory_space<vmem>>, %arg17: memref<1x32xf32, #tpu.memory_space<vmem>>, %arg18: memref<1x32xf32, #tpu.memory_space<vmem>>, %arg19: memref<32x64xbf16, #tpu.memory_space<vmem>>, %arg20: memref<1x64xf32, #tpu.memory_space<vmem>>, %arg21: memref<64x32xbf16, #tpu.memory_space<vmem>>, %arg22: memref<1x32xf32, #tpu.memory_space<vmem>>, %arg23: memref<1x32xf32, #tpu.memory_space<vmem>>, %arg24: memref<1x32xf32, #tpu.memory_space<vmem>>, %arg25: memref<8x32xf32, #tpu.memory_space<vmem>>) attributes {dimension_semantics = [#tpu.dimension_semantics<parallel>], iteration_bounds = array<i64: 2>, scalar_prefetch = 0 : i64, scratch_operands = 0 : i64, tpu.core_type = #tpu.core_type<tc>, window_params = [{transform_indices = @transform_0, window_bounds = array<i64: 8, 32>}, {transform_indices = @transform_1, window_bounds = array<i64: 8, 32>}, {transform_indices = @transform_2, window_bounds = array<i64: 1, 8, 8>}, {transform_indices = @transform_3, window_bounds = array<i64: 1, 8, 8>}, {pipeline_mode = #tpu.pipeline_mode<synchronous>, transform_indices = @transform_4, window_bounds = array<i64: 32, 96>}, {pipeline_mode = #tpu.pipeline_mode<synchronous>, transform_indices = @transform_5, window_bounds = array<i64: 1, 96>}, {pipeline_mode = #tpu.pipeline_mode<synchronous>, transform_indices = @transform_6, window_bounds = array<i64: 32, 32>}, {pipeline_mode = #tpu.pipeline_mode<synchronous>, transform_indices = @transform_7, window_bounds = array<i64: 1, 32>}, {pipeline_mode = #tpu.pipeline_mode<synchronous>, transform_indices = @transform_8, window_bounds = array<i64: 1, 32>}, {pipeline_mode = #tpu.pipeline_mode<synchronous>, transform_indices = @transform_9, window_bounds = array<i64: 1, 32>}, {pipeline_mode = #tpu.pipeline_mode<synchronous>, transform_indices = @transform_10, window_bounds = array<i64: 32, 32>}, {pipeline_mode = #tpu.pipeline_mode<synchronous>, transform_indices = @transform_11, window_bounds = array<i64: 1, 32>}, {pipeline_mode = #tpu.pipeline_mode<synchronous>, transform_indices = @transform_12, window_bounds = array<i64: 32, 64>}, {pipeline_mode = #tpu.pipeline_mode<synchronous>, transform_indices = @transform_13, window_bounds = array<i64: 1, 64>}, {pipeline_mode = #tpu.pipeline_mode<synchronous>, transform_indices = @transform_14, window_bounds = array<i64: 32, 32>}, {pipeline_mode = #tpu.pipeline_mode<synchronous>, transform_indices = @transform_15, window_bounds = array<i64: 1, 32>}, {pipeline_mode = #tpu.pipeline_mode<synchronous>, transform_indices = @transform_16, window_bounds = array<i64: 1, 32>}, {pipeline_mode = #tpu.pipeline_mode<synchronous>, transform_indices = @transform_17, window_bounds = array<i64: 1, 32>}, {pipeline_mode = #tpu.pipeline_mode<synchronous>, transform_indices = @transform_18, window_bounds = array<i64: 32, 64>}, {pipeline_mode = #tpu.pipeline_mode<synchronous>, transform_indices = @transform_19, window_bounds = array<i64: 1, 64>}, {pipeline_mode = #tpu.pipeline_mode<synchronous>, transform_indices = @transform_20, window_bounds = array<i64: 64, 32>}, {pipeline_mode = #tpu.pipeline_mode<synchronous>, transform_indices = @transform_21, window_bounds = array<i64: 1, 32>}, {pipeline_mode = #tpu.pipeline_mode<synchronous>, transform_indices = @transform_22, window_bounds = array<i64: 1, 32>}, {pipeline_mode = #tpu.pipeline_mode<synchronous>, transform_indices = @transform_23, window_bounds = array<i64: 1, 32>}, {transform_indices = @transform_24, window_bounds = array<i64: 8, 32>}]} {
    %c0 = arith.constant 0 : index
    %c0_0 = arith.constant 0 : index
    %0 = vector.load %arg1[%c0, %c0_0] : memref<8x32xf32, #tpu.memory_space<vmem>>, vector<8x32xf32>
    %c0_1 = arith.constant 0 : index
    %c0_2 = arith.constant 0 : index
    %1 = vector.load %arg2[%c0_1, %c0_2] : memref<8x32xf32, #tpu.memory_space<vmem>>, vector<8x32xf32>
    %c0_3 = arith.constant 0 : index
    %c0_4 = arith.constant 0 : index
    %c0_5 = arith.constant 0 : index
    %2 = vector.load %arg3[%c0_3, %c0_4, %c0_5] : memref<1x8x8xf32, #tpu.memory_space<vmem>>, vector<1x8x8xf32>
    %3 = vector.shape_cast %2 : vector<1x8x8xf32> to vector<8x8xf32>
    %c0_6 = arith.constant 0 : index
    %c0_7 = arith.constant 0 : index
    %c0_8 = arith.constant 0 : index
    %4 = vector.load %arg4[%c0_6, %c0_7, %c0_8] : memref<1x8x8xf32, #tpu.memory_space<vmem>>, vector<1x8x8xf32>
    %5 = vector.shape_cast %4 : vector<1x8x8xf32> to vector<8x8xf32>
    %6 = arith.truncf %0 : vector<8x32xf32> to vector<8x32xbf16>
    %c0_9 = arith.constant 0 : index
    %c0_10 = arith.constant 0 : index
    %7 = vector.load %arg5[%c0_9, %c0_10] : memref<32x96xbf16, #tpu.memory_space<vmem>>, vector<32x96xbf16>
    %cst = arith.constant dense<0.000000e+00> : vector<8x96xf32>
    %8 = tpu.matmul %6, %7, %cst {dimension_numbers = #tpu.dot_dimension_numbers<[1], [0], [0], [1], [0, 0, 1, 1], [], []>} : vector<8x32xbf16>, vector<32x96xbf16>, vector<8x96xf32> -> vector<8x96xf32>
    %c0_11 = arith.constant 0 : index
    %c0_12 = arith.constant 0 : index
    %9 = vector.load %arg6[%c0_11, %c0_12] : memref<1x96xf32, #tpu.memory_space<vmem>>, vector<1x96xf32>
    %10 = vector.broadcast %9 : vector<1x96xf32> to vector<8x96xf32>
    %11 = arith.addf %8, %10 : vector<8x96xf32>
    %12 = vector.extract_strided_slice %11 {offsets = [0, 0], sizes = [8, 32], strides = [1, 1]} : vector<8x96xf32> to vector<8x32xf32>
    %cst_13 = arith.constant 0.353553385 : f32
    %13 = vector.broadcast %cst_13 : f32 to vector<8x32xf32>
    %14 = arith.mulf %12, %13 : vector<8x32xf32>
    %15 = vector.extract_strided_slice %11 {offsets = [0, 32], sizes = [8, 32], strides = [1, 1]} : vector<8x96xf32> to vector<8x32xf32>
    %16 = vector.extract_strided_slice %11 {offsets = [0, 64], sizes = [8, 32], strides = [1, 1]} : vector<8x96xf32> to vector<8x32xf32>
    %17 = vector.extract_strided_slice %14 {offsets = [0, 0], sizes = [8, 8], strides = [1, 1]} : vector<8x32xf32> to vector<8x8xf32>
    %18 = arith.truncf %17 : vector<8x8xf32> to vector<8x8xbf16>
    %19 = vector.extract_strided_slice %15 {offsets = [0, 0], sizes = [8, 8], strides = [1, 1]} : vector<8x32xf32> to vector<8x8xf32>
    %20 = arith.truncf %19 : vector<8x8xf32> to vector<8x8xbf16>
    %21 = vector.extract_strided_slice %16 {offsets = [0, 0], sizes = [8, 8], strides = [1, 1]} : vector<8x32xf32> to vector<8x8xf32>
    %22 = arith.truncf %21 : vector<8x8xf32> to vector<8x8xbf16>
    %cst_14 = arith.constant dense<0.000000e+00> : vector<8x8xf32>
    %23 = tpu.matmul %18, %20, %cst_14 {dimension_numbers = #tpu.dot_dimension_numbers<[1], [1], [0], [0], [0, 0, 1, 0], [], []>} : vector<8x8xbf16>, vector<8x8xbf16>, vector<8x8xf32> -> vector<8x8xf32>
    %cst_15 = arith.constant 0.000000e+00 : f32
    %24 = vector.broadcast %cst_15 : f32 to vector<8x8xf32>
    %25 = arith.cmpf one, %3, %24 : vector<8x8xf32>
    %cst_16 = arith.constant -1.000000e+30 : f32
    %26 = vector.broadcast %cst_16 : f32 to vector<8x8xf32>
    %27 = arith.select %25, %23, %26 : vector<8x8xi1>, vector<8x8xf32>
    %cst_17 = arith.constant dense<0xFF800000> : vector<8xf32>
    %28 = vector.multi_reduction <maximumf>, %27, %cst_17 [1] : vector<8x8xf32> to vector<8xf32>
    %29 = vector.shape_cast %28 : vector<8xf32> to vector<8x1xf32>
    %30 = vector.broadcast %29 : vector<8x1xf32> to vector<8x8xf32>
    %31 = arith.subf %27, %30 : vector<8x8xf32>
    %32 = math.exp %31 : vector<8x8xf32>
    %cst_18 = arith.constant dense<0.000000e+00> : vector<8xf32>
    %33 = vector.multi_reduction <add>, %32, %cst_18 [1] : vector<8x8xf32> to vector<8xf32>
    %34 = vector.shape_cast %33 : vector<8xf32> to vector<8x1xf32>
    %35 = tpu.reciprocal %34 {approx = true} : vector<8x1xf32> -> vector<8x1xf32>
    %36 = vector.broadcast %35 : vector<8x1xf32> to vector<8x8xf32>
    %37 = arith.mulf %32, %36 : vector<8x8xf32>
    %38 = arith.mulf %37, %5 : vector<8x8xf32>
    %39 = arith.truncf %38 : vector<8x8xf32> to vector<8x8xbf16>
    %cst_19 = arith.constant dense<0.000000e+00> : vector<8x8xf32>
    %40 = tpu.matmul %39, %22, %cst_19 {dimension_numbers = #tpu.dot_dimension_numbers<[1], [0], [0], [1], [0, 0, 1, 1], [], []>} : vector<8x8xbf16>, vector<8x8xbf16>, vector<8x8xf32> -> vector<8x8xf32>
    %41 = vector.extract_strided_slice %14 {offsets = [0, 8], sizes = [8, 8], strides = [1, 1]} : vector<8x32xf32> to vector<8x8xf32>
    %42 = arith.truncf %41 : vector<8x8xf32> to vector<8x8xbf16>
    %43 = vector.extract_strided_slice %15 {offsets = [0, 8], sizes = [8, 8], strides = [1, 1]} : vector<8x32xf32> to vector<8x8xf32>
    %44 = arith.truncf %43 : vector<8x8xf32> to vector<8x8xbf16>
    %45 = vector.extract_strided_slice %16 {offsets = [0, 8], sizes = [8, 8], strides = [1, 1]} : vector<8x32xf32> to vector<8x8xf32>
    %46 = arith.truncf %45 : vector<8x8xf32> to vector<8x8xbf16>
    %cst_20 = arith.constant dense<0.000000e+00> : vector<8x8xf32>
    %47 = tpu.matmul %42, %44, %cst_20 {dimension_numbers = #tpu.dot_dimension_numbers<[1], [1], [0], [0], [0, 0, 1, 0], [], []>} : vector<8x8xbf16>, vector<8x8xbf16>, vector<8x8xf32> -> vector<8x8xf32>
    %cst_21 = arith.constant 0.000000e+00 : f32
    %48 = vector.broadcast %cst_21 : f32 to vector<8x8xf32>
    %49 = arith.cmpf one, %3, %48 : vector<8x8xf32>
    %cst_22 = arith.constant -1.000000e+30 : f32
    %50 = vector.broadcast %cst_22 : f32 to vector<8x8xf32>
    %51 = arith.select %49, %47, %50 : vector<8x8xi1>, vector<8x8xf32>
    %cst_23 = arith.constant dense<0xFF800000> : vector<8xf32>
    %52 = vector.multi_reduction <maximumf>, %51, %cst_23 [1] : vector<8x8xf32> to vector<8xf32>
    %53 = vector.shape_cast %52 : vector<8xf32> to vector<8x1xf32>
    %54 = vector.broadcast %53 : vector<8x1xf32> to vector<8x8xf32>
    %55 = arith.subf %51, %54 : vector<8x8xf32>
    %56 = math.exp %55 : vector<8x8xf32>
    %cst_24 = arith.constant dense<0.000000e+00> : vector<8xf32>
    %57 = vector.multi_reduction <add>, %56, %cst_24 [1] : vector<8x8xf32> to vector<8xf32>
    %58 = vector.shape_cast %57 : vector<8xf32> to vector<8x1xf32>
    %59 = tpu.reciprocal %58 {approx = true} : vector<8x1xf32> -> vector<8x1xf32>
    %60 = vector.broadcast %59 : vector<8x1xf32> to vector<8x8xf32>
    %61 = arith.mulf %56, %60 : vector<8x8xf32>
    %62 = arith.mulf %61, %5 : vector<8x8xf32>
    %63 = arith.truncf %62 : vector<8x8xf32> to vector<8x8xbf16>
    %cst_25 = arith.constant dense<0.000000e+00> : vector<8x8xf32>
    %64 = tpu.matmul %63, %46, %cst_25 {dimension_numbers = #tpu.dot_dimension_numbers<[1], [0], [0], [1], [0, 0, 1, 1], [], []>} : vector<8x8xbf16>, vector<8x8xbf16>, vector<8x8xf32> -> vector<8x8xf32>
    %65 = vector.extract_strided_slice %14 {offsets = [0, 16], sizes = [8, 8], strides = [1, 1]} : vector<8x32xf32> to vector<8x8xf32>
    %66 = arith.truncf %65 : vector<8x8xf32> to vector<8x8xbf16>
    %67 = vector.extract_strided_slice %15 {offsets = [0, 16], sizes = [8, 8], strides = [1, 1]} : vector<8x32xf32> to vector<8x8xf32>
    %68 = arith.truncf %67 : vector<8x8xf32> to vector<8x8xbf16>
    %69 = vector.extract_strided_slice %16 {offsets = [0, 16], sizes = [8, 8], strides = [1, 1]} : vector<8x32xf32> to vector<8x8xf32>
    %70 = arith.truncf %69 : vector<8x8xf32> to vector<8x8xbf16>
    %cst_26 = arith.constant dense<0.000000e+00> : vector<8x8xf32>
    %71 = tpu.matmul %66, %68, %cst_26 {dimension_numbers = #tpu.dot_dimension_numbers<[1], [1], [0], [0], [0, 0, 1, 0], [], []>} : vector<8x8xbf16>, vector<8x8xbf16>, vector<8x8xf32> -> vector<8x8xf32>
    %cst_27 = arith.constant 0.000000e+00 : f32
    %72 = vector.broadcast %cst_27 : f32 to vector<8x8xf32>
    %73 = arith.cmpf one, %3, %72 : vector<8x8xf32>
    %cst_28 = arith.constant -1.000000e+30 : f32
    %74 = vector.broadcast %cst_28 : f32 to vector<8x8xf32>
    %75 = arith.select %73, %71, %74 : vector<8x8xi1>, vector<8x8xf32>
    %cst_29 = arith.constant dense<0xFF800000> : vector<8xf32>
    %76 = vector.multi_reduction <maximumf>, %75, %cst_29 [1] : vector<8x8xf32> to vector<8xf32>
    %77 = vector.shape_cast %76 : vector<8xf32> to vector<8x1xf32>
    %78 = vector.broadcast %77 : vector<8x1xf32> to vector<8x8xf32>
    %79 = arith.subf %75, %78 : vector<8x8xf32>
    %80 = math.exp %79 : vector<8x8xf32>
    %cst_30 = arith.constant dense<0.000000e+00> : vector<8xf32>
    %81 = vector.multi_reduction <add>, %80, %cst_30 [1] : vector<8x8xf32> to vector<8xf32>
    %82 = vector.shape_cast %81 : vector<8xf32> to vector<8x1xf32>
    %83 = tpu.reciprocal %82 {approx = true} : vector<8x1xf32> -> vector<8x1xf32>
    %84 = vector.broadcast %83 : vector<8x1xf32> to vector<8x8xf32>
    %85 = arith.mulf %80, %84 : vector<8x8xf32>
    %86 = arith.mulf %85, %5 : vector<8x8xf32>
    %87 = arith.truncf %86 : vector<8x8xf32> to vector<8x8xbf16>
    %cst_31 = arith.constant dense<0.000000e+00> : vector<8x8xf32>
    %88 = tpu.matmul %87, %70, %cst_31 {dimension_numbers = #tpu.dot_dimension_numbers<[1], [0], [0], [1], [0, 0, 1, 1], [], []>} : vector<8x8xbf16>, vector<8x8xbf16>, vector<8x8xf32> -> vector<8x8xf32>
    %89 = vector.extract_strided_slice %14 {offsets = [0, 24], sizes = [8, 8], strides = [1, 1]} : vector<8x32xf32> to vector<8x8xf32>
    %90 = arith.truncf %89 : vector<8x8xf32> to vector<8x8xbf16>
    %91 = vector.extract_strided_slice %15 {offsets = [0, 24], sizes = [8, 8], strides = [1, 1]} : vector<8x32xf32> to vector<8x8xf32>
    %92 = arith.truncf %91 : vector<8x8xf32> to vector<8x8xbf16>
    %93 = vector.extract_strided_slice %16 {offsets = [0, 24], sizes = [8, 8], strides = [1, 1]} : vector<8x32xf32> to vector<8x8xf32>
    %94 = arith.truncf %93 : vector<8x8xf32> to vector<8x8xbf16>
    %cst_32 = arith.constant dense<0.000000e+00> : vector<8x8xf32>
    %95 = tpu.matmul %90, %92, %cst_32 {dimension_numbers = #tpu.dot_dimension_numbers<[1], [1], [0], [0], [0, 0, 1, 0], [], []>} : vector<8x8xbf16>, vector<8x8xbf16>, vector<8x8xf32> -> vector<8x8xf32>
    %cst_33 = arith.constant 0.000000e+00 : f32
    %96 = vector.broadcast %cst_33 : f32 to vector<8x8xf32>
    %97 = arith.cmpf one, %3, %96 : vector<8x8xf32>
    %cst_34 = arith.constant -1.000000e+30 : f32
    %98 = vector.broadcast %cst_34 : f32 to vector<8x8xf32>
    %99 = arith.select %97, %95, %98 : vector<8x8xi1>, vector<8x8xf32>
    %cst_35 = arith.constant dense<0xFF800000> : vector<8xf32>
    %100 = vector.multi_reduction <maximumf>, %99, %cst_35 [1] : vector<8x8xf32> to vector<8xf32>
    %101 = vector.shape_cast %100 : vector<8xf32> to vector<8x1xf32>
    %102 = vector.broadcast %101 : vector<8x1xf32> to vector<8x8xf32>
    %103 = arith.subf %99, %102 : vector<8x8xf32>
    %104 = math.exp %103 : vector<8x8xf32>
    %cst_36 = arith.constant dense<0.000000e+00> : vector<8xf32>
    %105 = vector.multi_reduction <add>, %104, %cst_36 [1] : vector<8x8xf32> to vector<8xf32>
    %106 = vector.shape_cast %105 : vector<8xf32> to vector<8x1xf32>
    %107 = tpu.reciprocal %106 {approx = true} : vector<8x1xf32> -> vector<8x1xf32>
    %108 = vector.broadcast %107 : vector<8x1xf32> to vector<8x8xf32>
    %109 = arith.mulf %104, %108 : vector<8x8xf32>
    %110 = arith.mulf %109, %5 : vector<8x8xf32>
    %111 = arith.truncf %110 : vector<8x8xf32> to vector<8x8xbf16>
    %cst_37 = arith.constant dense<0.000000e+00> : vector<8x8xf32>
    %112 = tpu.matmul %111, %94, %cst_37 {dimension_numbers = #tpu.dot_dimension_numbers<[1], [0], [0], [1], [0, 0, 1, 1], [], []>} : vector<8x8xbf16>, vector<8x8xbf16>, vector<8x8xf32> -> vector<8x8xf32>
    %113 = tpu.concatenate %40, %64, %88, %112 in 1 : vector<8x8xf32>, vector<8x8xf32>, vector<8x8xf32>, vector<8x8xf32> -> vector<8x32xf32>
    %114 = arith.truncf %113 : vector<8x32xf32> to vector<8x32xbf16>
    %c0_38 = arith.constant 0 : index
    %c0_39 = arith.constant 0 : index
    %115 = vector.load %arg7[%c0_38, %c0_39] : memref<32x32xbf16, #tpu.memory_space<vmem>>, vector<32x32xbf16>
    %cst_40 = arith.constant dense<0.000000e+00> : vector<8x32xf32>
    %116 = tpu.matmul %114, %115, %cst_40 {dimension_numbers = #tpu.dot_dimension_numbers<[1], [0], [0], [1], [0, 0, 1, 1], [], []>} : vector<8x32xbf16>, vector<32x32xbf16>, vector<8x32xf32> -> vector<8x32xf32>
    %c0_41 = arith.constant 0 : index
    %c0_42 = arith.constant 0 : index
    %117 = vector.load %arg8[%c0_41, %c0_42] : memref<1x32xf32, #tpu.memory_space<vmem>>, vector<1x32xf32>
    %118 = vector.broadcast %117 : vector<1x32xf32> to vector<8x32xf32>
    %119 = arith.addf %116, %118 : vector<8x32xf32>
    %120 = arith.addf %119, %0 : vector<8x32xf32>
    %cst_43 = arith.constant dense<0.000000e+00> : vector<8xf32>
    %121 = vector.multi_reduction <add>, %120, %cst_43 [1] : vector<8x32xf32> to vector<8xf32>
    %122 = vector.shape_cast %121 : vector<8xf32> to vector<8x1xf32>
    %cst_44 = arith.constant 3.200000e+01 : f32
    %123 = vector.broadcast %cst_44 : f32 to vector<8x1xf32>
    %124 = arith.divf %122, %123 : vector<8x1xf32>
    %125 = vector.broadcast %124 : vector<8x1xf32> to vector<8x32xf32>
    %126 = arith.subf %120, %125 : vector<8x32xf32>
    %127 = arith.mulf %126, %126 : vector<8x32xf32>
    %cst_45 = arith.constant dense<0.000000e+00> : vector<8xf32>
    %128 = vector.multi_reduction <add>, %127, %cst_45 [1] : vector<8x32xf32> to vector<8xf32>
    %129 = vector.shape_cast %128 : vector<8xf32> to vector<8x1xf32>
    %cst_46 = arith.constant 3.200000e+01 : f32
    %130 = vector.broadcast %cst_46 : f32 to vector<8x1xf32>
    %131 = arith.divf %129, %130 : vector<8x1xf32>
    %cst_47 = arith.constant 9.99999974E-6 : f32
    %132 = vector.broadcast %cst_47 : f32 to vector<8x1xf32>
    %133 = arith.addf %131, %132 : vector<8x1xf32>
    %134 = math.rsqrt %133 : vector<8x1xf32>
    %135 = vector.broadcast %134 : vector<8x1xf32> to vector<8x32xf32>
    %136 = arith.mulf %126, %135 : vector<8x32xf32>
    %c0_48 = arith.constant 0 : index
    %c0_49 = arith.constant 0 : index
    %137 = vector.load %arg9[%c0_48, %c0_49] : memref<1x32xf32, #tpu.memory_space<vmem>>, vector<1x32xf32>
    %138 = vector.broadcast %137 : vector<1x32xf32> to vector<8x32xf32>
    %139 = arith.mulf %136, %138 : vector<8x32xf32>
    %c0_50 = arith.constant 0 : index
    %c0_51 = arith.constant 0 : index
    %140 = vector.load %arg10[%c0_50, %c0_51] : memref<1x32xf32, #tpu.memory_space<vmem>>, vector<1x32xf32>
    %141 = vector.broadcast %140 : vector<1x32xf32> to vector<8x32xf32>
    %142 = arith.addf %139, %141 : vector<8x32xf32>
    %143 = arith.truncf %142 : vector<8x32xf32> to vector<8x32xbf16>
    %c0_52 = arith.constant 0 : index
    %c0_53 = arith.constant 0 : index
    %144 = vector.load %arg11[%c0_52, %c0_53] : memref<32x32xbf16, #tpu.memory_space<vmem>>, vector<32x32xbf16>
    %cst_54 = arith.constant dense<0.000000e+00> : vector<8x32xf32>
    %145 = tpu.matmul %143, %144, %cst_54 {dimension_numbers = #tpu.dot_dimension_numbers<[1], [0], [0], [1], [0, 0, 1, 1], [], []>} : vector<8x32xbf16>, vector<32x32xbf16>, vector<8x32xf32> -> vector<8x32xf32>
    %c0_55 = arith.constant 0 : index
    %c0_56 = arith.constant 0 : index
    %146 = vector.load %arg12[%c0_55, %c0_56] : memref<1x32xf32, #tpu.memory_space<vmem>>, vector<1x32xf32>
    %147 = vector.broadcast %146 : vector<1x32xf32> to vector<8x32xf32>
    %148 = arith.addf %145, %147 : vector<8x32xf32>
    %cst_57 = arith.constant 0.353553385 : f32
    %149 = vector.broadcast %cst_57 : f32 to vector<8x32xf32>
    %150 = arith.mulf %148, %149 : vector<8x32xf32>
    %151 = arith.truncf %1 : vector<8x32xf32> to vector<8x32xbf16>
    %c0_58 = arith.constant 0 : index
    %c0_59 = arith.constant 0 : index
    %152 = vector.load %arg13[%c0_58, %c0_59] : memref<32x64xbf16, #tpu.memory_space<vmem>>, vector<32x64xbf16>
    %cst_60 = arith.constant dense<0.000000e+00> : vector<8x64xf32>
    %153 = tpu.matmul %151, %152, %cst_60 {dimension_numbers = #tpu.dot_dimension_numbers<[1], [0], [0], [1], [0, 0, 1, 1], [], []>} : vector<8x32xbf16>, vector<32x64xbf16>, vector<8x64xf32> -> vector<8x64xf32>
    %c0_61 = arith.constant 0 : index
    %c0_62 = arith.constant 0 : index
    %154 = vector.load %arg14[%c0_61, %c0_62] : memref<1x64xf32, #tpu.memory_space<vmem>>, vector<1x64xf32>
    %155 = vector.broadcast %154 : vector<1x64xf32> to vector<8x64xf32>
    %156 = arith.addf %153, %155 : vector<8x64xf32>
    %157 = vector.extract_strided_slice %156 {offsets = [0, 0], sizes = [8, 32], strides = [1, 1]} : vector<8x64xf32> to vector<8x32xf32>
    %158 = vector.extract_strided_slice %156 {offsets = [0, 32], sizes = [8, 32], strides = [1, 1]} : vector<8x64xf32> to vector<8x32xf32>
    %159 = vector.extract_strided_slice %150 {offsets = [0, 0], sizes = [8, 8], strides = [1, 1]} : vector<8x32xf32> to vector<8x8xf32>
    %160 = arith.truncf %159 : vector<8x8xf32> to vector<8x8xbf16>
    %161 = vector.extract_strided_slice %157 {offsets = [0, 0], sizes = [8, 8], strides = [1, 1]} : vector<8x32xf32> to vector<8x8xf32>
    %162 = arith.truncf %161 : vector<8x8xf32> to vector<8x8xbf16>
    %163 = vector.extract_strided_slice %158 {offsets = [0, 0], sizes = [8, 8], strides = [1, 1]} : vector<8x32xf32> to vector<8x8xf32>
    %164 = arith.truncf %163 : vector<8x8xf32> to vector<8x8xbf16>
    %cst_63 = arith.constant dense<0.000000e+00> : vector<8x8xf32>
    %165 = tpu.matmul %160, %162, %cst_63 {dimension_numbers = #tpu.dot_dimension_numbers<[1], [1], [0], [0], [0, 0, 1, 0], [], []>} : vector<8x8xbf16>, vector<8x8xbf16>, vector<8x8xf32> -> vector<8x8xf32>
    %cst_64 = arith.constant dense<0xFF800000> : vector<8xf32>
    %166 = vector.multi_reduction <maximumf>, %165, %cst_64 [1] : vector<8x8xf32> to vector<8xf32>
    %167 = vector.shape_cast %166 : vector<8xf32> to vector<8x1xf32>
    %168 = vector.broadcast %167 : vector<8x1xf32> to vector<8x8xf32>
    %169 = arith.subf %165, %168 : vector<8x8xf32>
    %170 = math.exp %169 : vector<8x8xf32>
    %cst_65 = arith.constant dense<0.000000e+00> : vector<8xf32>
    %171 = vector.multi_reduction <add>, %170, %cst_65 [1] : vector<8x8xf32> to vector<8xf32>
    %172 = vector.shape_cast %171 : vector<8xf32> to vector<8x1xf32>
    %173 = tpu.reciprocal %172 {approx = true} : vector<8x1xf32> -> vector<8x1xf32>
    %174 = vector.broadcast %173 : vector<8x1xf32> to vector<8x8xf32>
    %175 = arith.mulf %170, %174 : vector<8x8xf32>
    %176 = arith.truncf %175 : vector<8x8xf32> to vector<8x8xbf16>
    %cst_66 = arith.constant dense<0.000000e+00> : vector<8x8xf32>
    %177 = tpu.matmul %176, %164, %cst_66 {dimension_numbers = #tpu.dot_dimension_numbers<[1], [0], [0], [1], [0, 0, 1, 1], [], []>} : vector<8x8xbf16>, vector<8x8xbf16>, vector<8x8xf32> -> vector<8x8xf32>
    %178 = vector.extract_strided_slice %150 {offsets = [0, 8], sizes = [8, 8], strides = [1, 1]} : vector<8x32xf32> to vector<8x8xf32>
    %179 = arith.truncf %178 : vector<8x8xf32> to vector<8x8xbf16>
    %180 = vector.extract_strided_slice %157 {offsets = [0, 8], sizes = [8, 8], strides = [1, 1]} : vector<8x32xf32> to vector<8x8xf32>
    %181 = arith.truncf %180 : vector<8x8xf32> to vector<8x8xbf16>
    %182 = vector.extract_strided_slice %158 {offsets = [0, 8], sizes = [8, 8], strides = [1, 1]} : vector<8x32xf32> to vector<8x8xf32>
    %183 = arith.truncf %182 : vector<8x8xf32> to vector<8x8xbf16>
    %cst_67 = arith.constant dense<0.000000e+00> : vector<8x8xf32>
    %184 = tpu.matmul %179, %181, %cst_67 {dimension_numbers = #tpu.dot_dimension_numbers<[1], [1], [0], [0], [0, 0, 1, 0], [], []>} : vector<8x8xbf16>, vector<8x8xbf16>, vector<8x8xf32> -> vector<8x8xf32>
    %cst_68 = arith.constant dense<0xFF800000> : vector<8xf32>
    %185 = vector.multi_reduction <maximumf>, %184, %cst_68 [1] : vector<8x8xf32> to vector<8xf32>
    %186 = vector.shape_cast %185 : vector<8xf32> to vector<8x1xf32>
    %187 = vector.broadcast %186 : vector<8x1xf32> to vector<8x8xf32>
    %188 = arith.subf %184, %187 : vector<8x8xf32>
    %189 = math.exp %188 : vector<8x8xf32>
    %cst_69 = arith.constant dense<0.000000e+00> : vector<8xf32>
    %190 = vector.multi_reduction <add>, %189, %cst_69 [1] : vector<8x8xf32> to vector<8xf32>
    %191 = vector.shape_cast %190 : vector<8xf32> to vector<8x1xf32>
    %192 = tpu.reciprocal %191 {approx = true} : vector<8x1xf32> -> vector<8x1xf32>
    %193 = vector.broadcast %192 : vector<8x1xf32> to vector<8x8xf32>
    %194 = arith.mulf %189, %193 : vector<8x8xf32>
    %195 = arith.truncf %194 : vector<8x8xf32> to vector<8x8xbf16>
    %cst_70 = arith.constant dense<0.000000e+00> : vector<8x8xf32>
    %196 = tpu.matmul %195, %183, %cst_70 {dimension_numbers = #tpu.dot_dimension_numbers<[1], [0], [0], [1], [0, 0, 1, 1], [], []>} : vector<8x8xbf16>, vector<8x8xbf16>, vector<8x8xf32> -> vector<8x8xf32>
    %197 = vector.extract_strided_slice %150 {offsets = [0, 16], sizes = [8, 8], strides = [1, 1]} : vector<8x32xf32> to vector<8x8xf32>
    %198 = arith.truncf %197 : vector<8x8xf32> to vector<8x8xbf16>
    %199 = vector.extract_strided_slice %157 {offsets = [0, 16], sizes = [8, 8], strides = [1, 1]} : vector<8x32xf32> to vector<8x8xf32>
    %200 = arith.truncf %199 : vector<8x8xf32> to vector<8x8xbf16>
    %201 = vector.extract_strided_slice %158 {offsets = [0, 16], sizes = [8, 8], strides = [1, 1]} : vector<8x32xf32> to vector<8x8xf32>
    %202 = arith.truncf %201 : vector<8x8xf32> to vector<8x8xbf16>
    %cst_71 = arith.constant dense<0.000000e+00> : vector<8x8xf32>
    %203 = tpu.matmul %198, %200, %cst_71 {dimension_numbers = #tpu.dot_dimension_numbers<[1], [1], [0], [0], [0, 0, 1, 0], [], []>} : vector<8x8xbf16>, vector<8x8xbf16>, vector<8x8xf32> -> vector<8x8xf32>
    %cst_72 = arith.constant dense<0xFF800000> : vector<8xf32>
    %204 = vector.multi_reduction <maximumf>, %203, %cst_72 [1] : vector<8x8xf32> to vector<8xf32>
    %205 = vector.shape_cast %204 : vector<8xf32> to vector<8x1xf32>
    %206 = vector.broadcast %205 : vector<8x1xf32> to vector<8x8xf32>
    %207 = arith.subf %203, %206 : vector<8x8xf32>
    %208 = math.exp %207 : vector<8x8xf32>
    %cst_73 = arith.constant dense<0.000000e+00> : vector<8xf32>
    %209 = vector.multi_reduction <add>, %208, %cst_73 [1] : vector<8x8xf32> to vector<8xf32>
    %210 = vector.shape_cast %209 : vector<8xf32> to vector<8x1xf32>
    %211 = tpu.reciprocal %210 {approx = true} : vector<8x1xf32> -> vector<8x1xf32>
    %212 = vector.broadcast %211 : vector<8x1xf32> to vector<8x8xf32>
    %213 = arith.mulf %208, %212 : vector<8x8xf32>
    %214 = arith.truncf %213 : vector<8x8xf32> to vector<8x8xbf16>
    %cst_74 = arith.constant dense<0.000000e+00> : vector<8x8xf32>
    %215 = tpu.matmul %214, %202, %cst_74 {dimension_numbers = #tpu.dot_dimension_numbers<[1], [0], [0], [1], [0, 0, 1, 1], [], []>} : vector<8x8xbf16>, vector<8x8xbf16>, vector<8x8xf32> -> vector<8x8xf32>
    %216 = vector.extract_strided_slice %150 {offsets = [0, 24], sizes = [8, 8], strides = [1, 1]} : vector<8x32xf32> to vector<8x8xf32>
    %217 = arith.truncf %216 : vector<8x8xf32> to vector<8x8xbf16>
    %218 = vector.extract_strided_slice %157 {offsets = [0, 24], sizes = [8, 8], strides = [1, 1]} : vector<8x32xf32> to vector<8x8xf32>
    %219 = arith.truncf %218 : vector<8x8xf32> to vector<8x8xbf16>
    %220 = vector.extract_strided_slice %158 {offsets = [0, 24], sizes = [8, 8], strides = [1, 1]} : vector<8x32xf32> to vector<8x8xf32>
    %221 = arith.truncf %220 : vector<8x8xf32> to vector<8x8xbf16>
    %cst_75 = arith.constant dense<0.000000e+00> : vector<8x8xf32>
    %222 = tpu.matmul %217, %219, %cst_75 {dimension_numbers = #tpu.dot_dimension_numbers<[1], [1], [0], [0], [0, 0, 1, 0], [], []>} : vector<8x8xbf16>, vector<8x8xbf16>, vector<8x8xf32> -> vector<8x8xf32>
    %cst_76 = arith.constant dense<0xFF800000> : vector<8xf32>
    %223 = vector.multi_reduction <maximumf>, %222, %cst_76 [1] : vector<8x8xf32> to vector<8xf32>
    %224 = vector.shape_cast %223 : vector<8xf32> to vector<8x1xf32>
    %225 = vector.broadcast %224 : vector<8x1xf32> to vector<8x8xf32>
    %226 = arith.subf %222, %225 : vector<8x8xf32>
    %227 = math.exp %226 : vector<8x8xf32>
    %cst_77 = arith.constant dense<0.000000e+00> : vector<8xf32>
    %228 = vector.multi_reduction <add>, %227, %cst_77 [1] : vector<8x8xf32> to vector<8xf32>
    %229 = vector.shape_cast %228 : vector<8xf32> to vector<8x1xf32>
    %230 = tpu.reciprocal %229 {approx = true} : vector<8x1xf32> -> vector<8x1xf32>
    %231 = vector.broadcast %230 : vector<8x1xf32> to vector<8x8xf32>
    %232 = arith.mulf %227, %231 : vector<8x8xf32>
    %233 = arith.truncf %232 : vector<8x8xf32> to vector<8x8xbf16>
    %cst_78 = arith.constant dense<0.000000e+00> : vector<8x8xf32>
    %234 = tpu.matmul %233, %221, %cst_78 {dimension_numbers = #tpu.dot_dimension_numbers<[1], [0], [0], [1], [0, 0, 1, 1], [], []>} : vector<8x8xbf16>, vector<8x8xbf16>, vector<8x8xf32> -> vector<8x8xf32>
    %235 = tpu.concatenate %177, %196, %215, %234 in 1 : vector<8x8xf32>, vector<8x8xf32>, vector<8x8xf32>, vector<8x8xf32> -> vector<8x32xf32>
    %236 = arith.truncf %235 : vector<8x32xf32> to vector<8x32xbf16>
    %c0_79 = arith.constant 0 : index
    %c0_80 = arith.constant 0 : index
    %237 = vector.load %arg15[%c0_79, %c0_80] : memref<32x32xbf16, #tpu.memory_space<vmem>>, vector<32x32xbf16>
    %cst_81 = arith.constant dense<0.000000e+00> : vector<8x32xf32>
    %238 = tpu.matmul %236, %237, %cst_81 {dimension_numbers = #tpu.dot_dimension_numbers<[1], [0], [0], [1], [0, 0, 1, 1], [], []>} : vector<8x32xbf16>, vector<32x32xbf16>, vector<8x32xf32> -> vector<8x32xf32>
    %c0_82 = arith.constant 0 : index
    %c0_83 = arith.constant 0 : index
    %239 = vector.load %arg16[%c0_82, %c0_83] : memref<1x32xf32, #tpu.memory_space<vmem>>, vector<1x32xf32>
    %240 = vector.broadcast %239 : vector<1x32xf32> to vector<8x32xf32>
    %241 = arith.addf %238, %240 : vector<8x32xf32>
    %242 = arith.addf %241, %142 : vector<8x32xf32>
    %cst_84 = arith.constant dense<0.000000e+00> : vector<8xf32>
    %243 = vector.multi_reduction <add>, %242, %cst_84 [1] : vector<8x32xf32> to vector<8xf32>
    %244 = vector.shape_cast %243 : vector<8xf32> to vector<8x1xf32>
    %cst_85 = arith.constant 3.200000e+01 : f32
    %245 = vector.broadcast %cst_85 : f32 to vector<8x1xf32>
    %246 = arith.divf %244, %245 : vector<8x1xf32>
    %247 = vector.broadcast %246 : vector<8x1xf32> to vector<8x32xf32>
    %248 = arith.subf %242, %247 : vector<8x32xf32>
    %249 = arith.mulf %248, %248 : vector<8x32xf32>
    %cst_86 = arith.constant dense<0.000000e+00> : vector<8xf32>
    %250 = vector.multi_reduction <add>, %249, %cst_86 [1] : vector<8x32xf32> to vector<8xf32>
    %251 = vector.shape_cast %250 : vector<8xf32> to vector<8x1xf32>
    %cst_87 = arith.constant 3.200000e+01 : f32
    %252 = vector.broadcast %cst_87 : f32 to vector<8x1xf32>
    %253 = arith.divf %251, %252 : vector<8x1xf32>
    %cst_88 = arith.constant 9.99999974E-6 : f32
    %254 = vector.broadcast %cst_88 : f32 to vector<8x1xf32>
    %255 = arith.addf %253, %254 : vector<8x1xf32>
    %256 = math.rsqrt %255 : vector<8x1xf32>
    %257 = vector.broadcast %256 : vector<8x1xf32> to vector<8x32xf32>
    %258 = arith.mulf %248, %257 : vector<8x32xf32>
    %c0_89 = arith.constant 0 : index
    %c0_90 = arith.constant 0 : index
    %259 = vector.load %arg17[%c0_89, %c0_90] : memref<1x32xf32, #tpu.memory_space<vmem>>, vector<1x32xf32>
    %260 = vector.broadcast %259 : vector<1x32xf32> to vector<8x32xf32>
    %261 = arith.mulf %258, %260 : vector<8x32xf32>
    %c0_91 = arith.constant 0 : index
    %c0_92 = arith.constant 0 : index
    %262 = vector.load %arg18[%c0_91, %c0_92] : memref<1x32xf32, #tpu.memory_space<vmem>>, vector<1x32xf32>
    %263 = vector.broadcast %262 : vector<1x32xf32> to vector<8x32xf32>
    %264 = arith.addf %261, %263 : vector<8x32xf32>
    %265 = arith.truncf %264 : vector<8x32xf32> to vector<8x32xbf16>
    %c0_93 = arith.constant 0 : index
    %c0_94 = arith.constant 0 : index
    %266 = vector.load %arg19[%c0_93, %c0_94] : memref<32x64xbf16, #tpu.memory_space<vmem>>, vector<32x64xbf16>
    %cst_95 = arith.constant dense<0.000000e+00> : vector<8x64xf32>
    %267 = tpu.matmul %265, %266, %cst_95 {dimension_numbers = #tpu.dot_dimension_numbers<[1], [0], [0], [1], [0, 0, 1, 1], [], []>} : vector<8x32xbf16>, vector<32x64xbf16>, vector<8x64xf32> -> vector<8x64xf32>
    %c0_96 = arith.constant 0 : index
    %c0_97 = arith.constant 0 : index
    %268 = vector.load %arg20[%c0_96, %c0_97] : memref<1x64xf32, #tpu.memory_space<vmem>>, vector<1x64xf32>
    %269 = vector.broadcast %268 : vector<1x64xf32> to vector<8x64xf32>
    %270 = arith.addf %267, %269 : vector<8x64xf32>
    %cst_98 = arith.constant 0.000000e+00 : f32
    %271 = vector.broadcast %cst_98 : f32 to vector<8x64xf32>
    %272 = arith.maximumf %270, %271 : vector<8x64xf32>
    %273 = arith.truncf %272 : vector<8x64xf32> to vector<8x64xbf16>
    %c0_99 = arith.constant 0 : index
    %c0_100 = arith.constant 0 : index
    %274 = vector.load %arg21[%c0_99, %c0_100] : memref<64x32xbf16, #tpu.memory_space<vmem>>, vector<64x32xbf16>
    %cst_101 = arith.constant dense<0.000000e+00> : vector<8x32xf32>
    %275 = tpu.matmul %273, %274, %cst_101 {dimension_numbers = #tpu.dot_dimension_numbers<[1], [0], [0], [1], [0, 0, 1, 1], [], []>} : vector<8x64xbf16>, vector<64x32xbf16>, vector<8x32xf32> -> vector<8x32xf32>
    %c0_102 = arith.constant 0 : index
    %c0_103 = arith.constant 0 : index
    %276 = vector.load %arg22[%c0_102, %c0_103] : memref<1x32xf32, #tpu.memory_space<vmem>>, vector<1x32xf32>
    %277 = vector.broadcast %276 : vector<1x32xf32> to vector<8x32xf32>
    %278 = arith.addf %275, %277 : vector<8x32xf32>
    %279 = arith.addf %278, %264 : vector<8x32xf32>
    %cst_104 = arith.constant dense<0.000000e+00> : vector<8xf32>
    %280 = vector.multi_reduction <add>, %279, %cst_104 [1] : vector<8x32xf32> to vector<8xf32>
    %281 = vector.shape_cast %280 : vector<8xf32> to vector<8x1xf32>
    %cst_105 = arith.constant 3.200000e+01 : f32
    %282 = vector.broadcast %cst_105 : f32 to vector<8x1xf32>
    %283 = arith.divf %281, %282 : vector<8x1xf32>
    %284 = vector.broadcast %283 : vector<8x1xf32> to vector<8x32xf32>
    %285 = arith.subf %279, %284 : vector<8x32xf32>
    %286 = arith.mulf %285, %285 : vector<8x32xf32>
    %cst_106 = arith.constant dense<0.000000e+00> : vector<8xf32>
    %287 = vector.multi_reduction <add>, %286, %cst_106 [1] : vector<8x32xf32> to vector<8xf32>
    %288 = vector.shape_cast %287 : vector<8xf32> to vector<8x1xf32>
    %cst_107 = arith.constant 3.200000e+01 : f32
    %289 = vector.broadcast %cst_107 : f32 to vector<8x1xf32>
    %290 = arith.divf %288, %289 : vector<8x1xf32>
    %cst_108 = arith.constant 9.99999974E-6 : f32
    %291 = vector.broadcast %cst_108 : f32 to vector<8x1xf32>
    %292 = arith.addf %290, %291 : vector<8x1xf32>
    %293 = math.rsqrt %292 : vector<8x1xf32>
    %294 = vector.broadcast %293 : vector<8x1xf32> to vector<8x32xf32>
    %295 = arith.mulf %285, %294 : vector<8x32xf32>
    %c0_109 = arith.constant 0 : index
    %c0_110 = arith.constant 0 : index
    %296 = vector.load %arg23[%c0_109, %c0_110] : memref<1x32xf32, #tpu.memory_space<vmem>>, vector<1x32xf32>
    %297 = vector.broadcast %296 : vector<1x32xf32> to vector<8x32xf32>
    %298 = arith.mulf %295, %297 : vector<8x32xf32>
    %c0_111 = arith.constant 0 : index
    %c0_112 = arith.constant 0 : index
    %299 = vector.load %arg24[%c0_111, %c0_112] : memref<1x32xf32, #tpu.memory_space<vmem>>, vector<1x32xf32>
    %300 = vector.broadcast %299 : vector<1x32xf32> to vector<8x32xf32>
    %301 = arith.addf %298, %300 : vector<8x32xf32>
    %c0_113 = arith.constant 0 : index
    %c0_114 = arith.constant 0 : index
    %302 = vector.load %arg25[%c0_113, %c0_114] : memref<8x32xf32, #tpu.memory_space<vmem>>, vector<8x32xf32>
    tpu.vector_store %arg25[%c0_113, %c0_114], %301 {strides = array<i32>} : memref<8x32xf32, #tpu.memory_space<vmem>>, vector<8x32xf32>,
    return
  }
  func.func @transform_0(%arg0: i32) -> (i32, i32) {
    %c0_i32 = arith.constant 0 : i32
    %c0_i32_0 = arith.constant 0 : i32
    return %arg0, %c0_i32 : i32, i32
  }
  func.func @transform_1(%arg0: i32) -> (i32, i32) {
    %c0_i32 = arith.constant 0 : i32
    %c0_i32_0 = arith.constant 0 : i32
    return %arg0, %c0_i32 : i32, i32
  }
  func.func @transform_2(%arg0: i32) -> (i32, i32, i32) {
    %c0_i32 = arith.constant 0 : i32
    %c0_i32_0 = arith.constant 0 : i32
    %c0_i32_1 = arith.constant 0 : i32
    return %arg0, %c0_i32, %c0_i32_0 : i32, i32, i32
  }
  func.func @transform_3(%arg0: i32) -> (i32, i32, i32) {
    %c0_i32 = arith.constant 0 : i32
    %c0_i32_0 = arith.constant 0 : i32
    %c0_i32_1 = arith.constant 0 : i32
    return %arg0, %c0_i32, %c0_i32_0 : i32, i32, i32
  }
  func.func @transform_4(%arg0: i32) -> (i32, i32) {
    %c0_i32 = arith.constant 0 : i32
    %c0_i32_0 = arith.constant 0 : i32
    %c0_i32_1 = arith.constant 0 : i32
    return %c0_i32, %c0_i32_0 : i32, i32
  }
  func.func @transform_5(%arg0: i32) -> (i32, i32) {
    %c0_i32 = arith.constant 0 : i32
    %c0_i32_0 = arith.constant 0 : i32
    %c0_i32_1 = arith.constant 0 : i32
    return %c0_i32, %c0_i32_0 : i32, i32
  }
  func.func @transform_6(%arg0: i32) -> (i32, i32) {
    %c0_i32 = arith.constant 0 : i32
    %c0_i32_0 = arith.constant 0 : i32
    %c0_i32_1 = arith.constant 0 : i32
    return %c0_i32, %c0_i32_0 : i32, i32
  }
  func.func @transform_7(%arg0: i32) -> (i32, i32) {
    %c0_i32 = arith.constant 0 : i32
    %c0_i32_0 = arith.constant 0 : i32
    %c0_i32_1 = arith.constant 0 : i32
    return %c0_i32, %c0_i32_0 : i32, i32
  }
  func.func @transform_8(%arg0: i32) -> (i32, i32) {
    %c0_i32 = arith.constant 0 : i32
    %c0_i32_0 = arith.constant 0 : i32
    %c0_i32_1 = arith.constant 0 : i32
    return %c0_i32, %c0_i32_0 : i32, i32
  }
  func.func @transform_9(%arg0: i32) -> (i32, i32) {
    %c0_i32 = arith.constant 0 : i32
    %c0_i32_0 = arith.constant 0 : i32
    %c0_i32_1 = arith.constant 0 : i32
    return %c0_i32, %c0_i32_0 : i32, i32
  }
  func.func @transform_10(%arg0: i32) -> (i32, i32) {
    %c0_i32 = arith.constant 0 : i32
    %c0_i32_0 = arith.constant 0 : i32
    %c0_i32_1 = arith.constant 0 : i32
    return %c0_i32, %c0_i32_0 : i32, i32
  }
  func.func @transform_11(%arg0: i32) -> (i32, i32) {
    %c0_i32 = arith.constant 0 : i32
    %c0_i32_0 = arith.constant 0 : i32
    %c0_i32_1 = arith.constant 0 : i32
    return %c0_i32, %c0_i32_0 : i32, i32
  }
  func.func @transform_12(%arg0: i32) -> (i32, i32) {
    %c0_i32 = arith.constant 0 : i32
    %c0_i32_0 = arith.constant 0 : i32
    %c0_i32_1 = arith.constant 0 : i32
    return %c0_i32, %c0_i32_0 : i32, i32
  }
  func.func @transform_13(%arg0: i32) -> (i32, i32) {
    %c0_i32 = arith.constant 0 : i32
    %c0_i32_0 = arith.constant 0 : i32
    %c0_i32_1 = arith.constant 0 : i32
    return %c0_i32, %c0_i32_0 : i32, i32
  }
  func.func @transform_14(%arg0: i32) -> (i32, i32) {
    %c0_i32 = arith.constant 0 : i32
    %c0_i32_0 = arith.constant 0 : i32
    %c0_i32_1 = arith.constant 0 : i32
    return %c0_i32, %c0_i32_0 : i32, i32
  }
  func.func @transform_15(%arg0: i32) -> (i32, i32) {
    %c0_i32 = arith.constant 0 : i32
    %c0_i32_0 = arith.constant 0 : i32
    %c0_i32_1 = arith.constant 0 : i32
    return %c0_i32, %c0_i32_0 : i32, i32
  }
  func.func @transform_16(%arg0: i32) -> (i32, i32) {
    %c0_i32 = arith.constant 0 : i32
    %c0_i32_0 = arith.constant 0 : i32
    %c0_i32_1 = arith.constant 0 : i32
    return %c0_i32, %c0_i32_0 : i32, i32
  }
  func.func @transform_17(%arg0: i32) -> (i32, i32) {
    %c0_i32 = arith.constant 0 : i32
    %c0_i32_0 = arith.constant 0 : i32
    %c0_i32_1 = arith.constant 0 : i32
    return %c0_i32, %c0_i32_0 : i32, i32
  }
  func.func @transform_18(%arg0: i32) -> (i32, i32) {
    %c0_i32 = arith.constant 0 : i32
    %c0_i32_0 = arith.constant 0 : i32
    %c0_i32_1 = arith.constant 0 : i32
    return %c0_i32, %c0_i32_0 : i32, i32
  }
  func.func @transform_19(%arg0: i32) -> (i32, i32) {
    %c0_i32 = arith.constant 0 : i32
    %c0_i32_0 = arith.constant 0 : i32
    %c0_i32_1 = arith.constant 0 : i32
    return %c0_i32, %c0_i32_0 : i32, i32
  }
  func.func @transform_20(%arg0: i32) -> (i32, i32) {
    %c0_i32 = arith.constant 0 : i32
    %c0_i32_0 = arith.constant 0 : i32
    %c0_i32_1 = arith.constant 0 : i32
    return %c0_i32, %c0_i32_0 : i32, i32
  }
  func.func @transform_21(%arg0: i32) -> (i32, i32) {
    %c0_i32 = arith.constant 0 : i32
    %c0_i32_0 = arith.constant 0 : i32
    %c0_i32_1 = arith.constant 0 : i32
    return %c0_i32, %c0_i32_0 : i32, i32
  }
  func.func @transform_22(%arg0: i32) -> (i32, i32) {
    %c0_i32 = arith.constant 0 : i32
    %c0_i32_0 = arith.constant 0 : i32
    %c0_i32_1 = arith.constant 0 : i32
    return %c0_i32, %c0_i32_0 : i32, i32
  }
  func.func @transform_23(%arg0: i32) -> (i32, i32) {
    %c0_i32 = arith.constant 0 : i32
    %c0_i32_0 = arith.constant 0 : i32
    %c0_i32_1 = arith.constant 0 : i32
    return %c0_i32, %c0_i32_0 : i32, i32
  }
  func.func @transform_24(%arg0: i32) -> (i32, i32) {
    %c0_i32 = arith.constant 0 : i32
    %c0_i32_0 = arith.constant 0 : i32
    return %arg0, %c0_i32 : i32, i32
  }
}

module attributes {stable_mosaic.version = 11 : i64} {
  func.func @_sub_decoder_kernel(%arg0: i32, %arg1: memref<8x32xf32, #tpu.memory_space<vmem>>, %arg2: memref<8x32xf32, #tpu.memory_space<vmem>>, %arg3: memref<1x8x8xf32, #tpu.memory_space<vmem>>, %arg4: memref<1x8x8xf32, #tpu.memory_space<vmem>>, %arg5: memref<32x96xbf16, #tpu.memory_space<vmem>>, %arg6: memref<1x96xf32, #tpu.memory_space<vmem>>, %arg7: memref<32x32xbf16, #tpu.memory_space<vmem>>, %arg8: memref<1x32xf32, #tpu.memory_space<vmem>>, %arg9: memref<1x32xf32, #tpu.memory_space<vmem>>, %arg10: memref<1x32xf32, #tpu.memory_space<vmem>>, %arg11: memref<32x32xbf16, #tpu.memory_space<vmem>>, %arg12: memref<1x32xf32, #tpu.memory_space<vmem>>, %arg13: memref<32x64xbf16, #tpu.memory_space<vmem>>, %arg14: memref<1x64xf32, #tpu.memory_space<vmem>>, %arg15: memref<32x32xbf16, #tpu.memory_space<vmem>>, %arg16: memref<1x32xf32, #tpu.memory_space<vmem>>, %arg17: memref<1x32xf32, #tpu.memory_space<vmem>>, %arg18: memref<1x32xf32, #tpu.memory_space<vmem>>, %arg19: memref<32x64xbf16, #tpu.memory_space<vmem>>, %arg20: memref<1x64xf32, #tpu.memory_space<vmem>>, %arg21: memref<64x32xbf16, #tpu.memory_space<vmem>>, %arg22: memref<1x32xf32, #tpu.memory_space<vmem>>, %arg23: memref<1x32xf32, #tpu.memory_space<vmem>>, %arg24: memref<1x32xf32, #tpu.memory_space<vmem>>, %arg25: memref<8x32xf32, #tpu.memory_space<vmem>>) attributes {dimension_semantics = [#tpu.dimension_semantics<parallel>], iteration_bounds = array<i64: 2>, scalar_prefetch = 0 : i64, scratch_operands = 0 : i64, tpu.core_type = #tpu.core_type<tc>, window_params = [{transform_indices = @transform_0, window_bounds = array<i64: 8, 32>}, {transform_indices = @transform_1, window_bounds = array<i64: 8, 32>}, {transform_indices = @transform_2, window_bounds = array<i64: 1, 8, 8>}, {transform_indices = @transform_3, window_bounds = array<i64: 1, 8, 8>}, {pipeline_mode = #tpu.pipeline_mode<synchronous>, transform_indices = @transform_4, window_bounds = array<i64: 32, 96>}, {pipeline_mode = #tpu.pipeline_mode<synchronous>, transform_indices = @transform_5, window_bounds = array<i64: 1, 96>}, {pipeline_mode = #tpu.pipeline_mode<synchronous>, transform_indices = @transform_6, window_bounds = array<i64: 32, 32>}, {pipeline_mode = #tpu.pipeline_mode<synchronous>, transform_indices = @transform_7, window_bounds = array<i64: 1, 32>}, {pipeline_mode = #tpu.pipeline_mode<synchronous>, transform_indices = @transform_8, window_bounds = array<i64: 1, 32>}, {pipeline_mode = #tpu.pipeline_mode<synchronous>, transform_indices = @transform_9, window_bounds = array<i64: 1, 32>}, {pipeline_mode = #tpu.pipeline_mode<synchronous>, transform_indices = @transform_10, window_bounds = array<i64: 32, 32>}, {pipeline_mode = #tpu.pipeline_mode<synchronous>, transform_indices = @transform_11, window_bounds = array<i64: 1, 32>}, {pipeline_mode = #tpu.pipeline_mode<synchronous>, transform_indices = @transform_12, window_bounds = array<i64: 32, 64>}, {pipeline_mode = #tpu.pipeline_mode<synchronous>, transform_indices = @transform_13, window_bounds = array<i64: 1, 64>}, {pipeline_mode = #tpu.pipeline_mode<synchronous>, transform_indices = @transform_14, window_bounds = array<i64: 32, 32>}, {pipeline_mode = #tpu.pipeline_mode<synchronous>, transform_indices = @transform_15, window_bounds = array<i64: 1, 32>}, {pipeline_mode = #tpu.pipeline_mode<synchronous>, transform_indices = @transform_16, window_bounds = array<i64: 1, 32>}, {pipeline_mode = #tpu.pipeline_mode<synchronous>, transform_indices = @transform_17, window_bounds = array<i64: 1, 32>}, {pipeline_mode = #tpu.pipeline_mode<synchronous>, transform_indices = @transform_18, window_bounds = array<i64: 32, 64>}, {pipeline_mode = #tpu.pipeline_mode<synchronous>, transform_indices = @transform_19, window_bounds = array<i64: 1, 64>}, {pipeline_mode = #tpu.pipeline_mode<synchronous>, transform_indices = @transform_20, window_bounds = array<i64: 64, 32>}, {pipeline_mode = #tpu.pipeline_mode<synchronous>, transform_indices = @transform_21, window_bounds = array<i64: 1, 32>}, {pipeline_mode = #tpu.pipeline_mode<synchronous>, transform_indices = @transform_22, window_bounds = array<i64: 1, 32>}, {pipeline_mode = #tpu.pipeline_mode<synchronous>, transform_indices = @transform_23, window_bounds = array<i64: 1, 32>}, {transform_indices = @transform_24, window_bounds = array<i64: 8, 32>}]} {
    %c0 = arith.constant 0 : index
    %c0_0 = arith.constant 0 : index
    %0 = vector.load %arg1[%c0, %c0_0] : memref<8x32xf32, #tpu.memory_space<vmem>>, vector<8x32xf32>
    %c0_1 = arith.constant 0 : index
    %c0_2 = arith.constant 0 : index
    %1 = vector.load %arg2[%c0_1, %c0_2] : memref<8x32xf32, #tpu.memory_space<vmem>>, vector<8x32xf32>
    %c0_3 = arith.constant 0 : index
    %c0_4 = arith.constant 0 : index
    %c0_5 = arith.constant 0 : index
    %2 = vector.load %arg3[%c0_3, %c0_4, %c0_5] : memref<1x8x8xf32, #tpu.memory_space<vmem>>, vector<1x8x8xf32>
    %3 = vector.shape_cast %2 : vector<1x8x8xf32> to vector<8x8xf32>
    %c0_6 = arith.constant 0 : index
    %c0_7 = arith.constant 0 : index
    %c0_8 = arith.constant 0 : index
    %4 = vector.load %arg4[%c0_6, %c0_7, %c0_8] : memref<1x8x8xf32, #tpu.memory_space<vmem>>, vector<1x8x8xf32>
    %5 = vector.shape_cast %4 : vector<1x8x8xf32> to vector<8x8xf32>
    %6 = arith.truncf %0 : vector<8x32xf32> to vector<8x32xbf16>
    %c0_9 = arith.constant 0 : index
    %c0_10 = arith.constant 0 : index
    %7 = vector.load %arg5[%c0_9, %c0_10] : memref<32x96xbf16, #tpu.memory_space<vmem>>, vector<32x96xbf16>
    %cst = arith.constant dense<0.000000e+00> : vector<8x96xf32>
    %8 = tpu.matmul %6, %7, %cst {dimension_numbers = #tpu.dot_dimension_numbers<[1], [0], [0], [1], [0, 0, 1, 1], [], []>} : vector<8x32xbf16>, vector<32x96xbf16>, vector<8x96xf32> -> vector<8x96xf32>
    %c0_11 = arith.constant 0 : index
    %c0_12 = arith.constant 0 : index
    %9 = vector.load %arg6[%c0_11, %c0_12] : memref<1x96xf32, #tpu.memory_space<vmem>>, vector<1x96xf32>
    %10 = vector.broadcast %9 : vector<1x96xf32> to vector<8x96xf32>
    %11 = arith.addf %8, %10 : vector<8x96xf32>
    %12 = vector.extract_strided_slice %11 {offsets = [0, 0], sizes = [8, 32], strides = [1, 1]} : vector<8x96xf32> to vector<8x32xf32>
    %cst_13 = arith.constant 0.353553385 : f32
    %13 = vector.broadcast %cst_13 : f32 to vector<8x32xf32>
    %14 = arith.mulf %12, %13 : vector<8x32xf32>
    %15 = vector.extract_strided_slice %11 {offsets = [0, 32], sizes = [8, 32], strides = [1, 1]} : vector<8x96xf32> to vector<8x32xf32>
    %16 = vector.extract_strided_slice %11 {offsets = [0, 64], sizes = [8, 32], strides = [1, 1]} : vector<8x96xf32> to vector<8x32xf32>
    %17 = vector.extract_strided_slice %14 {offsets = [0, 0], sizes = [8, 8], strides = [1, 1]} : vector<8x32xf32> to vector<8x8xf32>
    %18 = arith.truncf %17 : vector<8x8xf32> to vector<8x8xbf16>
    %19 = vector.extract_strided_slice %15 {offsets = [0, 0], sizes = [8, 8], strides = [1, 1]} : vector<8x32xf32> to vector<8x8xf32>
    %20 = arith.truncf %19 : vector<8x8xf32> to vector<8x8xbf16>
    %21 = vector.extract_strided_slice %16 {offsets = [0, 0], sizes = [8, 8], strides = [1, 1]} : vector<8x32xf32> to vector<8x8xf32>
    %22 = arith.truncf %21 : vector<8x8xf32> to vector<8x8xbf16>
    %cst_14 = arith.constant dense<0.000000e+00> : vector<8x8xf32>
    %23 = tpu.matmul %18, %20, %cst_14 {dimension_numbers = #tpu.dot_dimension_numbers<[1], [1], [0], [0], [0, 0, 1, 0], [], []>} : vector<8x8xbf16>, vector<8x8xbf16>, vector<8x8xf32> -> vector<8x8xf32>
    %cst_15 = arith.constant 0.000000e+00 : f32
    %24 = vector.broadcast %cst_15 : f32 to vector<8x8xf32>
    %25 = arith.cmpf one, %3, %24 : vector<8x8xf32>
    %cst_16 = arith.constant -1.000000e+30 : f32
    %26 = vector.broadcast %cst_16 : f32 to vector<8x8xf32>
    %27 = arith.select %25, %23, %26 : vector<8x8xi1>, vector<8x8xf32>
    %cst_17 = arith.constant dense<0xFF800000> : vector<8xf32>
    %28 = vector.multi_reduction <maximumf>, %27, %cst_17 [1] : vector<8x8xf32> to vector<8xf32>
    %29 = vector.shape_cast %28 : vector<8xf32> to vector<8x1xf32>
    %30 = vector.broadcast %29 : vector<8x1xf32> to vector<8x8xf32>
    %31 = arith.subf %27, %30 : vector<8x8xf32>
    %32 = math.exp %31 : vector<8x8xf32>
    %cst_18 = arith.constant dense<0.000000e+00> : vector<8xf32>
    %33 = vector.multi_reduction <add>, %32, %cst_18 [1] : vector<8x8xf32> to vector<8xf32>
    %34 = vector.shape_cast %33 : vector<8xf32> to vector<8x1xf32>
    %35 = tpu.reciprocal %34 {approx = true} : vector<8x1xf32> -> vector<8x1xf32>
    %36 = vector.broadcast %35 : vector<8x1xf32> to vector<8x8xf32>
    %37 = arith.mulf %32, %36 : vector<8x8xf32>
    %38 = arith.mulf %37, %5 : vector<8x8xf32>
    %39 = arith.truncf %38 : vector<8x8xf32> to vector<8x8xbf16>
    %cst_19 = arith.constant dense<0.000000e+00> : vector<8x8xf32>
    %40 = tpu.matmul %39, %22, %cst_19 {dimension_numbers = #tpu.dot_dimension_numbers<[1], [0], [0], [1], [0, 0, 1, 1], [], []>} : vector<8x8xbf16>, vector<8x8xbf16>, vector<8x8xf32> -> vector<8x8xf32>
    %41 = vector.extract_strided_slice %14 {offsets = [0, 8], sizes = [8, 8], strides = [1, 1]} : vector<8x32xf32> to vector<8x8xf32>
    %42 = arith.truncf %41 : vector<8x8xf32> to vector<8x8xbf16>
    %43 = vector.extract_strided_slice %15 {offsets = [0, 8], sizes = [8, 8], strides = [1, 1]} : vector<8x32xf32> to vector<8x8xf32>
    %44 = arith.truncf %43 : vector<8x8xf32> to vector<8x8xbf16>
    %45 = vector.extract_strided_slice %16 {offsets = [0, 8], sizes = [8, 8], strides = [1, 1]} : vector<8x32xf32> to vector<8x8xf32>
    %46 = arith.truncf %45 : vector<8x8xf32> to vector<8x8xbf16>
    %cst_20 = arith.constant dense<0.000000e+00> : vector<8x8xf32>
    %47 = tpu.matmul %42, %44, %cst_20 {dimension_numbers = #tpu.dot_dimension_numbers<[1], [1], [0], [0], [0, 0, 1, 0], [], []>} : vector<8x8xbf16>, vector<8x8xbf16>, vector<8x8xf32> -> vector<8x8xf32>
    %cst_21 = arith.constant 0.000000e+00 : f32
    %48 = vector.broadcast %cst_21 : f32 to vector<8x8xf32>
    %49 = arith.cmpf one, %3, %48 : vector<8x8xf32>
    %cst_22 = arith.constant -1.000000e+30 : f32
    %50 = vector.broadcast %cst_22 : f32 to vector<8x8xf32>
    %51 = arith.select %49, %47, %50 : vector<8x8xi1>, vector<8x8xf32>
    %cst_23 = arith.constant dense<0xFF800000> : vector<8xf32>
    %52 = vector.multi_reduction <maximumf>, %51, %cst_23 [1] : vector<8x8xf32> to vector<8xf32>
    %53 = vector.shape_cast %52 : vector<8xf32> to vector<8x1xf32>
    %54 = vector.broadcast %53 : vector<8x1xf32> to vector<8x8xf32>
    %55 = arith.subf %51, %54 : vector<8x8xf32>
    %56 = math.exp %55 : vector<8x8xf32>
    %cst_24 = arith.constant dense<0.000000e+00> : vector<8xf32>
    %57 = vector.multi_reduction <add>, %56, %cst_24 [1] : vector<8x8xf32> to vector<8xf32>
    %58 = vector.shape_cast %57 : vector<8xf32> to vector<8x1xf32>
    %59 = tpu.reciprocal %58 {approx = true} : vector<8x1xf32> -> vector<8x1xf32>
    %60 = vector.broadcast %59 : vector<8x1xf32> to vector<8x8xf32>
    %61 = arith.mulf %56, %60 : vector<8x8xf32>
    %62 = arith.mulf %61, %5 : vector<8x8xf32>
    %63 = arith.truncf %62 : vector<8x8xf32> to vector<8x8xbf16>
    %cst_25 = arith.constant dense<0.000000e+00> : vector<8x8xf32>
    %64 = tpu.matmul %63, %46, %cst_25 {dimension_numbers = #tpu.dot_dimension_numbers<[1], [0], [0], [1], [0, 0, 1, 1], [], []>} : vector<8x8xbf16>, vector<8x8xbf16>, vector<8x8xf32> -> vector<8x8xf32>
    %65 = vector.extract_strided_slice %14 {offsets = [0, 16], sizes = [8, 8], strides = [1, 1]} : vector<8x32xf32> to vector<8x8xf32>
    %66 = arith.truncf %65 : vector<8x8xf32> to vector<8x8xbf16>
    %67 = vector.extract_strided_slice %15 {offsets = [0, 16], sizes = [8, 8], strides = [1, 1]} : vector<8x32xf32> to vector<8x8xf32>
    %68 = arith.truncf %67 : vector<8x8xf32> to vector<8x8xbf16>
    %69 = vector.extract_strided_slice %16 {offsets = [0, 16], sizes = [8, 8], strides = [1, 1]} : vector<8x32xf32> to vector<8x8xf32>
    %70 = arith.truncf %69 : vector<8x8xf32> to vector<8x8xbf16>
    %cst_26 = arith.constant dense<0.000000e+00> : vector<8x8xf32>
    %71 = tpu.matmul %66, %68, %cst_26 {dimension_numbers = #tpu.dot_dimension_numbers<[1], [1], [0], [0], [0, 0, 1, 0], [], []>} : vector<8x8xbf16>, vector<8x8xbf16>, vector<8x8xf32> -> vector<8x8xf32>
    %cst_27 = arith.constant 0.000000e+00 : f32
    %72 = vector.broadcast %cst_27 : f32 to vector<8x8xf32>
    %73 = arith.cmpf one, %3, %72 : vector<8x8xf32>
    %cst_28 = arith.constant -1.000000e+30 : f32
    %74 = vector.broadcast %cst_28 : f32 to vector<8x8xf32>
    %75 = arith.select %73, %71, %74 : vector<8x8xi1>, vector<8x8xf32>
    %cst_29 = arith.constant dense<0xFF800000> : vector<8xf32>
    %76 = vector.multi_reduction <maximumf>, %75, %cst_29 [1] : vector<8x8xf32> to vector<8xf32>
    %77 = vector.shape_cast %76 : vector<8xf32> to vector<8x1xf32>
    %78 = vector.broadcast %77 : vector<8x1xf32> to vector<8x8xf32>
    %79 = arith.subf %75, %78 : vector<8x8xf32>
    %80 = math.exp %79 : vector<8x8xf32>
    %cst_30 = arith.constant dense<0.000000e+00> : vector<8xf32>
    %81 = vector.multi_reduction <add>, %80, %cst_30 [1] : vector<8x8xf32> to vector<8xf32>
    %82 = vector.shape_cast %81 : vector<8xf32> to vector<8x1xf32>
    %83 = tpu.reciprocal %82 {approx = true} : vector<8x1xf32> -> vector<8x1xf32>
    %84 = vector.broadcast %83 : vector<8x1xf32> to vector<8x8xf32>
    %85 = arith.mulf %80, %84 : vector<8x8xf32>
    %86 = arith.mulf %85, %5 : vector<8x8xf32>
    %87 = arith.truncf %86 : vector<8x8xf32> to vector<8x8xbf16>
    %cst_31 = arith.constant dense<0.000000e+00> : vector<8x8xf32>
    %88 = tpu.matmul %87, %70, %cst_31 {dimension_numbers = #tpu.dot_dimension_numbers<[1], [0], [0], [1], [0, 0, 1, 1], [], []>} : vector<8x8xbf16>, vector<8x8xbf16>, vector<8x8xf32> -> vector<8x8xf32>
    %89 = vector.extract_strided_slice %14 {offsets = [0, 24], sizes = [8, 8], strides = [1, 1]} : vector<8x32xf32> to vector<8x8xf32>
    %90 = arith.truncf %89 : vector<8x8xf32> to vector<8x8xbf16>
    %91 = vector.extract_strided_slice %15 {offsets = [0, 24], sizes = [8, 8], strides = [1, 1]} : vector<8x32xf32> to vector<8x8xf32>
    %92 = arith.truncf %91 : vector<8x8xf32> to vector<8x8xbf16>
    %93 = vector.extract_strided_slice %16 {offsets = [0, 24], sizes = [8, 8], strides = [1, 1]} : vector<8x32xf32> to vector<8x8xf32>
    %94 = arith.truncf %93 : vector<8x8xf32> to vector<8x8xbf16>
    %cst_32 = arith.constant dense<0.000000e+00> : vector<8x8xf32>
    %95 = tpu.matmul %90, %92, %cst_32 {dimension_numbers = #tpu.dot_dimension_numbers<[1], [1], [0], [0], [0, 0, 1, 0], [], []>} : vector<8x8xbf16>, vector<8x8xbf16>, vector<8x8xf32> -> vector<8x8xf32>
    %cst_33 = arith.constant 0.000000e+00 : f32
    %96 = vector.broadcast %cst_33 : f32 to vector<8x8xf32>
    %97 = arith.cmpf one, %3, %96 : vector<8x8xf32>
    %cst_34 = arith.constant -1.000000e+30 : f32
    %98 = vector.broadcast %cst_34 : f32 to vector<8x8xf32>
    %99 = arith.select %97, %95, %98 : vector<8x8xi1>, vector<8x8xf32>
    %cst_35 = arith.constant dense<0xFF800000> : vector<8xf32>
    %100 = vector.multi_reduction <maximumf>, %99, %cst_35 [1] : vector<8x8xf32> to vector<8xf32>
    %101 = vector.shape_cast %100 : vector<8xf32> to vector<8x1xf32>
    %102 = vector.broadcast %101 : vector<8x1xf32> to vector<8x8xf32>
    %103 = arith.subf %99, %102 : vector<8x8xf32>
    %104 = math.exp %103 : vector<8x8xf32>
    %cst_36 = arith.constant dense<0.000000e+00> : vector<8xf32>
    %105 = vector.multi_reduction <add>, %104, %cst_36 [1] : vector<8x8xf32> to vector<8xf32>
    %106 = vector.shape_cast %105 : vector<8xf32> to vector<8x1xf32>
    %107 = tpu.reciprocal %106 {approx = true} : vector<8x1xf32> -> vector<8x1xf32>
    %108 = vector.broadcast %107 : vector<8x1xf32> to vector<8x8xf32>
    %109 = arith.mulf %104, %108 : vector<8x8xf32>
    %110 = arith.mulf %109, %5 : vector<8x8xf32>
    %111 = arith.truncf %110 : vector<8x8xf32> to vector<8x8xbf16>
    %cst_37 = arith.constant dense<0.000000e+00> : vector<8x8xf32>
    %112 = tpu.matmul %111, %94, %cst_37 {dimension_numbers = #tpu.dot_dimension_numbers<[1], [0], [0], [1], [0, 0, 1, 1], [], []>} : vector<8x8xbf16>, vector<8x8xbf16>, vector<8x8xf32> -> vector<8x8xf32>
    %113 = tpu.concatenate %40, %64, %88, %112 in 1 : vector<8x8xf32>, vector<8x8xf32>, vector<8x8xf32>, vector<8x8xf32> -> vector<8x32xf32>
    %114 = arith.truncf %113 : vector<8x32xf32> to vector<8x32xbf16>
    %c0_38 = arith.constant 0 : index
    %c0_39 = arith.constant 0 : index
    %115 = vector.load %arg7[%c0_38, %c0_39] : memref<32x32xbf16, #tpu.memory_space<vmem>>, vector<32x32xbf16>
    %cst_40 = arith.constant dense<0.000000e+00> : vector<8x32xf32>
    %116 = tpu.matmul %114, %115, %cst_40 {dimension_numbers = #tpu.dot_dimension_numbers<[1], [0], [0], [1], [0, 0, 1, 1], [], []>} : vector<8x32xbf16>, vector<32x32xbf16>, vector<8x32xf32> -> vector<8x32xf32>
    %c0_41 = arith.constant 0 : index
    %c0_42 = arith.constant 0 : index
    %117 = vector.load %arg8[%c0_41, %c0_42] : memref<1x32xf32, #tpu.memory_space<vmem>>, vector<1x32xf32>
    %118 = vector.broadcast %117 : vector<1x32xf32> to vector<8x32xf32>
    %119 = arith.addf %116, %118 : vector<8x32xf32>
    %120 = arith.addf %119, %0 : vector<8x32xf32>
    %cst_43 = arith.constant dense<0.000000e+00> : vector<8xf32>
    %121 = vector.multi_reduction <add>, %120, %cst_43 [1] : vector<8x32xf32> to vector<8xf32>
    %122 = vector.shape_cast %121 : vector<8xf32> to vector<8x1xf32>
    %cst_44 = arith.constant 3.200000e+01 : f32
    %123 = vector.broadcast %cst_44 : f32 to vector<8x1xf32>
    %124 = arith.divf %122, %123 : vector<8x1xf32>
    %125 = vector.broadcast %124 : vector<8x1xf32> to vector<8x32xf32>
    %126 = arith.subf %120, %125 : vector<8x32xf32>
    %127 = arith.mulf %126, %126 : vector<8x32xf32>
    %cst_45 = arith.constant dense<0.000000e+00> : vector<8xf32>
    %128 = vector.multi_reduction <add>, %127, %cst_45 [1] : vector<8x32xf32> to vector<8xf32>
    %129 = vector.shape_cast %128 : vector<8xf32> to vector<8x1xf32>
    %cst_46 = arith.constant 3.200000e+01 : f32
    %130 = vector.broadcast %cst_46 : f32 to vector<8x1xf32>
    %131 = arith.divf %129, %130 : vector<8x1xf32>
    %cst_47 = arith.constant 9.99999974E-6 : f32
    %132 = vector.broadcast %cst_47 : f32 to vector<8x1xf32>
    %133 = arith.addf %131, %132 : vector<8x1xf32>
    %134 = math.rsqrt %133 : vector<8x1xf32>
    %135 = vector.broadcast %134 : vector<8x1xf32> to vector<8x32xf32>
    %136 = arith.mulf %126, %135 : vector<8x32xf32>
    %c0_48 = arith.constant 0 : index
    %c0_49 = arith.constant 0 : index
    %137 = vector.load %arg9[%c0_48, %c0_49] : memref<1x32xf32, #tpu.memory_space<vmem>>, vector<1x32xf32>
    %138 = vector.broadcast %137 : vector<1x32xf32> to vector<8x32xf32>
    %139 = arith.mulf %136, %138 : vector<8x32xf32>
    %c0_50 = arith.constant 0 : index
    %c0_51 = arith.constant 0 : index
    %140 = vector.load %arg10[%c0_50, %c0_51] : memref<1x32xf32, #tpu.memory_space<vmem>>, vector<1x32xf32>
    %141 = vector.broadcast %140 : vector<1x32xf32> to vector<8x32xf32>
    %142 = arith.addf %139, %141 : vector<8x32xf32>
    %143 = arith.truncf %142 : vector<8x32xf32> to vector<8x32xbf16>
    %c0_52 = arith.constant 0 : index
    %c0_53 = arith.constant 0 : index
    %144 = vector.load %arg11[%c0_52, %c0_53] : memref<32x32xbf16, #tpu.memory_space<vmem>>, vector<32x32xbf16>
    %cst_54 = arith.constant dense<0.000000e+00> : vector<8x32xf32>
    %145 = tpu.matmul %143, %144, %cst_54 {dimension_numbers = #tpu.dot_dimension_numbers<[1], [0], [0], [1], [0, 0, 1, 1], [], []>} : vector<8x32xbf16>, vector<32x32xbf16>, vector<8x32xf32> -> vector<8x32xf32>
    %c0_55 = arith.constant 0 : index
    %c0_56 = arith.constant 0 : index
    %146 = vector.load %arg12[%c0_55, %c0_56] : memref<1x32xf32, #tpu.memory_space<vmem>>, vector<1x32xf32>
    %147 = vector.broadcast %146 : vector<1x32xf32> to vector<8x32xf32>
    %148 = arith.addf %145, %147 : vector<8x32xf32>
    %cst_57 = arith.constant 0.353553385 : f32
    %149 = vector.broadcast %cst_57 : f32 to vector<8x32xf32>
    %150 = arith.mulf %148, %149 : vector<8x32xf32>
    %151 = arith.truncf %1 : vector<8x32xf32> to vector<8x32xbf16>
    %c0_58 = arith.constant 0 : index
    %c0_59 = arith.constant 0 : index
    %152 = vector.load %arg13[%c0_58, %c0_59] : memref<32x64xbf16, #tpu.memory_space<vmem>>, vector<32x64xbf16>
    %cst_60 = arith.constant dense<0.000000e+00> : vector<8x64xf32>
    %153 = tpu.matmul %151, %152, %cst_60 {dimension_numbers = #tpu.dot_dimension_numbers<[1], [0], [0], [1], [0, 0, 1, 1], [], []>} : vector<8x32xbf16>, vector<32x64xbf16>, vector<8x64xf32> -> vector<8x64xf32>
    %c0_61 = arith.constant 0 : index
    %c0_62 = arith.constant 0 : index
    %154 = vector.load %arg14[%c0_61, %c0_62] : memref<1x64xf32, #tpu.memory_space<vmem>>, vector<1x64xf32>
    %155 = vector.broadcast %154 : vector<1x64xf32> to vector<8x64xf32>
    %156 = arith.addf %153, %155 : vector<8x64xf32>
    %157 = vector.extract_strided_slice %156 {offsets = [0, 0], sizes = [8, 32], strides = [1, 1]} : vector<8x64xf32> to vector<8x32xf32>
    %158 = vector.extract_strided_slice %156 {offsets = [0, 32], sizes = [8, 32], strides = [1, 1]} : vector<8x64xf32> to vector<8x32xf32>
    %159 = vector.extract_strided_slice %150 {offsets = [0, 0], sizes = [8, 8], strides = [1, 1]} : vector<8x32xf32> to vector<8x8xf32>
    %160 = arith.truncf %159 : vector<8x8xf32> to vector<8x8xbf16>
    %161 = vector.extract_strided_slice %157 {offsets = [0, 0], sizes = [8, 8], strides = [1, 1]} : vector<8x32xf32> to vector<8x8xf32>
    %162 = arith.truncf %161 : vector<8x8xf32> to vector<8x8xbf16>
    %163 = vector.extract_strided_slice %158 {offsets = [0, 0], sizes = [8, 8], strides = [1, 1]} : vector<8x32xf32> to vector<8x8xf32>
    %164 = arith.truncf %163 : vector<8x8xf32> to vector<8x8xbf16>
    %cst_63 = arith.constant dense<0.000000e+00> : vector<8x8xf32>
    %165 = tpu.matmul %160, %162, %cst_63 {dimension_numbers = #tpu.dot_dimension_numbers<[1], [1], [0], [0], [0, 0, 1, 0], [], []>} : vector<8x8xbf16>, vector<8x8xbf16>, vector<8x8xf32> -> vector<8x8xf32>
    %cst_64 = arith.constant dense<0xFF800000> : vector<8xf32>
    %166 = vector.multi_reduction <maximumf>, %165, %cst_64 [1] : vector<8x8xf32> to vector<8xf32>
    %167 = vector.shape_cast %166 : vector<8xf32> to vector<8x1xf32>
    %168 = vector.broadcast %167 : vector<8x1xf32> to vector<8x8xf32>
    %169 = arith.subf %165, %168 : vector<8x8xf32>
    %170 = math.exp %169 : vector<8x8xf32>
    %cst_65 = arith.constant dense<0.000000e+00> : vector<8xf32>
    %171 = vector.multi_reduction <add>, %170, %cst_65 [1] : vector<8x8xf32> to vector<8xf32>
    %172 = vector.shape_cast %171 : vector<8xf32> to vector<8x1xf32>
    %173 = tpu.reciprocal %172 {approx = true} : vector<8x1xf32> -> vector<8x1xf32>
    %174 = vector.broadcast %173 : vector<8x1xf32> to vector<8x8xf32>
    %175 = arith.mulf %170, %174 : vector<8x8xf32>
    %176 = arith.truncf %175 : vector<8x8xf32> to vector<8x8xbf16>
    %cst_66 = arith.constant dense<0.000000e+00> : vector<8x8xf32>
    %177 = tpu.matmul %176, %164, %cst_66 {dimension_numbers = #tpu.dot_dimension_numbers<[1], [0], [0], [1], [0, 0, 1, 1], [], []>} : vector<8x8xbf16>, vector<8x8xbf16>, vector<8x8xf32> -> vector<8x8xf32>
    %178 = vector.extract_strided_slice %150 {offsets = [0, 8], sizes = [8, 8], strides = [1, 1]} : vector<8x32xf32> to vector<8x8xf32>
    %179 = arith.truncf %178 : vector<8x8xf32> to vector<8x8xbf16>
    %180 = vector.extract_strided_slice %157 {offsets = [0, 8], sizes = [8, 8], strides = [1, 1]} : vector<8x32xf32> to vector<8x8xf32>
    %181 = arith.truncf %180 : vector<8x8xf32> to vector<8x8xbf16>
    %182 = vector.extract_strided_slice %158 {offsets = [0, 8], sizes = [8, 8], strides = [1, 1]} : vector<8x32xf32> to vector<8x8xf32>
    %183 = arith.truncf %182 : vector<8x8xf32> to vector<8x8xbf16>
    %cst_67 = arith.constant dense<0.000000e+00> : vector<8x8xf32>
    %184 = tpu.matmul %179, %181, %cst_67 {dimension_numbers = #tpu.dot_dimension_numbers<[1], [1], [0], [0], [0, 0, 1, 0], [], []>} : vector<8x8xbf16>, vector<8x8xbf16>, vector<8x8xf32> -> vector<8x8xf32>
    %cst_68 = arith.constant dense<0xFF800000> : vector<8xf32>
    %185 = vector.multi_reduction <maximumf>, %184, %cst_68 [1] : vector<8x8xf32> to vector<8xf32>
    %186 = vector.shape_cast %185 : vector<8xf32> to vector<8x1xf32>
    %187 = vector.broadcast %186 : vector<8x1xf32> to vector<8x8xf32>
    %188 = arith.subf %184, %187 : vector<8x8xf32>
    %189 = math.exp %188 : vector<8x8xf32>
    %cst_69 = arith.constant dense<0.000000e+00> : vector<8xf32>
    %190 = vector.multi_reduction <add>, %189, %cst_69 [1] : vector<8x8xf32> to vector<8xf32>
    %191 = vector.shape_cast %190 : vector<8xf32> to vector<8x1xf32>
    %192 = tpu.reciprocal %191 {approx = true} : vector<8x1xf32> -> vector<8x1xf32>
    %193 = vector.broadcast %192 : vector<8x1xf32> to vector<8x8xf32>
    %194 = arith.mulf %189, %193 : vector<8x8xf32>
    %195 = arith.truncf %194 : vector<8x8xf32> to vector<8x8xbf16>
    %cst_70 = arith.constant dense<0.000000e+00> : vector<8x8xf32>
    %196 = tpu.matmul %195, %183, %cst_70 {dimension_numbers = #tpu.dot_dimension_numbers<[1], [0], [0], [1], [0, 0, 1, 1], [], []>} : vector<8x8xbf16>, vector<8x8xbf16>, vector<8x8xf32> -> vector<8x8xf32>
    %197 = vector.extract_strided_slice %150 {offsets = [0, 16], sizes = [8, 8], strides = [1, 1]} : vector<8x32xf32> to vector<8x8xf32>
    %198 = arith.truncf %197 : vector<8x8xf32> to vector<8x8xbf16>
    %199 = vector.extract_strided_slice %157 {offsets = [0, 16], sizes = [8, 8], strides = [1, 1]} : vector<8x32xf32> to vector<8x8xf32>
    %200 = arith.truncf %199 : vector<8x8xf32> to vector<8x8xbf16>
    %201 = vector.extract_strided_slice %158 {offsets = [0, 16], sizes = [8, 8], strides = [1, 1]} : vector<8x32xf32> to vector<8x8xf32>
    %202 = arith.truncf %201 : vector<8x8xf32> to vector<8x8xbf16>
    %cst_71 = arith.constant dense<0.000000e+00> : vector<8x8xf32>
    %203 = tpu.matmul %198, %200, %cst_71 {dimension_numbers = #tpu.dot_dimension_numbers<[1], [1], [0], [0], [0, 0, 1, 0], [], []>} : vector<8x8xbf16>, vector<8x8xbf16>, vector<8x8xf32> -> vector<8x8xf32>
    %cst_72 = arith.constant dense<0xFF800000> : vector<8xf32>
    %204 = vector.multi_reduction <maximumf>, %203, %cst_72 [1] : vector<8x8xf32> to vector<8xf32>
    %205 = vector.shape_cast %204 : vector<8xf32> to vector<8x1xf32>
    %206 = vector.broadcast %205 : vector<8x1xf32> to vector<8x8xf32>
    %207 = arith.subf %203, %206 : vector<8x8xf32>
    %208 = math.exp %207 : vector<8x8xf32>
    %cst_73 = arith.constant dense<0.000000e+00> : vector<8xf32>
    %209 = vector.multi_reduction <add>, %208, %cst_73 [1] : vector<8x8xf32> to vector<8xf32>
    %210 = vector.shape_cast %209 : vector<8xf32> to vector<8x1xf32>
    %211 = tpu.reciprocal %210 {approx = true} : vector<8x1xf32> -> vector<8x1xf32>
    %212 = vector.broadcast %211 : vector<8x1xf32> to vector<8x8xf32>
    %213 = arith.mulf %208, %212 : vector<8x8xf32>
    %214 = arith.truncf %213 : vector<8x8xf32> to vector<8x8xbf16>
    %cst_74 = arith.constant dense<0.000000e+00> : vector<8x8xf32>
    %215 = tpu.matmul %214, %202, %cst_74 {dimension_numbers = #tpu.dot_dimension_numbers<[1], [0], [0], [1], [0, 0, 1, 1], [], []>} : vector<8x8xbf16>, vector<8x8xbf16>, vector<8x8xf32> -> vector<8x8xf32>
    %216 = vector.extract_strided_slice %150 {offsets = [0, 24], sizes = [8, 8], strides = [1, 1]} : vector<8x32xf32> to vector<8x8xf32>
    %217 = arith.truncf %216 : vector<8x8xf32> to vector<8x8xbf16>
    %218 = vector.extract_strided_slice %157 {offsets = [0, 24], sizes = [8, 8], strides = [1, 1]} : vector<8x32xf32> to vector<8x8xf32>
    %219 = arith.truncf %218 : vector<8x8xf32> to vector<8x8xbf16>
    %220 = vector.extract_strided_slice %158 {offsets = [0, 24], sizes = [8, 8], strides = [1, 1]} : vector<8x32xf32> to vector<8x8xf32>
    %221 = arith.truncf %220 : vector<8x8xf32> to vector<8x8xbf16>
    %cst_75 = arith.constant dense<0.000000e+00> : vector<8x8xf32>
    %222 = tpu.matmul %217, %219, %cst_75 {dimension_numbers = #tpu.dot_dimension_numbers<[1], [1], [0], [0], [0, 0, 1, 0], [], []>} : vector<8x8xbf16>, vector<8x8xbf16>, vector<8x8xf32> -> vector<8x8xf32>
    %cst_76 = arith.constant dense<0xFF800000> : vector<8xf32>
    %223 = vector.multi_reduction <maximumf>, %222, %cst_76 [1] : vector<8x8xf32> to vector<8xf32>
    %224 = vector.shape_cast %223 : vector<8xf32> to vector<8x1xf32>
    %225 = vector.broadcast %224 : vector<8x1xf32> to vector<8x8xf32>
    %226 = arith.subf %222, %225 : vector<8x8xf32>
    %227 = math.exp %226 : vector<8x8xf32>
    %cst_77 = arith.constant dense<0.000000e+00> : vector<8xf32>
    %228 = vector.multi_reduction <add>, %227, %cst_77 [1] : vector<8x8xf32> to vector<8xf32>
    %229 = vector.shape_cast %228 : vector<8xf32> to vector<8x1xf32>
    %230 = tpu.reciprocal %229 {approx = true} : vector<8x1xf32> -> vector<8x1xf32>
    %231 = vector.broadcast %230 : vector<8x1xf32> to vector<8x8xf32>
    %232 = arith.mulf %227, %231 : vector<8x8xf32>
    %233 = arith.truncf %232 : vector<8x8xf32> to vector<8x8xbf16>
    %cst_78 = arith.constant dense<0.000000e+00> : vector<8x8xf32>
    %234 = tpu.matmul %233, %221, %cst_78 {dimension_numbers = #tpu.dot_dimension_numbers<[1], [0], [0], [1], [0, 0, 1, 1], [], []>} : vector<8x8xbf16>, vector<8x8xbf16>, vector<8x8xf32> -> vector<8x8xf32>
    %235 = tpu.concatenate %177, %196, %215, %234 in 1 : vector<8x8xf32>, vector<8x8xf32>, vector<8x8xf32>, vector<8x8xf32> -> vector<8x32xf32>
    %236 = arith.truncf %235 : vector<8x32xf32> to vector<8x32xbf16>
    %c0_79 = arith.constant 0 : index
    %c0_80 = arith.constant 0 : index
    %237 = vector.load %arg15[%c0_79, %c0_80] : memref<32x32xbf16, #tpu.memory_space<vmem>>, vector<32x32xbf16>
    %cst_81 = arith.constant dense<0.000000e+00> : vector<8x32xf32>
    %238 = tpu.matmul %236, %237, %cst_81 {dimension_numbers = #tpu.dot_dimension_numbers<[1], [0], [0], [1], [0, 0, 1, 1], [], []>} : vector<8x32xbf16>, vector<32x32xbf16>, vector<8x32xf32> -> vector<8x32xf32>
    %c0_82 = arith.constant 0 : index
    %c0_83 = arith.constant 0 : index
    %239 = vector.load %arg16[%c0_82, %c0_83] : memref<1x32xf32, #tpu.memory_space<vmem>>, vector<1x32xf32>
    %240 = vector.broadcast %239 : vector<1x32xf32> to vector<8x32xf32>
    %241 = arith.addf %238, %240 : vector<8x32xf32>
    %242 = arith.addf %241, %142 : vector<8x32xf32>
    %cst_84 = arith.constant dense<0.000000e+00> : vector<8xf32>
    %243 = vector.multi_reduction <add>, %242, %cst_84 [1] : vector<8x32xf32> to vector<8xf32>
    %244 = vector.shape_cast %243 : vector<8xf32> to vector<8x1xf32>
    %cst_85 = arith.constant 3.200000e+01 : f32
    %245 = vector.broadcast %cst_85 : f32 to vector<8x1xf32>
    %246 = arith.divf %244, %245 : vector<8x1xf32>
    %247 = vector.broadcast %246 : vector<8x1xf32> to vector<8x32xf32>
    %248 = arith.subf %242, %247 : vector<8x32xf32>
    %249 = arith.mulf %248, %248 : vector<8x32xf32>
    %cst_86 = arith.constant dense<0.000000e+00> : vector<8xf32>
    %250 = vector.multi_reduction <add>, %249, %cst_86 [1] : vector<8x32xf32> to vector<8xf32>
    %251 = vector.shape_cast %250 : vector<8xf32> to vector<8x1xf32>
    %cst_87 = arith.constant 3.200000e+01 : f32
    %252 = vector.broadcast %cst_87 : f32 to vector<8x1xf32>
    %253 = arith.divf %251, %252 : vector<8x1xf32>
    %cst_88 = arith.constant 9.99999974E-6 : f32
    %254 = vector.broadcast %cst_88 : f32 to vector<8x1xf32>
    %255 = arith.addf %253, %254 : vector<8x1xf32>
    %256 = math.rsqrt %255 : vector<8x1xf32>
    %257 = vector.broadcast %256 : vector<8x1xf32> to vector<8x32xf32>
    %258 = arith.mulf %248, %257 : vector<8x32xf32>
    %c0_89 = arith.constant 0 : index
    %c0_90 = arith.constant 0 : index
    %259 = vector.load %arg17[%c0_89, %c0_90] : memref<1x32xf32, #tpu.memory_space<vmem>>, vector<1x32xf32>
    %260 = vector.broadcast %259 : vector<1x32xf32> to vector<8x32xf32>
    %261 = arith.mulf %258, %260 : vector<8x32xf32>
    %c0_91 = arith.constant 0 : index
    %c0_92 = arith.constant 0 : index
    %262 = vector.load %arg18[%c0_91, %c0_92] : memref<1x32xf32, #tpu.memory_space<vmem>>, vector<1x32xf32>
    %263 = vector.broadcast %262 : vector<1x32xf32> to vector<8x32xf32>
    %264 = arith.addf %261, %263 : vector<8x32xf32>
    %265 = arith.truncf %264 : vector<8x32xf32> to vector<8x32xbf16>
    %c0_93 = arith.constant 0 : index
    %c0_94 = arith.constant 0 : index
    %266 = vector.load %arg19[%c0_93, %c0_94] : memref<32x64xbf16, #tpu.memory_space<vmem>>, vector<32x64xbf16>
    %cst_95 = arith.constant dense<0.000000e+00> : vector<8x64xf32>
    %267 = tpu.matmul %265, %266, %cst_95 {dimension_numbers = #tpu.dot_dimension_numbers<[1], [0], [0], [1], [0, 0, 1, 1], [], []>} : vector<8x32xbf16>, vector<32x64xbf16>, vector<8x64xf32> -> vector<8x64xf32>
    %c0_96 = arith.constant 0 : index
    %c0_97 = arith.constant 0 : index
    %268 = vector.load %arg20[%c0_96, %c0_97] : memref<1x64xf32, #tpu.memory_space<vmem>>, vector<1x64xf32>
    %269 = vector.broadcast %268 : vector<1x64xf32> to vector<8x64xf32>
    %270 = arith.addf %267, %269 : vector<8x64xf32>
    %cst_98 = arith.constant 0.000000e+00 : f32
    %271 = vector.broadcast %cst_98 : f32 to vector<8x64xf32>
    %272 = arith.maximumf %270, %271 : vector<8x64xf32>
    %273 = arith.truncf %272 : vector<8x64xf32> to vector<8x64xbf16>
    %c0_99 = arith.constant 0 : index
    %c0_100 = arith.constant 0 : index
    %274 = vector.load %arg21[%c0_99, %c0_100] : memref<64x32xbf16, #tpu.memory_space<vmem>>, vector<64x32xbf16>
    %cst_101 = arith.constant dense<0.000000e+00> : vector<8x32xf32>
    %275 = tpu.matmul %273, %274, %cst_101 {dimension_numbers = #tpu.dot_dimension_numbers<[1], [0], [0], [1], [0, 0, 1, 1], [], []>} : vector<8x64xbf16>, vector<64x32xbf16>, vector<8x32xf32> -> vector<8x32xf32>
    %c0_102 = arith.constant 0 : index
    %c0_103 = arith.constant 0 : index
    %276 = vector.load %arg22[%c0_102, %c0_103] : memref<1x32xf32, #tpu.memory_space<vmem>>, vector<1x32xf32>
    %277 = vector.broadcast %276 : vector<1x32xf32> to vector<8x32xf32>
    %278 = arith.addf %275, %277 : vector<8x32xf32>
    %279 = arith.addf %278, %264 : vector<8x32xf32>
    %cst_104 = arith.constant dense<0.000000e+00> : vector<8xf32>
    %280 = vector.multi_reduction <add>, %279, %cst_104 [1] : vector<8x32xf32> to vector<8xf32>
    %281 = vector.shape_cast %280 : vector<8xf32> to vector<8x1xf32>
    %cst_105 = arith.constant 3.200000e+01 : f32
    %282 = vector.broadcast %cst_105 : f32 to vector<8x1xf32>
    %283 = arith.divf %281, %282 : vector<8x1xf32>
    %284 = vector.broadcast %283 : vector<8x1xf32> to vector<8x32xf32>
    %285 = arith.subf %279, %284 : vector<8x32xf32>
    %286 = arith.mulf %285, %285 : vector<8x32xf32>
    %cst_106 = arith.constant dense<0.000000e+00> : vector<8xf32>
    %287 = vector.multi_reduction <add>, %286, %cst_106 [1] : vector<8x32xf32> to vector<8xf32>
    %288 = vector.shape_cast %287 : vector<8xf32> to vector<8x1xf32>
    %cst_107 = arith.constant 3.200000e+01 : f32
    %289 = vector.broadcast %cst_107 : f32 to vector<8x1xf32>
    %290 = arith.divf %288, %289 : vector<8x1xf32>
    %cst_108 = arith.constant 9.99999974E-6 : f32
    %291 = vector.broadcast %cst_108 : f32 to vector<8x1xf32>
    %292 = arith.addf %290, %291 : vector<8x1xf32>
    %293 = math.rsqrt %292 : vector<8x1xf32>
    %294 = vector.broadcast %293 : vector<8x1xf32> to vector<8x32xf32>
    %295 = arith.mulf %285, %294 : vector<8x32xf32>
    %c0_109 = arith.constant 0 : index
    %c0_110 = arith.constant 0 : index
    %296 = vector.load %arg23[%c0_109, %c0_110] : memref<1x32xf32, #tpu.memory_space<vmem>>, vector<1x32xf32>
    %297 = vector.broadcast %296 : vector<1x32xf32> to vector<8x32xf32>
    %298 = arith.mulf %295, %297 : vector<8x32xf32>
    %c0_111 = arith.constant 0 : index
    %c0_112 = arith.constant 0 : index
    %299 = vector.load %arg24[%c0_111, %c0_112] : memref<1x32xf32, #tpu.memory_space<vmem>>, vector<1x32xf32>
    %300 = vector.broadcast %299 : vector<1x32xf32> to vector<8x32xf32>
    %301 = arith.addf %298, %300 : vector<8x32xf32>
    %c0_113 = arith.constant 0 : index
    %c0_114 = arith.constant 0 : index
    %302 = vector.load %arg25[%c0_113, %c0_114] : memref<8x32xf32, #tpu.memory_space<vmem>>, vector<8x32xf32>
    tpu.vector_store %arg25[%c0_113, %c0_114], %301 {strides = array<i32>} : memref<8x32xf32, #tpu.memory_space<vmem>>, vector<8x32xf32>,
    return
  }
  func.func @transform_0(%arg0: i32) -> (i32, i32) {
    %c0_i32 = arith.constant 0 : i32
    %c0_i32_0 = arith.constant 0 : i32
    return %arg0, %c0_i32 : i32, i32
  }
  func.func @transform_1(%arg0: i32) -> (i32, i32) {
    %c0_i32 = arith.constant 0 : i32
    %c0_i32_0 = arith.constant 0 : i32
    return %arg0, %c0_i32 : i32, i32
  }
  func.func @transform_2(%arg0: i32) -> (i32, i32, i32) {
    %c0_i32 = arith.constant 0 : i32
    %c0_i32_0 = arith.constant 0 : i32
    %c0_i32_1 = arith.constant 0 : i32
    return %arg0, %c0_i32, %c0_i32_0 : i32, i32, i32
  }
  func.func @transform_3(%arg0: i32) -> (i32, i32, i32) {
    %c0_i32 = arith.constant 0 : i32
    %c0_i32_0 = arith.constant 0 : i32
    %c0_i32_1 = arith.constant 0 : i32
    return %arg0, %c0_i32, %c0_i32_0 : i32, i32, i32
  }
  func.func @transform_4(%arg0: i32) -> (i32, i32) {
    %c0_i32 = arith.constant 0 : i32
    %c0_i32_0 = arith.constant 0 : i32
    %c0_i32_1 = arith.constant 0 : i32
    return %c0_i32, %c0_i32_0 : i32, i32
  }
  func.func @transform_5(%arg0: i32) -> (i32, i32) {
    %c0_i32 = arith.constant 0 : i32
    %c0_i32_0 = arith.constant 0 : i32
    %c0_i32_1 = arith.constant 0 : i32
    return %c0_i32, %c0_i32_0 : i32, i32
  }
  func.func @transform_6(%arg0: i32) -> (i32, i32) {
    %c0_i32 = arith.constant 0 : i32
    %c0_i32_0 = arith.constant 0 : i32
    %c0_i32_1 = arith.constant 0 : i32
    return %c0_i32, %c0_i32_0 : i32, i32
  }
  func.func @transform_7(%arg0: i32) -> (i32, i32) {
    %c0_i32 = arith.constant 0 : i32
    %c0_i32_0 = arith.constant 0 : i32
    %c0_i32_1 = arith.constant 0 : i32
    return %c0_i32, %c0_i32_0 : i32, i32
  }
  func.func @transform_8(%arg0: i32) -> (i32, i32) {
    %c0_i32 = arith.constant 0 : i32
    %c0_i32_0 = arith.constant 0 : i32
    %c0_i32_1 = arith.constant 0 : i32
    return %c0_i32, %c0_i32_0 : i32, i32
  }
  func.func @transform_9(%arg0: i32) -> (i32, i32) {
    %c0_i32 = arith.constant 0 : i32
    %c0_i32_0 = arith.constant 0 : i32
    %c0_i32_1 = arith.constant 0 : i32
    return %c0_i32, %c0_i32_0 : i32, i32
  }
  func.func @transform_10(%arg0: i32) -> (i32, i32) {
    %c0_i32 = arith.constant 0 : i32
    %c0_i32_0 = arith.constant 0 : i32
    %c0_i32_1 = arith.constant 0 : i32
    return %c0_i32, %c0_i32_0 : i32, i32
  }
  func.func @transform_11(%arg0: i32) -> (i32, i32) {
    %c0_i32 = arith.constant 0 : i32
    %c0_i32_0 = arith.constant 0 : i32
    %c0_i32_1 = arith.constant 0 : i32
    return %c0_i32, %c0_i32_0 : i32, i32
  }
  func.func @transform_12(%arg0: i32) -> (i32, i32) {
    %c0_i32 = arith.constant 0 : i32
    %c0_i32_0 = arith.constant 0 : i32
    %c0_i32_1 = arith.constant 0 : i32
    return %c0_i32, %c0_i32_0 : i32, i32
  }
  func.func @transform_13(%arg0: i32) -> (i32, i32) {
    %c0_i32 = arith.constant 0 : i32
    %c0_i32_0 = arith.constant 0 : i32
    %c0_i32_1 = arith.constant 0 : i32
    return %c0_i32, %c0_i32_0 : i32, i32
  }
  func.func @transform_14(%arg0: i32) -> (i32, i32) {
    %c0_i32 = arith.constant 0 : i32
    %c0_i32_0 = arith.constant 0 : i32
    %c0_i32_1 = arith.constant 0 : i32
    return %c0_i32, %c0_i32_0 : i32, i32
  }
  func.func @transform_15(%arg0: i32) -> (i32, i32) {
    %c0_i32 = arith.constant 0 : i32
    %c0_i32_0 = arith.constant 0 : i32
    %c0_i32_1 = arith.constant 0 : i32
    return %c0_i32, %c0_i32_0 : i32, i32
  }
  func.func @transform_16(%arg0: i32) -> (i32, i32) {
    %c0_i32 = arith.constant 0 : i32
    %c0_i32_0 = arith.constant 0 : i32
    %c0_i32_1 = arith.constant 0 : i32
    return %c0_i32, %c0_i32_0 : i32, i32
  }
  func.func @transform_17(%arg0: i32) -> (i32, i32) {
    %c0_i32 = arith.constant 0 : i32
    %c0_i32_0 = arith.constant 0 : i32
    %c0_i32_1 = arith.constant 0 : i32
    return %c0_i32, %c0_i32_0 : i32, i32
  }
  func.func @transform_18(%arg0: i32) -> (i32, i32) {
    %c0_i32 = arith.constant 0 : i32
    %c0_i32_0 = arith.constant 0 : i32
    %c0_i32_1 = arith.constant 0 : i32
    return %c0_i32, %c0_i32_0 : i32, i32
  }
  func.func @transform_19(%arg0: i32) -> (i32, i32) {
    %c0_i32 = arith.constant 0 : i32
    %c0_i32_0 = arith.constant 0 : i32
    %c0_i32_1 = arith.constant 0 : i32
    return %c0_i32, %c0_i32_0 : i32, i32
  }
  func.func @transform_20(%arg0: i32) -> (i32, i32) {
    %c0_i32 = arith.constant 0 : i32
    %c0_i32_0 = arith.constant 0 : i32
    %c0_i32_1 = arith.constant 0 : i32
    return %c0_i32, %c0_i32_0 : i32, i32
  }
  func.func @transform_21(%arg0: i32) -> (i32, i32) {
    %c0_i32 = arith.constant 0 : i32
    %c0_i32_0 = arith.constant 0 : i32
    %c0_i32_1 = arith.constant 0 : i32
    return %c0_i32, %c0_i32_0 : i32, i32
  }
  func.func @transform_22(%arg0: i32) -> (i32, i32) {
    %c0_i32 = arith.constant 0 : i32
    %c0_i32_0 = arith.constant 0 : i32
    %c0_i32_1 = arith.constant 0 : i32
    return %c0_i32, %c0_i32_0 : i32, i32
  }
  func.func @transform_23(%arg0: i32) -> (i32, i32) {
    %c0_i32 = arith.constant 0 : i32
    %c0_i32_0 = arith.constant 0 : i32
    %c0_i32_1 = arith.constant 0 : i32
    return %c0_i32, %c0_i32_0 : i32, i32
  }
  func.func @transform_24(%arg0: i32) -> (i32, i32) {
    %c0_i32 = arith.constant 0 : i32
    %c0_i32_0 = arith.constant 0 : i32
    return %arg0, %c0_i32 : i32, i32
  }
}

</mosaic_0001>

<llo_original>
// kernel: decoder_forward.2
$region0: #{decoder_forward.2}
  #allocation0 [shape = 'u32[]', space=smem, size = 0x4, offset = 0x4, fixed_abs, tag = 'smem constant byte address 0x4 - core index']
  #allocation1 [shape = 'u32[144,128]{1,0:T(1,128)}', space=vmem, size = 0x12000, scoped, tag = 'internal scratch']
  %s0 = inlined_call_operand.vmem [shape: f32[16,32], index: 0, kind: input, shape index: {}]
  %s1 = inlined_call_operand.vmem [shape: f32[16,32], index: 1, kind: input, shape index: {}]
  %s2 = inlined_call_operand.vmem [shape: f32[2,8,8], index: 2, kind: input, shape index: {}]
  %s3 = inlined_call_operand.vmem [shape: f32[2,8,8], index: 3, kind: input, shape index: {}]
  %s4 = inlined_call_operand.vmem [shape: bf16[32,96], index: 4, kind: input, shape index: {}]
  %s5 = inlined_call_operand.hbm [shape: f32[1,96], index: 5, kind: input, shape index: {}]
  %s6 = inlined_call_operand.vmem [shape: bf16[32,32], index: 6, kind: input, shape index: {}]
  %s7 = inlined_call_operand.hbm [shape: f32[1,32], index: 7, kind: input, shape index: {}]
  %s8 = inlined_call_operand.hbm [shape: f32[1,32], index: 8, kind: input, shape index: {}]
  %s9 = inlined_call_operand.hbm [shape: f32[1,32], index: 9, kind: input, shape index: {}]
  %s10 = inlined_call_operand.hbm [shape: bf16[32,32], index: 10, kind: input, shape index: {}]
  %s11 = inlined_call_operand.hbm [shape: f32[1,32], index: 11, kind: input, shape index: {}]
  %s12 = inlined_call_operand.hbm [shape: bf16[32,64], index: 12, kind: input, shape index: {}]
  %s13 = inlined_call_operand.hbm [shape: f32[1,64], index: 13, kind: input, shape index: {}]
  %s14 = inlined_call_operand.hbm [shape: bf16[32,32], index: 14, kind: input, shape index: {}]
  %s15 = inlined_call_operand.hbm [shape: f32[1,32], index: 15, kind: input, shape index: {}]
  %s16 = inlined_call_operand.hbm [shape: f32[1,32], index: 16, kind: input, shape index: {}]
  %s17 = inlined_call_operand.hbm [shape: f32[1,32], index: 17, kind: input, shape index: {}]
  %s18 = inlined_call_operand.hbm [shape: bf16[32,64], index: 18, kind: input, shape index: {}]
  %s19 = inlined_call_operand.hbm [shape: f32[1,64], index: 19, kind: input, shape index: {}]
  %s20 = inlined_call_operand.vmem [shape: bf16[64,32], index: 20, kind: input, shape index: {}]
  %s21 = inlined_call_operand.hbm [shape: f32[1,32], index: 21, kind: input, shape index: {}]
  %s22 = inlined_call_operand.hbm [shape: f32[1,32], index: 22, kind: input, shape index: {}]
  %s23 = inlined_call_operand.hbm [shape: f32[1,32], index: 23, kind: input, shape index: {}]
  %s24 = inlined_call_operand.vmem [shape: f32[16,32], index: 24, kind: output, shape index: {}]
  %s25 = sld [smem:[#allocation0]]
  $region197: #{decoder_forward.2} parent=0
    _
  %s27 = ssub.s32 1, %s25
  %s28 = scalar_select 0, %s27, %s25
  $region1: #{decoder_forward.2} parent=0
    #allocation2 [shape = 'u8[512]{0}', space=vmem, size = 0x400, scoped, tag = 'input window, operand 5, single buffered']
    #allocation3 [shape = 's32[2]{0}', space=sflag, size = 0x8, scoped, tag = 'scoped memory for decoder_forward.2']
    #allocation4 [shape = 'u8[512]{0}', space=vmem, size = 0x400, scoped, tag = 'input window, operand 7, single buffered']
    #allocation5 [shape = 's32[1]{0}', space=sflag, size = 0x4, scoped, tag = 'scoped memory for decoder_forward.2']
    #allocation6 [shape = 'u8[512]{0}', space=vmem, size = 0x400, scoped, tag = 'input window, operand 8, single buffered']
    #allocation7 [shape = 'u8[512]{0}', space=vmem, size = 0x400, scoped, tag = 'input window, operand 9, single buffered']
    #allocation8 [shape = 's32[1]{0}', space=sflag, size = 0x4, scoped, tag = 'scoped memory for decoder_forward.2']
    #allocation9 [shape = 'u8[8192]{0}', space=vmem, size = 0x2000, scoped, tag = 'input window, operand 10, single buffered']
    #allocation10 [shape = 'u8[512]{0}', space=vmem, size = 0x400, scoped, tag = 'input window, operand 11, single buffered']
    #allocation11 [shape = 's32[1]{0}', space=sflag, size = 0x4, scoped, tag = 'scoped memory for decoder_forward.2']
    #allocation12 [shape = 'u8[8192]{0}', space=vmem, size = 0x2000, scoped, tag = 'input window, operand 12, single buffered']
    #allocation13 [shape = 'u8[512]{0}', space=vmem, size = 0x400, scoped, tag = 'input window, operand 13, single buffered']
    #allocation14 [shape = 's32[1]{0}', space=sflag, size = 0x4, scoped, tag = 'scoped memory for decoder_forward.2']
    #allocation15 [shape = 'u8[8192]{0}', space=vmem, size = 0x2000, scoped, tag = 'input window, operand 14, single buffered']
    #allocation16 [shape = 'u8[512]{0}', space=vmem, size = 0x400, scoped, tag = 'input window, operand 15, single buffered']
    #allocation17 [shape = 's32[1]{0}', space=sflag, size = 0x4, scoped, tag = 'scoped memory for decoder_forward.2']
    #allocation18 [shape = 'u8[512]{0}', space=vmem, size = 0x400, scoped, tag = 'input window, operand 16, single buffered']
    #allocation19 [shape = 'u8[512]{0}', space=vmem, size = 0x400, scoped, tag = 'input window, operand 17, single buffered']
    #allocation20 [shape = 's32[1]{0}', space=sflag, size = 0x4, scoped, tag = 'scoped memory for decoder_forward.2']
    #allocation21 [shape = 'u8[8192]{0}', space=vmem, size = 0x2000, scoped, tag = 'input window, operand 18, single buffered']
    #allocation22 [shape = 'u8[512]{0}', space=vmem, size = 0x400, scoped, tag = 'input window, operand 19, single buffered']
    #allocation23 [shape = 's32[1]{0}', space=sflag, size = 0x4, scoped, tag = 'scoped memory for decoder_forward.2']
    #allocation24 [shape = 'u8[512]{0}', space=vmem, size = 0x400, scoped, tag = 'input window, operand 21, single buffered']
    #allocation25 [shape = 'u8[512]{0}', space=vmem, size = 0x400, scoped, tag = 'input window, operand 22, single buffered']
    #allocation26 [shape = 's32[1]{0}', space=sflag, size = 0x4, scoped, tag = 'scoped memory for decoder_forward.2']
    #allocation27 [shape = 'u8[512]{0}', space=vmem, size = 0x400, scoped, tag = 'input window, operand 23, single buffered']
    %29 = vsyncpa [#allocation3], 0
    %30 = vsyncpa [#allocation5], 0
    %31 = vsyncpa [#allocation8], 0
    %32 = vsyncpa [#allocation11], 0
    %33 = vsyncpa [#allocation14], 0
    %34 = vsyncpa [#allocation17], 0
    %35 = vsyncpa [#allocation20], 0
    %36 = vsyncpa [#allocation23], 0
    %37 = vsyncpa [#allocation26], 0
    loop: start=0, step=1, limit=4
    $region2: #{decoder_forward.2} parent=1 // loop_pre_header
      _
    $region3: #{decoder_forward.2} parent=1 // loop_header
      %s39 = sphi 0, %s43
      %p40 = scmp.ge.s32.totalorder %s39, 4
      %s49 = sphi 0, %s51
      %s52 = sphi 0, %s49
      %s53 = sphi 0, %s52
      %s69 = sphi 0, %s53
      %s75 = sphi 0, %s77
      %s78 = sphi 0, %s75
      %s79 = sphi 0, %s78
      %s95 = sphi 0, %s79
      %s101 = sphi 0, %s103
      %s104 = sphi 0, %s101
      %s105 = sphi 0, %s104
      %s121 = sphi 0, %s105
      %s127 = sphi 0, %s129
      %s130 = sphi 0, %s127
      %s131 = sphi 0, %s130
      %s147 = sphi 0, %s131
      %s151 = sphi 0, %s151
      %s153 = sphi 0, %s151
      %s154 = sphi 0, %s153
      %s168 = sphi 0, %s154
      %s172 = sphi 0, %s172
      %s174 = sphi 0, %s172
      %s175 = sphi 0, %s174
      %s189 = sphi 0, %s175
      %s193 = sphi 0, %s193
      %s195 = sphi 0, %s193
      %s196 = sphi 0, %s195
      %s210 = sphi 0, %s196
      %s214 = sphi 0, %s214
      %s216 = sphi 0, %s214
      %s217 = sphi 0, %s216
      %s231 = sphi 0, %s217
      %s235 = sphi 0, %s235
      %s237 = sphi 0, %s235
      %s238 = sphi 0, %s237
      %s252 = sphi 0, %s238
      %s256 = sphi 0, %s256
      %s258 = sphi 0, %s256
      %s259 = sphi 0, %s258
      %s273 = sphi 0, %s259
      %s277 = sphi 0, %s277
      %s279 = sphi 0, %s277
      %s280 = sphi 0, %s279
      %s294 = sphi 0, %s280
      %s298 = sphi 0, %s298
      %s300 = sphi 0, %s298
      %s301 = sphi 0, %s300
      %s315 = sphi 0, %s301
      %s319 = sphi 0, %s319
      %s321 = sphi 0, %s319
      %s322 = sphi 0, %s321
      %s336 = sphi 0, %s322
      %s340 = sphi 0, %s340
      %s342 = sphi 0, %s340
      %s343 = sphi 0, %s342
      %s357 = sphi 0, %s343
      %s361 = sphi 0, %s361
      %s363 = sphi 0, %s361
      %s364 = sphi 0, %s363
      %s378 = sphi 0, %s364
      %s382 = sphi 0, %s382
      %s384 = sphi 0, %s382
      %s385 = sphi 0, %s384
      %s399 = sphi 0, %s385
      %s403 = sphi 0, %s403
      %s405 = sphi 0, %s403
      %s406 = sphi 0, %s405
      %s420 = sphi 0, %s406
      %s424 = sphi 0, %s424
      %s426 = sphi 0, %s424
      %s427 = sphi 0, %s426
      %s441 = sphi 0, %s427
      %s445 = sphi 0, %s445
      %s447 = sphi 0, %s445
      %s448 = sphi 0, %s447
      %s462 = sphi 0, %s448
      %s466 = sphi 0, %s466
      %s468 = sphi 0, %s466
      %s469 = sphi 0, %s468
      %s483 = sphi 0, %s469
      %s487 = sphi 0, %s487
      %s489 = sphi 0, %s487
      %s490 = sphi 0, %s489
      %s504 = sphi 0, %s490
      %s508 = sphi 0, %s508
      %s510 = sphi 0, %s508
      %s511 = sphi 0, %s510
      %s525 = sphi 0, %s511
      %s529 = sphi 0, %s529
      %s531 = sphi 0, %s529
      %s532 = sphi 0, %s531
      %s546 = sphi 0, %s532
      %s550 = sphi 0, %s550
      %s552 = sphi 0, %s550
      %s553 = sphi 0, %s552
      %s567 = sphi 0, %s553
      %s573 = sphi 0, %s575
      %s576 = sphi 0, %s573
      %s577 = sphi 0, %s576
      %s593 = sphi 0, %s577
    $region4: #{decoder_forward.2} parent=1 // loop_header_branch
      %42 = sbr.rel (%p40) target = $region8
    $region5: #{decoder_forward.2} parent=1 // loop_body
      %s44 = ssub.s32 %s39, 1
      %s45 = ssub.s32 %s39, 2
      %s46 = sadd.s32 %s39, 1
      %s47 = ssub.s32 %s39, %s46
      %p48 = scmp.eq.s32.totalorder %s47, 0
      %s50 = sadd.s32 %s49, 1
      %s51 = scalar_select %p48, %s49, %s50
      %p54 = pneg %p48
      %p55 = scmp.eq.s32.totalorder %s39, 1
      %p56 = por %p54, %p55
      %p57 = scmp.ne.s32.totalorder %s49, %s52
      %p58 = scmp.eq.s32.totalorder %s39, 0
      %p59 = por %p57, %p58
      %p60 = scmp.ne.s32.totalorder %s49, %s52
      %p61 = scmp.eq.s32.totalorder %s44, 1
      %p62 = por %p60, %p61
      %p63 = scmp.ne.s32.totalorder %s52, %s53
      %p64 = scmp.eq.s32.totalorder %s44, 0
      %p65 = por %p63, %p64
      %p66 = scmp.ne.s32.totalorder %s52, %s53
      %p67 = scmp.eq.s32.totalorder %s45, 1
      %p68 = por %p66, %p67
      %p70 = scmp.ne.s32.totalorder %s53, %s69
      %p71 = scmp.eq.s32.totalorder %s45, 0
      %p72 = por %p70, %p71
      %s73 = ssub.s32 %s39, %s46
      %p74 = scmp.eq.s32.totalorder %s73, 0
      %s76 = sadd.s32 %s75, 1
      %s77 = scalar_select %p74, %s75, %s76
      %p80 = pneg %p74
      %p81 = scmp.eq.s32.totalorder %s39, 1
      %p82 = por %p80, %p81
      %p83 = scmp.ne.s32.totalorder %s75, %s78
      %p84 = scmp.eq.s32.totalorder %s39, 0
      %p85 = por %p83, %p84
      %p86 = scmp.ne.s32.totalorder %s75, %s78
      %p87 = scmp.eq.s32.totalorder %s44, 1
      %p88 = por %p86, %p87
      %p89 = scmp.ne.s32.totalorder %s78, %s79
      %p90 = scmp.eq.s32.totalorder %s44, 0
      %p91 = por %p89, %p90
      %p92 = scmp.ne.s32.totalorder %s78, %s79
      %p93 = scmp.eq.s32.totalorder %s45, 1
      %p94 = por %p92, %p93
      %p96 = scmp.ne.s32.totalorder %s79, %s95
      %p97 = scmp.eq.s32.totalorder %s45, 0
      %p98 = por %p96, %p97
      %s99 = ssub.s32 %s39, %s46
      %p100 = scmp.eq.s32.totalorder %s99, 0
      %s102 = sadd.s32 %s101, 1
      %s103 = scalar_select %p100, %s101, %s102
      %p106 = pneg %p100
      %p107 = scmp.eq.s32.totalorder %s39, 1
      %p108 = por %p106, %p107
      %p109 = scmp.ne.s32.totalorder %s101, %s104
      %p110 = scmp.eq.s32.totalorder %s39, 0
      %p111 = por %p109, %p110
      %p112 = scmp.ne.s32.totalorder %s101, %s104
      %p113 = scmp.eq.s32.totalorder %s44, 1
      %p114 = por %p112, %p113
      %p115 = scmp.ne.s32.totalorder %s104, %s105
      %p116 = scmp.eq.s32.totalorder %s44, 0
      %p117 = por %p115, %p116
      %p118 = scmp.ne.s32.totalorder %s104, %s105
      %p119 = scmp.eq.s32.totalorder %s45, 1
      %p120 = por %p118, %p119
      %p122 = scmp.ne.s32.totalorder %s105, %s121
      %p123 = scmp.eq.s32.totalorder %s45, 0
      %p124 = por %p122, %p123
      %s125 = ssub.s32 %s39, %s46
      %p126 = scmp.eq.s32.totalorder %s125, 0
      %s128 = sadd.s32 %s127, 1
      %s129 = scalar_select %p126, %s127, %s128
      %p132 = pneg %p126
      %p133 = scmp.eq.s32.totalorder %s39, 1
      %p134 = por %p132, %p133
      %p135 = scmp.ne.s32.totalorder %s127, %s130
      %p136 = scmp.eq.s32.totalorder %s39, 0
      %p137 = por %p135, %p136
      %p138 = scmp.ne.s32.totalorder %s127, %s130
      %p139 = scmp.eq.s32.totalorder %s44, 1
      %p140 = por %p138, %p139
      %p141 = scmp.ne.s32.totalorder %s130, %s131
      %p142 = scmp.eq.s32.totalorder %s44, 0
      %p143 = por %p141, %p142
      %p144 = scmp.ne.s32.totalorder %s130, %s131
      %p145 = scmp.eq.s32.totalorder %s45, 1
      %p146 = por %p144, %p145
      %p148 = scmp.ne.s32.totalorder %s131, %s147
      %p149 = scmp.eq.s32.totalorder %s45, 0
      %p150 = por %p148, %p149
      %s152 = sadd.s32 %s151, 1
      %p155 = scmp.eq.s32.totalorder %s39, 1
      %p156 = scmp.ne.s32.totalorder %s151, %s153
      %p157 = scmp.eq.s32.totalorder %s39, 0
      %p158 = por %p156, %p157
      %p159 = scmp.ne.s32.totalorder %s151, %s153
      %p160 = scmp.eq.s32.totalorder %s44, 1
      %p161 = por %p159, %p160
      %p162 = scmp.ne.s32.totalorder %s153, %s154
      %p163 = scmp.eq.s32.totalorder %s44, 0
      %p164 = por %p162, %p163
      %p165 = scmp.ne.s32.totalorder %s153, %s154
      %p166 = scmp.eq.s32.totalorder %s45, 1
      %p167 = por %p165, %p166
      %p169 = scmp.ne.s32.totalorder %s154, %s168
      %p170 = scmp.eq.s32.totalorder %s45, 0
      %p171 = por %p169, %p170
      %s173 = sadd.s32 %s172, 1
      %p176 = scmp.eq.s32.totalorder %s39, 1
      %p177 = scmp.ne.s32.totalorder %s172, %s174
      %p178 = scmp.eq.s32.totalorder %s39, 0
      %p179 = por %p177, %p178
      %p180 = scmp.ne.s32.totalorder %s172, %s174
      %p181 = scmp.eq.s32.totalorder %s44, 1
      %p182 = por %p180, %p181
      %p183 = scmp.ne.s32.totalorder %s174, %s175
      %p184 = scmp.eq.s32.totalorder %s44, 0
      %p185 = por %p183, %p184
      %p186 = scmp.ne.s32.totalorder %s174, %s175
      %p187 = scmp.eq.s32.totalorder %s45, 1
      %p188 = por %p186, %p187
      %p190 = scmp.ne.s32.totalorder %s175, %s189
      %p191 = scmp.eq.s32.totalorder %s45, 0
      %p192 = por %p190, %p191
      %s194 = sadd.s32 %s193, 1
      %p197 = scmp.eq.s32.totalorder %s39, 1
      %p198 = scmp.ne.s32.totalorder %s193, %s195
      %p199 = scmp.eq.s32.totalorder %s39, 0
      %p200 = por %p198, %p199
      %p201 = scmp.ne.s32.totalorder %s193, %s195
      %p202 = scmp.eq.s32.totalorder %s44, 1
      %p203 = por %p201, %p202
      %p204 = scmp.ne.s32.totalorder %s195, %s196
      %p205 = scmp.eq.s32.totalorder %s44, 0
      %p206 = por %p204, %p205
      %p207 = scmp.ne.s32.totalorder %s195, %s196
      %p208 = scmp.eq.s32.totalorder %s45, 1
      %p209 = por %p207, %p208
      %p211 = scmp.ne.s32.totalorder %s196, %s210
      %p212 = scmp.eq.s32.totalorder %s45, 0
      %p213 = por %p211, %p212
      %s215 = sadd.s32 %s214, 1
      %p218 = scmp.eq.s32.totalorder %s39, 1
      %p219 = scmp.ne.s32.totalorder %s214, %s216
      %p220 = scmp.eq.s32.totalorder %s39, 0
      %p221 = por %p219, %p220
      %p222 = scmp.ne.s32.totalorder %s214, %s216
      %p223 = scmp.eq.s32.totalorder %s44, 1
      %p224 = por %p222, %p223
      %p225 = scmp.ne.s32.totalorder %s216, %s217
      %p226 = scmp.eq.s32.totalorder %s44, 0
      %p227 = por %p225, %p226
      %p228 = scmp.ne.s32.totalorder %s216, %s217
      %p229 = scmp.eq.s32.totalorder %s45, 1
      %p230 = por %p228, %p229
      %p232 = scmp.ne.s32.totalorder %s217, %s231
      %p233 = scmp.eq.s32.totalorder %s45, 0
      %p234 = por %p232, %p233
      %s236 = sadd.s32 %s235, 1
      %p239 = scmp.eq.s32.totalorder %s39, 1
      %p240 = scmp.ne.s32.totalorder %s235, %s237
      %p241 = scmp.eq.s32.totalorder %s39, 0
      %p242 = por %p240, %p241
      %p243 = scmp.ne.s32.totalorder %s235, %s237
      %p244 = scmp.eq.s32.totalorder %s44, 1
      %p245 = por %p243, %p244
      %p246 = scmp.ne.s32.totalorder %s237, %s238
      %p247 = scmp.eq.s32.totalorder %s44, 0
      %p248 = por %p246, %p247
      %p249 = scmp.ne.s32.totalorder %s237, %s238
      %p250 = scmp.eq.s32.totalorder %s45, 1
      %p251 = por %p249, %p250
      %p253 = scmp.ne.s32.totalorder %s238, %s252
      %p254 = scmp.eq.s32.totalorder %s45, 0
      %p255 = por %p253, %p254
      %s257 = sadd.s32 %s256, 1
      %p260 = scmp.eq.s32.totalorder %s39, 1
      %p261 = scmp.ne.s32.totalorder %s256, %s258
      %p262 = scmp.eq.s32.totalorder %s39, 0
      %p263 = por %p261, %p262
      %p264 = scmp.ne.s32.totalorder %s256, %s258
      %p265 = scmp.eq.s32.totalorder %s44, 1
      %p266 = por %p264, %p265
      %p267 = scmp.ne.s32.totalorder %s258, %s259
      %p268 = scmp.eq.s32.totalorder %s44, 0
      %p269 = por %p267, %p268
      %p270 = scmp.ne.s32.totalorder %s258, %s259
      %p271 = scmp.eq.s32.totalorder %s45, 1
      %p272 = por %p270, %p271
      %p274 = scmp.ne.s32.totalorder %s259, %s273
      %p275 = scmp.eq.s32.totalorder %s45, 0
      %p276 = por %p274, %p275
      %s278 = sadd.s32 %s277, 1
      %p281 = scmp.eq.s32.totalorder %s39, 1
      %p282 = scmp.ne.s32.totalorder %s277, %s279
      %p283 = scmp.eq.s32.totalorder %s39, 0
      %p284 = por %p282, %p283
      %p285 = scmp.ne.s32.totalorder %s277, %s279
      %p286 = scmp.eq.s32.totalorder %s44, 1
      %p287 = por %p285, %p286
      %p288 = scmp.ne.s32.totalorder %s279, %s280
      %p289 = scmp.eq.s32.totalorder %s44, 0
      %p290 = por %p288, %p289
      %p291 = scmp.ne.s32.totalorder %s279, %s280
      %p292 = scmp.eq.s32.totalorder %s45, 1
      %p293 = por %p291, %p292
      %p295 = scmp.ne.s32.totalorder %s280, %s294
      %p296 = scmp.eq.s32.totalorder %s45, 0
      %p297 = por %p295, %p296
      %s299 = sadd.s32 %s298, 1
      %p302 = scmp.eq.s32.totalorder %s39, 1
      %p303 = scmp.ne.s32.totalorder %s298, %s300
      %p304 = scmp.eq.s32.totalorder %s39, 0
      %p305 = por %p303, %p304
      %p306 = scmp.ne.s32.totalorder %s298, %s300
      %p307 = scmp.eq.s32.totalorder %s44, 1
      %p308 = por %p306, %p307
      %p309 = scmp.ne.s32.totalorder %s300, %s301
      %p310 = scmp.eq.s32.totalorder %s44, 0
      %p311 = por %p309, %p310
      %p312 = scmp.ne.s32.totalorder %s300, %s301
      %p313 = scmp.eq.s32.totalorder %s45, 1
      %p314 = por %p312, %p313
      %p316 = scmp.ne.s32.totalorder %s301, %s315
      %p317 = scmp.eq.s32.totalorder %s45, 0
      %p318 = por %p316, %p317
      %s320 = sadd.s32 %s319, 1
      %p323 = scmp.eq.s32.totalorder %s39, 1
      %p324 = scmp.ne.s32.totalorder %s319, %s321
      %p325 = scmp.eq.s32.totalorder %s39, 0
      %p326 = por %p324, %p325
      %p327 = scmp.ne.s32.totalorder %s319, %s321
      %p328 = scmp.eq.s32.totalorder %s44, 1
      %p329 = por %p327, %p328
      %p330 = scmp.ne.s32.totalorder %s321, %s322
      %p331 = scmp.eq.s32.totalorder %s44, 0
      %p332 = por %p330, %p331
      %p333 = scmp.ne.s32.totalorder %s321, %s322
      %p334 = scmp.eq.s32.totalorder %s45, 1
      %p335 = por %p333, %p334
      %p337 = scmp.ne.s32.totalorder %s322, %s336
      %p338 = scmp.eq.s32.totalorder %s45, 0
      %p339 = por %p337, %p338
      %s341 = sadd.s32 %s340, 1
      %p344 = scmp.eq.s32.totalorder %s39, 1
      %p345 = scmp.ne.s32.totalorder %s340, %s342
      %p346 = scmp.eq.s32.totalorder %s39, 0
      %p347 = por %p345, %p346
      %p348 = scmp.ne.s32.totalorder %s340, %s342
      %p349 = scmp.eq.s32.totalorder %s44, 1
      %p350 = por %p348, %p349
      %p351 = scmp.ne.s32.totalorder %s342, %s343
      %p352 = scmp.eq.s32.totalorder %s44, 0
      %p353 = por %p351, %p352
      %p354 = scmp.ne.s32.totalorder %s342, %s343
      %p355 = scmp.eq.s32.totalorder %s45, 1
      %p356 = por %p354, %p355
      %p358 = scmp.ne.s32.totalorder %s343, %s357
      %p359 = scmp.eq.s32.totalorder %s45, 0
      %p360 = por %p358, %p359
      %s362 = sadd.s32 %s361, 1
      %p365 = scmp.eq.s32.totalorder %s39, 1
      %p366 = scmp.ne.s32.totalorder %s361, %s363
      %p367 = scmp.eq.s32.totalorder %s39, 0
      %p368 = por %p366, %p367
      %p369 = scmp.ne.s32.totalorder %s361, %s363
      %p370 = scmp.eq.s32.totalorder %s44, 1
      %p371 = por %p369, %p370
      %p372 = scmp.ne.s32.totalorder %s363, %s364
      %p373 = scmp.eq.s32.totalorder %s44, 0
      %p374 = por %p372, %p373
      %p375 = scmp.ne.s32.totalorder %s363, %s364
      %p376 = scmp.eq.s32.totalorder %s45, 1
      %p377 = por %p375, %p376
      %p379 = scmp.ne.s32.totalorder %s364, %s378
      %p380 = scmp.eq.s32.totalorder %s45, 0
      %p381 = por %p379, %p380
      %s383 = sadd.s32 %s382, 1
      %p386 = scmp.eq.s32.totalorder %s39, 1
      %p387 = scmp.ne.s32.totalorder %s382, %s384
      %p388 = scmp.eq.s32.totalorder %s39, 0
      %p389 = por %p387, %p388
      %p390 = scmp.ne.s32.totalorder %s382, %s384
      %p391 = scmp.eq.s32.totalorder %s44, 1
      %p392 = por %p390, %p391
      %p393 = scmp.ne.s32.totalorder %s384, %s385
      %p394 = scmp.eq.s32.totalorder %s44, 0
      %p395 = por %p393, %p394
      %p396 = scmp.ne.s32.totalorder %s384, %s385
      %p397 = scmp.eq.s32.totalorder %s45, 1
      %p398 = por %p396, %p397
      %p400 = scmp.ne.s32.totalorder %s385, %s399
      %p401 = scmp.eq.s32.totalorder %s45, 0
      %p402 = por %p400, %p401
      %s404 = sadd.s32 %s403, 1
      %p407 = scmp.eq.s32.totalorder %s39, 1
      %p408 = scmp.ne.s32.totalorder %s403, %s405
      %p409 = scmp.eq.s32.totalorder %s39, 0
      %p410 = por %p408, %p409
      %p411 = scmp.ne.s32.totalorder %s403, %s405
      %p412 = scmp.eq.s32.totalorder %s44, 1
      %p413 = por %p411, %p412
      %p414 = scmp.ne.s32.totalorder %s405, %s406
      %p415 = scmp.eq.s32.totalorder %s44, 0
      %p416 = por %p414, %p415
      %p417 = scmp.ne.s32.totalorder %s405, %s406
      %p418 = scmp.eq.s32.totalorder %s45, 1
      %p419 = por %p417, %p418
      %p421 = scmp.ne.s32.totalorder %s406, %s420
      %p422 = scmp.eq.s32.totalorder %s45, 0
      %p423 = por %p421, %p422
      %s425 = sadd.s32 %s424, 1
      %p428 = scmp.eq.s32.totalorder %s39, 1
      %p429 = scmp.ne.s32.totalorder %s424, %s426
      %p430 = scmp.eq.s32.totalorder %s39, 0
      %p431 = por %p429, %p430
      %p432 = scmp.ne.s32.totalorder %s424, %s426
      %p433 = scmp.eq.s32.totalorder %s44, 1
      %p434 = por %p432, %p433
      %p435 = scmp.ne.s32.totalorder %s426, %s427
      %p436 = scmp.eq.s32.totalorder %s44, 0
      %p437 = por %p435, %p436
      %p438 = scmp.ne.s32.totalorder %s426, %s427
      %p439 = scmp.eq.s32.totalorder %s45, 1
      %p440 = por %p438, %p439
      %p442 = scmp.ne.s32.totalorder %s427, %s441
      %p443 = scmp.eq.s32.totalorder %s45, 0
      %p444 = por %p442, %p443
      %s446 = sadd.s32 %s445, 1
      %p449 = scmp.eq.s32.totalorder %s39, 1
      %p450 = scmp.ne.s32.totalorder %s445, %s447
      %p451 = scmp.eq.s32.totalorder %s39, 0
      %p452 = por %p450, %p451
      %p453 = scmp.ne.s32.totalorder %s445, %s447
      %p454 = scmp.eq.s32.totalorder %s44, 1
      %p455 = por %p453, %p454
      %p456 = scmp.ne.s32.totalorder %s447, %s448
      %p457 = scmp.eq.s32.totalorder %s44, 0
      %p458 = por %p456, %p457
      %p459 = scmp.ne.s32.totalorder %s447, %s448
      %p460 = scmp.eq.s32.totalorder %s45, 1
      %p461 = por %p459, %p460
      %p463 = scmp.ne.s32.totalorder %s448, %s462
      %p464 = scmp.eq.s32.totalorder %s45, 0
      %p465 = por %p463, %p464
      %s467 = sadd.s32 %s466, 1
      %p470 = scmp.eq.s32.totalorder %s39, 1
      %p471 = scmp.ne.s32.totalorder %s466, %s468
      %p472 = scmp.eq.s32.totalorder %s39, 0
      %p473 = por %p471, %p472
      %p474 = scmp.ne.s32.totalorder %s466, %s468
      %p475 = scmp.eq.s32.totalorder %s44, 1
      %p476 = por %p474, %p475
      %p477 = scmp.ne.s32.totalorder %s468, %s469
      %p478 = scmp.eq.s32.totalorder %s44, 0
      %p479 = por %p477, %p478
      %p480 = scmp.ne.s32.totalorder %s468, %s469
      %p481 = scmp.eq.s32.totalorder %s45, 1
      %p482 = por %p480, %p481
      %p484 = scmp.ne.s32.totalorder %s469, %s483
      %p485 = scmp.eq.s32.totalorder %s45, 0
      %p486 = por %p484, %p485
      %s488 = sadd.s32 %s487, 1
      %p491 = scmp.eq.s32.totalorder %s39, 1
      %p492 = scmp.ne.s32.totalorder %s487, %s489
      %p493 = scmp.eq.s32.totalorder %s39, 0
      %p494 = por %p492, %p493
      %p495 = scmp.ne.s32.totalorder %s487, %s489
      %p496 = scmp.eq.s32.totalorder %s44, 1
      %p497 = por %p495, %p496
      %p498 = scmp.ne.s32.totalorder %s489, %s490
      %p499 = scmp.eq.s32.totalorder %s44, 0
      %p500 = por %p498, %p499
      %p501 = scmp.ne.s32.totalorder %s489, %s490
      %p502 = scmp.eq.s32.totalorder %s45, 1
      %p503 = por %p501, %p502
      %p505 = scmp.ne.s32.totalorder %s490, %s504
      %p506 = scmp.eq.s32.totalorder %s45, 0
      %p507 = por %p505, %p506
      %s509 = sadd.s32 %s508, 1
      %p512 = scmp.eq.s32.totalorder %s39, 1
      %p513 = scmp.ne.s32.totalorder %s508, %s510
      %p514 = scmp.eq.s32.totalorder %s39, 0
      %p515 = por %p513, %p514
      %p516 = scmp.ne.s32.totalorder %s508, %s510
      %p517 = scmp.eq.s32.totalorder %s44, 1
      %p518 = por %p516, %p517
      %p519 = scmp.ne.s32.totalorder %s510, %s511
      %p520 = scmp.eq.s32.totalorder %s44, 0
      %p521 = por %p519, %p520
      %p522 = scmp.ne.s32.totalorder %s510, %s511
      %p523 = scmp.eq.s32.totalorder %s45, 1
      %p524 = por %p522, %p523
      %p526 = scmp.ne.s32.totalorder %s511, %s525
      %p527 = scmp.eq.s32.totalorder %s45, 0
      %p528 = por %p526, %p527
      %s530 = sadd.s32 %s529, 1
      %p533 = scmp.eq.s32.totalorder %s39, 1
      %p534 = scmp.ne.s32.totalorder %s529, %s531
      %p535 = scmp.eq.s32.totalorder %s39, 0
      %p536 = por %p534, %p535
      %p537 = scmp.ne.s32.totalorder %s529, %s531
      %p538 = scmp.eq.s32.totalorder %s44, 1
      %p539 = por %p537, %p538
      %p540 = scmp.ne.s32.totalorder %s531, %s532
      %p541 = scmp.eq.s32.totalorder %s44, 0
      %p542 = por %p540, %p541
      %p543 = scmp.ne.s32.totalorder %s531, %s532
      %p544 = scmp.eq.s32.totalorder %s45, 1
      %p545 = por %p543, %p544
      %p547 = scmp.ne.s32.totalorder %s532, %s546
      %p548 = scmp.eq.s32.totalorder %s45, 0
      %p549 = por %p547, %p548
      %s551 = sadd.s32 %s550, 1
      %p554 = scmp.eq.s32.totalorder %s39, 1
      %p555 = scmp.ne.s32.totalorder %s550, %s552
      %p556 = scmp.eq.s32.totalorder %s39, 0
      %p557 = por %p555, %p556
      %p558 = scmp.ne.s32.totalorder %s550, %s552
      %p559 = scmp.eq.s32.totalorder %s44, 1
      %p560 = por %p558, %p559
      %p561 = scmp.ne.s32.totalorder %s552, %s553
      %p562 = scmp.eq.s32.totalorder %s44, 0
      %p563 = por %p561, %p562
      %p564 = scmp.ne.s32.totalorder %s552, %s553
      %p565 = scmp.eq.s32.totalorder %s45, 1
      %p566 = por %p564, %p565
      %p568 = scmp.ne.s32.totalorder %s553, %s567
      %p569 = scmp.eq.s32.totalorder %s45, 0
      %p570 = por %p568, %p569
      %s571 = ssub.s32 %s39, %s46
      %p572 = scmp.eq.s32.totalorder %s571, 0
      %s574 = sadd.s32 %s573, 1
      %s575 = scalar_select %p572, %s573, %s574
      %p578 = pneg %p572
      %p579 = scmp.eq.s32.totalorder %s39, 1
      %p580 = por %p578, %p579
      %p581 = scmp.ne.s32.totalorder %s573, %s576
      %p582 = scmp.eq.s32.totalorder %s39, 0
      %p583 = por %p581, %p582
      %p584 = scmp.ne.s32.totalorder %s573, %s576
      %p585 = scmp.eq.s32.totalorder %s44, 1
      %p586 = por %p584, %p585
      %p587 = scmp.ne.s32.totalorder %s576, %s577
      %p588 = scmp.eq.s32.totalorder %s44, 0
      %p589 = por %p587, %p588
      %p590 = scmp.ne.s32.totalorder %s576, %s577
      %p591 = scmp.eq.s32.totalorder %s45, 1
      %p592 = por %p590, %p591
      %p594 = scmp.ne.s32.totalorder %s577, %s593
      %p595 = scmp.eq.s32.totalorder %s45, 0
      %p596 = por %p594, %p595
      %p597 = scmp.le.s32.totalorder 1, %s39
      %p598 = scmp.lt.s32.totalorder %s39, 3
      %p599 = pnand %p597, %p598
      %p600 = pneg %p599
      // Predicated region
      $region9: #{decoder_forward.2} parent=5 // pred_check
        _
      $region10: #{decoder_forward.2} parent=5 // pred_check_branch
        %602 = sbr.rel (%p599) target = $region12
      $region11: #{decoder_forward.2} parent=5 // pred_region
        %s603 = ssub.s32 %s39, 1
        // Predicated region
        $region13: #{decoder_forward.2} parent=11 // pred_check
          %p604 = pneg %p164
        $region14: #{decoder_forward.2} parent=11 // pred_check_branch
          %606 = sbr.rel (%p604) target = $region16
        $region15: #{decoder_forward.2} parent=11 // pred_region
          _
        $region16: #{decoder_forward.2} parent=11 // pred_fallthru
          _
        // Predicated region
        $region17: #{decoder_forward.2} parent=11 // pred_check
          %p607 = pneg %p185
        $region18: #{decoder_forward.2} parent=11 // pred_check_branch
          %609 = sbr.rel (%p607) target = $region20
        $region19: #{decoder_forward.2} parent=11 // pred_region
          %s611 = ssub.s32 16, 16
          %612 = vsyncadd [#allocation3], %s611
          %s614 = sshll.u32 [#allocation2], 4
          %s615 = int_to_ptr.vmem [resolvable:$true] %s614
          %617 = dma.hbm_to_vmem [thread:$0]  %s5, 16, %s615, [#allocation3]
        $region20: #{decoder_forward.2} parent=11 // pred_fallthru
          _
        // Predicated region
        $region21: #{decoder_forward.2} parent=11 // pred_check
          %p618 = pneg %p206
        $region22: #{decoder_forward.2} parent=11 // pred_check_branch
          %620 = sbr.rel (%p618) target = $region24
        $region23: #{decoder_forward.2} parent=11 // pred_region
          _
        $region24: #{decoder_forward.2} parent=11 // pred_fallthru
          _
        // Predicated region
        $region25: #{decoder_forward.2} parent=11 // pred_check
          %p621 = pneg %p227
        $region26: #{decoder_forward.2} parent=11 // pred_check_branch
          %623 = sbr.rel (%p621) target = $region28
        $region27: #{decoder_forward.2} parent=11 // pred_region
          %s625 = ssub.s32 16, 16
          %626 = vsyncadd [#allocation5], %s625
          %s628 = sshll.u32 [#allocation4], 4
          %s629 = int_to_ptr.vmem [resolvable:$true] %s628
          %631 = dma.hbm_to_vmem [thread:$0]  %s7, 16, %s629, [#allocation5]
        $region28: #{decoder_forward.2} parent=11 // pred_fallthru
          _
        // Predicated region
        $region29: #{decoder_forward.2} parent=11 // pred_check
          %p632 = pneg %p248
        $region30: #{decoder_forward.2} parent=11 // pred_check_branch
          %634 = sbr.rel (%p632) target = $region32
        $region31: #{decoder_forward.2} parent=11 // pred_region
          %s636 = ssub.s32 16, 16
          %637 = vsyncadd [#allocation5], %s636
          %s639 = sshll.u32 [#allocation6], 4
          %s640 = int_to_ptr.vmem [resolvable:$true] %s639
          %642 = dma.hbm_to_vmem [thread:$0]  %s8, 16, %s640, [#allocation5]
        $region32: #{decoder_forward.2} parent=11 // pred_fallthru
          _
        // Predicated region
        $region33: #{decoder_forward.2} parent=11 // pred_check
          %p643 = pneg %p269
        $region34: #{decoder_forward.2} parent=11 // pred_check_branch
          %645 = sbr.rel (%p643) target = $region36
        $region35: #{decoder_forward.2} parent=11 // pred_region
          %s647 = ssub.s32 16, 16
          %648 = vsyncadd [#allocation8], %s647
          %s650 = sshll.u32 [#allocation7], 4
          %s651 = int_to_ptr.vmem [resolvable:$true] %s650
          %653 = dma.hbm_to_vmem [thread:$0]  %s9, 16, %s651, [#allocation8]
        $region36: #{decoder_forward.2} parent=11 // pred_fallthru
          _
        // Predicated region
        $region37: #{decoder_forward.2} parent=11 // pred_check
          %p654 = pneg %p290
        $region38: #{decoder_forward.2} parent=11 // pred_check_branch
          %656 = sbr.rel (%p654) target = $region40
        $region39: #{decoder_forward.2} parent=11 // pred_region
          %s658 = ssub.s32 256, 256
          %659 = vsyncadd [#allocation8], %s658
          %s660 = sshll.u32 [#allocation9], 4
          %s661 = int_to_ptr.vmem [resolvable:$true] %s660
          %666 = dma.hbm_to_vmem [thread:$0]  %s10, 256, %s661, [#allocation8], 64, 64, 4
        $region40: #{decoder_forward.2} parent=11 // pred_fallthru
          _
        // Predicated region
        $region41: #{decoder_forward.2} parent=11 // pred_check
          %p667 = pneg %p311
        $region42: #{decoder_forward.2} parent=11 // pred_check_branch
          %669 = sbr.rel (%p667) target = $region44
        $region43: #{decoder_forward.2} parent=11 // pred_region
          %s671 = ssub.s32 16, 16
          %672 = vsyncadd [#allocation11], %s671
          %s674 = sshll.u32 [#allocation10], 4
          %s675 = int_to_ptr.vmem [resolvable:$true] %s674
          %677 = dma.hbm_to_vmem [thread:$0]  %s11, 16, %s675, [#allocation11]
        $region44: #{decoder_forward.2} parent=11 // pred_fallthru
          _
        // Predicated region
        $region45: #{decoder_forward.2} parent=11 // pred_check
          %p678 = pneg %p332
        $region46: #{decoder_forward.2} parent=11 // pred_check_branch
          %680 = sbr.rel (%p678) target = $region48
        $region47: #{decoder_forward.2} parent=11 // pred_region
          %s682 = ssub.s32 256, 256
          %683 = vsyncadd [#allocation11], %s682
          %s684 = sshll.u32 [#allocation12], 4
          %s685 = int_to_ptr.vmem [resolvable:$true] %s684
          %690 = dma.hbm_to_vmem [thread:$0]  %s12, 256, %s685, [#allocation11], 64, 64, 4
        $region48: #{decoder_forward.2} parent=11 // pred_fallthru
          _
        // Predicated region
        $region49: #{decoder_forward.2} parent=11 // pred_check
          %p691 = pneg %p353
        $region50: #{decoder_forward.2} parent=11 // pred_check_branch
          %693 = sbr.rel (%p691) target = $region52
        $region51: #{decoder_forward.2} parent=11 // pred_region
          %s695 = ssub.s32 16, 16
          %696 = vsyncadd [#allocation14], %s695
          %s698 = sshll.u32 [#allocation13], 4
          %s699 = int_to_ptr.vmem [resolvable:$true] %s698
          %701 = dma.hbm_to_vmem [thread:$0]  %s13, 16, %s699, [#allocation14]
        $region52: #{decoder_forward.2} parent=11 // pred_fallthru
          _
        // Predicated region
        $region53: #{decoder_forward.2} parent=11 // pred_check
          %p702 = pneg %p374
        $region54: #{decoder_forward.2} parent=11 // pred_check_branch
          %704 = sbr.rel (%p702) target = $region56
        $region55: #{decoder_forward.2} parent=11 // pred_region
          %s706 = ssub.s32 256, 256
          %707 = vsyncadd [#allocation14], %s706
          %s708 = sshll.u32 [#allocation15], 4
          %s709 = int_to_ptr.vmem [resolvable:$true] %s708
          %714 = dma.hbm_to_vmem [thread:$0]  %s14, 256, %s709, [#allocation14], 64, 64, 4
        $region56: #{decoder_forward.2} parent=11 // pred_fallthru
          _
        // Predicated region
        $region57: #{decoder_forward.2} parent=11 // pred_check
          %p715 = pneg %p395
        $region58: #{decoder_forward.2} parent=11 // pred_check_branch
          %717 = sbr.rel (%p715) target = $region60
        $region59: #{decoder_forward.2} parent=11 // pred_region
          %s719 = ssub.s32 16, 16
          %720 = vsyncadd [#allocation17], %s719
          %s722 = sshll.u32 [#allocation16], 4
          %s723 = int_to_ptr.vmem [resolvable:$true] %s722
          %725 = dma.hbm_to_vmem [thread:$0]  %s15, 16, %s723, [#allocation17]
        $region60: #{decoder_forward.2} parent=11 // pred_fallthru
          _
        // Predicated region
        $region61: #{decoder_forward.2} parent=11 // pred_check
          %p726 = pneg %p416
        $region62: #{decoder_forward.2} parent=11 // pred_check_branch
          %728 = sbr.rel (%p726) target = $region64
        $region63: #{decoder_forward.2} parent=11 // pred_region
          %s730 = ssub.s32 16, 16
          %731 = vsyncadd [#allocation17], %s730
          %s733 = sshll.u32 [#allocation18], 4
          %s734 = int_to_ptr.vmem [resolvable:$true] %s733
          %736 = dma.hbm_to_vmem [thread:$0]  %s16, 16, %s734, [#allocation17]
        $region64: #{decoder_forward.2} parent=11 // pred_fallthru
          _
        // Predicated region
        $region65: #{decoder_forward.2} parent=11 // pred_check
          %p737 = pneg %p437
        $region66: #{decoder_forward.2} parent=11 // pred_check_branch
          %739 = sbr.rel (%p737) target = $region68
        $region67: #{decoder_forward.2} parent=11 // pred_region
          %s741 = ssub.s32 16, 16
          %742 = vsyncadd [#allocation20], %s741
          %s744 = sshll.u32 [#allocation19], 4
          %s745 = int_to_ptr.vmem [resolvable:$true] %s744
          %747 = dma.hbm_to_vmem [thread:$0]  %s17, 16, %s745, [#allocation20]
        $region68: #{decoder_forward.2} parent=11 // pred_fallthru
          _
        // Predicated region
        $region69: #{decoder_forward.2} parent=11 // pred_check
          %p748 = pneg %p458
        $region70: #{decoder_forward.2} parent=11 // pred_check_branch
          %750 = sbr.rel (%p748) target = $region72
        $region71: #{decoder_forward.2} parent=11 // pred_region
          %s752 = ssub.s32 256, 256
          %753 = vsyncadd [#allocation20], %s752
          %s754 = sshll.u32 [#allocation21], 4
          %s755 = int_to_ptr.vmem [resolvable:$true] %s754
          %760 = dma.hbm_to_vmem [thread:$0]  %s18, 256, %s755, [#allocation20], 64, 64, 4
        $region72: #{decoder_forward.2} parent=11 // pred_fallthru
          _
        // Predicated region
        $region73: #{decoder_forward.2} parent=11 // pred_check
          %p761 = pneg %p479
        $region74: #{decoder_forward.2} parent=11 // pred_check_branch
          %763 = sbr.rel (%p761) target = $region76
        $region75: #{decoder_forward.2} parent=11 // pred_region
          %s765 = ssub.s32 16, 16
          %766 = vsyncadd [#allocation23], %s765
          %s768 = sshll.u32 [#allocation22], 4
          %s769 = int_to_ptr.vmem [resolvable:$true] %s768
          %771 = dma.hbm_to_vmem [thread:$0]  %s19, 16, %s769, [#allocation23]
        $region76: #{decoder_forward.2} parent=11 // pred_fallthru
          _
        // Predicated region
        $region77: #{decoder_forward.2} parent=11 // pred_check
          %p772 = pneg %p500
        $region78: #{decoder_forward.2} parent=11 // pred_check_branch
          %774 = sbr.rel (%p772) target = $region80
        $region79: #{decoder_forward.2} parent=11 // pred_region
          _
        $region80: #{decoder_forward.2} parent=11 // pred_fallthru
          _
        // Predicated region
        $region81: #{decoder_forward.2} parent=11 // pred_check
          %p775 = pneg %p521
        $region82: #{decoder_forward.2} parent=11 // pred_check_branch
          %777 = sbr.rel (%p775) target = $region84
        $region83: #{decoder_forward.2} parent=11 // pred_region
          %s779 = ssub.s32 16, 16
          %780 = vsyncadd [#allocation23], %s779
          %s782 = sshll.u32 [#allocation24], 4
          %s783 = int_to_ptr.vmem [resolvable:$true] %s782
          %785 = dma.hbm_to_vmem [thread:$0]  %s21, 16, %s783, [#allocation23]
        $region84: #{decoder_forward.2} parent=11 // pred_fallthru
          _
        // Predicated region
        $region85: #{decoder_forward.2} parent=11 // pred_check
          %p786 = pneg %p542
        $region86: #{decoder_forward.2} parent=11 // pred_check_branch
          %788 = sbr.rel (%p786) target = $region88
        $region87: #{decoder_forward.2} parent=11 // pred_region
          %s790 = ssub.s32 16, 16
          %791 = vsyncadd [#allocation26], %s790
          %s793 = sshll.u32 [#allocation25], 4
          %s794 = int_to_ptr.vmem [resolvable:$true] %s793
          %796 = dma.hbm_to_vmem [thread:$0]  %s22, 16, %s794, [#allocation26]
        $region88: #{decoder_forward.2} parent=11 // pred_fallthru
          _
        // Predicated region
        $region89: #{decoder_forward.2} parent=11 // pred_check
          %p797 = pneg %p563
        $region90: #{decoder_forward.2} parent=11 // pred_check_branch
          %799 = sbr.rel (%p797) target = $region92
        $region91: #{decoder_forward.2} parent=11 // pred_region
          %s801 = ssub.s32 16, 16
          %802 = vsyncadd [#allocation26], %s801
          %s804 = sshll.u32 [#allocation27], 4
          %s805 = int_to_ptr.vmem [resolvable:$true] %s804
          %807 = dma.hbm_to_vmem [thread:$0]  %s23, 16, %s805, [#allocation26]
        $region92: #{decoder_forward.2} parent=11 // pred_fallthru
          _
      $region12: #{decoder_forward.2} parent=5 // pred_fallthru
        _
      %p808 = scmp.lt.s32.totalorder %s39, 2
      // Predicated region
      $region93: #{decoder_forward.2} parent=5 // pred_check
        %p809 = pneg %p808
      $region94: #{decoder_forward.2} parent=5 // pred_check_branch
        %811 = sbr.rel (%p809) target = $region96
      $region95: #{decoder_forward.2} parent=5 // pred_region
        // Predicated region
        $region97: #{decoder_forward.2} parent=95 // pred_check
          %p812 = pneg %p59
        $region98: #{decoder_forward.2} parent=95 // pred_check_branch
          %814 = sbr.rel (%p812) target = $region100
        $region99: #{decoder_forward.2} parent=95 // pred_region
          %p815 = scmp.lt.s32.totalorder %s39, 1
          %s816 = scalar_select %p815, %s39, 1
          %s817 = smul.addr %s816, 8
          %s818 = scalar_lea.vmem %s0, %s817
        $region100: #{decoder_forward.2} parent=95 // pred_fallthru
          _
        // Predicated region
        $region101: #{decoder_forward.2} parent=95 // pred_check
          %p819 = pneg %p85
        $region102: #{decoder_forward.2} parent=95 // pred_check_branch
          %821 = sbr.rel (%p819) target = $region104
        $region103: #{decoder_forward.2} parent=95 // pred_region
          %p822 = scmp.lt.s32.totalorder %s39, 1
          %s823 = scalar_select %p822, %s39, 1
          %s824 = smul.addr %s823, 8
          %s825 = scalar_lea.vmem %s1, %s824
        $region104: #{decoder_forward.2} parent=95 // pred_fallthru
          _
        // Predicated region
        $region105: #{decoder_forward.2} parent=95 // pred_check
          %p826 = pneg %p111
        $region106: #{decoder_forward.2} parent=95 // pred_check_branch
          %828 = sbr.rel (%p826) target = $region108
        $region107: #{decoder_forward.2} parent=95 // pred_region
          %p829 = scmp.lt.s32.totalorder %s39, 1
          %s830 = scalar_select %p829, %s39, 1
          %s831 = smul.addr %s830, 8
          %s832 = scalar_lea.vmem %s2, %s831
        $region108: #{decoder_forward.2} parent=95 // pred_fallthru
          _
        // Predicated region
        $region109: #{decoder_forward.2} parent=95 // pred_check
          %p833 = pneg %p137
        $region110: #{decoder_forward.2} parent=95 // pred_check_branch
          %835 = sbr.rel (%p833) target = $region112
        $region111: #{decoder_forward.2} parent=95 // pred_region
          %p836 = scmp.lt.s32.totalorder %s39, 1
          %s837 = scalar_select %p836, %s39, 1
          %s838 = smul.addr %s837, 8
          %s839 = scalar_lea.vmem %s3, %s838
        $region112: #{decoder_forward.2} parent=95 // pred_fallthru
          _
      $region96: #{decoder_forward.2} parent=5 // pred_fallthru
        _
      %p840 = scmp.le.s32.totalorder 1, %s39
      %p841 = scmp.lt.s32.totalorder %s39, 3
      %p842 = pnand %p840, %p841
      %p843 = pneg %p842
      // Predicated region
      $region113: #{decoder_forward.2} parent=5 // pred_check
        _
      $region114: #{decoder_forward.2} parent=5 // pred_check_branch
        %845 = sbr.rel (%p842) target = $region116
      $region115: #{decoder_forward.2} parent=5 // pred_region
        %s846 = ssub.s32 %s39, 1
        // Predicated region
        $region117: #{decoder_forward.2} parent=115 // pred_check
          %p847 = pneg %p185
        $region118: #{decoder_forward.2} parent=115 // pred_check_branch
          %849 = sbr.rel (%p847) target = $region120
        $region119: #{decoder_forward.2} parent=115 // pred_region
          %850 = dma.done [#allocation3], 16
        $region120: #{decoder_forward.2} parent=115 // pred_fallthru
          _
        // Predicated region
        $region121: #{decoder_forward.2} parent=115 // pred_check
          %p851 = pneg %p227
        $region122: #{decoder_forward.2} parent=115 // pred_check_branch
          %853 = sbr.rel (%p851) target = $region124
        $region123: #{decoder_forward.2} parent=115 // pred_region
          %854 = dma.done [#allocation5], 16
        $region124: #{decoder_forward.2} parent=115 // pred_fallthru
          _
        // Predicated region
        $region125: #{decoder_forward.2} parent=115 // pred_check
          %p855 = pneg %p248
        $region126: #{decoder_forward.2} parent=115 // pred_check_branch
          %857 = sbr.rel (%p855) target = $region128
        $region127: #{decoder_forward.2} parent=115 // pred_region
          %858 = dma.done [#allocation5], 16
        $region128: #{decoder_forward.2} parent=115 // pred_fallthru
          _
        // Predicated region
        $region129: #{decoder_forward.2} parent=115 // pred_check
          %p859 = pneg %p269
        $region130: #{decoder_forward.2} parent=115 // pred_check_branch
          %861 = sbr.rel (%p859) target = $region132
        $region131: #{decoder_forward.2} parent=115 // pred_region
          %862 = dma.done [#allocation8], 16
        $region132: #{decoder_forward.2} parent=115 // pred_fallthru
          _
        // Predicated region
        $region133: #{decoder_forward.2} parent=115 // pred_check
          %p863 = pneg %p290
        $region134: #{decoder_forward.2} parent=115 // pred_check_branch
          %865 = sbr.rel (%p863) target = $region136
        $region135: #{decoder_forward.2} parent=115 // pred_region
          %866 = dma.done [#allocation8], 256
        $region136: #{decoder_forward.2} parent=115 // pred_fallthru
          _
        // Predicated region
        $region137: #{decoder_forward.2} parent=115 // pred_check
          %p867 = pneg %p311
        $region138: #{decoder_forward.2} parent=115 // pred_check_branch
          %869 = sbr.rel (%p867) target = $region140
        $region139: #{decoder_forward.2} parent=115 // pred_region
          %870 = dma.done [#allocation11], 16
        $region140: #{decoder_forward.2} parent=115 // pred_fallthru
          _
        // Predicated region
        $region141: #{decoder_forward.2} parent=115 // pred_check
          %p871 = pneg %p332
        $region142: #{decoder_forward.2} parent=115 // pred_check_branch
          %873 = sbr.rel (%p871) target = $region144
        $region143: #{decoder_forward.2} parent=115 // pred_region
          %874 = dma.done [#allocation11], 256
        $region144: #{decoder_forward.2} parent=115 // pred_fallthru
          _
        // Predicated region
        $region145: #{decoder_forward.2} parent=115 // pred_check
          %p875 = pneg %p353
        $region146: #{decoder_forward.2} parent=115 // pred_check_branch
          %877 = sbr.rel (%p875) target = $region148
        $region147: #{decoder_forward.2} parent=115 // pred_region
          %878 = dma.done [#allocation14], 16
        $region148: #{decoder_forward.2} parent=115 // pred_fallthru
          _
        // Predicated region
        $region149: #{decoder_forward.2} parent=115 // pred_check
          %p879 = pneg %p374
        $region150: #{decoder_forward.2} parent=115 // pred_check_branch
          %881 = sbr.rel (%p879) target = $region152
        $region151: #{decoder_forward.2} parent=115 // pred_region
          %882 = dma.done [#allocation14], 256
        $region152: #{decoder_forward.2} parent=115 // pred_fallthru
          _
        // Predicated region
        $region153: #{decoder_forward.2} parent=115 // pred_check
          %p883 = pneg %p395
        $region154: #{decoder_forward.2} parent=115 // pred_check_branch
          %885 = sbr.rel (%p883) target = $region156
        $region155: #{decoder_forward.2} parent=115 // pred_region
          %886 = dma.done [#allocation17], 16
        $region156: #{decoder_forward.2} parent=115 // pred_fallthru
          _
        // Predicated region
        $region157: #{decoder_forward.2} parent=115 // pred_check
          %p887 = pneg %p416
        $region158: #{decoder_forward.2} parent=115 // pred_check_branch
          %889 = sbr.rel (%p887) target = $region160
        $region159: #{decoder_forward.2} parent=115 // pred_region
          %890 = dma.done [#allocation17], 16
        $region160: #{decoder_forward.2} parent=115 // pred_fallthru
          _
        // Predicated region
        $region161: #{decoder_forward.2} parent=115 // pred_check
          %p891 = pneg %p437
        $region162: #{decoder_forward.2} parent=115 // pred_check_branch
          %893 = sbr.rel (%p891) target = $region164
        $region163: #{decoder_forward.2} parent=115 // pred_region
          %894 = dma.done [#allocation20], 16
        $region164: #{decoder_forward.2} parent=115 // pred_fallthru
          _
        // Predicated region
        $region165: #{decoder_forward.2} parent=115 // pred_check
          %p895 = pneg %p458
        $region166: #{decoder_forward.2} parent=115 // pred_check_branch
          %897 = sbr.rel (%p895) target = $region168
        $region167: #{decoder_forward.2} parent=115 // pred_region
          %898 = dma.done [#allocation20], 256
        $region168: #{decoder_forward.2} parent=115 // pred_fallthru
          _
        // Predicated region
        $region169: #{decoder_forward.2} parent=115 // pred_check
          %p899 = pneg %p479
        $region170: #{decoder_forward.2} parent=115 // pred_check_branch
          %901 = sbr.rel (%p899) target = $region172
        $region171: #{decoder_forward.2} parent=115 // pred_region
          %902 = dma.done [#allocation23], 16
        $region172: #{decoder_forward.2} parent=115 // pred_fallthru
          _
        // Predicated region
        $region173: #{decoder_forward.2} parent=115 // pred_check
          %p903 = pneg %p521
        $region174: #{decoder_forward.2} parent=115 // pred_check_branch
          %905 = sbr.rel (%p903) target = $region176
        $region175: #{decoder_forward.2} parent=115 // pred_region
          %906 = dma.done [#allocation23], 16
        $region176: #{decoder_forward.2} parent=115 // pred_fallthru
          _
        // Predicated region
        $region177: #{decoder_forward.2} parent=115 // pred_check
          %p907 = pneg %p542
        $region178: #{decoder_forward.2} parent=115 // pred_check_branch
          %909 = sbr.rel (%p907) target = $region180
        $region179: #{decoder_forward.2} parent=115 // pred_region
          %910 = dma.done [#allocation26], 16
        $region180: #{decoder_forward.2} parent=115 // pred_fallthru
          _
        // Predicated region
        $region181: #{decoder_forward.2} parent=115 // pred_check
          %p911 = pneg %p563
        $region182: #{decoder_forward.2} parent=115 // pred_check_branch
          %913 = sbr.rel (%p911) target = $region184
        $region183: #{decoder_forward.2} parent=115 // pred_region
          %914 = dma.done [#allocation26], 16
        $region184: #{decoder_forward.2} parent=115 // pred_fallthru
          _
        %p915 = scmp.lt.s32.totalorder %s44, 1
        %s916 = scalar_select %p915, %s44, 1
        %s917 = smul.addr %s916, 8
        %s918 = scalar_lea.vmem %s0, %s917
        %p919 = pneg %p65
        %p920 = pneg %p62
        %p921 = scmp.lt.s32.totalorder %s44, 1
        %s922 = scalar_select %p921, %s44, 1
        %s923 = smul.addr %s922, 8
        %s924 = scalar_lea.vmem %s1, %s923
        %p925 = pneg %p91
        %p926 = pneg %p88
        %p927 = scmp.lt.s32.totalorder %s44, 1
        %s928 = scalar_select %p927, %s44, 1
        %s929 = smul.addr %s928, 8
        %s930 = scalar_lea.vmem %s2, %s929
        %p931 = pneg %p117
        %p932 = pneg %p114
        %p933 = scmp.lt.s32.totalorder %s44, 1
        %s934 = scalar_select %p933, %s44, 1
        %s935 = smul.addr %s934, 8
        %s936 = scalar_lea.vmem %s3, %s935
        %p937 = pneg %p143
        %p938 = pneg %p140
        %p939 = pneg %p164
        %p940 = pneg %p161
        %p941 = pneg %p185
        %p942 = pneg %p182
        %p943 = pneg %p206
        %p944 = pneg %p203
        %p945 = pneg %p227
        %p946 = pneg %p224
        %p947 = pneg %p248
        %p948 = pneg %p245
        %p949 = pneg %p269
        %p950 = pneg %p266
        %p951 = pneg %p290
        %p952 = pneg %p287
        %p953 = pneg %p311
        %p954 = pneg %p308
        %p955 = pneg %p332
        %p956 = pneg %p329
        %p957 = pneg %p353
        %p958 = pneg %p350
        %p959 = pneg %p374
        %p960 = pneg %p371
        %p961 = pneg %p395
        %p962 = pneg %p392
        %p963 = pneg %p416
        %p964 = pneg %p413
        %p965 = pneg %p437
        %p966 = pneg %p434
        %p967 = pneg %p458
        %p968 = pneg %p455
        %p969 = pneg %p479
        %p970 = pneg %p476
        %p971 = pneg %p500
        %p972 = pneg %p497
        %p973 = pneg %p521
        %p974 = pneg %p518
        %p975 = pneg %p542
        %p976 = pneg %p539
        %p977 = pneg %p563
        %p978 = pneg %p560
        %p979 = pneg %p589
        %p980 = pneg %p586
        %p981 = scmp.lt.s32.totalorder %s44, 1
        %s982 = scalar_select %p981, %s44, 1
        %s983 = smul.addr %s982, 8
        %s984 = scalar_lea.vmem %s24, %s983
        %p985 = scmp.lt.s32.totalorder %s44, 1
        %s986 = scalar_select %p985, %s44, 1
        %s987 = smul.addr %s986, 8
        %s988 = scalar_lea.vmem %s0, %s987
        %p989 = scmp.lt.s32.totalorder %s44, 1
        %s990 = scalar_select %p989, %s44, 1
        %s991 = smul.addr %s990, 8
        %s992 = scalar_lea.vmem %s1, %s991
        %p993 = scmp.lt.s32.totalorder %s44, 1
        %s994 = scalar_select %p993, %s44, 1
        %s995 = smul.addr %s994, 8
        %s996 = scalar_lea.vmem %s2, %s995
        %p997 = scmp.lt.s32.totalorder %s44, 1
        %s998 = scalar_select %p997, %s44, 1
        %s999 = smul.addr %s998, 8
        %s1000 = scalar_lea.vmem %s3, %s999
        %p1001 = scmp.lt.s32.totalorder %s44, 1
        %s1002 = scalar_select %p1001, %s44, 1
        %s1003 = smul.addr %s1002, 8
        %s1004 = scalar_lea.vmem %s24, %s1003
        %v1006 = vld [vmem:[%s988] sm:$0xff]
        %v1007 = vld [vmem:[%s992] sm:$0xff]
        %v1008 = vld [vmem:[%s996] sm:$0xff]
        %v1009 = vld [vmem:[%s1000] sm:$0xff]
        %v1010 = vpack.c.bf16 %v1006, %v1006
        %v1011 = vld [vmem:[%s4] sm:$0xf]
        %v1012 = vld [vmem:[%s4 + $0x4] sm:$0xf]
        %v1013 = vld [vmem:[%s4 + $0x8] sm:$0xf]
        %v1014 = vld [vmem:[%s4 + $0xc] sm:$0xf]
        %v1015 = vld [vmem:[#allocation2] sm:$0x1]
        %v1017 = vlaneseq
        %v1018 = vshrl.u32 %v1017, 7
        %v1019 = vsub.s32 0, %v1018
        %v1020 = vrot.slane %v1015, %v1019
        %v1026 = vunpack.c.l.b16 %v1011
        %v1027 = vunpack.c.l.b16 %v1012
        %v1028 = vunpack.c.l.b16 %v1013
        %v1029 = vunpack.c.l.b16 %v1014
        %v1030 = vpack.c.b16 %v1027, %v1026
        %v1031 = vpack.c.b16 %v1029, %v1028
        %vm1034 = vcmask 261120
        %v1036 = vsel %vm1034, %v1010, 0
        %1038 = vmatprep.subr.bf16.mxu0 0
        %1039 = vmatpush1.bf16.msra.mxu0 %v1030
        %1040 = vmatprep.subr.bf16.mxu0 0
        %1041 = vmatpush1.bf16.msra.mxu0 %v1031
        %1042 = vmatprep.subr.bf16.mxu0 0
        %1043 = vmatpush1.bf16.msra.mxu0 0
        %1044 = vmatprep.subr.bf16.mxu0 0
        %1045 = vmatpush1.bf16.msra.mxu0 0
        %1046 = vmatprep.subr.bf16.mxu0 0
        %1047 = vmatpush1.bf16.msra.mxu0 0
        %1048 = vmatprep.subr.bf16.mxu0 0
        %1049 = vmatpush1.bf16.msra.mxu0 0
        %1050 = vmatprep.subr.bf16.mxu0 0
        %1051 = vmatpush1.bf16.msra.mxu0 0
        %1052 = vmatprep.subr.bf16.mxu0 0
        %1053 = vmatpush1.bf16.msra.mxu0 0
        %1054 = vmatprep.subr.bf16.mxu0 0
        %1055 = vmatpush1.bf16.msra.mxu0 0
        %1056 = vmatprep.subr.bf16.mxu0 0
        %1057 = vmatpush1.bf16.msra.mxu0 0
        %1058 = vmatprep.subr.bf16.mxu0 0
        %1059 = vmatpush1.bf16.msra.mxu0 0
        %1060 = vmatprep.subr.bf16.mxu0 0
        %1061 = vmatpush1.bf16.msra.mxu0 0
        %1062 = vmatprep.subr.bf16.mxu0 0
        %1063 = vmatpush1.bf16.msra.mxu0 0
        %1064 = vmatprep.subr.bf16.mxu0 0
        %1065 = vmatpush1.bf16.msra.mxu0 0
        %1066 = vmatprep.subr.bf16.mxu0 0
        %1067 = vmatpush1.bf16.msra.mxu0 0
        %1068 = vmatprep.subr.bf16.mxu0 0
        %1069 = vmatpush1.bf16.msra.mxu0 0
        %1070 = vmatprep.mubr.bf16.mxu0 0
        %1071 = vmatmul.mubr.bf16.gmra.mrb[0].mxu0 %v1036
        %v1072 = vpop.f32.mrb[0].mxu0
        %v1073 = vadd.f32 %v1020, %v1072
        %v1074 = vpop.f32.mrb[0].mxu0
        %v1075 = vpop.f32.mrb[0].mxu0
        %v1076 = vpop.f32.mrb[0].mxu0
        %1077 = vdwg.mxu0
        %v1078 = vmul.f32 %v1073, 0.35355338
        %v1079 = vpack.c.bf16 %v1078, %v1078
        %v1080 = vpack.c.bf16 %v1073, %v1073
        %1082 = vrot.lane.b32.xlu0 %v1080, 96
        %v1083 = vpop.permute.xlu0 %1082
        %vm1084 = vcmask 64512
        %v1086 = vsel %vm1084, %v1079, 0
        %v1089 = vsel %vm1084, %v1083, 0
        %1091 = vmatprep.subr.bf16.mxu0 0
        %1092 = vmatpush1.bf16.xpose.msra.mxu0 %v1089
        %1093 = vmatprep.subr.bf16.mxu0 0
        %1094 = vmatpush1.bf16.xpose.msra.mxu0 0
        %1095 = vmatprep.subr.bf16.mxu0 0
        %1096 = vmatpush1.bf16.xpose.msra.mxu0 0
        %1097 = vmatprep.subr.bf16.mxu0 0
        %1098 = vmatpush1.bf16.xpose.msra.mxu0 0
        %1099 = vmatprep.subr.bf16.mxu0 0
        %1100 = vmatpush1.bf16.xpose.msra.mxu0 0
        %1101 = vmatprep.subr.bf16.mxu0 0
        %1102 = vmatpush1.bf16.xpose.msra.mxu0 0
        %1103 = vmatprep.subr.bf16.mxu0 0
        %1104 = vmatpush1.bf16.xpose.msra.mxu0 0
        %1105 = vmatprep.subr.bf16.mxu0 0
        %1106 = vmatpush1.bf16.xpose.msra.mxu0 0
        %1107 = vmatprep.subr.bf16.mxu0 0
        %1108 = vmatpush1.bf16.xpose.msra.mxu0 0
        %1109 = vmatprep.subr.bf16.mxu0 0
        %1110 = vmatpush1.bf16.xpose.msra.mxu0 0
        %1111 = vmatprep.subr.bf16.mxu0 0
        %1112 = vmatpush1.bf16.xpose.msra.mxu0 0
        %1113 = vmatprep.subr.bf16.mxu0 0
        %1114 = vmatpush1.bf16.xpose.msra.mxu0 0
        %1115 = vmatprep.subr.bf16.mxu0 0
        %1116 = vmatpush1.bf16.xpose.msra.mxu0 0
        %1117 = vmatprep.subr.bf16.mxu0 0
        %1118 = vmatpush1.bf16.xpose.msra.mxu0 0
        %1119 = vmatprep.subr.bf16.mxu0 0
        %1120 = vmatpush1.bf16.xpose.msra.mxu0 0
        %1121 = vmatprep.subr.bf16.mxu0 0
        %1122 = vmatpush1.bf16.xpose.msra.mxu0 0
        %1123 = vmatprep.mubr.bf16.mxu0 0
        %1124 = vmatmul.mubr.bf16.gmra.mrb[0].mxu0 %v1086
        %v1125 = vpop.f32.mrb[0].mxu0
        %v1126 = vadd.f32 0.0, %v1125
        %v1127 = vpop.f32.mrb[0].mxu0
        %v1128 = vpop.f32.mrb[0].mxu0
        %v1129 = vpop.f32.mrb[0].mxu0
        %1130 = vdwg.mxu0
        %vm1131 = vcmp.ne.f32.partialorder %v1008, 0.0
        %v1132 = vsel %vm1131, %v1126, -1e+30
        %v1133 = vsel %vm1084, %v1132, -inf
        %1134 = vmax.xlane.f32.xlu0 %v1133
        %v1135 = vpop.xlane.xlu0 %1134
        %v1136 = vsub.f32 %v1132, %v1135
        %v1137 = vmul.f32 %v1136, 1.442695
        %v1138 = vpow.pop %v1137
        %v1139 = vsel %vm1084, %v1138, 0.0
        %1140 = vadd.xlane.f32.xlu0 %v1139
        %v1141 = vpop.xlane.xlu0 %1140
        %v1142 = vrcp.pop %v1141
        %v1143 = vmul.f32 %v1138, %v1142
        %v1144 = vmul.f32 %v1143, %v1009
        %v1145 = vpack.c.bf16 %v1144, %v1144
        %1146 = vrot.lane.b32.xlu0 %v1080, 64
        %v1147 = vpop.permute.xlu0 %1146
        %v1149 = vsel %vm1084, %v1145, 0
        %vm1151 = vcmask 1043456
        %v1153 = vsel %vm1151, %v1147, 0
        %1155 = vmatprep.subr.bf16.mxu0 0
        %1156 = vmatpush1.bf16.msra.mxu0 %v1153
        %1157 = vmatprep.subr.bf16.mxu0 0
        %1158 = vmatpush1.bf16.msra.mxu0 0
        %1159 = vmatprep.subr.bf16.mxu0 0
        %1160 = vmatpush1.bf16.msra.mxu0 0
        %1161 = vmatprep.subr.bf16.mxu0 0
        %1162 = vmatpush1.bf16.msra.mxu0 0
        %1163 = vmatprep.subr.bf16.mxu0 0
        %1164 = vmatpush1.bf16.msra.mxu0 0
        %1165 = vmatprep.subr.bf16.mxu0 0
        %1166 = vmatpush1.bf16.msra.mxu0 0
        %1167 = vmatprep.subr.bf16.mxu0 0
        %1168 = vmatpush1.bf16.msra.mxu0 0
        %1169 = vmatprep.subr.bf16.mxu0 0
        %1170 = vmatpush1.bf16.msra.mxu0 0
        %1171 = vmatprep.subr.bf16.mxu0 0
        %1172 = vmatpush1.bf16.msra.mxu0 0
        %1173 = vmatprep.subr.bf16.mxu0 0
        %1174 = vmatpush1.bf16.msra.mxu0 0
        %1175 = vmatprep.subr.bf16.mxu0 0
        %1176 = vmatpush1.bf16.msra.mxu0 0
        %1177 = vmatprep.subr.bf16.mxu0 0
        %1178 = vmatpush1.bf16.msra.mxu0 0
        %1179 = vmatprep.subr.bf16.mxu0 0
        %1180 = vmatpush1.bf16.msra.mxu0 0
        %1181 = vmatprep.subr.bf16.mxu0 0
        %1182 = vmatpush1.bf16.msra.mxu0 0
        %1183 = vmatprep.subr.bf16.mxu0 0
        %1184 = vmatpush1.bf16.msra.mxu0 0
        %1185 = vmatprep.subr.bf16.mxu0 0
        %1186 = vmatpush1.bf16.msra.mxu0 0
        %1187 = vmatprep.mubr.bf16.mxu0 0
        %1188 = vmatmul.mubr.bf16.gmra.mrb[0].mxu0 %v1149
        %v1189 = vpop.f32.mrb[0].mxu0
        %v1190 = vadd.f32 0.0, %v1189
        %v1191 = vpop.f32.mrb[0].mxu0
        %v1192 = vpop.f32.mrb[0].mxu0
        %v1193 = vpop.f32.mrb[0].mxu0
        %1194 = vdwg.mxu0
        %1196 = vrot.lane.b32.xlu0 %v1079, 120
        %v1197 = vpop.permute.xlu0 %1196
        %1198 = vrot.lane.b32.xlu0 %v1080, 88
        %v1199 = vpop.permute.xlu0 %1198
        %v1201 = vsel %vm1084, %v1197, 0
        %v1204 = vsel %vm1084, %v1199, 0
        %1206 = vmatprep.subr.bf16.mxu0 0
        %1207 = vmatpush1.bf16.xpose.msra.mxu0 %v1204
        %1208 = vmatprep.subr.bf16.mxu0 0
        %1209 = vmatpush1.bf16.xpose.msra.mxu0 0
        %1210 = vmatprep.subr.bf16.mxu0 0
        %1211 = vmatpush1.bf16.xpose.msra.mxu0 0
        %1212 = vmatprep.subr.bf16.mxu0 0
        %1213 = vmatpush1.bf16.xpose.msra.mxu0 0
        %1214 = vmatprep.subr.bf16.mxu0 0
        %1215 = vmatpush1.bf16.xpose.msra.mxu0 0
        %1216 = vmatprep.subr.bf16.mxu0 0
        %1217 = vmatpush1.bf16.xpose.msra.mxu0 0
        %1218 = vmatprep.subr.bf16.mxu0 0
        %1219 = vmatpush1.bf16.xpose.msra.mxu0 0
        %1220 = vmatprep.subr.bf16.mxu0 0
        %1221 = vmatpush1.bf16.xpose.msra.mxu0 0
        %1222 = vmatprep.subr.bf16.mxu0 0
        %1223 = vmatpush1.bf16.xpose.msra.mxu0 0
        %1224 = vmatprep.subr.bf16.mxu0 0
        %1225 = vmatpush1.bf16.xpose.msra.mxu0 0
        %1226 = vmatprep.subr.bf16.mxu0 0
        %1227 = vmatpush1.bf16.xpose.msra.mxu0 0
        %1228 = vmatprep.subr.bf16.mxu0 0
        %1229 = vmatpush1.bf16.xpose.msra.mxu0 0
        %1230 = vmatprep.subr.bf16.mxu0 0
        %1231 = vmatpush1.bf16.xpose.msra.mxu0 0
        %1232 = vmatprep.subr.bf16.mxu0 0
        %1233 = vmatpush1.bf16.xpose.msra.mxu0 0
        %1234 = vmatprep.subr.bf16.mxu0 0
        %1235 = vmatpush1.bf16.xpose.msra.mxu0 0
        %1236 = vmatprep.subr.bf16.mxu0 0
        %1237 = vmatpush1.bf16.xpose.msra.mxu0 0
        %1238 = vmatprep.mubr.bf16.mxu0 0
        %1239 = vmatmul.mubr.bf16.gmra.mrb[0].mxu0 %v1201
        %v1240 = vpop.f32.mrb[0].mxu0
        %v1241 = vadd.f32 0.0, %v1240
        %v1242 = vpop.f32.mrb[0].mxu0
        %v1243 = vpop.f32.mrb[0].mxu0
        %v1244 = vpop.f32.mrb[0].mxu0
        %1245 = vdwg.mxu0
        %v1246 = vsel %vm1131, %v1241, -1e+30
        %v1247 = vsel %vm1084, %v1246, -inf
        %1248 = vmax.xlane.f32.xlu0 %v1247
        %v1249 = vpop.xlane.xlu0 %1248
        %v1250 = vsub.f32 %v1246, %v1249
        %v1251 = vmul.f32 %v1250, 1.442695
        %v1252 = vpow.pop %v1251
        %v1253 = vsel %vm1084, %v1252, 0.0
        %1254 = vadd.xlane.f32.xlu0 %v1253
        %v1255 = vpop.xlane.xlu0 %1254
        %v1256 = vrcp.pop %v1255
        %v1257 = vmul.f32 %v1252, %v1256
        %v1258 = vmul.f32 %v1257, %v1009
        %v1259 = vpack.c.bf16 %v1258, %v1258
        %1260 = vrot.lane.b32.xlu0 %v1080, 56
        %v1261 = vpop.permute.xlu0 %1260
        %v1263 = vsel %vm1084, %v1259, 0
        %v1266 = vsel %vm1151, %v1261, 0
        %1268 = vmatprep.subr.bf16.mxu0 0
        %1269 = vmatpush1.bf16.msra.mxu0 %v1266
        %1270 = vmatprep.subr.bf16.mxu0 0
        %1271 = vmatpush1.bf16.msra.mxu0 0
        %1272 = vmatprep.subr.bf16.mxu0 0
        %1273 = vmatpush1.bf16.msra.mxu0 0
        %1274 = vmatprep.subr.bf16.mxu0 0
        %1275 = vmatpush1.bf16.msra.mxu0 0
        %1276 = vmatprep.subr.bf16.mxu0 0
        %1277 = vmatpush1.bf16.msra.mxu0 0
        %1278 = vmatprep.subr.bf16.mxu0 0
        %1279 = vmatpush1.bf16.msra.mxu0 0
        %1280 = vmatprep.subr.bf16.mxu0 0
        %1281 = vmatpush1.bf16.msra.mxu0 0
        %1282 = vmatprep.subr.bf16.mxu0 0
        %1283 = vmatpush1.bf16.msra.mxu0 0
        %1284 = vmatprep.subr.bf16.mxu0 0
        %1285 = vmatpush1.bf16.msra.mxu0 0
        %1286 = vmatprep.subr.bf16.mxu0 0
        %1287 = vmatpush1.bf16.msra.mxu0 0
        %1288 = vmatprep.subr.bf16.mxu0 0
        %1289 = vmatpush1.bf16.msra.mxu0 0
        %1290 = vmatprep.subr.bf16.mxu0 0
        %1291 = vmatpush1.bf16.msra.mxu0 0
        %1292 = vmatprep.subr.bf16.mxu0 0
        %1293 = vmatpush1.bf16.msra.mxu0 0
        %1294 = vmatprep.subr.bf16.mxu0 0
        %1295 = vmatpush1.bf16.msra.mxu0 0
        %1296 = vmatprep.subr.bf16.mxu0 0
        %1297 = vmatpush1.bf16.msra.mxu0 0
        %1298 = vmatprep.subr.bf16.mxu0 0
        %1299 = vmatpush1.bf16.msra.mxu0 0
        %1300 = vmatprep.mubr.bf16.mxu0 0
        %1301 = vmatmul.mubr.bf16.gmra.mrb[0].mxu0 %v1263
        %v1302 = vpop.f32.mrb[0].mxu0
        %v1303 = vadd.f32 0.0, %v1302
        %v1304 = vpop.f32.mrb[0].mxu0
        %v1305 = vpop.f32.mrb[0].mxu0
        %v1306 = vpop.f32.mrb[0].mxu0
        %1307 = vdwg.mxu0
        %1308 = vrot.lane.b32.xlu0 %v1079, 112
        %v1309 = vpop.permute.xlu0 %1308
        %1310 = vrot.lane.b32.xlu0 %v1080, 80
        %v1311 = vpop.permute.xlu0 %1310
        %v1313 = vsel %vm1084, %v1309, 0
        %v1316 = vsel %vm1084, %v1311, 0
        %1318 = vmatprep.subr.bf16.mxu0 0
        %1319 = vmatpush1.bf16.xpose.msra.mxu0 %v1316
        %1320 = vmatprep.subr.bf16.mxu0 0
        %1321 = vmatpush1.bf16.xpose.msra.mxu0 0
        %1322 = vmatprep.subr.bf16.mxu0 0
        %1323 = vmatpush1.bf16.xpose.msra.mxu0 0
        %1324 = vmatprep.subr.bf16.mxu0 0
        %1325 = vmatpush1.bf16.xpose.msra.mxu0 0
        %1326 = vmatprep.subr.bf16.mxu0 0
        %1327 = vmatpush1.bf16.xpose.msra.mxu0 0
        %1328 = vmatprep.subr.bf16.mxu0 0
        %1329 = vmatpush1.bf16.xpose.msra.mxu0 0
        %1330 = vmatprep.subr.bf16.mxu0 0
        %1331 = vmatpush1.bf16.xpose.msra.mxu0 0
        %1332 = vmatprep.subr.bf16.mxu0 0
        %1333 = vmatpush1.bf16.xpose.msra.mxu0 0
        %1334 = vmatprep.subr.bf16.mxu0 0
        %1335 = vmatpush1.bf16.xpose.msra.mxu0 0
        %1336 = vmatprep.subr.bf16.mxu0 0
        %1337 = vmatpush1.bf16.xpose.msra.mxu0 0
        %1338 = vmatprep.subr.bf16.mxu0 0
        %1339 = vmatpush1.bf16.xpose.msra.mxu0 0
        %1340 = vmatprep.subr.bf16.mxu0 0
        %1341 = vmatpush1.bf16.xpose.msra.mxu0 0
        %1342 = vmatprep.subr.bf16.mxu0 0
        %1343 = vmatpush1.bf16.xpose.msra.mxu0 0
        %1344 = vmatprep.subr.bf16.mxu0 0
        %1345 = vmatpush1.bf16.xpose.msra.mxu0 0
        %1346 = vmatprep.subr.bf16.mxu0 0
        %1347 = vmatpush1.bf16.xpose.msra.mxu0 0
        %1348 = vmatprep.subr.bf16.mxu0 0
        %1349 = vmatpush1.bf16.xpose.msra.mxu0 0
        %1350 = vmatprep.mubr.bf16.mxu0 0
        %1351 = vmatmul.mubr.bf16.gmra.mrb[0].mxu0 %v1313
        %v1352 = vpop.f32.mrb[0].mxu0
        %v1353 = vadd.f32 0.0, %v1352
        %v1354 = vpop.f32.mrb[0].mxu0
        %v1355 = vpop.f32.mrb[0].mxu0
        %v1356 = vpop.f32.mrb[0].mxu0
        %1357 = vdwg.mxu0
        %v1358 = vsel %vm1131, %v1353, -1e+30
        %v1359 = vsel %vm1084, %v1358, -inf
        %1360 = vmax.xlane.f32.xlu0 %v1359
        %v1361 = vpop.xlane.xlu0 %1360
        %v1362 = vsub.f32 %v1358, %v1361
        %v1363 = vmul.f32 %v1362, 1.442695
        %v1364 = vpow.pop %v1363
        %v1365 = vsel %vm1084, %v1364, 0.0
        %1366 = vadd.xlane.f32.xlu0 %v1365
        %v1367 = vpop.xlane.xlu0 %1366
        %v1368 = vrcp.pop %v1367
        %v1369 = vmul.f32 %v1364, %v1368
        %v1370 = vmul.f32 %v1369, %v1009
        %v1371 = vpack.c.bf16 %v1370, %v1370
        %1372 = vrot.lane.b32.xlu0 %v1080, 48
        %v1373 = vpop.permute.xlu0 %1372
        %v1375 = vsel %vm1084, %v1371, 0
        %v1378 = vsel %vm1151, %v1373, 0
        %1380 = vmatprep.subr.bf16.mxu0 0
        %1381 = vmatpush1.bf16.msra.mxu0 %v1378
        %1382 = vmatprep.subr.bf16.mxu0 0
        %1383 = vmatpush1.bf16.msra.mxu0 0
        %1384 = vmatprep.subr.bf16.mxu0 0
        %1385 = vmatpush1.bf16.msra.mxu0 0
        %1386 = vmatprep.subr.bf16.mxu0 0
        %1387 = vmatpush1.bf16.msra.mxu0 0
        %1388 = vmatprep.subr.bf16.mxu0 0
        %1389 = vmatpush1.bf16.msra.mxu0 0
        %1390 = vmatprep.subr.bf16.mxu0 0
        %1391 = vmatpush1.bf16.msra.mxu0 0
        %1392 = vmatprep.subr.bf16.mxu0 0
        %1393 = vmatpush1.bf16.msra.mxu0 0
        %1394 = vmatprep.subr.bf16.mxu0 0
        %1395 = vmatpush1.bf16.msra.mxu0 0
        %1396 = vmatprep.subr.bf16.mxu0 0
        %1397 = vmatpush1.bf16.msra.mxu0 0
        %1398 = vmatprep.subr.bf16.mxu0 0
        %1399 = vmatpush1.bf16.msra.mxu0 0
        %1400 = vmatprep.subr.bf16.mxu0 0
        %1401 = vmatpush1.bf16.msra.mxu0 0
        %1402 = vmatprep.subr.bf16.mxu0 0
        %1403 = vmatpush1.bf16.msra.mxu0 0
        %1404 = vmatprep.subr.bf16.mxu0 0
        %1405 = vmatpush1.bf16.msra.mxu0 0
        %1406 = vmatprep.subr.bf16.mxu0 0
        %1407 = vmatpush1.bf16.msra.mxu0 0
        %1408 = vmatprep.subr.bf16.mxu0 0
        %1409 = vmatpush1.bf16.msra.mxu0 0
        %1410 = vmatprep.subr.bf16.mxu0 0
        %1411 = vmatpush1.bf16.msra.mxu0 0
        %1412 = vmatprep.mubr.bf16.mxu0 0
        %1413 = vmatmul.mubr.bf16.gmra.mrb[0].mxu0 %v1375
        %v1414 = vpop.f32.mrb[0].mxu0
        %v1415 = vadd.f32 0.0, %v1414
        %v1416 = vpop.f32.mrb[0].mxu0
        %v1417 = vpop.f32.mrb[0].mxu0
        %v1418 = vpop.f32.mrb[0].mxu0
        %1419 = vdwg.mxu0
        %1420 = vrot.lane.b32.xlu0 %v1079, 104
        %v1421 = vpop.permute.xlu0 %1420
        %1422 = vrot.lane.b32.xlu0 %v1080, 72
        %v1423 = vpop.permute.xlu0 %1422
        %v1425 = vsel %vm1084, %v1421, 0
        %v1428 = vsel %vm1084, %v1423, 0
        %1430 = vmatprep.subr.bf16.mxu0 0
        %1431 = vmatpush1.bf16.xpose.msra.mxu0 %v1428
        %1432 = vmatprep.subr.bf16.mxu0 0
        %1433 = vmatpush1.bf16.xpose.msra.mxu0 0
        %1434 = vmatprep.subr.bf16.mxu0 0
        %1435 = vmatpush1.bf16.xpose.msra.mxu0 0
        %1436 = vmatprep.subr.bf16.mxu0 0
        %1437 = vmatpush1.bf16.xpose.msra.mxu0 0
        %1438 = vmatprep.subr.bf16.mxu0 0
        %1439 = vmatpush1.bf16.xpose.msra.mxu0 0
        %1440 = vmatprep.subr.bf16.mxu0 0
        %1441 = vmatpush1.bf16.xpose.msra.mxu0 0
        %1442 = vmatprep.subr.bf16.mxu0 0
        %1443 = vmatpush1.bf16.xpose.msra.mxu0 0
        %1444 = vmatprep.subr.bf16.mxu0 0
        %1445 = vmatpush1.bf16.xpose.msra.mxu0 0
        %1446 = vmatprep.subr.bf16.mxu0 0
        %1447 = vmatpush1.bf16.xpose.msra.mxu0 0
        %1448 = vmatprep.subr.bf16.mxu0 0
        %1449 = vmatpush1.bf16.xpose.msra.mxu0 0
        %1450 = vmatprep.subr.bf16.mxu0 0
        %1451 = vmatpush1.bf16.xpose.msra.mxu0 0
        %1452 = vmatprep.subr.bf16.mxu0 0
        %1453 = vmatpush1.bf16.xpose.msra.mxu0 0
        %1454 = vmatprep.subr.bf16.mxu0 0
        %1455 = vmatpush1.bf16.xpose.msra.mxu0 0
        %1456 = vmatprep.subr.bf16.mxu0 0
        %1457 = vmatpush1.bf16.xpose.msra.mxu0 0
        %1458 = vmatprep.subr.bf16.mxu0 0
        %1459 = vmatpush1.bf16.xpose.msra.mxu0 0
        %1460 = vmatprep.subr.bf16.mxu0 0
        %1461 = vmatpush1.bf16.xpose.msra.mxu0 0
        %1462 = vmatprep.mubr.bf16.mxu0 0
        %1463 = vmatmul.mubr.bf16.gmra.mrb[0].mxu0 %v1425
        %v1464 = vpop.f32.mrb[0].mxu0
        %v1465 = vadd.f32 0.0, %v1464
        %v1466 = vpop.f32.mrb[0].mxu0
        %v1467 = vpop.f32.mrb[0].mxu0
        %v1468 = vpop.f32.mrb[0].mxu0
        %1469 = vdwg.mxu0
        %v1470 = vsel %vm1131, %v1465, -1e+30
        %v1471 = vsel %vm1084, %v1470, -inf
        %1472 = vmax.xlane.f32.xlu0 %v1471
        %v1473 = vpop.xlane.xlu0 %1472
        %v1474 = vsub.f32 %v1470, %v1473
        %v1475 = vmul.f32 %v1474, 1.442695
        %v1476 = vpow.pop %v1475
        %v1477 = vsel %vm1084, %v1476, 0.0
        %1478 = vadd.xlane.f32.xlu0 %v1477
        %v1479 = vpop.xlane.xlu0 %1478
        %v1480 = vrcp.pop %v1479
        %v1481 = vmul.f32 %v1476, %v1480
        %v1482 = vmul.f32 %v1481, %v1009
        %v1483 = vpack.c.bf16 %v1482, %v1482
        %1484 = vrot.lane.b32.xlu0 %v1080, 40
        %v1485 = vpop.permute.xlu0 %1484
        %v1487 = vsel %vm1084, %v1483, 0
        %v1490 = vsel %vm1151, %v1485, 0
        %1492 = vmatprep.subr.bf16.mxu0 0
        %1493 = vmatpush1.bf16.msra.mxu0 %v1490
        %1494 = vmatprep.subr.bf16.mxu0 0
        %1495 = vmatpush1.bf16.msra.mxu0 0
        %1496 = vmatprep.subr.bf16.mxu0 0
        %1497 = vmatpush1.bf16.msra.mxu0 0
        %1498 = vmatprep.subr.bf16.mxu0 0
        %1499 = vmatpush1.bf16.msra.mxu0 0
        %1500 = vmatprep.subr.bf16.mxu0 0
        %1501 = vmatpush1.bf16.msra.mxu0 0
        %1502 = vmatprep.subr.bf16.mxu0 0
        %1503 = vmatpush1.bf16.msra.mxu0 0
        %1504 = vmatprep.subr.bf16.mxu0 0
        %1505 = vmatpush1.bf16.msra.mxu0 0
        %1506 = vmatprep.subr.bf16.mxu0 0
        %1507 = vmatpush1.bf16.msra.mxu0 0
        %1508 = vmatprep.subr.bf16.mxu0 0
        %1509 = vmatpush1.bf16.msra.mxu0 0
        %1510 = vmatprep.subr.bf16.mxu0 0
        %1511 = vmatpush1.bf16.msra.mxu0 0
        %1512 = vmatprep.subr.bf16.mxu0 0
        %1513 = vmatpush1.bf16.msra.mxu0 0
        %1514 = vmatprep.subr.bf16.mxu0 0
        %1515 = vmatpush1.bf16.msra.mxu0 0
        %1516 = vmatprep.subr.bf16.mxu0 0
        %1517 = vmatpush1.bf16.msra.mxu0 0
        %1518 = vmatprep.subr.bf16.mxu0 0
        %1519 = vmatpush1.bf16.msra.mxu0 0
        %1520 = vmatprep.subr.bf16.mxu0 0
        %1521 = vmatpush1.bf16.msra.mxu0 0
        %1522 = vmatprep.subr.bf16.mxu0 0
        %1523 = vmatpush1.bf16.msra.mxu0 0
        %1524 = vmatprep.mubr.bf16.mxu0 0
        %1525 = vmatmul.mubr.bf16.gmra.mrb[0].mxu0 %v1487
        %v1526 = vpop.f32.mrb[0].mxu0
        %v1527 = vadd.f32 0.0, %v1526
        %v1528 = vpop.f32.mrb[0].mxu0
        %v1529 = vpop.f32.mrb[0].mxu0
        %v1530 = vpop.f32.mrb[0].mxu0
        %1531 = vdwg.mxu0
        %1533 = vrot.lane.b32.xlu0 %v1303, 8
        %v1534 = vpop.permute.xlu0 %1533
        %1537 = vrot.lane.b32.xlu0 %v1415, 16
        %v1538 = vpop.permute.xlu0 %1537
        %1541 = vrot.lane.b32.xlu0 %v1527, 24
        %v1542 = vpop.permute.xlu0 %1541
        %v1544 = vsel %vm1084, %v1190, %v1534
        %vm1545 = vcmask 130048
        %v1546 = vsel %vm1545, %v1544, %v1538
        %vm1547 = vcmask 195584
        %v1548 = vsel %vm1547, %v1546, %v1542
        %v1549 = vpack.c.bf16 %v1548, %v1548
        %v1550 = vld [vmem:[%s6] sm:$0xf]
        %v1551 = vld [vmem:[%s6 + $0x4] sm:$0xf]
        %v1552 = vld [vmem:[%s6 + $0x8] sm:$0xf]
        %v1553 = vld [vmem:[%s6 + $0xc] sm:$0xf]
        %v1554 = vld [vmem:[#allocation4] sm:$0x1]
        %v1556 = vlaneseq
        %v1557 = vshrl.u32 %v1556, 7
        %v1558 = vsub.s32 0, %v1557
        %v1559 = vrot.slane %v1554, %v1558
        %v1565 = vunpack.c.l.b16 %v1550
        %v1566 = vunpack.c.l.b16 %v1551
        %v1567 = vunpack.c.l.b16 %v1552
        %v1568 = vunpack.c.l.b16 %v1553
        %v1569 = vpack.c.b16 %v1566, %v1565
        %v1570 = vpack.c.b16 %v1568, %v1567
        %v1574 = vsel %vm1034, %v1549, 0
        %1576 = vmatprep.subr.bf16.mxu0 0
        %1577 = vmatpush1.bf16.msra.mxu0 %v1569
        %1578 = vmatprep.subr.bf16.mxu0 0
        %1579 = vmatpush1.bf16.msra.mxu0 %v1570
        %1580 = vmatprep.subr.bf16.mxu0 0
        %1581 = vmatpush1.bf16.msra.mxu0 0
        %1582 = vmatprep.subr.bf16.mxu0 0
        %1583 = vmatpush1.bf16.msra.mxu0 0
        %1584 = vmatprep.subr.bf16.mxu0 0
        %1585 = vmatpush1.bf16.msra.mxu0 0
        %1586 = vmatprep.subr.bf16.mxu0 0
        %1587 = vmatpush1.bf16.msra.mxu0 0
        %1588 = vmatprep.subr.bf16.mxu0 0
        %1589 = vmatpush1.bf16.msra.mxu0 0
        %1590 = vmatprep.subr.bf16.mxu0 0
        %1591 = vmatpush1.bf16.msra.mxu0 0
        %1592 = vmatprep.subr.bf16.mxu0 0
        %1593 = vmatpush1.bf16.msra.mxu0 0
        %1594 = vmatprep.subr.bf16.mxu0 0
        %1595 = vmatpush1.bf16.msra.mxu0 0
        %1596 = vmatprep.subr.bf16.mxu0 0
        %1597 = vmatpush1.bf16.msra.mxu0 0
        %1598 = vmatprep.subr.bf16.mxu0 0
        %1599 = vmatpush1.bf16.msra.mxu0 0
        %1600 = vmatprep.subr.bf16.mxu0 0
        %1601 = vmatpush1.bf16.msra.mxu0 0
        %1602 = vmatprep.subr.bf16.mxu0 0
        %1603 = vmatpush1.bf16.msra.mxu0 0
        %1604 = vmatprep.subr.bf16.mxu0 0
        %1605 = vmatpush1.bf16.msra.mxu0 0
        %1606 = vmatprep.subr.bf16.mxu0 0
        %1607 = vmatpush1.bf16.msra.mxu0 0
        %1608 = vmatprep.mubr.bf16.mxu0 0
        %1609 = vmatmul.mubr.bf16.gmra.mrb[0].mxu0 %v1574
        %v1610 = vpop.f32.mrb[0].mxu0
        %v1611 = vadd.f32 %v1559, %v1610
        %v1612 = vpop.f32.mrb[0].mxu0
        %v1613 = vpop.f32.mrb[0].mxu0
        %v1614 = vpop.f32.mrb[0].mxu0
        %1615 = vdwg.mxu0
        %v1616 = vadd.f32 %v1611, %v1006
        %v1617 = vsel %vm1034, %v1616, 0.0
        %1618 = vadd.xlane.f32.xlu0 %v1617
        %v1619 = vpop.xlane.xlu0 %1618
        %v1620 = vrcp.pop 32.0
        %v1621 = vmul.f32 %v1619, %v1620
        %v1622 = vsub.f32 %v1616, %v1621
        %v1623 = vmul.f32 %v1622, %v1622
        %v1624 = vsel %vm1034, %v1623, 0.0
        %1625 = vadd.xlane.f32.xlu0 %v1624
        %v1626 = vpop.xlane.xlu0 %1625
        %v1627 = vmul.f32 %v1626, %v1620
        %v1628 = vadd.f32 %v1627, 1e-05
        %v1629 = vrsqrt.pop %v1628
        %v1630 = vmul.f32 %v1622, %v1629
        %v1631 = vld [vmem:[#allocation6] sm:$0x1]
        %v1633 = vlaneseq
        %v1634 = vshrl.u32 %v1633, 7
        %v1635 = vsub.s32 0, %v1634
        %v1636 = vrot.slane %v1631, %v1635
        %v1638 = vmul.f32 %v1630, %v1636
        %v1639 = vld [vmem:[#allocation7] sm:$0x1]
        %v1641 = vlaneseq
        %v1642 = vshrl.u32 %v1641, 7
        %v1643 = vsub.s32 0, %v1642
        %v1644 = vrot.slane %v1639, %v1643
        %v1646 = vadd.f32 %v1638, %v1644
        %v1647 = vpack.c.bf16 %v1646, %v1646
        %v1648 = vld [vmem:[#allocation9] sm:$0xf]
        %v1649 = vld [vmem:[#allocation9 + $0x4] sm:$0xf]
        %v1650 = vld [vmem:[#allocation9 + $0x8] sm:$0xf]
        %v1651 = vld [vmem:[#allocation9 + $0xc] sm:$0xf]
        %v1652 = vld [vmem:[#allocation10] sm:$0x1]
        %v1654 = vlaneseq
        %v1655 = vshrl.u32 %v1654, 7
        %v1656 = vsub.s32 0, %v1655
        %v1657 = vrot.slane %v1652, %v1656
        %v1663 = vunpack.c.l.b16 %v1648
        %v1664 = vunpack.c.l.b16 %v1649
        %v1665 = vunpack.c.l.b16 %v1650
        %v1666 = vunpack.c.l.b16 %v1651
        %v1667 = vpack.c.b16 %v1664, %v1663
        %v1668 = vpack.c.b16 %v1666, %v1665
        %v1672 = vsel %vm1034, %v1647, 0
        %1674 = vmatprep.subr.bf16.mxu0 0
        %1675 = vmatpush1.bf16.msra.mxu0 %v1667
        %1676 = vmatprep.subr.bf16.mxu0 0
        %1677 = vmatpush1.bf16.msra.mxu0 %v1668
        %1678 = vmatprep.subr.bf16.mxu0 0
        %1679 = vmatpush1.bf16.msra.mxu0 0
        %1680 = vmatprep.subr.bf16.mxu0 0
        %1681 = vmatpush1.bf16.msra.mxu0 0
        %1682 = vmatprep.subr.bf16.mxu0 0
        %1683 = vmatpush1.bf16.msra.mxu0 0
        %1684 = vmatprep.subr.bf16.mxu0 0
        %1685 = vmatpush1.bf16.msra.mxu0 0
        %1686 = vmatprep.subr.bf16.mxu0 0
        %1687 = vmatpush1.bf16.msra.mxu0 0
        %1688 = vmatprep.subr.bf16.mxu0 0
        %1689 = vmatpush1.bf16.msra.mxu0 0
        %1690 = vmatprep.subr.bf16.mxu0 0
        %1691 = vmatpush1.bf16.msra.mxu0 0
        %1692 = vmatprep.subr.bf16.mxu0 0
        %1693 = vmatpush1.bf16.msra.mxu0 0
        %1694 = vmatprep.subr.bf16.mxu0 0
        %1695 = vmatpush1.bf16.msra.mxu0 0
        %1696 = vmatprep.subr.bf16.mxu0 0
        %1697 = vmatpush1.bf16.msra.mxu0 0
        %1698 = vmatprep.subr.bf16.mxu0 0
        %1699 = vmatpush1.bf16.msra.mxu0 0
        %1700 = vmatprep.subr.bf16.mxu0 0
        %1701 = vmatpush1.bf16.msra.mxu0 0
        %1702 = vmatprep.subr.bf16.mxu0 0
        %1703 = vmatpush1.bf16.msra.mxu0 0
        %1704 = vmatprep.subr.bf16.mxu0 0
        %1705 = vmatpush1.bf16.msra.mxu0 0
        %1706 = vmatprep.mubr.bf16.mxu0 0
        %1707 = vmatmul.mubr.bf16.gmra.mrb[0].mxu0 %v1672
        %v1708 = vpop.f32.mrb[0].mxu0
        %v1709 = vadd.f32 %v1657, %v1708
        %v1710 = vpop.f32.mrb[0].mxu0
        %v1711 = vpop.f32.mrb[0].mxu0
        %v1712 = vpop.f32.mrb[0].mxu0
        %1713 = vdwg.mxu0
        %v1714 = vmul.f32 %v1709, 0.35355338
        %v1715 = vpack.c.bf16 %v1007, %v1007
        %v1716 = vld [vmem:[#allocation12] sm:$0xf]
        %v1717 = vld [vmem:[#allocation12 + $0x4] sm:$0xf]
        %v1718 = vld [vmem:[#allocation12 + $0x8] sm:$0xf]
        %v1719 = vld [vmem:[#allocation12 + $0xc] sm:$0xf]
        %v1720 = vld [vmem:[#allocation13] sm:$0x1]
        %v1722 = vlaneseq
        %v1723 = vshrl.u32 %v1722, 7
        %v1724 = vsub.s32 0, %v1723
        %v1725 = vrot.slane %v1720, %v1724
        %v1731 = vunpack.c.l.b16 %v1716
        %v1732 = vunpack.c.l.b16 %v1717
        %v1733 = vunpack.c.l.b16 %v1718
        %v1734 = vunpack.c.l.b16 %v1719
        %v1735 = vpack.c.b16 %v1732, %v1731
        %v1736 = vpack.c.b16 %v1734, %v1733
        %v1740 = vsel %vm1034, %v1715, 0
        %1742 = vmatprep.subr.bf16.mxu0 0
        %1743 = vmatpush1.bf16.msra.mxu0 %v1735
        %1744 = vmatprep.subr.bf16.mxu0 0
        %1745 = vmatpush1.bf16.msra.mxu0 %v1736
        %1746 = vmatprep.subr.bf16.mxu0 0
        %1747 = vmatpush1.bf16.msra.mxu0 0
        %1748 = vmatprep.subr.bf16.mxu0 0
        %1749 = vmatpush1.bf16.msra.mxu0 0
        %1750 = vmatprep.subr.bf16.mxu0 0
        %1751 = vmatpush1.bf16.msra.mxu0 0
        %1752 = vmatprep.subr.bf16.mxu0 0
        %1753 = vmatpush1.bf16.msra.mxu0 0
        %1754 = vmatprep.subr.bf16.mxu0 0
        %1755 = vmatpush1.bf16.msra.mxu0 0
        %1756 = vmatprep.subr.bf16.mxu0 0
        %1757 = vmatpush1.bf16.msra.mxu0 0
        %1758 = vmatprep.subr.bf16.mxu0 0
        %1759 = vmatpush1.bf16.msra.mxu0 0
        %1760 = vmatprep.subr.bf16.mxu0 0
        %1761 = vmatpush1.bf16.msra.mxu0 0
        %1762 = vmatprep.subr.bf16.mxu0 0
        %1763 = vmatpush1.bf16.msra.mxu0 0
        %1764 = vmatprep.subr.bf16.mxu0 0
        %1765 = vmatpush1.bf16.msra.mxu0 0
        %1766 = vmatprep.subr.bf16.mxu0 0
        %1767 = vmatpush1.bf16.msra.mxu0 0
        %1768 = vmatprep.subr.bf16.mxu0 0
        %1769 = vmatpush1.bf16.msra.mxu0 0
        %1770 = vmatprep.subr.bf16.mxu0 0
        %1771 = vmatpush1.bf16.msra.mxu0 0
        %1772 = vmatprep.subr.bf16.mxu0 0
        %1773 = vmatpush1.bf16.msra.mxu0 0
        %1774 = vmatprep.mubr.bf16.mxu0 0
        %1775 = vmatmul.mubr.bf16.gmra.mrb[0].mxu0 %v1740
        %v1776 = vpop.f32.mrb[0].mxu0
        %v1777 = vadd.f32 %v1725, %v1776
        %v1778 = vpop.f32.mrb[0].mxu0
        %v1779 = vpop.f32.mrb[0].mxu0
        %v1780 = vpop.f32.mrb[0].mxu0
        %1781 = vdwg.mxu0
        %v1782 = vpack.c.bf16 %v1714, %v1714
        %v1783 = vpack.c.bf16 %v1777, %v1777
        %v1785 = vsel %vm1084, %v1782, 0
        %v1788 = vsel %vm1084, %v1783, 0
        %1790 = vmatprep.subr.bf16.mxu0 0
        %1791 = vmatpush1.bf16.xpose.msra.mxu0 %v1788
        %1792 = vmatprep.subr.bf16.mxu0 0
        %1793 = vmatpush1.bf16.xpose.msra.mxu0 0
        %1794 = vmatprep.subr.bf16.mxu0 0
        %1795 = vmatpush1.bf16.xpose.msra.mxu0 0
        %1796 = vmatprep.subr.bf16.mxu0 0
        %1797 = vmatpush1.bf16.xpose.msra.mxu0 0
        %1798 = vmatprep.subr.bf16.mxu0 0
        %1799 = vmatpush1.bf16.xpose.msra.mxu0 0
        %1800 = vmatprep.subr.bf16.mxu0 0
        %1801 = vmatpush1.bf16.xpose.msra.mxu0 0
        %1802 = vmatprep.subr.bf16.mxu0 0
        %1803 = vmatpush1.bf16.xpose.msra.mxu0 0
        %1804 = vmatprep.subr.bf16.mxu0 0
        %1805 = vmatpush1.bf16.xpose.msra.mxu0 0
        %1806 = vmatprep.subr.bf16.mxu0 0
        %1807 = vmatpush1.bf16.xpose.msra.mxu0 0
        %1808 = vmatprep.subr.bf16.mxu0 0
        %1809 = vmatpush1.bf16.xpose.msra.mxu0 0
        %1810 = vmatprep.subr.bf16.mxu0 0
        %1811 = vmatpush1.bf16.xpose.msra.mxu0 0
        %1812 = vmatprep.subr.bf16.mxu0 0
        %1813 = vmatpush1.bf16.xpose.msra.mxu0 0
        %1814 = vmatprep.subr.bf16.mxu0 0
        %1815 = vmatpush1.bf16.xpose.msra.mxu0 0
        %1816 = vmatprep.subr.bf16.mxu0 0
        %1817 = vmatpush1.bf16.xpose.msra.mxu0 0
        %1818 = vmatprep.subr.bf16.mxu0 0
        %1819 = vmatpush1.bf16.xpose.msra.mxu0 0
        %1820 = vmatprep.subr.bf16.mxu0 0
        %1821 = vmatpush1.bf16.xpose.msra.mxu0 0
        %1822 = vmatprep.mubr.bf16.mxu0 0
        %1823 = vmatmul.mubr.bf16.gmra.mrb[0].mxu0 %v1785
        %v1824 = vpop.f32.mrb[0].mxu0
        %v1825 = vadd.f32 0.0, %v1824
        %v1826 = vpop.f32.mrb[0].mxu0
        %v1827 = vpop.f32.mrb[0].mxu0
        %v1828 = vpop.f32.mrb[0].mxu0
        %1829 = vdwg.mxu0
        %v1830 = vsel %vm1084, %v1825, -inf
        %1831 = vmax.xlane.f32.xlu0 %v1830
        %v1832 = vpop.xlane.xlu0 %1831
        %v1833 = vsub.f32 %v1825, %v1832
        %v1834 = vmul.f32 %v1833, 1.442695
        %v1835 = vpow.pop %v1834
        %v1836 = vsel %vm1084, %v1835, 0.0
        %1837 = vadd.xlane.f32.xlu0 %v1836
        %v1838 = vpop.xlane.xlu0 %1837
        %v1839 = vrcp.pop %v1838
        %v1840 = vmul.f32 %v1835, %v1839
        %v1841 = vpack.c.bf16 %v1840, %v1840
        %1843 = vrot.lane.b32.xlu0 %v1783, 96
        %v1844 = vpop.permute.xlu0 %1843
        %v1846 = vsel %vm1084, %v1841, 0
        %v1849 = vsel %vm1151, %v1844, 0
        %1851 = vmatprep.subr.bf16.mxu0 0
        %1852 = vmatpush1.bf16.msra.mxu0 %v1849
        %1853 = vmatprep.subr.bf16.mxu0 0
        %1854 = vmatpush1.bf16.msra.mxu0 0
        %1855 = vmatprep.subr.bf16.mxu0 0
        %1856 = vmatpush1.bf16.msra.mxu0 0
        %1857 = vmatprep.subr.bf16.mxu0 0
        %1858 = vmatpush1.bf16.msra.mxu0 0
        %1859 = vmatprep.subr.bf16.mxu0 0
        %1860 = vmatpush1.bf16.msra.mxu0 0
        %1861 = vmatprep.subr.bf16.mxu0 0
        %1862 = vmatpush1.bf16.msra.mxu0 0
        %1863 = vmatprep.subr.bf16.mxu0 0
        %1864 = vmatpush1.bf16.msra.mxu0 0
        %1865 = vmatprep.subr.bf16.mxu0 0
        %1866 = vmatpush1.bf16.msra.mxu0 0
        %1867 = vmatprep.subr.bf16.mxu0 0
        %1868 = vmatpush1.bf16.msra.mxu0 0
        %1869 = vmatprep.subr.bf16.mxu0 0
        %1870 = vmatpush1.bf16.msra.mxu0 0
        %1871 = vmatprep.subr.bf16.mxu0 0
        %1872 = vmatpush1.bf16.msra.mxu0 0
        %1873 = vmatprep.subr.bf16.mxu0 0
        %1874 = vmatpush1.bf16.msra.mxu0 0
        %1875 = vmatprep.subr.bf16.mxu0 0
        %1876 = vmatpush1.bf16.msra.mxu0 0
        %1877 = vmatprep.subr.bf16.mxu0 0
        %1878 = vmatpush1.bf16.msra.mxu0 0
        %1879 = vmatprep.subr.bf16.mxu0 0
        %1880 = vmatpush1.bf16.msra.mxu0 0
        %1881 = vmatprep.subr.bf16.mxu0 0
        %1882 = vmatpush1.bf16.msra.mxu0 0
        %1883 = vmatprep.mubr.bf16.mxu0 0
        %1884 = vmatmul.mubr.bf16.gmra.mrb[0].mxu0 %v1846
        %v1885 = vpop.f32.mrb[0].mxu0
        %v1886 = vadd.f32 0.0, %v1885
        %v1887 = vpop.f32.mrb[0].mxu0
        %v1888 = vpop.f32.mrb[0].mxu0
        %v1889 = vpop.f32.mrb[0].mxu0
        %1890 = vdwg.mxu0
        %1892 = vrot.lane.b32.xlu0 %v1782, 120
        %v1893 = vpop.permute.xlu0 %1892
        %1894 = vrot.lane.b32.xlu0 %v1783, 120
        %v1895 = vpop.permute.xlu0 %1894
        %v1897 = vsel %vm1084, %v1893, 0
        %v1900 = vsel %vm1084, %v1895, 0
        %1902 = vmatprep.subr.bf16.mxu0 0
        %1903 = vmatpush1.bf16.xpose.msra.mxu0 %v1900
        %1904 = vmatprep.subr.bf16.mxu0 0
        %1905 = vmatpush1.bf16.xpose.msra.mxu0 0
        %1906 = vmatprep.subr.bf16.mxu0 0
        %1907 = vmatpush1.bf16.xpose.msra.mxu0 0
        %1908 = vmatprep.subr.bf16.mxu0 0
        %1909 = vmatpush1.bf16.xpose.msra.mxu0 0
        %1910 = vmatprep.subr.bf16.mxu0 0
        %1911 = vmatpush1.bf16.xpose.msra.mxu0 0
        %1912 = vmatprep.subr.bf16.mxu0 0
        %1913 = vmatpush1.bf16.xpose.msra.mxu0 0
        %1914 = vmatprep.subr.bf16.mxu0 0
        %1915 = vmatpush1.bf16.xpose.msra.mxu0 0
        %1916 = vmatprep.subr.bf16.mxu0 0
        %1917 = vmatpush1.bf16.xpose.msra.mxu0 0
        %1918 = vmatprep.subr.bf16.mxu0 0
        %1919 = vmatpush1.bf16.xpose.msra.mxu0 0
        %1920 = vmatprep.subr.bf16.mxu0 0
        %1921 = vmatpush1.bf16.xpose.msra.mxu0 0
        %1922 = vmatprep.subr.bf16.mxu0 0
        %1923 = vmatpush1.bf16.xpose.msra.mxu0 0
        %1924 = vmatprep.subr.bf16.mxu0 0
        %1925 = vmatpush1.bf16.xpose.msra.mxu0 0
        %1926 = vmatprep.subr.bf16.mxu0 0
        %1927 = vmatpush1.bf16.xpose.msra.mxu0 0
        %1928 = vmatprep.subr.bf16.mxu0 0
        %1929 = vmatpush1.bf16.xpose.msra.mxu0 0
        %1930 = vmatprep.subr.bf16.mxu0 0
        %1931 = vmatpush1.bf16.xpose.msra.mxu0 0
        %1932 = vmatprep.subr.bf16.mxu0 0
        %1933 = vmatpush1.bf16.xpose.msra.mxu0 0
        %1934 = vmatprep.mubr.bf16.mxu0 0
        %1935 = vmatmul.mubr.bf16.gmra.mrb[0].mxu0 %v1897
        %v1936 = vpop.f32.mrb[0].mxu0
        %v1937 = vadd.f32 0.0, %v1936
        %v1938 = vpop.f32.mrb[0].mxu0
        %v1939 = vpop.f32.mrb[0].mxu0
        %v1940 = vpop.f32.mrb[0].mxu0
        %1941 = vdwg.mxu0
        %v1942 = vsel %vm1084, %v1937, -inf
        %1943 = vmax.xlane.f32.xlu0 %v1942
        %v1944 = vpop.xlane.xlu0 %1943
        %v1945 = vsub.f32 %v1937, %v1944
        %v1946 = vmul.f32 %v1945, 1.442695
        %v1947 = vpow.pop %v1946
        %v1948 = vsel %vm1084, %v1947, 0.0
        %1949 = vadd.xlane.f32.xlu0 %v1948
        %v1950 = vpop.xlane.xlu0 %1949
        %v1951 = vrcp.pop %v1950
        %v1952 = vmul.f32 %v1947, %v1951
        %v1953 = vpack.c.bf16 %v1952, %v1952
        %1954 = vrot.lane.b32.xlu0 %v1783, 88
        %v1955 = vpop.permute.xlu0 %1954
        %v1957 = vsel %vm1084, %v1953, 0
        %v1960 = vsel %vm1151, %v1955, 0
        %1962 = vmatprep.subr.bf16.mxu0 0
        %1963 = vmatpush1.bf16.msra.mxu0 %v1960
        %1964 = vmatprep.subr.bf16.mxu0 0
        %1965 = vmatpush1.bf16.msra.mxu0 0
        %1966 = vmatprep.subr.bf16.mxu0 0
        %1967 = vmatpush1.bf16.msra.mxu0 0
        %1968 = vmatprep.subr.bf16.mxu0 0
        %1969 = vmatpush1.bf16.msra.mxu0 0
        %1970 = vmatprep.subr.bf16.mxu0 0
        %1971 = vmatpush1.bf16.msra.mxu0 0
        %1972 = vmatprep.subr.bf16.mxu0 0
        %1973 = vmatpush1.bf16.msra.mxu0 0
        %1974 = vmatprep.subr.bf16.mxu0 0
        %1975 = vmatpush1.bf16.msra.mxu0 0
        %1976 = vmatprep.subr.bf16.mxu0 0
        %1977 = vmatpush1.bf16.msra.mxu0 0
        %1978 = vmatprep.subr.bf16.mxu0 0
        %1979 = vmatpush1.bf16.msra.mxu0 0
        %1980 = vmatprep.subr.bf16.mxu0 0
        %1981 = vmatpush1.bf16.msra.mxu0 0
        %1982 = vmatprep.subr.bf16.mxu0 0
        %1983 = vmatpush1.bf16.msra.mxu0 0
        %1984 = vmatprep.subr.bf16.mxu0 0
        %1985 = vmatpush1.bf16.msra.mxu0 0
        %1986 = vmatprep.subr.bf16.mxu0 0
        %1987 = vmatpush1.bf16.msra.mxu0 0
        %1988 = vmatprep.subr.bf16.mxu0 0
        %1989 = vmatpush1.bf16.msra.mxu0 0
        %1990 = vmatprep.subr.bf16.mxu0 0
        %1991 = vmatpush1.bf16.msra.mxu0 0
        %1992 = vmatprep.subr.bf16.mxu0 0
        %1993 = vmatpush1.bf16.msra.mxu0 0
        %1994 = vmatprep.mubr.bf16.mxu0 0
        %1995 = vmatmul.mubr.bf16.gmra.mrb[0].mxu0 %v1957
        %v1996 = vpop.f32.mrb[0].mxu0
        %v1997 = vadd.f32 0.0, %v1996
        %v1998 = vpop.f32.mrb[0].mxu0
        %v1999 = vpop.f32.mrb[0].mxu0
        %v2000 = vpop.f32.mrb[0].mxu0
        %2001 = vdwg.mxu0
        %2002 = vrot.lane.b32.xlu0 %v1782, 112
        %v2003 = vpop.permute.xlu0 %2002
        %2004 = vrot.lane.b32.xlu0 %v1783, 112
        %v2005 = vpop.permute.xlu0 %2004
        %v2007 = vsel %vm1084, %v2003, 0
        %v2010 = vsel %vm1084, %v2005, 0
        %2012 = vmatprep.subr.bf16.mxu0 0
        %2013 = vmatpush1.bf16.xpose.msra.mxu0 %v2010
        %2014 = vmatprep.subr.bf16.mxu0 0
        %2015 = vmatpush1.bf16.xpose.msra.mxu0 0
        %2016 = vmatprep.subr.bf16.mxu0 0
        %2017 = vmatpush1.bf16.xpose.msra.mxu0 0
        %2018 = vmatprep.subr.bf16.mxu0 0
        %2019 = vmatpush1.bf16.xpose.msra.mxu0 0
        %2020 = vmatprep.subr.bf16.mxu0 0
        %2021 = vmatpush1.bf16.xpose.msra.mxu0 0
        %2022 = vmatprep.subr.bf16.mxu0 0
        %2023 = vmatpush1.bf16.xpose.msra.mxu0 0
        %2024 = vmatprep.subr.bf16.mxu0 0
        %2025 = vmatpush1.bf16.xpose.msra.mxu0 0
        %2026 = vmatprep.subr.bf16.mxu0 0
        %2027 = vmatpush1.bf16.xpose.msra.mxu0 0
        %2028 = vmatprep.subr.bf16.mxu0 0
        %2029 = vmatpush1.bf16.xpose.msra.mxu0 0
        %2030 = vmatprep.subr.bf16.mxu0 0
        %2031 = vmatpush1.bf16.xpose.msra.mxu0 0
        %2032 = vmatprep.subr.bf16.mxu0 0
        %2033 = vmatpush1.bf16.xpose.msra.mxu0 0
        %2034 = vmatprep.subr.bf16.mxu0 0
        %2035 = vmatpush1.bf16.xpose.msra.mxu0 0
        %2036 = vmatprep.subr.bf16.mxu0 0
        %2037 = vmatpush1.bf16.xpose.msra.mxu0 0
        %2038 = vmatprep.subr.bf16.mxu0 0
        %2039 = vmatpush1.bf16.xpose.msra.mxu0 0
        %2040 = vmatprep.subr.bf16.mxu0 0
        %2041 = vmatpush1.bf16.xpose.msra.mxu0 0
        %2042 = vmatprep.subr.bf16.mxu0 0
        %2043 = vmatpush1.bf16.xpose.msra.mxu0 0
        %2044 = vmatprep.mubr.bf16.mxu0 0
        %2045 = vmatmul.mubr.bf16.gmra.mrb[0].mxu0 %v2007
        %v2046 = vpop.f32.mrb[0].mxu0
        %v2047 = vadd.f32 0.0, %v2046
        %v2048 = vpop.f32.mrb[0].mxu0
        %v2049 = vpop.f32.mrb[0].mxu0
        %v2050 = vpop.f32.mrb[0].mxu0
        %2051 = vdwg.mxu0
        %v2052 = vsel %vm1084, %v2047, -inf
        %2053 = vmax.xlane.f32.xlu0 %v2052
        %v2054 = vpop.xlane.xlu0 %2053
        %v2055 = vsub.f32 %v2047, %v2054
        %v2056 = vmul.f32 %v2055, 1.442695
        %v2057 = vpow.pop %v2056
        %v2058 = vsel %vm1084, %v2057, 0.0
        %2059 = vadd.xlane.f32.xlu0 %v2058
        %v2060 = vpop.xlane.xlu0 %2059
        %v2061 = vrcp.pop %v2060
        %v2062 = vmul.f32 %v2057, %v2061
        %v2063 = vpack.c.bf16 %v2062, %v2062
        %2064 = vrot.lane.b32.xlu0 %v1783, 80
        %v2065 = vpop.permute.xlu0 %2064
        %v2067 = vsel %vm1084, %v2063, 0
        %v2070 = vsel %vm1151, %v2065, 0
        %2072 = vmatprep.subr.bf16.mxu0 0
        %2073 = vmatpush1.bf16.msra.mxu0 %v2070
        %2074 = vmatprep.subr.bf16.mxu0 0
        %2075 = vmatpush1.bf16.msra.mxu0 0
        %2076 = vmatprep.subr.bf16.mxu0 0
        %2077 = vmatpush1.bf16.msra.mxu0 0
        %2078 = vmatprep.subr.bf16.mxu0 0
        %2079 = vmatpush1.bf16.msra.mxu0 0
        %2080 = vmatprep.subr.bf16.mxu0 0
        %2081 = vmatpush1.bf16.msra.mxu0 0
        %2082 = vmatprep.subr.bf16.mxu0 0
        %2083 = vmatpush1.bf16.msra.mxu0 0
        %2084 = vmatprep.subr.bf16.mxu0 0
        %2085 = vmatpush1.bf16.msra.mxu0 0
        %2086 = vmatprep.subr.bf16.mxu0 0
        %2087 = vmatpush1.bf16.msra.mxu0 0
        %2088 = vmatprep.subr.bf16.mxu0 0
        %2089 = vmatpush1.bf16.msra.mxu0 0
        %2090 = vmatprep.subr.bf16.mxu0 0
        %2091 = vmatpush1.bf16.msra.mxu0 0
        %2092 = vmatprep.subr.bf16.mxu0 0
        %2093 = vmatpush1.bf16.msra.mxu0 0
        %2094 = vmatprep.subr.bf16.mxu0 0
        %2095 = vmatpush1.bf16.msra.mxu0 0
        %2096 = vmatprep.subr.bf16.mxu0 0
        %2097 = vmatpush1.bf16.msra.mxu0 0
        %2098 = vmatprep.subr.bf16.mxu0 0
        %2099 = vmatpush1.bf16.msra.mxu0 0
        %2100 = vmatprep.subr.bf16.mxu0 0
        %2101 = vmatpush1.bf16.msra.mxu0 0
        %2102 = vmatprep.subr.bf16.mxu0 0
        %2103 = vmatpush1.bf16.msra.mxu0 0
        %2104 = vmatprep.mubr.bf16.mxu0 0
        %2105 = vmatmul.mubr.bf16.gmra.mrb[0].mxu0 %v2067
        %v2106 = vpop.f32.mrb[0].mxu0
        %v2107 = vadd.f32 0.0, %v2106
        %v2108 = vpop.f32.mrb[0].mxu0
        %v2109 = vpop.f32.mrb[0].mxu0
        %v2110 = vpop.f32.mrb[0].mxu0
        %2111 = vdwg.mxu0
        %2112 = vrot.lane.b32.xlu0 %v1782, 104
        %v2113 = vpop.permute.xlu0 %2112
        %2114 = vrot.lane.b32.xlu0 %v1783, 104
        %v2115 = vpop.permute.xlu0 %2114
        %v2117 = vsel %vm1084, %v2113, 0
        %v2120 = vsel %vm1084, %v2115, 0
        %2122 = vmatprep.subr.bf16.mxu0 0
        %2123 = vmatpush1.bf16.xpose.msra.mxu0 %v2120
        %2124 = vmatprep.subr.bf16.mxu0 0
        %2125 = vmatpush1.bf16.xpose.msra.mxu0 0
        %2126 = vmatprep.subr.bf16.mxu0 0
        %2127 = vmatpush1.bf16.xpose.msra.mxu0 0
        %2128 = vmatprep.subr.bf16.mxu0 0
        %2129 = vmatpush1.bf16.xpose.msra.mxu0 0
        %2130 = vmatprep.subr.bf16.mxu0 0
        %2131 = vmatpush1.bf16.xpose.msra.mxu0 0
        %2132 = vmatprep.subr.bf16.mxu0 0
        %2133 = vmatpush1.bf16.xpose.msra.mxu0 0
        %2134 = vmatprep.subr.bf16.mxu0 0
        %2135 = vmatpush1.bf16.xpose.msra.mxu0 0
        %2136 = vmatprep.subr.bf16.mxu0 0
        %2137 = vmatpush1.bf16.xpose.msra.mxu0 0
        %2138 = vmatprep.subr.bf16.mxu0 0
        %2139 = vmatpush1.bf16.xpose.msra.mxu0 0
        %2140 = vmatprep.subr.bf16.mxu0 0
        %2141 = vmatpush1.bf16.xpose.msra.mxu0 0
        %2142 = vmatprep.subr.bf16.mxu0 0
        %2143 = vmatpush1.bf16.xpose.msra.mxu0 0
        %2144 = vmatprep.subr.bf16.mxu0 0
        %2145 = vmatpush1.bf16.xpose.msra.mxu0 0
        %2146 = vmatprep.subr.bf16.mxu0 0
        %2147 = vmatpush1.bf16.xpose.msra.mxu0 0
        %2148 = vmatprep.subr.bf16.mxu0 0
        %2149 = vmatpush1.bf16.xpose.msra.mxu0 0
        %2150 = vmatprep.subr.bf16.mxu0 0
        %2151 = vmatpush1.bf16.xpose.msra.mxu0 0
        %2152 = vmatprep.subr.bf16.mxu0 0
        %2153 = vmatpush1.bf16.xpose.msra.mxu0 0
        %2154 = vmatprep.mubr.bf16.mxu0 0
        %2155 = vmatmul.mubr.bf16.gmra.mrb[0].mxu0 %v2117
        %v2156 = vpop.f32.mrb[0].mxu0
        %v2157 = vadd.f32 0.0, %v2156
        %v2158 = vpop.f32.mrb[0].mxu0
        %v2159 = vpop.f32.mrb[0].mxu0
        %v2160 = vpop.f32.mrb[0].mxu0
        %2161 = vdwg.mxu0
        %v2162 = vsel %vm1084, %v2157, -inf
        %2163 = vmax.xlane.f32.xlu0 %v2162
        %v2164 = vpop.xlane.xlu0 %2163
        %v2165 = vsub.f32 %v2157, %v2164
        %v2166 = vmul.f32 %v2165, 1.442695
        %v2167 = vpow.pop %v2166
        %v2168 = vsel %vm1084, %v2167, 0.0
        %2169 = vadd.xlane.f32.xlu0 %v2168
        %v2170 = vpop.xlane.xlu0 %2169
        %v2171 = vrcp.pop %v2170
        %v2172 = vmul.f32 %v2167, %v2171
        %v2173 = vpack.c.bf16 %v2172, %v2172
        %2174 = vrot.lane.b32.xlu0 %v1783, 72
        %v2175 = vpop.permute.xlu0 %2174
        %v2177 = vsel %vm1084, %v2173, 0
        %v2180 = vsel %vm1151, %v2175, 0
        %2182 = vmatprep.subr.bf16.mxu0 0
        %2183 = vmatpush1.bf16.msra.mxu0 %v2180
        %2184 = vmatprep.subr.bf16.mxu0 0
        %2185 = vmatpush1.bf16.msra.mxu0 0
        %2186 = vmatprep.subr.bf16.mxu0 0
        %2187 = vmatpush1.bf16.msra.mxu0 0
        %2188 = vmatprep.subr.bf16.mxu0 0
        %2189 = vmatpush1.bf16.msra.mxu0 0
        %2190 = vmatprep.subr.bf16.mxu0 0
        %2191 = vmatpush1.bf16.msra.mxu0 0
        %2192 = vmatprep.subr.bf16.mxu0 0
        %2193 = vmatpush1.bf16.msra.mxu0 0
        %2194 = vmatprep.subr.bf16.mxu0 0
        %2195 = vmatpush1.bf16.msra.mxu0 0
        %2196 = vmatprep.subr.bf16.mxu0 0
        %2197 = vmatpush1.bf16.msra.mxu0 0
        %2198 = vmatprep.subr.bf16.mxu0 0
        %2199 = vmatpush1.bf16.msra.mxu0 0
        %2200 = vmatprep.subr.bf16.mxu0 0
        %2201 = vmatpush1.bf16.msra.mxu0 0
        %2202 = vmatprep.subr.bf16.mxu0 0
        %2203 = vmatpush1.bf16.msra.mxu0 0
        %2204 = vmatprep.subr.bf16.mxu0 0
        %2205 = vmatpush1.bf16.msra.mxu0 0
        %2206 = vmatprep.subr.bf16.mxu0 0
        %2207 = vmatpush1.bf16.msra.mxu0 0
        %2208 = vmatprep.subr.bf16.mxu0 0
        %2209 = vmatpush1.bf16.msra.mxu0 0
        %2210 = vmatprep.subr.bf16.mxu0 0
        %2211 = vmatpush1.bf16.msra.mxu0 0
        %2212 = vmatprep.subr.bf16.mxu0 0
        %2213 = vmatpush1.bf16.msra.mxu0 0
        %2214 = vmatprep.mubr.bf16.mxu0 0
        %2215 = vmatmul.mubr.bf16.gmra.mrb[0].mxu0 %v2177
        %v2216 = vpop.f32.mrb[0].mxu0
        %v2217 = vadd.f32 0.0, %v2216
        %v2218 = vpop.f32.mrb[0].mxu0
        %v2219 = vpop.f32.mrb[0].mxu0
        %v2220 = vpop.f32.mrb[0].mxu0
        %2221 = vdwg.mxu0
        %2223 = vrot.lane.b32.xlu0 %v1997, 8
        %v2224 = vpop.permute.xlu0 %2223
        %2227 = vrot.lane.b32.xlu0 %v2107, 16
        %v2228 = vpop.permute.xlu0 %2227
        %2231 = vrot.lane.b32.xlu0 %v2217, 24
        %v2232 = vpop.permute.xlu0 %2231
        %v2234 = vsel %vm1084, %v1886, %v2224
        %v2235 = vsel %vm1545, %v2234, %v2228
        %v2236 = vsel %vm1547, %v2235, %v2232
        %v2237 = vpack.c.bf16 %v2236, %v2236
        %v2238 = vld [vmem:[#allocation15] sm:$0xf]
        %v2239 = vld [vmem:[#allocation15 + $0x4] sm:$0xf]
        %v2240 = vld [vmem:[#allocation15 + $0x8] sm:$0xf]
        %v2241 = vld [vmem:[#allocation15 + $0xc] sm:$0xf]
        %v2242 = vld [vmem:[#allocation16] sm:$0x1]
        %v2244 = vlaneseq
        %v2245 = vshrl.u32 %v2244, 7
        %v2246 = vsub.s32 0, %v2245
        %v2247 = vrot.slane %v2242, %v2246
        %v2253 = vunpack.c.l.b16 %v2238
        %v2254 = vunpack.c.l.b16 %v2239
        %v2255 = vunpack.c.l.b16 %v2240
        %v2256 = vunpack.c.l.b16 %v2241
        %v2257 = vpack.c.b16 %v2254, %v2253
        %v2258 = vpack.c.b16 %v2256, %v2255
        %v2262 = vsel %vm1034, %v2237, 0
        %2264 = vmatprep.subr.bf16.mxu0 0
        %2265 = vmatpush1.bf16.msra.mxu0 %v2257
        %2266 = vmatprep.subr.bf16.mxu0 0
        %2267 = vmatpush1.bf16.msra.mxu0 %v2258
        %2268 = vmatprep.subr.bf16.mxu0 0
        %2269 = vmatpush1.bf16.msra.mxu0 0
        %2270 = vmatprep.subr.bf16.mxu0 0
        %2271 = vmatpush1.bf16.msra.mxu0 0
        %2272 = vmatprep.subr.bf16.mxu0 0
        %2273 = vmatpush1.bf16.msra.mxu0 0
        %2274 = vmatprep.subr.bf16.mxu0 0
        %2275 = vmatpush1.bf16.msra.mxu0 0
        %2276 = vmatprep.subr.bf16.mxu0 0
        %2277 = vmatpush1.bf16.msra.mxu0 0
        %2278 = vmatprep.subr.bf16.mxu0 0
        %2279 = vmatpush1.bf16.msra.mxu0 0
        %2280 = vmatprep.subr.bf16.mxu0 0
        %2281 = vmatpush1.bf16.msra.mxu0 0
        %2282 = vmatprep.subr.bf16.mxu0 0
        %2283 = vmatpush1.bf16.msra.mxu0 0
        %2284 = vmatprep.subr.bf16.mxu0 0
        %2285 = vmatpush1.bf16.msra.mxu0 0
        %2286 = vmatprep.subr.bf16.mxu0 0
        %2287 = vmatpush1.bf16.msra.mxu0 0
        %2288 = vmatprep.subr.bf16.mxu0 0
        %2289 = vmatpush1.bf16.msra.mxu0 0
        %2290 = vmatprep.subr.bf16.mxu0 0
        %2291 = vmatpush1.bf16.msra.mxu0 0
        %2292 = vmatprep.subr.bf16.mxu0 0
        %2293 = vmatpush1.bf16.msra.mxu0 0
        %2294 = vmatprep.subr.bf16.mxu0 0
        %2295 = vmatpush1.bf16.msra.mxu0 0
        %2296 = vmatprep.mubr.bf16.mxu0 0
        %2297 = vmatmul.mubr.bf16.gmra.mrb[0].mxu0 %v2262
        %v2298 = vpop.f32.mrb[0].mxu0
        %v2299 = vadd.f32 %v2247, %v2298
        %v2300 = vpop.f32.mrb[0].mxu0
        %v2301 = vpop.f32.mrb[0].mxu0
        %v2302 = vpop.f32.mrb[0].mxu0
        %2303 = vdwg.mxu0
        %v2304 = vadd.f32 %v2299, %v1646
        %v2305 = vsel %vm1034, %v2304, 0.0
        %2306 = vadd.xlane.f32.xlu0 %v2305
        %v2307 = vpop.xlane.xlu0 %2306
        %v2308 = vmul.f32 %v2307, %v1620
        %v2309 = vsub.f32 %v2304, %v2308
        %v2310 = vmul.f32 %v2309, %v2309
        %v2311 = vsel %vm1034, %v2310, 0.0
        %2312 = vadd.xlane.f32.xlu0 %v2311
        %v2313 = vpop.xlane.xlu0 %2312
        %v2314 = vmul.f32 %v2313, %v1620
        %v2315 = vadd.f32 %v2314, 1e-05
        %v2316 = vrsqrt.pop %v2315
        %v2317 = vmul.f32 %v2309, %v2316
        %v2318 = vld [vmem:[#allocation18] sm:$0x1]
        %v2320 = vlaneseq
        %v2321 = vshrl.u32 %v2320, 7
        %v2322 = vsub.s32 0, %v2321
        %v2323 = vrot.slane %v2318, %v2322
        %v2325 = vmul.f32 %v2317, %v2323
        %v2326 = vld [vmem:[#allocation19] sm:$0x1]
        %v2328 = vlaneseq
        %v2329 = vshrl.u32 %v2328, 7
        %v2330 = vsub.s32 0, %v2329
        %v2331 = vrot.slane %v2326, %v2330
        %v2333 = vadd.f32 %v2325, %v2331
        %v2334 = vpack.c.bf16 %v2333, %v2333
        %v2335 = vld [vmem:[#allocation21] sm:$0xf]
        %v2336 = vld [vmem:[#allocation21 + $0x4] sm:$0xf]
        %v2337 = vld [vmem:[#allocation21 + $0x8] sm:$0xf]
        %v2338 = vld [vmem:[#allocation21 + $0xc] sm:$0xf]
        %v2339 = vld [vmem:[#allocation22] sm:$0x1]
        %v2341 = vlaneseq
        %v2342 = vshrl.u32 %v2341, 7
        %v2343 = vsub.s32 0, %v2342
        %v2344 = vrot.slane %v2339, %v2343
        %v2350 = vunpack.c.l.b16 %v2335
        %v2351 = vunpack.c.l.b16 %v2336
        %v2352 = vunpack.c.l.b16 %v2337
        %v2353 = vunpack.c.l.b16 %v2338
        %v2354 = vpack.c.b16 %v2351, %v2350
        %v2355 = vpack.c.b16 %v2353, %v2352
        %v2359 = vsel %vm1034, %v2334, 0
        %2361 = vmatprep.subr.bf16.mxu0 0
        %2362 = vmatpush1.bf16.msra.mxu0 %v2354
        %2363 = vmatprep.subr.bf16.mxu0 0
        %2364 = vmatpush1.bf16.msra.mxu0 %v2355
        %2365 = vmatprep.subr.bf16.mxu0 0
        %2366 = vmatpush1.bf16.msra.mxu0 0
        %2367 = vmatprep.subr.bf16.mxu0 0
        %2368 = vmatpush1.bf16.msra.mxu0 0
        %2369 = vmatprep.subr.bf16.mxu0 0
        %2370 = vmatpush1.bf16.msra.mxu0 0
        %2371 = vmatprep.subr.bf16.mxu0 0
        %2372 = vmatpush1.bf16.msra.mxu0 0
        %2373 = vmatprep.subr.bf16.mxu0 0
        %2374 = vmatpush1.bf16.msra.mxu0 0
        %2375 = vmatprep.subr.bf16.mxu0 0
        %2376 = vmatpush1.bf16.msra.mxu0 0
        %2377 = vmatprep.subr.bf16.mxu0 0
        %2378 = vmatpush1.bf16.msra.mxu0 0
        %2379 = vmatprep.subr.bf16.mxu0 0
        %2380 = vmatpush1.bf16.msra.mxu0 0
        %2381 = vmatprep.subr.bf16.mxu0 0
        %2382 = vmatpush1.bf16.msra.mxu0 0
        %2383 = vmatprep.subr.bf16.mxu0 0
        %2384 = vmatpush1.bf16.msra.mxu0 0
        %2385 = vmatprep.subr.bf16.mxu0 0
        %2386 = vmatpush1.bf16.msra.mxu0 0
        %2387 = vmatprep.subr.bf16.mxu0 0
        %2388 = vmatpush1.bf16.msra.mxu0 0
        %2389 = vmatprep.subr.bf16.mxu0 0
        %2390 = vmatpush1.bf16.msra.mxu0 0
        %2391 = vmatprep.subr.bf16.mxu0 0
        %2392 = vmatpush1.bf16.msra.mxu0 0
        %2393 = vmatprep.mubr.bf16.mxu0 0
        %2394 = vmatmul.mubr.bf16.gmra.mrb[0].mxu0 %v2359
        %v2395 = vpop.f32.mrb[0].mxu0
        %v2396 = vadd.f32 %v2344, %v2395
        %v2397 = vpop.f32.mrb[0].mxu0
        %v2398 = vpop.f32.mrb[0].mxu0
        %v2399 = vpop.f32.mrb[0].mxu0
        %2400 = vdwg.mxu0
        %v2401 = vmax.f32 %v2396, 0.0
        %v2402 = vpack.c.bf16 %v2401, %v2401
        %v2403 = vld [vmem:[%s20] sm:$0xf]
        %v2404 = vld [vmem:[%s20 + $0x4] sm:$0xf]
        %v2405 = vld [vmem:[%s20 + $0x8] sm:$0xf]
        %v2406 = vld [vmem:[%s20 + $0xc] sm:$0xf]
        %v2407 = vld [vmem:[%s20 + $0x10] sm:$0xf]
        %v2408 = vld [vmem:[%s20 + $0x14] sm:$0xf]
        %v2409 = vld [vmem:[%s20 + $0x18] sm:$0xf]
        %v2410 = vld [vmem:[%s20 + $0x1c] sm:$0xf]
        %v2411 = vld [vmem:[#allocation24] sm:$0x1]
        %v2413 = vlaneseq
        %v2414 = vshrl.u32 %v2413, 7
        %v2415 = vsub.s32 0, %v2414
        %v2416 = vrot.slane %v2411, %v2415
        %v2426 = vunpack.c.l.b16 %v2403
        %v2427 = vunpack.c.l.b16 %v2404
        %v2428 = vunpack.c.l.b16 %v2405
        %v2429 = vunpack.c.l.b16 %v2406
        %v2430 = vunpack.c.l.b16 %v2407
        %v2431 = vunpack.c.l.b16 %v2408
        %v2432 = vunpack.c.l.b16 %v2409
        %v2433 = vunpack.c.l.b16 %v2410
        %v2434 = vpack.c.b16 %v2427, %v2426
        %v2435 = vpack.c.b16 %v2429, %v2428
        %v2436 = vpack.c.b16 %v2431, %v2430
        %v2437 = vpack.c.b16 %v2433, %v2432
        %vm2442 = vcmask 523264
        %v2444 = vsel %vm2442, %v2402, 0
        %2446 = vmatprep.subr.bf16.mxu0 0
        %2447 = vmatpush1.bf16.msra.mxu0 %v2434
        %2448 = vmatprep.subr.bf16.mxu0 0
        %2449 = vmatpush1.bf16.msra.mxu0 %v2435
        %2450 = vmatprep.subr.bf16.mxu0 0
        %2451 = vmatpush1.bf16.msra.mxu0 %v2436
        %2452 = vmatprep.subr.bf16.mxu0 0
        %2453 = vmatpush1.bf16.msra.mxu0 %v2437
        %2454 = vmatprep.subr.bf16.mxu0 0
        %2455 = vmatpush1.bf16.msra.mxu0 0
        %2456 = vmatprep.subr.bf16.mxu0 0
        %2457 = vmatpush1.bf16.msra.mxu0 0
        %2458 = vmatprep.subr.bf16.mxu0 0
        %2459 = vmatpush1.bf16.msra.mxu0 0
        %2460 = vmatprep.subr.bf16.mxu0 0
        %2461 = vmatpush1.bf16.msra.mxu0 0
        %2462 = vmatprep.subr.bf16.mxu0 0
        %2463 = vmatpush1.bf16.msra.mxu0 0
        %2464 = vmatprep.subr.bf16.mxu0 0
        %2465 = vmatpush1.bf16.msra.mxu0 0
        %2466 = vmatprep.subr.bf16.mxu0 0
        %2467 = vmatpush1.bf16.msra.mxu0 0
        %2468 = vmatprep.subr.bf16.mxu0 0
        %2469 = vmatpush1.bf16.msra.mxu0 0
        %2470 = vmatprep.subr.bf16.mxu0 0
        %2471 = vmatpush1.bf16.msra.mxu0 0
        %2472 = vmatprep.subr.bf16.mxu0 0
        %2473 = vmatpush1.bf16.msra.mxu0 0
        %2474 = vmatprep.subr.bf16.mxu0 0
        %2475 = vmatpush1.bf16.msra.mxu0 0
        %2476 = vmatprep.subr.bf16.mxu0 0
        %2477 = vmatpush1.bf16.msra.mxu0 0
        %2478 = vmatprep.mubr.bf16.mxu0 0
        %2479 = vmatmul.mubr.bf16.gmra.mrb[0].mxu0 %v2444
        %v2480 = vpop.f32.mrb[0].mxu0
        %v2481 = vadd.f32 %v2416, %v2480
        %v2482 = vpop.f32.mrb[0].mxu0
        %v2483 = vpop.f32.mrb[0].mxu0
        %v2484 = vpop.f32.mrb[0].mxu0
        %2485 = vdwg.mxu0
        %v2486 = vadd.f32 %v2481, %v2333
        %v2487 = vsel %vm1034, %v2486, 0.0
        %2488 = vadd.xlane.f32.xlu0 %v2487
        %v2489 = vpop.xlane.xlu0 %2488
        %v2490 = vmul.f32 %v2489, %v1620
        %v2491 = vsub.f32 %v2486, %v2490
        %v2492 = vmul.f32 %v2491, %v2491
        %v2493 = vsel %vm1034, %v2492, 0.0
        %2494 = vadd.xlane.f32.xlu0 %v2493
        %v2495 = vpop.xlane.xlu0 %2494
        %v2496 = vmul.f32 %v2495, %v1620
        %v2497 = vadd.f32 %v2496, 1e-05
        %v2498 = vrsqrt.pop %v2497
        %v2499 = vmul.f32 %v2491, %v2498
        %v2500 = vld [vmem:[#allocation25] sm:$0x1]
        %v2502 = vlaneseq
        %v2503 = vshrl.u32 %v2502, 7
        %v2504 = vsub.s32 0, %v2503
        %v2505 = vrot.slane %v2500, %v2504
        %v2507 = vmul.f32 %v2499, %v2505
        %v2508 = vld [vmem:[#allocation27] sm:$0x1]
        %v2510 = vlaneseq
        %v2511 = vshrl.u32 %v2510, 7
        %v2512 = vsub.s32 0, %v2511
        %v2513 = vrot.slane %v2508, %v2512
        %v2515 = vadd.f32 %v2507, %v2513
        %2516 = vst.msk [vmem:[%s1004] sm:$0xff] %vm1034, %v2515
        %p2517 = scmp.lt.s32.totalorder %s44, 1
        %s2518 = scalar_select %p2517, %s44, 1
        %s2519 = smul.addr %s2518, 8
        %s2520 = scalar_lea.vmem %s24, %s2519
        // Predicated region
        $region185: #{decoder_forward.2} parent=115 // pred_check
          %p2521 = pneg %p586
        $region186: #{decoder_forward.2} parent=115 // pred_check_branch
          %2523 = sbr.rel (%p2521) target = $region188
        $region187: #{decoder_forward.2} parent=115 // pred_region
          _
        $region188: #{decoder_forward.2} parent=115 // pred_fallthru
          _
      $region116: #{decoder_forward.2} parent=5 // pred_fallthru
        _
      %p2524 = scmp.le.s32.totalorder 2, %s39
      // Predicated region
      $region189: #{decoder_forward.2} parent=5 // pred_check
        %p2525 = pneg %p2524
      $region190: #{decoder_forward.2} parent=5 // pred_check_branch
        %2527 = sbr.rel (%p2525) target = $region192
      $region191: #{decoder_forward.2} parent=5 // pred_region
        %s2528 = ssub.s32 %s39, 2
        // Predicated region
        $region193: #{decoder_forward.2} parent=191 // pred_check
          %p2529 = pneg %p592
        $region194: #{decoder_forward.2} parent=191 // pred_check_branch
          %2531 = sbr.rel (%p2529) target = $region196
        $region195: #{decoder_forward.2} parent=191 // pred_region
          %p2532 = scmp.lt.s32.totalorder %s45, 1
          %s2533 = scalar_select %p2532, %s45, 1
          %s2534 = smul.addr %s2533, 8
          %s2535 = scalar_lea.vmem %s24, %s2534
        $region196: #{decoder_forward.2} parent=191 // pred_fallthru
          _
      $region192: #{decoder_forward.2} parent=5 // pred_fallthru
        _
    $region6: #{decoder_forward.2} parent=1 // loop_footer
      %s43 = sadd.s32 1, %s39
    $region7: #{decoder_forward.2} parent=1 // loop_footer_branch
      %38 = sbr.rel target = $region3
    $region8: #{decoder_forward.2} parent=1 // loop_exit
      _
    %2536 = vsyncpa [#allocation3], 1
    %s2537 = scalar_lea.sflag [#allocation3], 1
    %2538 = vsyncpa %s2537, 1
    %2539 = vsyncpa [#allocation5], 1
    %2540 = vsyncpa [#allocation8], 1
    %2541 = vsyncpa [#allocation11], 1
    %2542 = vsyncpa [#allocation14], 1
    %2543 = vsyncpa [#allocation17], 1
    %2544 = vsyncpa [#allocation20], 1
    %2545 = vsyncpa [#allocation23], 1
    %2546 = vsyncpa [#allocation26], 1

// kernel: decoder_forward.3
$region0: #{decoder_forward.3}
  #allocation0 [shape = 'u32[]', space=smem, size = 0x4, offset = 0x4, fixed_abs, tag = 'smem constant byte address 0x4 - core index']
  #allocation1 [shape = 'u32[144,128]{1,0:T(1,128)}', space=vmem, size = 0x12000, scoped, tag = 'internal scratch']
  %s0 = inlined_call_operand.vmem [shape: f32[16,32], index: 0, kind: input, shape index: {}]
  %s1 = inlined_call_operand.vmem [shape: f32[16,32], index: 1, kind: input, shape index: {}]
  %s2 = inlined_call_operand.vmem [shape: f32[2,8,8], index: 2, kind: input, shape index: {}]
  %s3 = inlined_call_operand.vmem [shape: f32[2,8,8], index: 3, kind: input, shape index: {}]
  %s4 = inlined_call_operand.vmem [shape: bf16[32,96], index: 4, kind: input, shape index: {}]
  %s5 = inlined_call_operand.vmem [shape: f32[1,96], index: 5, kind: input, shape index: {}]
  %s6 = inlined_call_operand.vmem [shape: bf16[32,32], index: 6, kind: input, shape index: {}]
  %s7 = inlined_call_operand.vmem [shape: f32[1,32], index: 7, kind: input, shape index: {}]
  %s8 = inlined_call_operand.vmem [shape: f32[1,32], index: 8, kind: input, shape index: {}]
  %s9 = inlined_call_operand.vmem [shape: f32[1,32], index: 9, kind: input, shape index: {}]
  %s10 = inlined_call_operand.vmem [shape: bf16[32,32], index: 10, kind: input, shape index: {}]
  %s11 = inlined_call_operand.vmem [shape: f32[1,32], index: 11, kind: input, shape index: {}]
  %s12 = inlined_call_operand.vmem [shape: bf16[32,64], index: 12, kind: input, shape index: {}]
  %s13 = inlined_call_operand.vmem [shape: f32[1,64], index: 13, kind: input, shape index: {}]
  %s14 = inlined_call_operand.vmem [shape: bf16[32,32], index: 14, kind: input, shape index: {}]
  %s15 = inlined_call_operand.vmem [shape: f32[1,32], index: 15, kind: input, shape index: {}]
  %s16 = inlined_call_operand.vmem [shape: f32[1,32], index: 16, kind: input, shape index: {}]
  %s17 = inlined_call_operand.vmem [shape: f32[1,32], index: 17, kind: input, shape index: {}]
  %s18 = inlined_call_operand.vmem [shape: bf16[32,64], index: 18, kind: input, shape index: {}]
  %s19 = inlined_call_operand.vmem [shape: f32[1,64], index: 19, kind: input, shape index: {}]
  %s20 = inlined_call_operand.vmem [shape: bf16[64,32], index: 20, kind: input, shape index: {}]
  %s21 = inlined_call_operand.vmem [shape: f32[1,32], index: 21, kind: input, shape index: {}]
  %s22 = inlined_call_operand.vmem [shape: f32[1,32], index: 22, kind: input, shape index: {}]
  %s23 = inlined_call_operand.vmem [shape: f32[1,32], index: 23, kind: input, shape index: {}]
  %s24 = inlined_call_operand.hbm [shape: f32[16,32], index: 24, kind: output, shape index: {}]
  %s25 = sld [smem:[#allocation0]]
  $region129: #{decoder_forward.3} parent=0
    _
  %s27 = ssub.s32 1, %s25
  %s28 = scalar_select 0, %s27, %s25
  $region1: #{decoder_forward.3} parent=0
    #allocation2 [shape = 'u8[8192]{0}', space=vmem, size = 0x2000, scoped, tag = 'output window, operand 0']
    #allocation3 [shape = 's32[2]{0}', space=sflag, size = 0x8, scoped, tag = 'scoped memory for decoder_forward.3']
    %29 = vsyncpa [#allocation3], 0
    %s30 = scalar_lea.sflag [#allocation3], 1
    %31 = vsyncpa %s30, 0
    loop: start=0, step=1, limit=4
    $region2: #{decoder_forward.3} parent=1 // loop_pre_header
      _
    $region3: #{decoder_forward.3} parent=1 // loop_header
      %s33 = sphi 0, %s37
      %p34 = scmp.ge.s32.totalorder %s33, 4
      %s43 = sphi 0, %s45
      %s46 = sphi 0, %s43
      %s47 = sphi 0, %s46
      %s63 = sphi 0, %s47
      %s69 = sphi 0, %s71
      %s72 = sphi 0, %s69
      %s73 = sphi 0, %s72
      %s89 = sphi 0, %s73
      %s95 = sphi 0, %s97
      %s98 = sphi 0, %s95
      %s99 = sphi 0, %s98
      %s115 = sphi 0, %s99
      %s121 = sphi 0, %s123
      %s124 = sphi 0, %s121
      %s125 = sphi 0, %s124
      %s141 = sphi 0, %s125
      %s145 = sphi 0, %s145
      %s147 = sphi 0, %s145
      %s148 = sphi 0, %s147
      %s162 = sphi 0, %s148
      %s166 = sphi 0, %s166
      %s168 = sphi 0, %s166
      %s169 = sphi 0, %s168
      %s183 = sphi 0, %s169
      %s187 = sphi 0, %s187
      %s189 = sphi 0, %s187
      %s190 = sphi 0, %s189
      %s204 = sphi 0, %s190
      %s208 = sphi 0, %s208
      %s210 = sphi 0, %s208
      %s211 = sphi 0, %s210
      %s225 = sphi 0, %s211
      %s229 = sphi 0, %s229
      %s231 = sphi 0, %s229
      %s232 = sphi 0, %s231
      %s246 = sphi 0, %s232
      %s250 = sphi 0, %s250
      %s252 = sphi 0, %s250
      %s253 = sphi 0, %s252
      %s267 = sphi 0, %s253
      %s271 = sphi 0, %s271
      %s273 = sphi 0, %s271
      %s274 = sphi 0, %s273
      %s288 = sphi 0, %s274
      %s292 = sphi 0, %s292
      %s294 = sphi 0, %s292
      %s295 = sphi 0, %s294
      %s309 = sphi 0, %s295
      %s313 = sphi 0, %s313
      %s315 = sphi 0, %s313
      %s316 = sphi 0, %s315
      %s330 = sphi 0, %s316
      %s334 = sphi 0, %s334
      %s336 = sphi 0, %s334
      %s337 = sphi 0, %s336
      %s351 = sphi 0, %s337
      %s355 = sphi 0, %s355
      %s357 = sphi 0, %s355
      %s358 = sphi 0, %s357
      %s372 = sphi 0, %s358
      %s376 = sphi 0, %s376
      %s378 = sphi 0, %s376
      %s379 = sphi 0, %s378
      %s393 = sphi 0, %s379
      %s397 = sphi 0, %s397
      %s399 = sphi 0, %s397
      %s400 = sphi 0, %s399
      %s414 = sphi 0, %s400
      %s418 = sphi 0, %s418
      %s420 = sphi 0, %s418
      %s421 = sphi 0, %s420
      %s435 = sphi 0, %s421
      %s439 = sphi 0, %s439
      %s441 = sphi 0, %s439
      %s442 = sphi 0, %s441
      %s456 = sphi 0, %s442
      %s460 = sphi 0, %s460
      %s462 = sphi 0, %s460
      %s463 = sphi 0, %s462
      %s477 = sphi 0, %s463
      %s481 = sphi 0, %s481
      %s483 = sphi 0, %s481
      %s484 = sphi 0, %s483
      %s498 = sphi 0, %s484
      %s502 = sphi 0, %s502
      %s504 = sphi 0, %s502
      %s505 = sphi 0, %s504
      %s519 = sphi 0, %s505
      %s523 = sphi 0, %s523
      %s525 = sphi 0, %s523
      %s526 = sphi 0, %s525
      %s540 = sphi 0, %s526
      %s544 = sphi 0, %s544
      %s546 = sphi 0, %s544
      %s547 = sphi 0, %s546
      %s561 = sphi 0, %s547
      %s567 = sphi 0, %s569
      %s570 = sphi 0, %s567
      %s571 = sphi 0, %s570
      %s587 = sphi 0, %s571
    $region4: #{decoder_forward.3} parent=1 // loop_header_branch
      %36 = sbr.rel (%p34) target = $region8
    $region5: #{decoder_forward.3} parent=1 // loop_body
      %s38 = ssub.s32 %s33, 1
      %s39 = ssub.s32 %s33, 2
      %s40 = sadd.s32 %s33, 1
      %s41 = ssub.s32 %s33, %s40
      %p42 = scmp.eq.s32.totalorder %s41, 0
      %s44 = sadd.s32 %s43, 1
      %s45 = scalar_select %p42, %s43, %s44
      %p48 = pneg %p42
      %p49 = scmp.eq.s32.totalorder %s33, 1
      %p50 = por %p48, %p49
      %p51 = scmp.ne.s32.totalorder %s43, %s46
      %p52 = scmp.eq.s32.totalorder %s33, 0
      %p53 = por %p51, %p52
      %p54 = scmp.ne.s32.totalorder %s43, %s46
      %p55 = scmp.eq.s32.totalorder %s38, 1
      %p56 = por %p54, %p55
      %p57 = scmp.ne.s32.totalorder %s46, %s47
      %p58 = scmp.eq.s32.totalorder %s38, 0
      %p59 = por %p57, %p58
      %p60 = scmp.ne.s32.totalorder %s46, %s47
      %p61 = scmp.eq.s32.totalorder %s39, 1
      %p62 = por %p60, %p61
      %p64 = scmp.ne.s32.totalorder %s47, %s63
      %p65 = scmp.eq.s32.totalorder %s39, 0
      %p66 = por %p64, %p65
      %s67 = ssub.s32 %s33, %s40
      %p68 = scmp.eq.s32.totalorder %s67, 0
      %s70 = sadd.s32 %s69, 1
      %s71 = scalar_select %p68, %s69, %s70
      %p74 = pneg %p68
      %p75 = scmp.eq.s32.totalorder %s33, 1
      %p76 = por %p74, %p75
      %p77 = scmp.ne.s32.totalorder %s69, %s72
      %p78 = scmp.eq.s32.totalorder %s33, 0
      %p79 = por %p77, %p78
      %p80 = scmp.ne.s32.totalorder %s69, %s72
      %p81 = scmp.eq.s32.totalorder %s38, 1
      %p82 = por %p80, %p81
      %p83 = scmp.ne.s32.totalorder %s72, %s73
      %p84 = scmp.eq.s32.totalorder %s38, 0
      %p85 = por %p83, %p84
      %p86 = scmp.ne.s32.totalorder %s72, %s73
      %p87 = scmp.eq.s32.totalorder %s39, 1
      %p88 = por %p86, %p87
      %p90 = scmp.ne.s32.totalorder %s73, %s89
      %p91 = scmp.eq.s32.totalorder %s39, 0
      %p92 = por %p90, %p91
      %s93 = ssub.s32 %s33, %s40
      %p94 = scmp.eq.s32.totalorder %s93, 0
      %s96 = sadd.s32 %s95, 1
      %s97 = scalar_select %p94, %s95, %s96
      %p100 = pneg %p94
      %p101 = scmp.eq.s32.totalorder %s33, 1
      %p102 = por %p100, %p101
      %p103 = scmp.ne.s32.totalorder %s95, %s98
      %p104 = scmp.eq.s32.totalorder %s33, 0
      %p105 = por %p103, %p104
      %p106 = scmp.ne.s32.totalorder %s95, %s98
      %p107 = scmp.eq.s32.totalorder %s38, 1
      %p108 = por %p106, %p107
      %p109 = scmp.ne.s32.totalorder %s98, %s99
      %p110 = scmp.eq.s32.totalorder %s38, 0
      %p111 = por %p109, %p110
      %p112 = scmp.ne.s32.totalorder %s98, %s99
      %p113 = scmp.eq.s32.totalorder %s39, 1
      %p114 = por %p112, %p113
      %p116 = scmp.ne.s32.totalorder %s99, %s115
      %p117 = scmp.eq.s32.totalorder %s39, 0
      %p118 = por %p116, %p117
      %s119 = ssub.s32 %s33, %s40
      %p120 = scmp.eq.s32.totalorder %s119, 0
      %s122 = sadd.s32 %s121, 1
      %s123 = scalar_select %p120, %s121, %s122
      %p126 = pneg %p120
      %p127 = scmp.eq.s32.totalorder %s33, 1
      %p128 = por %p126, %p127
      %p129 = scmp.ne.s32.totalorder %s121, %s124
      %p130 = scmp.eq.s32.totalorder %s33, 0
      %p131 = por %p129, %p130
      %p132 = scmp.ne.s32.totalorder %s121, %s124
      %p133 = scmp.eq.s32.totalorder %s38, 1
      %p134 = por %p132, %p133
      %p135 = scmp.ne.s32.totalorder %s124, %s125
      %p136 = scmp.eq.s32.totalorder %s38, 0
      %p137 = por %p135, %p136
      %p138 = scmp.ne.s32.totalorder %s124, %s125
      %p139 = scmp.eq.s32.totalorder %s39, 1
      %p140 = por %p138, %p139
      %p142 = scmp.ne.s32.totalorder %s125, %s141
      %p143 = scmp.eq.s32.totalorder %s39, 0
      %p144 = por %p142, %p143
      %s146 = sadd.s32 %s145, 1
      %p149 = scmp.eq.s32.totalorder %s33, 1
      %p150 = scmp.ne.s32.totalorder %s145, %s147
      %p151 = scmp.eq.s32.totalorder %s33, 0
      %p152 = por %p150, %p151
      %p153 = scmp.ne.s32.totalorder %s145, %s147
      %p154 = scmp.eq.s32.totalorder %s38, 1
      %p155 = por %p153, %p154
      %p156 = scmp.ne.s32.totalorder %s147, %s148
      %p157 = scmp.eq.s32.totalorder %s38, 0
      %p158 = por %p156, %p157
      %p159 = scmp.ne.s32.totalorder %s147, %s148
      %p160 = scmp.eq.s32.totalorder %s39, 1
      %p161 = por %p159, %p160
      %p163 = scmp.ne.s32.totalorder %s148, %s162
      %p164 = scmp.eq.s32.totalorder %s39, 0
      %p165 = por %p163, %p164
      %s167 = sadd.s32 %s166, 1
      %p170 = scmp.eq.s32.totalorder %s33, 1
      %p171 = scmp.ne.s32.totalorder %s166, %s168
      %p172 = scmp.eq.s32.totalorder %s33, 0
      %p173 = por %p171, %p172
      %p174 = scmp.ne.s32.totalorder %s166, %s168
      %p175 = scmp.eq.s32.totalorder %s38, 1
      %p176 = por %p174, %p175
      %p177 = scmp.ne.s32.totalorder %s168, %s169
      %p178 = scmp.eq.s32.totalorder %s38, 0
      %p179 = por %p177, %p178
      %p180 = scmp.ne.s32.totalorder %s168, %s169
      %p181 = scmp.eq.s32.totalorder %s39, 1
      %p182 = por %p180, %p181
      %p184 = scmp.ne.s32.totalorder %s169, %s183
      %p185 = scmp.eq.s32.totalorder %s39, 0
      %p186 = por %p184, %p185
      %s188 = sadd.s32 %s187, 1
      %p191 = scmp.eq.s32.totalorder %s33, 1
      %p192 = scmp.ne.s32.totalorder %s187, %s189
      %p193 = scmp.eq.s32.totalorder %s33, 0
      %p194 = por %p192, %p193
      %p195 = scmp.ne.s32.totalorder %s187, %s189
      %p196 = scmp.eq.s32.totalorder %s38, 1
      %p197 = por %p195, %p196
      %p198 = scmp.ne.s32.totalorder %s189, %s190
      %p199 = scmp.eq.s32.totalorder %s38, 0
      %p200 = por %p198, %p199
      %p201 = scmp.ne.s32.totalorder %s189, %s190
      %p202 = scmp.eq.s32.totalorder %s39, 1
      %p203 = por %p201, %p202
      %p205 = scmp.ne.s32.totalorder %s190, %s204
      %p206 = scmp.eq.s32.totalorder %s39, 0
      %p207 = por %p205, %p206
      %s209 = sadd.s32 %s208, 1
      %p212 = scmp.eq.s32.totalorder %s33, 1
      %p213 = scmp.ne.s32.totalorder %s208, %s210
      %p214 = scmp.eq.s32.totalorder %s33, 0
      %p215 = por %p213, %p214
      %p216 = scmp.ne.s32.totalorder %s208, %s210
      %p217 = scmp.eq.s32.totalorder %s38, 1
      %p218 = por %p216, %p217
      %p219 = scmp.ne.s32.totalorder %s210, %s211
      %p220 = scmp.eq.s32.totalorder %s38, 0
      %p221 = por %p219, %p220
      %p222 = scmp.ne.s32.totalorder %s210, %s211
      %p223 = scmp.eq.s32.totalorder %s39, 1
      %p224 = por %p222, %p223
      %p226 = scmp.ne.s32.totalorder %s211, %s225
      %p227 = scmp.eq.s32.totalorder %s39, 0
      %p228 = por %p226, %p227
      %s230 = sadd.s32 %s229, 1
      %p233 = scmp.eq.s32.totalorder %s33, 1
      %p234 = scmp.ne.s32.totalorder %s229, %s231
      %p235 = scmp.eq.s32.totalorder %s33, 0
      %p236 = por %p234, %p235
      %p237 = scmp.ne.s32.totalorder %s229, %s231
      %p238 = scmp.eq.s32.totalorder %s38, 1
      %p239 = por %p237, %p238
      %p240 = scmp.ne.s32.totalorder %s231, %s232
      %p241 = scmp.eq.s32.totalorder %s38, 0
      %p242 = por %p240, %p241
      %p243 = scmp.ne.s32.totalorder %s231, %s232
      %p244 = scmp.eq.s32.totalorder %s39, 1
      %p245 = por %p243, %p244
      %p247 = scmp.ne.s32.totalorder %s232, %s246
      %p248 = scmp.eq.s32.totalorder %s39, 0
      %p249 = por %p247, %p248
      %s251 = sadd.s32 %s250, 1
      %p254 = scmp.eq.s32.totalorder %s33, 1
      %p255 = scmp.ne.s32.totalorder %s250, %s252
      %p256 = scmp.eq.s32.totalorder %s33, 0
      %p257 = por %p255, %p256
      %p258 = scmp.ne.s32.totalorder %s250, %s252
      %p259 = scmp.eq.s32.totalorder %s38, 1
      %p260 = por %p258, %p259
      %p261 = scmp.ne.s32.totalorder %s252, %s253
      %p262 = scmp.eq.s32.totalorder %s38, 0
      %p263 = por %p261, %p262
      %p264 = scmp.ne.s32.totalorder %s252, %s253
      %p265 = scmp.eq.s32.totalorder %s39, 1
      %p266 = por %p264, %p265
      %p268 = scmp.ne.s32.totalorder %s253, %s267
      %p269 = scmp.eq.s32.totalorder %s39, 0
      %p270 = por %p268, %p269
      %s272 = sadd.s32 %s271, 1
      %p275 = scmp.eq.s32.totalorder %s33, 1
      %p276 = scmp.ne.s32.totalorder %s271, %s273
      %p277 = scmp.eq.s32.totalorder %s33, 0
      %p278 = por %p276, %p277
      %p279 = scmp.ne.s32.totalorder %s271, %s273
      %p280 = scmp.eq.s32.totalorder %s38, 1
      %p281 = por %p279, %p280
      %p282 = scmp.ne.s32.totalorder %s273, %s274
      %p283 = scmp.eq.s32.totalorder %s38, 0
      %p284 = por %p282, %p283
      %p285 = scmp.ne.s32.totalorder %s273, %s274
      %p286 = scmp.eq.s32.totalorder %s39, 1
      %p287 = por %p285, %p286
      %p289 = scmp.ne.s32.totalorder %s274, %s288
      %p290 = scmp.eq.s32.totalorder %s39, 0
      %p291 = por %p289, %p290
      %s293 = sadd.s32 %s292, 1
      %p296 = scmp.eq.s32.totalorder %s33, 1
      %p297 = scmp.ne.s32.totalorder %s292, %s294
      %p298 = scmp.eq.s32.totalorder %s33, 0
      %p299 = por %p297, %p298
      %p300 = scmp.ne.s32.totalorder %s292, %s294
      %p301 = scmp.eq.s32.totalorder %s38, 1
      %p302 = por %p300, %p301
      %p303 = scmp.ne.s32.totalorder %s294, %s295
      %p304 = scmp.eq.s32.totalorder %s38, 0
      %p305 = por %p303, %p304
      %p306 = scmp.ne.s32.totalorder %s294, %s295
      %p307 = scmp.eq.s32.totalorder %s39, 1
      %p308 = por %p306, %p307
      %p310 = scmp.ne.s32.totalorder %s295, %s309
      %p311 = scmp.eq.s32.totalorder %s39, 0
      %p312 = por %p310, %p311
      %s314 = sadd.s32 %s313, 1
      %p317 = scmp.eq.s32.totalorder %s33, 1
      %p318 = scmp.ne.s32.totalorder %s313, %s315
      %p319 = scmp.eq.s32.totalorder %s33, 0
      %p320 = por %p318, %p319
      %p321 = scmp.ne.s32.totalorder %s313, %s315
      %p322 = scmp.eq.s32.totalorder %s38, 1
      %p323 = por %p321, %p322
      %p324 = scmp.ne.s32.totalorder %s315, %s316
      %p325 = scmp.eq.s32.totalorder %s38, 0
      %p326 = por %p324, %p325
      %p327 = scmp.ne.s32.totalorder %s315, %s316
      %p328 = scmp.eq.s32.totalorder %s39, 1
      %p329 = por %p327, %p328
      %p331 = scmp.ne.s32.totalorder %s316, %s330
      %p332 = scmp.eq.s32.totalorder %s39, 0
      %p333 = por %p331, %p332
      %s335 = sadd.s32 %s334, 1
      %p338 = scmp.eq.s32.totalorder %s33, 1
      %p339 = scmp.ne.s32.totalorder %s334, %s336
      %p340 = scmp.eq.s32.totalorder %s33, 0
      %p341 = por %p339, %p340
      %p342 = scmp.ne.s32.totalorder %s334, %s336
      %p343 = scmp.eq.s32.totalorder %s38, 1
      %p344 = por %p342, %p343
      %p345 = scmp.ne.s32.totalorder %s336, %s337
      %p346 = scmp.eq.s32.totalorder %s38, 0
      %p347 = por %p345, %p346
      %p348 = scmp.ne.s32.totalorder %s336, %s337
      %p349 = scmp.eq.s32.totalorder %s39, 1
      %p350 = por %p348, %p349
      %p352 = scmp.ne.s32.totalorder %s337, %s351
      %p353 = scmp.eq.s32.totalorder %s39, 0
      %p354 = por %p352, %p353
      %s356 = sadd.s32 %s355, 1
      %p359 = scmp.eq.s32.totalorder %s33, 1
      %p360 = scmp.ne.s32.totalorder %s355, %s357
      %p361 = scmp.eq.s32.totalorder %s33, 0
      %p362 = por %p360, %p361
      %p363 = scmp.ne.s32.totalorder %s355, %s357
      %p364 = scmp.eq.s32.totalorder %s38, 1
      %p365 = por %p363, %p364
      %p366 = scmp.ne.s32.totalorder %s357, %s358
      %p367 = scmp.eq.s32.totalorder %s38, 0
      %p368 = por %p366, %p367
      %p369 = scmp.ne.s32.totalorder %s357, %s358
      %p370 = scmp.eq.s32.totalorder %s39, 1
      %p371 = por %p369, %p370
      %p373 = scmp.ne.s32.totalorder %s358, %s372
      %p374 = scmp.eq.s32.totalorder %s39, 0
      %p375 = por %p373, %p374
      %s377 = sadd.s32 %s376, 1
      %p380 = scmp.eq.s32.totalorder %s33, 1
      %p381 = scmp.ne.s32.totalorder %s376, %s378
      %p382 = scmp.eq.s32.totalorder %s33, 0
      %p383 = por %p381, %p382
      %p384 = scmp.ne.s32.totalorder %s376, %s378
      %p385 = scmp.eq.s32.totalorder %s38, 1
      %p386 = por %p384, %p385
      %p387 = scmp.ne.s32.totalorder %s378, %s379
      %p388 = scmp.eq.s32.totalorder %s38, 0
      %p389 = por %p387, %p388
      %p390 = scmp.ne.s32.totalorder %s378, %s379
      %p391 = scmp.eq.s32.totalorder %s39, 1
      %p392 = por %p390, %p391
      %p394 = scmp.ne.s32.totalorder %s379, %s393
      %p395 = scmp.eq.s32.totalorder %s39, 0
      %p396 = por %p394, %p395
      %s398 = sadd.s32 %s397, 1
      %p401 = scmp.eq.s32.totalorder %s33, 1
      %p402 = scmp.ne.s32.totalorder %s397, %s399
      %p403 = scmp.eq.s32.totalorder %s33, 0
      %p404 = por %p402, %p403
      %p405 = scmp.ne.s32.totalorder %s397, %s399
      %p406 = scmp.eq.s32.totalorder %s38, 1
      %p407 = por %p405, %p406
      %p408 = scmp.ne.s32.totalorder %s399, %s400
      %p409 = scmp.eq.s32.totalorder %s38, 0
      %p410 = por %p408, %p409
      %p411 = scmp.ne.s32.totalorder %s399, %s400
      %p412 = scmp.eq.s32.totalorder %s39, 1
      %p413 = por %p411, %p412
      %p415 = scmp.ne.s32.totalorder %s400, %s414
      %p416 = scmp.eq.s32.totalorder %s39, 0
      %p417 = por %p415, %p416
      %s419 = sadd.s32 %s418, 1
      %p422 = scmp.eq.s32.totalorder %s33, 1
      %p423 = scmp.ne.s32.totalorder %s418, %s420
      %p424 = scmp.eq.s32.totalorder %s33, 0
      %p425 = por %p423, %p424
      %p426 = scmp.ne.s32.totalorder %s418, %s420
      %p427 = scmp.eq.s32.totalorder %s38, 1
      %p428 = por %p426, %p427
      %p429 = scmp.ne.s32.totalorder %s420, %s421
      %p430 = scmp.eq.s32.totalorder %s38, 0
      %p431 = por %p429, %p430
      %p432 = scmp.ne.s32.totalorder %s420, %s421
      %p433 = scmp.eq.s32.totalorder %s39, 1
      %p434 = por %p432, %p433
      %p436 = scmp.ne.s32.totalorder %s421, %s435
      %p437 = scmp.eq.s32.totalorder %s39, 0
      %p438 = por %p436, %p437
      %s440 = sadd.s32 %s439, 1
      %p443 = scmp.eq.s32.totalorder %s33, 1
      %p444 = scmp.ne.s32.totalorder %s439, %s441
      %p445 = scmp.eq.s32.totalorder %s33, 0
      %p446 = por %p444, %p445
      %p447 = scmp.ne.s32.totalorder %s439, %s441
      %p448 = scmp.eq.s32.totalorder %s38, 1
      %p449 = por %p447, %p448
      %p450 = scmp.ne.s32.totalorder %s441, %s442
      %p451 = scmp.eq.s32.totalorder %s38, 0
      %p452 = por %p450, %p451
      %p453 = scmp.ne.s32.totalorder %s441, %s442
      %p454 = scmp.eq.s32.totalorder %s39, 1
      %p455 = por %p453, %p454
      %p457 = scmp.ne.s32.totalorder %s442, %s456
      %p458 = scmp.eq.s32.totalorder %s39, 0
      %p459 = por %p457, %p458
      %s461 = sadd.s32 %s460, 1
      %p464 = scmp.eq.s32.totalorder %s33, 1
      %p465 = scmp.ne.s32.totalorder %s460, %s462
      %p466 = scmp.eq.s32.totalorder %s33, 0
      %p467 = por %p465, %p466
      %p468 = scmp.ne.s32.totalorder %s460, %s462
      %p469 = scmp.eq.s32.totalorder %s38, 1
      %p470 = por %p468, %p469
      %p471 = scmp.ne.s32.totalorder %s462, %s463
      %p472 = scmp.eq.s32.totalorder %s38, 0
      %p473 = por %p471, %p472
      %p474 = scmp.ne.s32.totalorder %s462, %s463
      %p475 = scmp.eq.s32.totalorder %s39, 1
      %p476 = por %p474, %p475
      %p478 = scmp.ne.s32.totalorder %s463, %s477
      %p479 = scmp.eq.s32.totalorder %s39, 0
      %p480 = por %p478, %p479
      %s482 = sadd.s32 %s481, 1
      %p485 = scmp.eq.s32.totalorder %s33, 1
      %p486 = scmp.ne.s32.totalorder %s481, %s483
      %p487 = scmp.eq.s32.totalorder %s33, 0
      %p488 = por %p486, %p487
      %p489 = scmp.ne.s32.totalorder %s481, %s483
      %p490 = scmp.eq.s32.totalorder %s38, 1
      %p491 = por %p489, %p490
      %p492 = scmp.ne.s32.totalorder %s483, %s484
      %p493 = scmp.eq.s32.totalorder %s38, 0
      %p494 = por %p492, %p493
      %p495 = scmp.ne.s32.totalorder %s483, %s484
      %p496 = scmp.eq.s32.totalorder %s39, 1
      %p497 = por %p495, %p496
      %p499 = scmp.ne.s32.totalorder %s484, %s498
      %p500 = scmp.eq.s32.totalorder %s39, 0
      %p501 = por %p499, %p500
      %s503 = sadd.s32 %s502, 1
      %p506 = scmp.eq.s32.totalorder %s33, 1
      %p507 = scmp.ne.s32.totalorder %s502, %s504
      %p508 = scmp.eq.s32.totalorder %s33, 0
      %p509 = por %p507, %p508
      %p510 = scmp.ne.s32.totalorder %s502, %s504
      %p511 = scmp.eq.s32.totalorder %s38, 1
      %p512 = por %p510, %p511
      %p513 = scmp.ne.s32.totalorder %s504, %s505
      %p514 = scmp.eq.s32.totalorder %s38, 0
      %p515 = por %p513, %p514
      %p516 = scmp.ne.s32.totalorder %s504, %s505
      %p517 = scmp.eq.s32.totalorder %s39, 1
      %p518 = por %p516, %p517
      %p520 = scmp.ne.s32.totalorder %s505, %s519
      %p521 = scmp.eq.s32.totalorder %s39, 0
      %p522 = por %p520, %p521
      %s524 = sadd.s32 %s523, 1
      %p527 = scmp.eq.s32.totalorder %s33, 1
      %p528 = scmp.ne.s32.totalorder %s523, %s525
      %p529 = scmp.eq.s32.totalorder %s33, 0
      %p530 = por %p528, %p529
      %p531 = scmp.ne.s32.totalorder %s523, %s525
      %p532 = scmp.eq.s32.totalorder %s38, 1
      %p533 = por %p531, %p532
      %p534 = scmp.ne.s32.totalorder %s525, %s526
      %p535 = scmp.eq.s32.totalorder %s38, 0
      %p536 = por %p534, %p535
      %p537 = scmp.ne.s32.totalorder %s525, %s526
      %p538 = scmp.eq.s32.totalorder %s39, 1
      %p539 = por %p537, %p538
      %p541 = scmp.ne.s32.totalorder %s526, %s540
      %p542 = scmp.eq.s32.totalorder %s39, 0
      %p543 = por %p541, %p542
      %s545 = sadd.s32 %s544, 1
      %p548 = scmp.eq.s32.totalorder %s33, 1
      %p549 = scmp.ne.s32.totalorder %s544, %s546
      %p550 = scmp.eq.s32.totalorder %s33, 0
      %p551 = por %p549, %p550
      %p552 = scmp.ne.s32.totalorder %s544, %s546
      %p553 = scmp.eq.s32.totalorder %s38, 1
      %p554 = por %p552, %p553
      %p555 = scmp.ne.s32.totalorder %s546, %s547
      %p556 = scmp.eq.s32.totalorder %s38, 0
      %p557 = por %p555, %p556
      %p558 = scmp.ne.s32.totalorder %s546, %s547
      %p559 = scmp.eq.s32.totalorder %s39, 1
      %p560 = por %p558, %p559
      %p562 = scmp.ne.s32.totalorder %s547, %s561
      %p563 = scmp.eq.s32.totalorder %s39, 0
      %p564 = por %p562, %p563
      %s565 = ssub.s32 %s33, %s40
      %p566 = scmp.eq.s32.totalorder %s565, 0
      %s568 = sadd.s32 %s567, 1
      %s569 = scalar_select %p566, %s567, %s568
      %p572 = pneg %p566
      %p573 = scmp.eq.s32.totalorder %s33, 1
      %p574 = por %p572, %p573
      %p575 = scmp.ne.s32.totalorder %s567, %s570
      %p576 = scmp.eq.s32.totalorder %s33, 0
      %p577 = por %p575, %p576
      %p578 = scmp.ne.s32.totalorder %s567, %s570
      %p579 = scmp.eq.s32.totalorder %s38, 1
      %p580 = por %p578, %p579
      %p581 = scmp.ne.s32.totalorder %s570, %s571
      %p582 = scmp.eq.s32.totalorder %s38, 0
      %p583 = por %p581, %p582
      %p584 = scmp.ne.s32.totalorder %s570, %s571
      %p585 = scmp.eq.s32.totalorder %s39, 1
      %p586 = por %p584, %p585
      %p588 = scmp.ne.s32.totalorder %s571, %s587
      %p589 = scmp.eq.s32.totalorder %s39, 0
      %p590 = por %p588, %p589
      %p591 = scmp.le.s32.totalorder 1, %s33
      %p592 = scmp.lt.s32.totalorder %s33, 3
      %p593 = pnand %p591, %p592
      %p594 = pneg %p593
      // Predicated region
      $region9: #{decoder_forward.3} parent=5 // pred_check
        _
      $region10: #{decoder_forward.3} parent=5 // pred_check_branch
        %596 = sbr.rel (%p593) target = $region12
      $region11: #{decoder_forward.3} parent=5 // pred_region
        %s597 = ssub.s32 %s33, 1
        // Predicated region
        $region13: #{decoder_forward.3} parent=11 // pred_check
          %p598 = pneg %p158
        $region14: #{decoder_forward.3} parent=11 // pred_check_branch
          %600 = sbr.rel (%p598) target = $region16
        $region15: #{decoder_forward.3} parent=11 // pred_region
          _
        $region16: #{decoder_forward.3} parent=11 // pred_fallthru
          _
        // Predicated region
        $region17: #{decoder_forward.3} parent=11 // pred_check
          %p601 = pneg %p179
        $region18: #{decoder_forward.3} parent=11 // pred_check_branch
          %603 = sbr.rel (%p601) target = $region20
        $region19: #{decoder_forward.3} parent=11 // pred_region
          _
        $region20: #{decoder_forward.3} parent=11 // pred_fallthru
          _
        // Predicated region
        $region21: #{decoder_forward.3} parent=11 // pred_check
          %p604 = pneg %p200
        $region22: #{decoder_forward.3} parent=11 // pred_check_branch
          %606 = sbr.rel (%p604) target = $region24
        $region23: #{decoder_forward.3} parent=11 // pred_region
          _
        $region24: #{decoder_forward.3} parent=11 // pred_fallthru
          _
        // Predicated region
        $region25: #{decoder_forward.3} parent=11 // pred_check
          %p607 = pneg %p221
        $region26: #{decoder_forward.3} parent=11 // pred_check_branch
          %609 = sbr.rel (%p607) target = $region28
        $region27: #{decoder_forward.3} parent=11 // pred_region
          _
        $region28: #{decoder_forward.3} parent=11 // pred_fallthru
          _
        // Predicated region
        $region29: #{decoder_forward.3} parent=11 // pred_check
          %p610 = pneg %p242
        $region30: #{decoder_forward.3} parent=11 // pred_check_branch
          %612 = sbr.rel (%p610) target = $region32
        $region31: #{decoder_forward.3} parent=11 // pred_region
          _
        $region32: #{decoder_forward.3} parent=11 // pred_fallthru
          _
        // Predicated region
        $region33: #{decoder_forward.3} parent=11 // pred_check
          %p613 = pneg %p263
        $region34: #{decoder_forward.3} parent=11 // pred_check_branch
          %615 = sbr.rel (%p613) target = $region36
        $region35: #{decoder_forward.3} parent=11 // pred_region
          _
        $region36: #{decoder_forward.3} parent=11 // pred_fallthru
          _
        // Predicated region
        $region37: #{decoder_forward.3} parent=11 // pred_check
          %p616 = pneg %p284
        $region38: #{decoder_forward.3} parent=11 // pred_check_branch
          %618 = sbr.rel (%p616) target = $region40
        $region39: #{decoder_forward.3} parent=11 // pred_region
          _
        $region40: #{decoder_forward.3} parent=11 // pred_fallthru
          _
        // Predicated region
        $region41: #{decoder_forward.3} parent=11 // pred_check
          %p619 = pneg %p305
        $region42: #{decoder_forward.3} parent=11 // pred_check_branch
          %621 = sbr.rel (%p619) target = $region44
        $region43: #{decoder_forward.3} parent=11 // pred_region
          _
        $region44: #{decoder_forward.3} parent=11 // pred_fallthru
          _
        // Predicated region
        $region45: #{decoder_forward.3} parent=11 // pred_check
          %p622 = pneg %p326
        $region46: #{decoder_forward.3} parent=11 // pred_check_branch
          %624 = sbr.rel (%p622) target = $region48
        $region47: #{decoder_forward.3} parent=11 // pred_region
          _
        $region48: #{decoder_forward.3} parent=11 // pred_fallthru
          _
        // Predicated region
        $region49: #{decoder_forward.3} parent=11 // pred_check
          %p625 = pneg %p347
        $region50: #{decoder_forward.3} parent=11 // pred_check_branch
          %627 = sbr.rel (%p625) target = $region52
        $region51: #{decoder_forward.3} parent=11 // pred_region
          _
        $region52: #{decoder_forward.3} parent=11 // pred_fallthru
          _
        // Predicated region
        $region53: #{decoder_forward.3} parent=11 // pred_check
          %p628 = pneg %p368
        $region54: #{decoder_forward.3} parent=11 // pred_check_branch
          %630 = sbr.rel (%p628) target = $region56
        $region55: #{decoder_forward.3} parent=11 // pred_region
          _
        $region56: #{decoder_forward.3} parent=11 // pred_fallthru
          _
        // Predicated region
        $region57: #{decoder_forward.3} parent=11 // pred_check
          %p631 = pneg %p389
        $region58: #{decoder_forward.3} parent=11 // pred_check_branch
          %633 = sbr.rel (%p631) target = $region60
        $region59: #{decoder_forward.3} parent=11 // pred_region
          _
        $region60: #{decoder_forward.3} parent=11 // pred_fallthru
          _
        // Predicated region
        $region61: #{decoder_forward.3} parent=11 // pred_check
          %p634 = pneg %p410
        $region62: #{decoder_forward.3} parent=11 // pred_check_branch
          %636 = sbr.rel (%p634) target = $region64
        $region63: #{decoder_forward.3} parent=11 // pred_region
          _
        $region64: #{decoder_forward.3} parent=11 // pred_fallthru
          _
        // Predicated region
        $region65: #{decoder_forward.3} parent=11 // pred_check
          %p637 = pneg %p431
        $region66: #{decoder_forward.3} parent=11 // pred_check_branch
          %639 = sbr.rel (%p637) target = $region68
        $region67: #{decoder_forward.3} parent=11 // pred_region
          _
        $region68: #{decoder_forward.3} parent=11 // pred_fallthru
          _
        // Predicated region
        $region69: #{decoder_forward.3} parent=11 // pred_check
          %p640 = pneg %p452
        $region70: #{decoder_forward.3} parent=11 // pred_check_branch
          %642 = sbr.rel (%p640) target = $region72
        $region71: #{decoder_forward.3} parent=11 // pred_region
          _
        $region72: #{decoder_forward.3} parent=11 // pred_fallthru
          _
        // Predicated region
        $region73: #{decoder_forward.3} parent=11 // pred_check
          %p643 = pneg %p473
        $region74: #{decoder_forward.3} parent=11 // pred_check_branch
          %645 = sbr.rel (%p643) target = $region76
        $region75: #{decoder_forward.3} parent=11 // pred_region
          _
        $region76: #{decoder_forward.3} parent=11 // pred_fallthru
          _
        // Predicated region
        $region77: #{decoder_forward.3} parent=11 // pred_check
          %p646 = pneg %p494
        $region78: #{decoder_forward.3} parent=11 // pred_check_branch
          %648 = sbr.rel (%p646) target = $region80
        $region79: #{decoder_forward.3} parent=11 // pred_region
          _
        $region80: #{decoder_forward.3} parent=11 // pred_fallthru
          _
        // Predicated region
        $region81: #{decoder_forward.3} parent=11 // pred_check
          %p649 = pneg %p515
        $region82: #{decoder_forward.3} parent=11 // pred_check_branch
          %651 = sbr.rel (%p649) target = $region84
        $region83: #{decoder_forward.3} parent=11 // pred_region
          _
        $region84: #{decoder_forward.3} parent=11 // pred_fallthru
          _
        // Predicated region
        $region85: #{decoder_forward.3} parent=11 // pred_check
          %p652 = pneg %p536
        $region86: #{decoder_forward.3} parent=11 // pred_check_branch
          %654 = sbr.rel (%p652) target = $region88
        $region87: #{decoder_forward.3} parent=11 // pred_region
          _
        $region88: #{decoder_forward.3} parent=11 // pred_fallthru
          _
        // Predicated region
        $region89: #{decoder_forward.3} parent=11 // pred_check
          %p655 = pneg %p557
        $region90: #{decoder_forward.3} parent=11 // pred_check_branch
          %657 = sbr.rel (%p655) target = $region92
        $region91: #{decoder_forward.3} parent=11 // pred_region
          _
        $region92: #{decoder_forward.3} parent=11 // pred_fallthru
          _
      $region12: #{decoder_forward.3} parent=5 // pred_fallthru
        _
      %p658 = scmp.lt.s32.totalorder %s33, 2
      // Predicated region
      $region93: #{decoder_forward.3} parent=5 // pred_check
        %p659 = pneg %p658
      $region94: #{decoder_forward.3} parent=5 // pred_check_branch
        %661 = sbr.rel (%p659) target = $region96
      $region95: #{decoder_forward.3} parent=5 // pred_region
        // Predicated region
        $region97: #{decoder_forward.3} parent=95 // pred_check
          %p662 = pneg %p53
        $region98: #{decoder_forward.3} parent=95 // pred_check_branch
          %664 = sbr.rel (%p662) target = $region100
        $region99: #{decoder_forward.3} parent=95 // pred_region
          %p665 = scmp.lt.s32.totalorder %s33, 1
          %s666 = scalar_select %p665, %s33, 1
          %s667 = smul.addr %s666, 8
          %s668 = scalar_lea.vmem %s0, %s667
        $region100: #{decoder_forward.3} parent=95 // pred_fallthru
          _
        // Predicated region
        $region101: #{decoder_forward.3} parent=95 // pred_check
          %p669 = pneg %p79
        $region102: #{decoder_forward.3} parent=95 // pred_check_branch
          %671 = sbr.rel (%p669) target = $region104
        $region103: #{decoder_forward.3} parent=95 // pred_region
          %p672 = scmp.lt.s32.totalorder %s33, 1
          %s673 = scalar_select %p672, %s33, 1
          %s674 = smul.addr %s673, 8
          %s675 = scalar_lea.vmem %s1, %s674
        $region104: #{decoder_forward.3} parent=95 // pred_fallthru
          _
        // Predicated region
        $region105: #{decoder_forward.3} parent=95 // pred_check
          %p676 = pneg %p105
        $region106: #{decoder_forward.3} parent=95 // pred_check_branch
          %678 = sbr.rel (%p676) target = $region108
        $region107: #{decoder_forward.3} parent=95 // pred_region
          %p679 = scmp.lt.s32.totalorder %s33, 1
          %s680 = scalar_select %p679, %s33, 1
          %s681 = smul.addr %s680, 8
          %s682 = scalar_lea.vmem %s2, %s681
        $region108: #{decoder_forward.3} parent=95 // pred_fallthru
          _
        // Predicated region
        $region109: #{decoder_forward.3} parent=95 // pred_check
          %p683 = pneg %p131
        $region110: #{decoder_forward.3} parent=95 // pred_check_branch
          %685 = sbr.rel (%p683) target = $region112
        $region111: #{decoder_forward.3} parent=95 // pred_region
          %p686 = scmp.lt.s32.totalorder %s33, 1
          %s687 = scalar_select %p686, %s33, 1
          %s688 = smul.addr %s687, 8
          %s689 = scalar_lea.vmem %s3, %s688
        $region112: #{decoder_forward.3} parent=95 // pred_fallthru
          _
      $region96: #{decoder_forward.3} parent=5 // pred_fallthru
        _
      %p690 = scmp.le.s32.totalorder 1, %s33
      %p691 = scmp.lt.s32.totalorder %s33, 3
      %p692 = pnand %p690, %p691
      %p693 = pneg %p692
      // Predicated region
      $region113: #{decoder_forward.3} parent=5 // pred_check
        _
      $region114: #{decoder_forward.3} parent=5 // pred_check_branch
        %695 = sbr.rel (%p692) target = $region116
      $region115: #{decoder_forward.3} parent=5 // pred_region
        %s696 = ssub.s32 %s33, 1
        %p697 = scmp.lt.s32.totalorder %s38, 1
        %s698 = scalar_select %p697, %s38, 1
        %s699 = smul.addr %s698, 8
        %s700 = scalar_lea.vmem %s0, %s699
        %p701 = pneg %p59
        %p702 = pneg %p56
        %p703 = scmp.lt.s32.totalorder %s38, 1
        %s704 = scalar_select %p703, %s38, 1
        %s705 = smul.addr %s704, 8
        %s706 = scalar_lea.vmem %s1, %s705
        %p707 = pneg %p85
        %p708 = pneg %p82
        %p709 = scmp.lt.s32.totalorder %s38, 1
        %s710 = scalar_select %p709, %s38, 1
        %s711 = smul.addr %s710, 8
        %s712 = scalar_lea.vmem %s2, %s711
        %p713 = pneg %p111
        %p714 = pneg %p108
        %p715 = scmp.lt.s32.totalorder %s38, 1
        %s716 = scalar_select %p715, %s38, 1
        %s717 = smul.addr %s716, 8
        %s718 = scalar_lea.vmem %s3, %s717
        %p719 = pneg %p137
        %p720 = pneg %p134
        %p721 = pneg %p158
        %p722 = pneg %p155
        %p723 = pneg %p179
        %p724 = pneg %p176
        %p725 = pneg %p200
        %p726 = pneg %p197
        %p727 = pneg %p221
        %p728 = pneg %p218
        %p729 = pneg %p242
        %p730 = pneg %p239
        %p731 = pneg %p263
        %p732 = pneg %p260
        %p733 = pneg %p284
        %p734 = pneg %p281
        %p735 = pneg %p305
        %p736 = pneg %p302
        %p737 = pneg %p326
        %p738 = pneg %p323
        %p739 = pneg %p347
        %p740 = pneg %p344
        %p741 = pneg %p368
        %p742 = pneg %p365
        %p743 = pneg %p389
        %p744 = pneg %p386
        %p745 = pneg %p410
        %p746 = pneg %p407
        %p747 = pneg %p431
        %p748 = pneg %p428
        %p749 = pneg %p452
        %p750 = pneg %p449
        %p751 = pneg %p473
        %p752 = pneg %p470
        %p753 = pneg %p494
        %p754 = pneg %p491
        %p755 = pneg %p515
        %p756 = pneg %p512
        %p757 = pneg %p536
        %p758 = pneg %p533
        %p759 = pneg %p557
        %p760 = pneg %p554
        %p761 = pneg %p583
        %p762 = pneg %p580
        %s763 = sand.u32 %s570, 1
        %s764 = scalar_lea.sflag [#allocation3], %s763
        %s765 = sand.u32 %s570, 1
        %s766 = smul.addr %s765, 8
        %s767 = scalar_lea.vmem [#allocation2], %s766
        %p768 = scmp.lt.s32.totalorder %s38, 1
        %s769 = scalar_select %p768, %s38, 1
        %s770 = smul.addr %s769, 8
        %s771 = scalar_lea.vmem %s0, %s770
        %p772 = scmp.lt.s32.totalorder %s38, 1
        %s773 = scalar_select %p772, %s38, 1
        %s774 = smul.addr %s773, 8
        %s775 = scalar_lea.vmem %s1, %s774
        %p776 = scmp.lt.s32.totalorder %s38, 1
        %s777 = scalar_select %p776, %s38, 1
        %s778 = smul.addr %s777, 8
        %s779 = scalar_lea.vmem %s2, %s778
        %p780 = scmp.lt.s32.totalorder %s38, 1
        %s781 = scalar_select %p780, %s38, 1
        %s782 = smul.addr %s781, 8
        %s783 = scalar_lea.vmem %s3, %s782
        %v785 = vld [vmem:[%s771] sm:$0xff]
        %v786 = vld [vmem:[%s775] sm:$0xff]
        %v787 = vld [vmem:[%s779] sm:$0xff]
        %v788 = vld [vmem:[%s783] sm:$0xff]
        %v789 = vpack.c.bf16 %v785, %v785
        %v790 = vld [vmem:[%s4] sm:$0xf]
        %v791 = vld [vmem:[%s4 + $0x4] sm:$0xf]
        %v792 = vld [vmem:[%s4 + $0x8] sm:$0xf]
        %v793 = vld [vmem:[%s4 + $0xc] sm:$0xf]
        %v794 = vld [vmem:[%s5] sm:$0x1]
        %v796 = vlaneseq
        %v797 = vshrl.u32 %v796, 7
        %v798 = vsub.s32 0, %v797
        %v799 = vrot.slane %v794, %v798
        %v805 = vunpack.c.l.b16 %v790
        %v806 = vunpack.c.l.b16 %v791
        %v807 = vunpack.c.l.b16 %v792
        %v808 = vunpack.c.l.b16 %v793
        %v809 = vpack.c.b16 %v806, %v805
        %v810 = vpack.c.b16 %v808, %v807
        %vm813 = vcmask 261120
        %v815 = vsel %vm813, %v789, 0
        %817 = vmatprep.subr.bf16.mxu0 0
        %818 = vmatpush1.bf16.msra.mxu0 %v809
        %819 = vmatprep.subr.bf16.mxu0 0
        %820 = vmatpush1.bf16.msra.mxu0 %v810
        %821 = vmatprep.subr.bf16.mxu0 0
        %822 = vmatpush1.bf16.msra.mxu0 0
        %823 = vmatprep.subr.bf16.mxu0 0
        %824 = vmatpush1.bf16.msra.mxu0 0
        %825 = vmatprep.subr.bf16.mxu0 0
        %826 = vmatpush1.bf16.msra.mxu0 0
        %827 = vmatprep.subr.bf16.mxu0 0
        %828 = vmatpush1.bf16.msra.mxu0 0
        %829 = vmatprep.subr.bf16.mxu0 0
        %830 = vmatpush1.bf16.msra.mxu0 0
        %831 = vmatprep.subr.bf16.mxu0 0
        %832 = vmatpush1.bf16.msra.mxu0 0
        %833 = vmatprep.subr.bf16.mxu0 0
        %834 = vmatpush1.bf16.msra.mxu0 0
        %835 = vmatprep.subr.bf16.mxu0 0
        %836 = vmatpush1.bf16.msra.mxu0 0
        %837 = vmatprep.subr.bf16.mxu0 0
        %838 = vmatpush1.bf16.msra.mxu0 0
        %839 = vmatprep.subr.bf16.mxu0 0
        %840 = vmatpush1.bf16.msra.mxu0 0
        %841 = vmatprep.subr.bf16.mxu0 0
        %842 = vmatpush1.bf16.msra.mxu0 0
        %843 = vmatprep.subr.bf16.mxu0 0
        %844 = vmatpush1.bf16.msra.mxu0 0
        %845 = vmatprep.subr.bf16.mxu0 0
        %846 = vmatpush1.bf16.msra.mxu0 0
        %847 = vmatprep.subr.bf16.mxu0 0
        %848 = vmatpush1.bf16.msra.mxu0 0
        %849 = vmatprep.mubr.bf16.mxu0 0
        %850 = vmatmul.mubr.bf16.gmra.mrb[0].mxu0 %v815
        %v851 = vpop.f32.mrb[0].mxu0
        %v852 = vadd.f32 %v799, %v851
        %v853 = vpop.f32.mrb[0].mxu0
        %v854 = vpop.f32.mrb[0].mxu0
        %v855 = vpop.f32.mrb[0].mxu0
        %856 = vdwg.mxu0
        %v857 = vmul.f32 %v852, 0.35355338
        %v858 = vpack.c.bf16 %v857, %v857
        %v859 = vpack.c.bf16 %v852, %v852
        %861 = vrot.lane.b32.xlu0 %v859, 96
        %v862 = vpop.permute.xlu0 %861
        %vm863 = vcmask 64512
        %v865 = vsel %vm863, %v858, 0
        %v868 = vsel %vm863, %v862, 0
        %870 = vmatprep.subr.bf16.mxu0 0
        %871 = vmatpush1.bf16.xpose.msra.mxu0 %v868
        %872 = vmatprep.subr.bf16.mxu0 0
        %873 = vmatpush1.bf16.xpose.msra.mxu0 0
        %874 = vmatprep.subr.bf16.mxu0 0
        %875 = vmatpush1.bf16.xpose.msra.mxu0 0
        %876 = vmatprep.subr.bf16.mxu0 0
        %877 = vmatpush1.bf16.xpose.msra.mxu0 0
        %878 = vmatprep.subr.bf16.mxu0 0
        %879 = vmatpush1.bf16.xpose.msra.mxu0 0
        %880 = vmatprep.subr.bf16.mxu0 0
        %881 = vmatpush1.bf16.xpose.msra.mxu0 0
        %882 = vmatprep.subr.bf16.mxu0 0
        %883 = vmatpush1.bf16.xpose.msra.mxu0 0
        %884 = vmatprep.subr.bf16.mxu0 0
        %885 = vmatpush1.bf16.xpose.msra.mxu0 0
        %886 = vmatprep.subr.bf16.mxu0 0
        %887 = vmatpush1.bf16.xpose.msra.mxu0 0
        %888 = vmatprep.subr.bf16.mxu0 0
        %889 = vmatpush1.bf16.xpose.msra.mxu0 0
        %890 = vmatprep.subr.bf16.mxu0 0
        %891 = vmatpush1.bf16.xpose.msra.mxu0 0
        %892 = vmatprep.subr.bf16.mxu0 0
        %893 = vmatpush1.bf16.xpose.msra.mxu0 0
        %894 = vmatprep.subr.bf16.mxu0 0
        %895 = vmatpush1.bf16.xpose.msra.mxu0 0
        %896 = vmatprep.subr.bf16.mxu0 0
        %897 = vmatpush1.bf16.xpose.msra.mxu0 0
        %898 = vmatprep.subr.bf16.mxu0 0
        %899 = vmatpush1.bf16.xpose.msra.mxu0 0
        %900 = vmatprep.subr.bf16.mxu0 0
        %901 = vmatpush1.bf16.xpose.msra.mxu0 0
        %902 = vmatprep.mubr.bf16.mxu0 0
        %903 = vmatmul.mubr.bf16.gmra.mrb[0].mxu0 %v865
        %v904 = vpop.f32.mrb[0].mxu0
        %v905 = vadd.f32 0.0, %v904
        %v906 = vpop.f32.mrb[0].mxu0
        %v907 = vpop.f32.mrb[0].mxu0
        %v908 = vpop.f32.mrb[0].mxu0
        %909 = vdwg.mxu0
        %vm910 = vcmp.ne.f32.partialorder %v787, 0.0
        %v911 = vsel %vm910, %v905, -1e+30
        %v912 = vsel %vm863, %v911, -inf
        %913 = vmax.xlane.f32.xlu0 %v912
        %v914 = vpop.xlane.xlu0 %913
        %v915 = vsub.f32 %v911, %v914
        %v916 = vmul.f32 %v915, 1.442695
        %v917 = vpow.pop %v916
        %v918 = vsel %vm863, %v917, 0.0
        %919 = vadd.xlane.f32.xlu0 %v918
        %v920 = vpop.xlane.xlu0 %919
        %v921 = vrcp.pop %v920
        %v922 = vmul.f32 %v917, %v921
        %v923 = vmul.f32 %v922, %v788
        %v924 = vpack.c.bf16 %v923, %v923
        %925 = vrot.lane.b32.xlu0 %v859, 64
        %v926 = vpop.permute.xlu0 %925
        %v928 = vsel %vm863, %v924, 0
        %vm930 = vcmask 1043456
        %v932 = vsel %vm930, %v926, 0
        %934 = vmatprep.subr.bf16.mxu0 0
        %935 = vmatpush1.bf16.msra.mxu0 %v932
        %936 = vmatprep.subr.bf16.mxu0 0
        %937 = vmatpush1.bf16.msra.mxu0 0
        %938 = vmatprep.subr.bf16.mxu0 0
        %939 = vmatpush1.bf16.msra.mxu0 0
        %940 = vmatprep.subr.bf16.mxu0 0
        %941 = vmatpush1.bf16.msra.mxu0 0
        %942 = vmatprep.subr.bf16.mxu0 0
        %943 = vmatpush1.bf16.msra.mxu0 0
        %944 = vmatprep.subr.bf16.mxu0 0
        %945 = vmatpush1.bf16.msra.mxu0 0
        %946 = vmatprep.subr.bf16.mxu0 0
        %947 = vmatpush1.bf16.msra.mxu0 0
        %948 = vmatprep.subr.bf16.mxu0 0
        %949 = vmatpush1.bf16.msra.mxu0 0
        %950 = vmatprep.subr.bf16.mxu0 0
        %951 = vmatpush1.bf16.msra.mxu0 0
        %952 = vmatprep.subr.bf16.mxu0 0
        %953 = vmatpush1.bf16.msra.mxu0 0
        %954 = vmatprep.subr.bf16.mxu0 0
        %955 = vmatpush1.bf16.msra.mxu0 0
        %956 = vmatprep.subr.bf16.mxu0 0
        %957 = vmatpush1.bf16.msra.mxu0 0
        %958 = vmatprep.subr.bf16.mxu0 0
        %959 = vmatpush1.bf16.msra.mxu0 0
        %960 = vmatprep.subr.bf16.mxu0 0
        %961 = vmatpush1.bf16.msra.mxu0 0
        %962 = vmatprep.subr.bf16.mxu0 0
        %963 = vmatpush1.bf16.msra.mxu0 0
        %964 = vmatprep.subr.bf16.mxu0 0
        %965 = vmatpush1.bf16.msra.mxu0 0
        %966 = vmatprep.mubr.bf16.mxu0 0
        %967 = vmatmul.mubr.bf16.gmra.mrb[0].mxu0 %v928
        %v968 = vpop.f32.mrb[0].mxu0
        %v969 = vadd.f32 0.0, %v968
        %v970 = vpop.f32.mrb[0].mxu0
        %v971 = vpop.f32.mrb[0].mxu0
        %v972 = vpop.f32.mrb[0].mxu0
        %973 = vdwg.mxu0
        %975 = vrot.lane.b32.xlu0 %v858, 120
        %v976 = vpop.permute.xlu0 %975
        %977 = vrot.lane.b32.xlu0 %v859, 88
        %v978 = vpop.permute.xlu0 %977
        %v980 = vsel %vm863, %v976, 0
        %v983 = vsel %vm863, %v978, 0
        %985 = vmatprep.subr.bf16.mxu0 0
        %986 = vmatpush1.bf16.xpose.msra.mxu0 %v983
        %987 = vmatprep.subr.bf16.mxu0 0
        %988 = vmatpush1.bf16.xpose.msra.mxu0 0
        %989 = vmatprep.subr.bf16.mxu0 0
        %990 = vmatpush1.bf16.xpose.msra.mxu0 0
        %991 = vmatprep.subr.bf16.mxu0 0
        %992 = vmatpush1.bf16.xpose.msra.mxu0 0
        %993 = vmatprep.subr.bf16.mxu0 0
        %994 = vmatpush1.bf16.xpose.msra.mxu0 0
        %995 = vmatprep.subr.bf16.mxu0 0
        %996 = vmatpush1.bf16.xpose.msra.mxu0 0
        %997 = vmatprep.subr.bf16.mxu0 0
        %998 = vmatpush1.bf16.xpose.msra.mxu0 0
        %999 = vmatprep.subr.bf16.mxu0 0
        %1000 = vmatpush1.bf16.xpose.msra.mxu0 0
        %1001 = vmatprep.subr.bf16.mxu0 0
        %1002 = vmatpush1.bf16.xpose.msra.mxu0 0
        %1003 = vmatprep.subr.bf16.mxu0 0
        %1004 = vmatpush1.bf16.xpose.msra.mxu0 0
        %1005 = vmatprep.subr.bf16.mxu0 0
        %1006 = vmatpush1.bf16.xpose.msra.mxu0 0
        %1007 = vmatprep.subr.bf16.mxu0 0
        %1008 = vmatpush1.bf16.xpose.msra.mxu0 0
        %1009 = vmatprep.subr.bf16.mxu0 0
        %1010 = vmatpush1.bf16.xpose.msra.mxu0 0
        %1011 = vmatprep.subr.bf16.mxu0 0
        %1012 = vmatpush1.bf16.xpose.msra.mxu0 0
        %1013 = vmatprep.subr.bf16.mxu0 0
        %1014 = vmatpush1.bf16.xpose.msra.mxu0 0
        %1015 = vmatprep.subr.bf16.mxu0 0
        %1016 = vmatpush1.bf16.xpose.msra.mxu0 0
        %1017 = vmatprep.mubr.bf16.mxu0 0
        %1018 = vmatmul.mubr.bf16.gmra.mrb[0].mxu0 %v980
        %v1019 = vpop.f32.mrb[0].mxu0
        %v1020 = vadd.f32 0.0, %v1019
        %v1021 = vpop.f32.mrb[0].mxu0
        %v1022 = vpop.f32.mrb[0].mxu0
        %v1023 = vpop.f32.mrb[0].mxu0
        %1024 = vdwg.mxu0
        %v1025 = vsel %vm910, %v1020, -1e+30
        %v1026 = vsel %vm863, %v1025, -inf
        %1027 = vmax.xlane.f32.xlu0 %v1026
        %v1028 = vpop.xlane.xlu0 %1027
        %v1029 = vsub.f32 %v1025, %v1028
        %v1030 = vmul.f32 %v1029, 1.442695
        %v1031 = vpow.pop %v1030
        %v1032 = vsel %vm863, %v1031, 0.0
        %1033 = vadd.xlane.f32.xlu0 %v1032
        %v1034 = vpop.xlane.xlu0 %1033
        %v1035 = vrcp.pop %v1034
        %v1036 = vmul.f32 %v1031, %v1035
        %v1037 = vmul.f32 %v1036, %v788
        %v1038 = vpack.c.bf16 %v1037, %v1037
        %1039 = vrot.lane.b32.xlu0 %v859, 56
        %v1040 = vpop.permute.xlu0 %1039
        %v1042 = vsel %vm863, %v1038, 0
        %v1045 = vsel %vm930, %v1040, 0
        %1047 = vmatprep.subr.bf16.mxu0 0
        %1048 = vmatpush1.bf16.msra.mxu0 %v1045
        %1049 = vmatprep.subr.bf16.mxu0 0
        %1050 = vmatpush1.bf16.msra.mxu0 0
        %1051 = vmatprep.subr.bf16.mxu0 0
        %1052 = vmatpush1.bf16.msra.mxu0 0
        %1053 = vmatprep.subr.bf16.mxu0 0
        %1054 = vmatpush1.bf16.msra.mxu0 0
        %1055 = vmatprep.subr.bf16.mxu0 0
        %1056 = vmatpush1.bf16.msra.mxu0 0
        %1057 = vmatprep.subr.bf16.mxu0 0
        %1058 = vmatpush1.bf16.msra.mxu0 0
        %1059 = vmatprep.subr.bf16.mxu0 0
        %1060 = vmatpush1.bf16.msra.mxu0 0
        %1061 = vmatprep.subr.bf16.mxu0 0
        %1062 = vmatpush1.bf16.msra.mxu0 0
        %1063 = vmatprep.subr.bf16.mxu0 0
        %1064 = vmatpush1.bf16.msra.mxu0 0
        %1065 = vmatprep.subr.bf16.mxu0 0
        %1066 = vmatpush1.bf16.msra.mxu0 0
        %1067 = vmatprep.subr.bf16.mxu0 0
        %1068 = vmatpush1.bf16.msra.mxu0 0
        %1069 = vmatprep.subr.bf16.mxu0 0
        %1070 = vmatpush1.bf16.msra.mxu0 0
        %1071 = vmatprep.subr.bf16.mxu0 0
        %1072 = vmatpush1.bf16.msra.mxu0 0
        %1073 = vmatprep.subr.bf16.mxu0 0
        %1074 = vmatpush1.bf16.msra.mxu0 0
        %1075 = vmatprep.subr.bf16.mxu0 0
        %1076 = vmatpush1.bf16.msra.mxu0 0
        %1077 = vmatprep.subr.bf16.mxu0 0
        %1078 = vmatpush1.bf16.msra.mxu0 0
        %1079 = vmatprep.mubr.bf16.mxu0 0
        %1080 = vmatmul.mubr.bf16.gmra.mrb[0].mxu0 %v1042
        %v1081 = vpop.f32.mrb[0].mxu0
        %v1082 = vadd.f32 0.0, %v1081
        %v1083 = vpop.f32.mrb[0].mxu0
        %v1084 = vpop.f32.mrb[0].mxu0
        %v1085 = vpop.f32.mrb[0].mxu0
        %1086 = vdwg.mxu0
        %1087 = vrot.lane.b32.xlu0 %v858, 112
        %v1088 = vpop.permute.xlu0 %1087
        %1089 = vrot.lane.b32.xlu0 %v859, 80
        %v1090 = vpop.permute.xlu0 %1089
        %v1092 = vsel %vm863, %v1088, 0
        %v1095 = vsel %vm863, %v1090, 0
        %1097 = vmatprep.subr.bf16.mxu0 0
        %1098 = vmatpush1.bf16.xpose.msra.mxu0 %v1095
        %1099 = vmatprep.subr.bf16.mxu0 0
        %1100 = vmatpush1.bf16.xpose.msra.mxu0 0
        %1101 = vmatprep.subr.bf16.mxu0 0
        %1102 = vmatpush1.bf16.xpose.msra.mxu0 0
        %1103 = vmatprep.subr.bf16.mxu0 0
        %1104 = vmatpush1.bf16.xpose.msra.mxu0 0
        %1105 = vmatprep.subr.bf16.mxu0 0
        %1106 = vmatpush1.bf16.xpose.msra.mxu0 0
        %1107 = vmatprep.subr.bf16.mxu0 0
        %1108 = vmatpush1.bf16.xpose.msra.mxu0 0
        %1109 = vmatprep.subr.bf16.mxu0 0
        %1110 = vmatpush1.bf16.xpose.msra.mxu0 0
        %1111 = vmatprep.subr.bf16.mxu0 0
        %1112 = vmatpush1.bf16.xpose.msra.mxu0 0
        %1113 = vmatprep.subr.bf16.mxu0 0
        %1114 = vmatpush1.bf16.xpose.msra.mxu0 0
        %1115 = vmatprep.subr.bf16.mxu0 0
        %1116 = vmatpush1.bf16.xpose.msra.mxu0 0
        %1117 = vmatprep.subr.bf16.mxu0 0
        %1118 = vmatpush1.bf16.xpose.msra.mxu0 0
        %1119 = vmatprep.subr.bf16.mxu0 0
        %1120 = vmatpush1.bf16.xpose.msra.mxu0 0
        %1121 = vmatprep.subr.bf16.mxu0 0
        %1122 = vmatpush1.bf16.xpose.msra.mxu0 0
        %1123 = vmatprep.subr.bf16.mxu0 0
        %1124 = vmatpush1.bf16.xpose.msra.mxu0 0
        %1125 = vmatprep.subr.bf16.mxu0 0
        %1126 = vmatpush1.bf16.xpose.msra.mxu0 0
        %1127 = vmatprep.subr.bf16.mxu0 0
        %1128 = vmatpush1.bf16.xpose.msra.mxu0 0
        %1129 = vmatprep.mubr.bf16.mxu0 0
        %1130 = vmatmul.mubr.bf16.gmra.mrb[0].mxu0 %v1092
        %v1131 = vpop.f32.mrb[0].mxu0
        %v1132 = vadd.f32 0.0, %v1131
        %v1133 = vpop.f32.mrb[0].mxu0
        %v1134 = vpop.f32.mrb[0].mxu0
        %v1135 = vpop.f32.mrb[0].mxu0
        %1136 = vdwg.mxu0
        %v1137 = vsel %vm910, %v1132, -1e+30
        %v1138 = vsel %vm863, %v1137, -inf
        %1139 = vmax.xlane.f32.xlu0 %v1138
        %v1140 = vpop.xlane.xlu0 %1139
        %v1141 = vsub.f32 %v1137, %v1140
        %v1142 = vmul.f32 %v1141, 1.442695
        %v1143 = vpow.pop %v1142
        %v1144 = vsel %vm863, %v1143, 0.0
        %1145 = vadd.xlane.f32.xlu0 %v1144
        %v1146 = vpop.xlane.xlu0 %1145
        %v1147 = vrcp.pop %v1146
        %v1148 = vmul.f32 %v1143, %v1147
        %v1149 = vmul.f32 %v1148, %v788
        %v1150 = vpack.c.bf16 %v1149, %v1149
        %1151 = vrot.lane.b32.xlu0 %v859, 48
        %v1152 = vpop.permute.xlu0 %1151
        %v1154 = vsel %vm863, %v1150, 0
        %v1157 = vsel %vm930, %v1152, 0
        %1159 = vmatprep.subr.bf16.mxu0 0
        %1160 = vmatpush1.bf16.msra.mxu0 %v1157
        %1161 = vmatprep.subr.bf16.mxu0 0
        %1162 = vmatpush1.bf16.msra.mxu0 0
        %1163 = vmatprep.subr.bf16.mxu0 0
        %1164 = vmatpush1.bf16.msra.mxu0 0
        %1165 = vmatprep.subr.bf16.mxu0 0
        %1166 = vmatpush1.bf16.msra.mxu0 0
        %1167 = vmatprep.subr.bf16.mxu0 0
        %1168 = vmatpush1.bf16.msra.mxu0 0
        %1169 = vmatprep.subr.bf16.mxu0 0
        %1170 = vmatpush1.bf16.msra.mxu0 0
        %1171 = vmatprep.subr.bf16.mxu0 0
        %1172 = vmatpush1.bf16.msra.mxu0 0
        %1173 = vmatprep.subr.bf16.mxu0 0
        %1174 = vmatpush1.bf16.msra.mxu0 0
        %1175 = vmatprep.subr.bf16.mxu0 0
        %1176 = vmatpush1.bf16.msra.mxu0 0
        %1177 = vmatprep.subr.bf16.mxu0 0
        %1178 = vmatpush1.bf16.msra.mxu0 0
        %1179 = vmatprep.subr.bf16.mxu0 0
        %1180 = vmatpush1.bf16.msra.mxu0 0
        %1181 = vmatprep.subr.bf16.mxu0 0
        %1182 = vmatpush1.bf16.msra.mxu0 0
        %1183 = vmatprep.subr.bf16.mxu0 0
        %1184 = vmatpush1.bf16.msra.mxu0 0
        %1185 = vmatprep.subr.bf16.mxu0 0
        %1186 = vmatpush1.bf16.msra.mxu0 0
        %1187 = vmatprep.subr.bf16.mxu0 0
        %1188 = vmatpush1.bf16.msra.mxu0 0
        %1189 = vmatprep.subr.bf16.mxu0 0
        %1190 = vmatpush1.bf16.msra.mxu0 0
        %1191 = vmatprep.mubr.bf16.mxu0 0
        %1192 = vmatmul.mubr.bf16.gmra.mrb[0].mxu0 %v1154
        %v1193 = vpop.f32.mrb[0].mxu0
        %v1194 = vadd.f32 0.0, %v1193
        %v1195 = vpop.f32.mrb[0].mxu0
        %v1196 = vpop.f32.mrb[0].mxu0
        %v1197 = vpop.f32.mrb[0].mxu0
        %1198 = vdwg.mxu0
        %1199 = vrot.lane.b32.xlu0 %v858, 104
        %v1200 = vpop.permute.xlu0 %1199
        %1201 = vrot.lane.b32.xlu0 %v859, 72
        %v1202 = vpop.permute.xlu0 %1201
        %v1204 = vsel %vm863, %v1200, 0
        %v1207 = vsel %vm863, %v1202, 0
        %1209 = vmatprep.subr.bf16.mxu0 0
        %1210 = vmatpush1.bf16.xpose.msra.mxu0 %v1207
        %1211 = vmatprep.subr.bf16.mxu0 0
        %1212 = vmatpush1.bf16.xpose.msra.mxu0 0
        %1213 = vmatprep.subr.bf16.mxu0 0
        %1214 = vmatpush1.bf16.xpose.msra.mxu0 0
        %1215 = vmatprep.subr.bf16.mxu0 0
        %1216 = vmatpush1.bf16.xpose.msra.mxu0 0
        %1217 = vmatprep.subr.bf16.mxu0 0
        %1218 = vmatpush1.bf16.xpose.msra.mxu0 0
        %1219 = vmatprep.subr.bf16.mxu0 0
        %1220 = vmatpush1.bf16.xpose.msra.mxu0 0
        %1221 = vmatprep.subr.bf16.mxu0 0
        %1222 = vmatpush1.bf16.xpose.msra.mxu0 0
        %1223 = vmatprep.subr.bf16.mxu0 0
        %1224 = vmatpush1.bf16.xpose.msra.mxu0 0
        %1225 = vmatprep.subr.bf16.mxu0 0
        %1226 = vmatpush1.bf16.xpose.msra.mxu0 0
        %1227 = vmatprep.subr.bf16.mxu0 0
        %1228 = vmatpush1.bf16.xpose.msra.mxu0 0
        %1229 = vmatprep.subr.bf16.mxu0 0
        %1230 = vmatpush1.bf16.xpose.msra.mxu0 0
        %1231 = vmatprep.subr.bf16.mxu0 0
        %1232 = vmatpush1.bf16.xpose.msra.mxu0 0
        %1233 = vmatprep.subr.bf16.mxu0 0
        %1234 = vmatpush1.bf16.xpose.msra.mxu0 0
        %1235 = vmatprep.subr.bf16.mxu0 0
        %1236 = vmatpush1.bf16.xpose.msra.mxu0 0
        %1237 = vmatprep.subr.bf16.mxu0 0
        %1238 = vmatpush1.bf16.xpose.msra.mxu0 0
        %1239 = vmatprep.subr.bf16.mxu0 0
        %1240 = vmatpush1.bf16.xpose.msra.mxu0 0
        %1241 = vmatprep.mubr.bf16.mxu0 0
        %1242 = vmatmul.mubr.bf16.gmra.mrb[0].mxu0 %v1204
        %v1243 = vpop.f32.mrb[0].mxu0
        %v1244 = vadd.f32 0.0, %v1243
        %v1245 = vpop.f32.mrb[0].mxu0
        %v1246 = vpop.f32.mrb[0].mxu0
        %v1247 = vpop.f32.mrb[0].mxu0
        %1248 = vdwg.mxu0
        %v1249 = vsel %vm910, %v1244, -1e+30
        %v1250 = vsel %vm863, %v1249, -inf
        %1251 = vmax.xlane.f32.xlu0 %v1250
        %v1252 = vpop.xlane.xlu0 %1251
        %v1253 = vsub.f32 %v1249, %v1252
        %v1254 = vmul.f32 %v1253, 1.442695
        %v1255 = vpow.pop %v1254
        %v1256 = vsel %vm863, %v1255, 0.0
        %1257 = vadd.xlane.f32.xlu0 %v1256
        %v1258 = vpop.xlane.xlu0 %1257
        %v1259 = vrcp.pop %v1258
        %v1260 = vmul.f32 %v1255, %v1259
        %v1261 = vmul.f32 %v1260, %v788
        %v1262 = vpack.c.bf16 %v1261, %v1261
        %1263 = vrot.lane.b32.xlu0 %v859, 40
        %v1264 = vpop.permute.xlu0 %1263
        %v1266 = vsel %vm863, %v1262, 0
        %v1269 = vsel %vm930, %v1264, 0
        %1271 = vmatprep.subr.bf16.mxu0 0
        %1272 = vmatpush1.bf16.msra.mxu0 %v1269
        %1273 = vmatprep.subr.bf16.mxu0 0
        %1274 = vmatpush1.bf16.msra.mxu0 0
        %1275 = vmatprep.subr.bf16.mxu0 0
        %1276 = vmatpush1.bf16.msra.mxu0 0
        %1277 = vmatprep.subr.bf16.mxu0 0
        %1278 = vmatpush1.bf16.msra.mxu0 0
        %1279 = vmatprep.subr.bf16.mxu0 0
        %1280 = vmatpush1.bf16.msra.mxu0 0
        %1281 = vmatprep.subr.bf16.mxu0 0
        %1282 = vmatpush1.bf16.msra.mxu0 0
        %1283 = vmatprep.subr.bf16.mxu0 0
        %1284 = vmatpush1.bf16.msra.mxu0 0
        %1285 = vmatprep.subr.bf16.mxu0 0
        %1286 = vmatpush1.bf16.msra.mxu0 0
        %1287 = vmatprep.subr.bf16.mxu0 0
        %1288 = vmatpush1.bf16.msra.mxu0 0
        %1289 = vmatprep.subr.bf16.mxu0 0
        %1290 = vmatpush1.bf16.msra.mxu0 0
        %1291 = vmatprep.subr.bf16.mxu0 0
        %1292 = vmatpush1.bf16.msra.mxu0 0
        %1293 = vmatprep.subr.bf16.mxu0 0
        %1294 = vmatpush1.bf16.msra.mxu0 0
        %1295 = vmatprep.subr.bf16.mxu0 0
        %1296 = vmatpush1.bf16.msra.mxu0 0
        %1297 = vmatprep.subr.bf16.mxu0 0
        %1298 = vmatpush1.bf16.msra.mxu0 0
        %1299 = vmatprep.subr.bf16.mxu0 0
        %1300 = vmatpush1.bf16.msra.mxu0 0
        %1301 = vmatprep.subr.bf16.mxu0 0
        %1302 = vmatpush1.bf16.msra.mxu0 0
        %1303 = vmatprep.mubr.bf16.mxu0 0
        %1304 = vmatmul.mubr.bf16.gmra.mrb[0].mxu0 %v1266
        %v1305 = vpop.f32.mrb[0].mxu0
        %v1306 = vadd.f32 0.0, %v1305
        %v1307 = vpop.f32.mrb[0].mxu0
        %v1308 = vpop.f32.mrb[0].mxu0
        %v1309 = vpop.f32.mrb[0].mxu0
        %1310 = vdwg.mxu0
        %1312 = vrot.lane.b32.xlu0 %v1082, 8
        %v1313 = vpop.permute.xlu0 %1312
        %1316 = vrot.lane.b32.xlu0 %v1194, 16
        %v1317 = vpop.permute.xlu0 %1316
        %1320 = vrot.lane.b32.xlu0 %v1306, 24
        %v1321 = vpop.permute.xlu0 %1320
        %v1323 = vsel %vm863, %v969, %v1313
        %vm1324 = vcmask 130048
        %v1325 = vsel %vm1324, %v1323, %v1317
        %vm1326 = vcmask 195584
        %v1327 = vsel %vm1326, %v1325, %v1321
        %v1328 = vpack.c.bf16 %v1327, %v1327
        %v1329 = vld [vmem:[%s6] sm:$0xf]
        %v1330 = vld [vmem:[%s6 + $0x4] sm:$0xf]
        %v1331 = vld [vmem:[%s6 + $0x8] sm:$0xf]
        %v1332 = vld [vmem:[%s6 + $0xc] sm:$0xf]
        %v1333 = vld [vmem:[%s7] sm:$0x1]
        %v1335 = vlaneseq
        %v1336 = vshrl.u32 %v1335, 7
        %v1337 = vsub.s32 0, %v1336
        %v1338 = vrot.slane %v1333, %v1337
        %v1344 = vunpack.c.l.b16 %v1329
        %v1345 = vunpack.c.l.b16 %v1330
        %v1346 = vunpack.c.l.b16 %v1331
        %v1347 = vunpack.c.l.b16 %v1332
        %v1348 = vpack.c.b16 %v1345, %v1344
        %v1349 = vpack.c.b16 %v1347, %v1346
        %v1353 = vsel %vm813, %v1328, 0
        %1355 = vmatprep.subr.bf16.mxu0 0
        %1356 = vmatpush1.bf16.msra.mxu0 %v1348
        %1357 = vmatprep.subr.bf16.mxu0 0
        %1358 = vmatpush1.bf16.msra.mxu0 %v1349
        %1359 = vmatprep.subr.bf16.mxu0 0
        %1360 = vmatpush1.bf16.msra.mxu0 0
        %1361 = vmatprep.subr.bf16.mxu0 0
        %1362 = vmatpush1.bf16.msra.mxu0 0
        %1363 = vmatprep.subr.bf16.mxu0 0
        %1364 = vmatpush1.bf16.msra.mxu0 0
        %1365 = vmatprep.subr.bf16.mxu0 0
        %1366 = vmatpush1.bf16.msra.mxu0 0
        %1367 = vmatprep.subr.bf16.mxu0 0
        %1368 = vmatpush1.bf16.msra.mxu0 0
        %1369 = vmatprep.subr.bf16.mxu0 0
        %1370 = vmatpush1.bf16.msra.mxu0 0
        %1371 = vmatprep.subr.bf16.mxu0 0
        %1372 = vmatpush1.bf16.msra.mxu0 0
        %1373 = vmatprep.subr.bf16.mxu0 0
        %1374 = vmatpush1.bf16.msra.mxu0 0
        %1375 = vmatprep.subr.bf16.mxu0 0
        %1376 = vmatpush1.bf16.msra.mxu0 0
        %1377 = vmatprep.subr.bf16.mxu0 0
        %1378 = vmatpush1.bf16.msra.mxu0 0
        %1379 = vmatprep.subr.bf16.mxu0 0
        %1380 = vmatpush1.bf16.msra.mxu0 0
        %1381 = vmatprep.subr.bf16.mxu0 0
        %1382 = vmatpush1.bf16.msra.mxu0 0
        %1383 = vmatprep.subr.bf16.mxu0 0
        %1384 = vmatpush1.bf16.msra.mxu0 0
        %1385 = vmatprep.subr.bf16.mxu0 0
        %1386 = vmatpush1.bf16.msra.mxu0 0
        %1387 = vmatprep.mubr.bf16.mxu0 0
        %1388 = vmatmul.mubr.bf16.gmra.mrb[0].mxu0 %v1353
        %v1389 = vpop.f32.mrb[0].mxu0
        %v1390 = vadd.f32 %v1338, %v1389
        %v1391 = vpop.f32.mrb[0].mxu0
        %v1392 = vpop.f32.mrb[0].mxu0
        %v1393 = vpop.f32.mrb[0].mxu0
        %1394 = vdwg.mxu0
        %v1395 = vadd.f32 %v1390, %v785
        %v1396 = vsel %vm813, %v1395, 0.0
        %1397 = vadd.xlane.f32.xlu0 %v1396
        %v1398 = vpop.xlane.xlu0 %1397
        %v1399 = vrcp.pop 32.0
        %v1400 = vmul.f32 %v1398, %v1399
        %v1401 = vsub.f32 %v1395, %v1400
        %v1402 = vmul.f32 %v1401, %v1401
        %v1403 = vsel %vm813, %v1402, 0.0
        %1404 = vadd.xlane.f32.xlu0 %v1403
        %v1405 = vpop.xlane.xlu0 %1404
        %v1406 = vmul.f32 %v1405, %v1399
        %v1407 = vadd.f32 %v1406, 1e-05
        %v1408 = vrsqrt.pop %v1407
        %v1409 = vmul.f32 %v1401, %v1408
        %v1410 = vld [vmem:[%s8] sm:$0x1]
        %v1412 = vlaneseq
        %v1413 = vshrl.u32 %v1412, 7
        %v1414 = vsub.s32 0, %v1413
        %v1415 = vrot.slane %v1410, %v1414
        %v1417 = vmul.f32 %v1409, %v1415
        %v1418 = vld [vmem:[%s9] sm:$0x1]
        %v1420 = vlaneseq
        %v1421 = vshrl.u32 %v1420, 7
        %v1422 = vsub.s32 0, %v1421
        %v1423 = vrot.slane %v1418, %v1422
        %v1425 = vadd.f32 %v1417, %v1423
        %v1426 = vpack.c.bf16 %v1425, %v1425
        %v1427 = vld [vmem:[%s10] sm:$0xf]
        %v1428 = vld [vmem:[%s10 + $0x4] sm:$0xf]
        %v1429 = vld [vmem:[%s10 + $0x8] sm:$0xf]
        %v1430 = vld [vmem:[%s10 + $0xc] sm:$0xf]
        %v1431 = vld [vmem:[%s11] sm:$0x1]
        %v1433 = vlaneseq
        %v1434 = vshrl.u32 %v1433, 7
        %v1435 = vsub.s32 0, %v1434
        %v1436 = vrot.slane %v1431, %v1435
        %v1442 = vunpack.c.l.b16 %v1427
        %v1443 = vunpack.c.l.b16 %v1428
        %v1444 = vunpack.c.l.b16 %v1429
        %v1445 = vunpack.c.l.b16 %v1430
        %v1446 = vpack.c.b16 %v1443, %v1442
        %v1447 = vpack.c.b16 %v1445, %v1444
        %v1451 = vsel %vm813, %v1426, 0
        %1453 = vmatprep.subr.bf16.mxu0 0
        %1454 = vmatpush1.bf16.msra.mxu0 %v1446
        %1455 = vmatprep.subr.bf16.mxu0 0
        %1456 = vmatpush1.bf16.msra.mxu0 %v1447
        %1457 = vmatprep.subr.bf16.mxu0 0
        %1458 = vmatpush1.bf16.msra.mxu0 0
        %1459 = vmatprep.subr.bf16.mxu0 0
        %1460 = vmatpush1.bf16.msra.mxu0 0
        %1461 = vmatprep.subr.bf16.mxu0 0
        %1462 = vmatpush1.bf16.msra.mxu0 0
        %1463 = vmatprep.subr.bf16.mxu0 0
        %1464 = vmatpush1.bf16.msra.mxu0 0
        %1465 = vmatprep.subr.bf16.mxu0 0
        %1466 = vmatpush1.bf16.msra.mxu0 0
        %1467 = vmatprep.subr.bf16.mxu0 0
        %1468 = vmatpush1.bf16.msra.mxu0 0
        %1469 = vmatprep.subr.bf16.mxu0 0
        %1470 = vmatpush1.bf16.msra.mxu0 0
        %1471 = vmatprep.subr.bf16.mxu0 0
        %1472 = vmatpush1.bf16.msra.mxu0 0
        %1473 = vmatprep.subr.bf16.mxu0 0
        %1474 = vmatpush1.bf16.msra.mxu0 0
        %1475 = vmatprep.subr.bf16.mxu0 0
        %1476 = vmatpush1.bf16.msra.mxu0 0
        %1477 = vmatprep.subr.bf16.mxu0 0
        %1478 = vmatpush1.bf16.msra.mxu0 0
        %1479 = vmatprep.subr.bf16.mxu0 0
        %1480 = vmatpush1.bf16.msra.mxu0 0
        %1481 = vmatprep.subr.bf16.mxu0 0
        %1482 = vmatpush1.bf16.msra.mxu0 0
        %1483 = vmatprep.subr.bf16.mxu0 0
        %1484 = vmatpush1.bf16.msra.mxu0 0
        %1485 = vmatprep.mubr.bf16.mxu0 0
        %1486 = vmatmul.mubr.bf16.gmra.mrb[0].mxu0 %v1451
        %v1487 = vpop.f32.mrb[0].mxu0
        %v1488 = vadd.f32 %v1436, %v1487
        %v1489 = vpop.f32.mrb[0].mxu0
        %v1490 = vpop.f32.mrb[0].mxu0
        %v1491 = vpop.f32.mrb[0].mxu0
        %1492 = vdwg.mxu0
        %v1493 = vmul.f32 %v1488, 0.35355338
        %v1494 = vpack.c.bf16 %v786, %v786
        %v1495 = vld [vmem:[%s12] sm:$0xf]
        %v1496 = vld [vmem:[%s12 + $0x4] sm:$0xf]
        %v1497 = vld [vmem:[%s12 + $0x8] sm:$0xf]
        %v1498 = vld [vmem:[%s12 + $0xc] sm:$0xf]
        %v1499 = vld [vmem:[%s13] sm:$0x1]
        %v1501 = vlaneseq
        %v1502 = vshrl.u32 %v1501, 7
        %v1503 = vsub.s32 0, %v1502
        %v1504 = vrot.slane %v1499, %v1503
        %v1510 = vunpack.c.l.b16 %v1495
        %v1511 = vunpack.c.l.b16 %v1496
        %v1512 = vunpack.c.l.b16 %v1497
        %v1513 = vunpack.c.l.b16 %v1498
        %v1514 = vpack.c.b16 %v1511, %v1510
        %v1515 = vpack.c.b16 %v1513, %v1512
        %v1519 = vsel %vm813, %v1494, 0
        %1521 = vmatprep.subr.bf16.mxu0 0
        %1522 = vmatpush1.bf16.msra.mxu0 %v1514
        %1523 = vmatprep.subr.bf16.mxu0 0
        %1524 = vmatpush1.bf16.msra.mxu0 %v1515
        %1525 = vmatprep.subr.bf16.mxu0 0
        %1526 = vmatpush1.bf16.msra.mxu0 0
        %1527 = vmatprep.subr.bf16.mxu0 0
        %1528 = vmatpush1.bf16.msra.mxu0 0
        %1529 = vmatprep.subr.bf16.mxu0 0
        %1530 = vmatpush1.bf16.msra.mxu0 0
        %1531 = vmatprep.subr.bf16.mxu0 0
        %1532 = vmatpush1.bf16.msra.mxu0 0
        %1533 = vmatprep.subr.bf16.mxu0 0
        %1534 = vmatpush1.bf16.msra.mxu0 0
        %1535 = vmatprep.subr.bf16.mxu0 0
        %1536 = vmatpush1.bf16.msra.mxu0 0
        %1537 = vmatprep.subr.bf16.mxu0 0
        %1538 = vmatpush1.bf16.msra.mxu0 0
        %1539 = vmatprep.subr.bf16.mxu0 0
        %1540 = vmatpush1.bf16.msra.mxu0 0
        %1541 = vmatprep.subr.bf16.mxu0 0
        %1542 = vmatpush1.bf16.msra.mxu0 0
        %1543 = vmatprep.subr.bf16.mxu0 0
        %1544 = vmatpush1.bf16.msra.mxu0 0
        %1545 = vmatprep.subr.bf16.mxu0 0
        %1546 = vmatpush1.bf16.msra.mxu0 0
        %1547 = vmatprep.subr.bf16.mxu0 0
        %1548 = vmatpush1.bf16.msra.mxu0 0
        %1549 = vmatprep.subr.bf16.mxu0 0
        %1550 = vmatpush1.bf16.msra.mxu0 0
        %1551 = vmatprep.subr.bf16.mxu0 0
        %1552 = vmatpush1.bf16.msra.mxu0 0
        %1553 = vmatprep.mubr.bf16.mxu0 0
        %1554 = vmatmul.mubr.bf16.gmra.mrb[0].mxu0 %v1519
        %v1555 = vpop.f32.mrb[0].mxu0
        %v1556 = vadd.f32 %v1504, %v1555
        %v1557 = vpop.f32.mrb[0].mxu0
        %v1558 = vpop.f32.mrb[0].mxu0
        %v1559 = vpop.f32.mrb[0].mxu0
        %1560 = vdwg.mxu0
        %v1561 = vpack.c.bf16 %v1493, %v1493
        %v1562 = vpack.c.bf16 %v1556, %v1556
        %v1564 = vsel %vm863, %v1561, 0
        %v1567 = vsel %vm863, %v1562, 0
        %1569 = vmatprep.subr.bf16.mxu0 0
        %1570 = vmatpush1.bf16.xpose.msra.mxu0 %v1567
        %1571 = vmatprep.subr.bf16.mxu0 0
        %1572 = vmatpush1.bf16.xpose.msra.mxu0 0
        %1573 = vmatprep.subr.bf16.mxu0 0
        %1574 = vmatpush1.bf16.xpose.msra.mxu0 0
        %1575 = vmatprep.subr.bf16.mxu0 0
        %1576 = vmatpush1.bf16.xpose.msra.mxu0 0
        %1577 = vmatprep.subr.bf16.mxu0 0
        %1578 = vmatpush1.bf16.xpose.msra.mxu0 0
        %1579 = vmatprep.subr.bf16.mxu0 0
        %1580 = vmatpush1.bf16.xpose.msra.mxu0 0
        %1581 = vmatprep.subr.bf16.mxu0 0
        %1582 = vmatpush1.bf16.xpose.msra.mxu0 0
        %1583 = vmatprep.subr.bf16.mxu0 0
        %1584 = vmatpush1.bf16.xpose.msra.mxu0 0
        %1585 = vmatprep.subr.bf16.mxu0 0
        %1586 = vmatpush1.bf16.xpose.msra.mxu0 0
        %1587 = vmatprep.subr.bf16.mxu0 0
        %1588 = vmatpush1.bf16.xpose.msra.mxu0 0
        %1589 = vmatprep.subr.bf16.mxu0 0
        %1590 = vmatpush1.bf16.xpose.msra.mxu0 0
        %1591 = vmatprep.subr.bf16.mxu0 0
        %1592 = vmatpush1.bf16.xpose.msra.mxu0 0
        %1593 = vmatprep.subr.bf16.mxu0 0
        %1594 = vmatpush1.bf16.xpose.msra.mxu0 0
        %1595 = vmatprep.subr.bf16.mxu0 0
        %1596 = vmatpush1.bf16.xpose.msra.mxu0 0
        %1597 = vmatprep.subr.bf16.mxu0 0
        %1598 = vmatpush1.bf16.xpose.msra.mxu0 0
        %1599 = vmatprep.subr.bf16.mxu0 0
        %1600 = vmatpush1.bf16.xpose.msra.mxu0 0
        %1601 = vmatprep.mubr.bf16.mxu0 0
        %1602 = vmatmul.mubr.bf16.gmra.mrb[0].mxu0 %v1564
        %v1603 = vpop.f32.mrb[0].mxu0
        %v1604 = vadd.f32 0.0, %v1603
        %v1605 = vpop.f32.mrb[0].mxu0
        %v1606 = vpop.f32.mrb[0].mxu0
        %v1607 = vpop.f32.mrb[0].mxu0
        %1608 = vdwg.mxu0
        %v1609 = vsel %vm863, %v1604, -inf
        %1610 = vmax.xlane.f32.xlu0 %v1609
        %v1611 = vpop.xlane.xlu0 %1610
        %v1612 = vsub.f32 %v1604, %v1611
        %v1613 = vmul.f32 %v1612, 1.442695
        %v1614 = vpow.pop %v1613
        %v1615 = vsel %vm863, %v1614, 0.0
        %1616 = vadd.xlane.f32.xlu0 %v1615
        %v1617 = vpop.xlane.xlu0 %1616
        %v1618 = vrcp.pop %v1617
        %v1619 = vmul.f32 %v1614, %v1618
        %v1620 = vpack.c.bf16 %v1619, %v1619
        %1622 = vrot.lane.b32.xlu0 %v1562, 96
        %v1623 = vpop.permute.xlu0 %1622
        %v1625 = vsel %vm863, %v1620, 0
        %v1628 = vsel %vm930, %v1623, 0
        %1630 = vmatprep.subr.bf16.mxu0 0
        %1631 = vmatpush1.bf16.msra.mxu0 %v1628
        %1632 = vmatprep.subr.bf16.mxu0 0
        %1633 = vmatpush1.bf16.msra.mxu0 0
        %1634 = vmatprep.subr.bf16.mxu0 0
        %1635 = vmatpush1.bf16.msra.mxu0 0
        %1636 = vmatprep.subr.bf16.mxu0 0
        %1637 = vmatpush1.bf16.msra.mxu0 0
        %1638 = vmatprep.subr.bf16.mxu0 0
        %1639 = vmatpush1.bf16.msra.mxu0 0
        %1640 = vmatprep.subr.bf16.mxu0 0
        %1641 = vmatpush1.bf16.msra.mxu0 0
        %1642 = vmatprep.subr.bf16.mxu0 0
        %1643 = vmatpush1.bf16.msra.mxu0 0
        %1644 = vmatprep.subr.bf16.mxu0 0
        %1645 = vmatpush1.bf16.msra.mxu0 0
        %1646 = vmatprep.subr.bf16.mxu0 0
        %1647 = vmatpush1.bf16.msra.mxu0 0
        %1648 = vmatprep.subr.bf16.mxu0 0
        %1649 = vmatpush1.bf16.msra.mxu0 0
        %1650 = vmatprep.subr.bf16.mxu0 0
        %1651 = vmatpush1.bf16.msra.mxu0 0
        %1652 = vmatprep.subr.bf16.mxu0 0
        %1653 = vmatpush1.bf16.msra.mxu0 0
        %1654 = vmatprep.subr.bf16.mxu0 0
        %1655 = vmatpush1.bf16.msra.mxu0 0
        %1656 = vmatprep.subr.bf16.mxu0 0
        %1657 = vmatpush1.bf16.msra.mxu0 0
        %1658 = vmatprep.subr.bf16.mxu0 0
        %1659 = vmatpush1.bf16.msra.mxu0 0
        %1660 = vmatprep.subr.bf16.mxu0 0
        %1661 = vmatpush1.bf16.msra.mxu0 0
        %1662 = vmatprep.mubr.bf16.mxu0 0
        %1663 = vmatmul.mubr.bf16.gmra.mrb[0].mxu0 %v1625
        %v1664 = vpop.f32.mrb[0].mxu0
        %v1665 = vadd.f32 0.0, %v1664
        %v1666 = vpop.f32.mrb[0].mxu0
        %v1667 = vpop.f32.mrb[0].mxu0
        %v1668 = vpop.f32.mrb[0].mxu0
        %1669 = vdwg.mxu0
        %1671 = vrot.lane.b32.xlu0 %v1561, 120
        %v1672 = vpop.permute.xlu0 %1671
        %1673 = vrot.lane.b32.xlu0 %v1562, 120
        %v1674 = vpop.permute.xlu0 %1673
        %v1676 = vsel %vm863, %v1672, 0
        %v1679 = vsel %vm863, %v1674, 0
        %1681 = vmatprep.subr.bf16.mxu0 0
        %1682 = vmatpush1.bf16.xpose.msra.mxu0 %v1679
        %1683 = vmatprep.subr.bf16.mxu0 0
        %1684 = vmatpush1.bf16.xpose.msra.mxu0 0
        %1685 = vmatprep.subr.bf16.mxu0 0
        %1686 = vmatpush1.bf16.xpose.msra.mxu0 0
        %1687 = vmatprep.subr.bf16.mxu0 0
        %1688 = vmatpush1.bf16.xpose.msra.mxu0 0
        %1689 = vmatprep.subr.bf16.mxu0 0
        %1690 = vmatpush1.bf16.xpose.msra.mxu0 0
        %1691 = vmatprep.subr.bf16.mxu0 0
        %1692 = vmatpush1.bf16.xpose.msra.mxu0 0
        %1693 = vmatprep.subr.bf16.mxu0 0
        %1694 = vmatpush1.bf16.xpose.msra.mxu0 0
        %1695 = vmatprep.subr.bf16.mxu0 0
        %1696 = vmatpush1.bf16.xpose.msra.mxu0 0
        %1697 = vmatprep.subr.bf16.mxu0 0
        %1698 = vmatpush1.bf16.xpose.msra.mxu0 0
        %1699 = vmatprep.subr.bf16.mxu0 0
        %1700 = vmatpush1.bf16.xpose.msra.mxu0 0
        %1701 = vmatprep.subr.bf16.mxu0 0
        %1702 = vmatpush1.bf16.xpose.msra.mxu0 0
        %1703 = vmatprep.subr.bf16.mxu0 0
        %1704 = vmatpush1.bf16.xpose.msra.mxu0 0
        %1705 = vmatprep.subr.bf16.mxu0 0
        %1706 = vmatpush1.bf16.xpose.msra.mxu0 0
        %1707 = vmatprep.subr.bf16.mxu0 0
        %1708 = vmatpush1.bf16.xpose.msra.mxu0 0
        %1709 = vmatprep.subr.bf16.mxu0 0
        %1710 = vmatpush1.bf16.xpose.msra.mxu0 0
        %1711 = vmatprep.subr.bf16.mxu0 0
        %1712 = vmatpush1.bf16.xpose.msra.mxu0 0
        %1713 = vmatprep.mubr.bf16.mxu0 0
        %1714 = vmatmul.mubr.bf16.gmra.mrb[0].mxu0 %v1676
        %v1715 = vpop.f32.mrb[0].mxu0
        %v1716 = vadd.f32 0.0, %v1715
        %v1717 = vpop.f32.mrb[0].mxu0
        %v1718 = vpop.f32.mrb[0].mxu0
        %v1719 = vpop.f32.mrb[0].mxu0
        %1720 = vdwg.mxu0
        %v1721 = vsel %vm863, %v1716, -inf
        %1722 = vmax.xlane.f32.xlu0 %v1721
        %v1723 = vpop.xlane.xlu0 %1722
        %v1724 = vsub.f32 %v1716, %v1723
        %v1725 = vmul.f32 %v1724, 1.442695
        %v1726 = vpow.pop %v1725
        %v1727 = vsel %vm863, %v1726, 0.0
        %1728 = vadd.xlane.f32.xlu0 %v1727
        %v1729 = vpop.xlane.xlu0 %1728
        %v1730 = vrcp.pop %v1729
        %v1731 = vmul.f32 %v1726, %v1730
        %v1732 = vpack.c.bf16 %v1731, %v1731
        %1733 = vrot.lane.b32.xlu0 %v1562, 88
        %v1734 = vpop.permute.xlu0 %1733
        %v1736 = vsel %vm863, %v1732, 0
        %v1739 = vsel %vm930, %v1734, 0
        %1741 = vmatprep.subr.bf16.mxu0 0
        %1742 = vmatpush1.bf16.msra.mxu0 %v1739
        %1743 = vmatprep.subr.bf16.mxu0 0
        %1744 = vmatpush1.bf16.msra.mxu0 0
        %1745 = vmatprep.subr.bf16.mxu0 0
        %1746 = vmatpush1.bf16.msra.mxu0 0
        %1747 = vmatprep.subr.bf16.mxu0 0
        %1748 = vmatpush1.bf16.msra.mxu0 0
        %1749 = vmatprep.subr.bf16.mxu0 0
        %1750 = vmatpush1.bf16.msra.mxu0 0
        %1751 = vmatprep.subr.bf16.mxu0 0
        %1752 = vmatpush1.bf16.msra.mxu0 0
        %1753 = vmatprep.subr.bf16.mxu0 0
        %1754 = vmatpush1.bf16.msra.mxu0 0
        %1755 = vmatprep.subr.bf16.mxu0 0
        %1756 = vmatpush1.bf16.msra.mxu0 0
        %1757 = vmatprep.subr.bf16.mxu0 0
        %1758 = vmatpush1.bf16.msra.mxu0 0
        %1759 = vmatprep.subr.bf16.mxu0 0
        %1760 = vmatpush1.bf16.msra.mxu0 0
        %1761 = vmatprep.subr.bf16.mxu0 0
        %1762 = vmatpush1.bf16.msra.mxu0 0
        %1763 = vmatprep.subr.bf16.mxu0 0
        %1764 = vmatpush1.bf16.msra.mxu0 0
        %1765 = vmatprep.subr.bf16.mxu0 0
        %1766 = vmatpush1.bf16.msra.mxu0 0
        %1767 = vmatprep.subr.bf16.mxu0 0
        %1768 = vmatpush1.bf16.msra.mxu0 0
        %1769 = vmatprep.subr.bf16.mxu0 0
        %1770 = vmatpush1.bf16.msra.mxu0 0
        %1771 = vmatprep.subr.bf16.mxu0 0
        %1772 = vmatpush1.bf16.msra.mxu0 0
        %1773 = vmatprep.mubr.bf16.mxu0 0
        %1774 = vmatmul.mubr.bf16.gmra.mrb[0].mxu0 %v1736
        %v1775 = vpop.f32.mrb[0].mxu0
        %v1776 = vadd.f32 0.0, %v1775
        %v1777 = vpop.f32.mrb[0].mxu0
        %v1778 = vpop.f32.mrb[0].mxu0
        %v1779 = vpop.f32.mrb[0].mxu0
        %1780 = vdwg.mxu0
        %1781 = vrot.lane.b32.xlu0 %v1561, 112
        %v1782 = vpop.permute.xlu0 %1781
        %1783 = vrot.lane.b32.xlu0 %v1562, 112
        %v1784 = vpop.permute.xlu0 %1783
        %v1786 = vsel %vm863, %v1782, 0
        %v1789 = vsel %vm863, %v1784, 0
        %1791 = vmatprep.subr.bf16.mxu0 0
        %1792 = vmatpush1.bf16.xpose.msra.mxu0 %v1789
        %1793 = vmatprep.subr.bf16.mxu0 0
        %1794 = vmatpush1.bf16.xpose.msra.mxu0 0
        %1795 = vmatprep.subr.bf16.mxu0 0
        %1796 = vmatpush1.bf16.xpose.msra.mxu0 0
        %1797 = vmatprep.subr.bf16.mxu0 0
        %1798 = vmatpush1.bf16.xpose.msra.mxu0 0
        %1799 = vmatprep.subr.bf16.mxu0 0
        %1800 = vmatpush1.bf16.xpose.msra.mxu0 0
        %1801 = vmatprep.subr.bf16.mxu0 0
        %1802 = vmatpush1.bf16.xpose.msra.mxu0 0
        %1803 = vmatprep.subr.bf16.mxu0 0
        %1804 = vmatpush1.bf16.xpose.msra.mxu0 0
        %1805 = vmatprep.subr.bf16.mxu0 0
        %1806 = vmatpush1.bf16.xpose.msra.mxu0 0
        %1807 = vmatprep.subr.bf16.mxu0 0
        %1808 = vmatpush1.bf16.xpose.msra.mxu0 0
        %1809 = vmatprep.subr.bf16.mxu0 0
        %1810 = vmatpush1.bf16.xpose.msra.mxu0 0
        %1811 = vmatprep.subr.bf16.mxu0 0
        %1812 = vmatpush1.bf16.xpose.msra.mxu0 0
        %1813 = vmatprep.subr.bf16.mxu0 0
        %1814 = vmatpush1.bf16.xpose.msra.mxu0 0
        %1815 = vmatprep.subr.bf16.mxu0 0
        %1816 = vmatpush1.bf16.xpose.msra.mxu0 0
        %1817 = vmatprep.subr.bf16.mxu0 0
        %1818 = vmatpush1.bf16.xpose.msra.mxu0 0
        %1819 = vmatprep.subr.bf16.mxu0 0
        %1820 = vmatpush1.bf16.xpose.msra.mxu0 0
        %1821 = vmatprep.subr.bf16.mxu0 0
        %1822 = vmatpush1.bf16.xpose.msra.mxu0 0
        %1823 = vmatprep.mubr.bf16.mxu0 0
        %1824 = vmatmul.mubr.bf16.gmra.mrb[0].mxu0 %v1786
        %v1825 = vpop.f32.mrb[0].mxu0
        %v1826 = vadd.f32 0.0, %v1825
        %v1827 = vpop.f32.mrb[0].mxu0
        %v1828 = vpop.f32.mrb[0].mxu0
        %v1829 = vpop.f32.mrb[0].mxu0
        %1830 = vdwg.mxu0
        %v1831 = vsel %vm863, %v1826, -inf
        %1832 = vmax.xlane.f32.xlu0 %v1831
        %v1833 = vpop.xlane.xlu0 %1832
        %v1834 = vsub.f32 %v1826, %v1833
        %v1835 = vmul.f32 %v1834, 1.442695
        %v1836 = vpow.pop %v1835
        %v1837 = vsel %vm863, %v1836, 0.0
        %1838 = vadd.xlane.f32.xlu0 %v1837
        %v1839 = vpop.xlane.xlu0 %1838
        %v1840 = vrcp.pop %v1839
        %v1841 = vmul.f32 %v1836, %v1840
        %v1842 = vpack.c.bf16 %v1841, %v1841
        %1843 = vrot.lane.b32.xlu0 %v1562, 80
        %v1844 = vpop.permute.xlu0 %1843
        %v1846 = vsel %vm863, %v1842, 0
        %v1849 = vsel %vm930, %v1844, 0
        %1851 = vmatprep.subr.bf16.mxu0 0
        %1852 = vmatpush1.bf16.msra.mxu0 %v1849
        %1853 = vmatprep.subr.bf16.mxu0 0
        %1854 = vmatpush1.bf16.msra.mxu0 0
        %1855 = vmatprep.subr.bf16.mxu0 0
        %1856 = vmatpush1.bf16.msra.mxu0 0
        %1857 = vmatprep.subr.bf16.mxu0 0
        %1858 = vmatpush1.bf16.msra.mxu0 0
        %1859 = vmatprep.subr.bf16.mxu0 0
        %1860 = vmatpush1.bf16.msra.mxu0 0
        %1861 = vmatprep.subr.bf16.mxu0 0
        %1862 = vmatpush1.bf16.msra.mxu0 0
        %1863 = vmatprep.subr.bf16.mxu0 0
        %1864 = vmatpush1.bf16.msra.mxu0 0
        %1865 = vmatprep.subr.bf16.mxu0 0
        %1866 = vmatpush1.bf16.msra.mxu0 0
        %1867 = vmatprep.subr.bf16.mxu0 0
        %1868 = vmatpush1.bf16.msra.mxu0 0
        %1869 = vmatprep.subr.bf16.mxu0 0
        %1870 = vmatpush1.bf16.msra.mxu0 0
        %1871 = vmatprep.subr.bf16.mxu0 0
        %1872 = vmatpush1.bf16.msra.mxu0 0
        %1873 = vmatprep.subr.bf16.mxu0 0
        %1874 = vmatpush1.bf16.msra.mxu0 0
        %1875 = vmatprep.subr.bf16.mxu0 0
        %1876 = vmatpush1.bf16.msra.mxu0 0
        %1877 = vmatprep.subr.bf16.mxu0 0
        %1878 = vmatpush1.bf16.msra.mxu0 0
        %1879 = vmatprep.subr.bf16.mxu0 0
        %1880 = vmatpush1.bf16.msra.mxu0 0
        %1881 = vmatprep.subr.bf16.mxu0 0
        %1882 = vmatpush1.bf16.msra.mxu0 0
        %1883 = vmatprep.mubr.bf16.mxu0 0
        %1884 = vmatmul.mubr.bf16.gmra.mrb[0].mxu0 %v1846
        %v1885 = vpop.f32.mrb[0].mxu0
        %v1886 = vadd.f32 0.0, %v1885
        %v1887 = vpop.f32.mrb[0].mxu0
        %v1888 = vpop.f32.mrb[0].mxu0
        %v1889 = vpop.f32.mrb[0].mxu0
        %1890 = vdwg.mxu0
        %1891 = vrot.lane.b32.xlu0 %v1561, 104
        %v1892 = vpop.permute.xlu0 %1891
        %1893 = vrot.lane.b32.xlu0 %v1562, 104
        %v1894 = vpop.permute.xlu0 %1893
        %v1896 = vsel %vm863, %v1892, 0
        %v1899 = vsel %vm863, %v1894, 0
        %1901 = vmatprep.subr.bf16.mxu0 0
        %1902 = vmatpush1.bf16.xpose.msra.mxu0 %v1899
        %1903 = vmatprep.subr.bf16.mxu0 0
        %1904 = vmatpush1.bf16.xpose.msra.mxu0 0
        %1905 = vmatprep.subr.bf16.mxu0 0
        %1906 = vmatpush1.bf16.xpose.msra.mxu0 0
        %1907 = vmatprep.subr.bf16.mxu0 0
        %1908 = vmatpush1.bf16.xpose.msra.mxu0 0
        %1909 = vmatprep.subr.bf16.mxu0 0
        %1910 = vmatpush1.bf16.xpose.msra.mxu0 0
        %1911 = vmatprep.subr.bf16.mxu0 0
        %1912 = vmatpush1.bf16.xpose.msra.mxu0 0
        %1913 = vmatprep.subr.bf16.mxu0 0
        %1914 = vmatpush1.bf16.xpose.msra.mxu0 0
        %1915 = vmatprep.subr.bf16.mxu0 0
        %1916 = vmatpush1.bf16.xpose.msra.mxu0 0
        %1917 = vmatprep.subr.bf16.mxu0 0
        %1918 = vmatpush1.bf16.xpose.msra.mxu0 0
        %1919 = vmatprep.subr.bf16.mxu0 0
        %1920 = vmatpush1.bf16.xpose.msra.mxu0 0
        %1921 = vmatprep.subr.bf16.mxu0 0
        %1922 = vmatpush1.bf16.xpose.msra.mxu0 0
        %1923 = vmatprep.subr.bf16.mxu0 0
        %1924 = vmatpush1.bf16.xpose.msra.mxu0 0
        %1925 = vmatprep.subr.bf16.mxu0 0
        %1926 = vmatpush1.bf16.xpose.msra.mxu0 0
        %1927 = vmatprep.subr.bf16.mxu0 0
        %1928 = vmatpush1.bf16.xpose.msra.mxu0 0
        %1929 = vmatprep.subr.bf16.mxu0 0
        %1930 = vmatpush1.bf16.xpose.msra.mxu0 0
        %1931 = vmatprep.subr.bf16.mxu0 0
        %1932 = vmatpush1.bf16.xpose.msra.mxu0 0
        %1933 = vmatprep.mubr.bf16.mxu0 0
        %1934 = vmatmul.mubr.bf16.gmra.mrb[0].mxu0 %v1896
        %v1935 = vpop.f32.mrb[0].mxu0
        %v1936 = vadd.f32 0.0, %v1935
        %v1937 = vpop.f32.mrb[0].mxu0
        %v1938 = vpop.f32.mrb[0].mxu0
        %v1939 = vpop.f32.mrb[0].mxu0
        %1940 = vdwg.mxu0
        %v1941 = vsel %vm863, %v1936, -inf
        %1942 = vmax.xlane.f32.xlu0 %v1941
        %v1943 = vpop.xlane.xlu0 %1942
        %v1944 = vsub.f32 %v1936, %v1943
        %v1945 = vmul.f32 %v1944, 1.442695
        %v1946 = vpow.pop %v1945
        %v1947 = vsel %vm863, %v1946, 0.0
        %1948 = vadd.xlane.f32.xlu0 %v1947
        %v1949 = vpop.xlane.xlu0 %1948
        %v1950 = vrcp.pop %v1949
        %v1951 = vmul.f32 %v1946, %v1950
        %v1952 = vpack.c.bf16 %v1951, %v1951
        %1953 = vrot.lane.b32.xlu0 %v1562, 72
        %v1954 = vpop.permute.xlu0 %1953
        %v1956 = vsel %vm863, %v1952, 0
        %v1959 = vsel %vm930, %v1954, 0
        %1961 = vmatprep.subr.bf16.mxu0 0
        %1962 = vmatpush1.bf16.msra.mxu0 %v1959
        %1963 = vmatprep.subr.bf16.mxu0 0
        %1964 = vmatpush1.bf16.msra.mxu0 0
        %1965 = vmatprep.subr.bf16.mxu0 0
        %1966 = vmatpush1.bf16.msra.mxu0 0
        %1967 = vmatprep.subr.bf16.mxu0 0
        %1968 = vmatpush1.bf16.msra.mxu0 0
        %1969 = vmatprep.subr.bf16.mxu0 0
        %1970 = vmatpush1.bf16.msra.mxu0 0
        %1971 = vmatprep.subr.bf16.mxu0 0
        %1972 = vmatpush1.bf16.msra.mxu0 0
        %1973 = vmatprep.subr.bf16.mxu0 0
        %1974 = vmatpush1.bf16.msra.mxu0 0
        %1975 = vmatprep.subr.bf16.mxu0 0
        %1976 = vmatpush1.bf16.msra.mxu0 0
        %1977 = vmatprep.subr.bf16.mxu0 0
        %1978 = vmatpush1.bf16.msra.mxu0 0
        %1979 = vmatprep.subr.bf16.mxu0 0
        %1980 = vmatpush1.bf16.msra.mxu0 0
        %1981 = vmatprep.subr.bf16.mxu0 0
        %1982 = vmatpush1.bf16.msra.mxu0 0
        %1983 = vmatprep.subr.bf16.mxu0 0
        %1984 = vmatpush1.bf16.msra.mxu0 0
        %1985 = vmatprep.subr.bf16.mxu0 0
        %1986 = vmatpush1.bf16.msra.mxu0 0
        %1987 = vmatprep.subr.bf16.mxu0 0
        %1988 = vmatpush1.bf16.msra.mxu0 0
        %1989 = vmatprep.subr.bf16.mxu0 0
        %1990 = vmatpush1.bf16.msra.mxu0 0
        %1991 = vmatprep.subr.bf16.mxu0 0
        %1992 = vmatpush1.bf16.msra.mxu0 0
        %1993 = vmatprep.mubr.bf16.mxu0 0
        %1994 = vmatmul.mubr.bf16.gmra.mrb[0].mxu0 %v1956
        %v1995 = vpop.f32.mrb[0].mxu0
        %v1996 = vadd.f32 0.0, %v1995
        %v1997 = vpop.f32.mrb[0].mxu0
        %v1998 = vpop.f32.mrb[0].mxu0
        %v1999 = vpop.f32.mrb[0].mxu0
        %2000 = vdwg.mxu0
        %2002 = vrot.lane.b32.xlu0 %v1776, 8
        %v2003 = vpop.permute.xlu0 %2002
        %2006 = vrot.lane.b32.xlu0 %v1886, 16
        %v2007 = vpop.permute.xlu0 %2006
        %2010 = vrot.lane.b32.xlu0 %v1996, 24
        %v2011 = vpop.permute.xlu0 %2010
        %v2013 = vsel %vm863, %v1665, %v2003
        %v2014 = vsel %vm1324, %v2013, %v2007
        %v2015 = vsel %vm1326, %v2014, %v2011
        %v2016 = vpack.c.bf16 %v2015, %v2015
        %v2017 = vld [vmem:[%s14] sm:$0xf]
        %v2018 = vld [vmem:[%s14 + $0x4] sm:$0xf]
        %v2019 = vld [vmem:[%s14 + $0x8] sm:$0xf]
        %v2020 = vld [vmem:[%s14 + $0xc] sm:$0xf]
        %v2021 = vld [vmem:[%s15] sm:$0x1]
        %v2023 = vlaneseq
        %v2024 = vshrl.u32 %v2023, 7
        %v2025 = vsub.s32 0, %v2024
        %v2026 = vrot.slane %v2021, %v2025
        %v2032 = vunpack.c.l.b16 %v2017
        %v2033 = vunpack.c.l.b16 %v2018
        %v2034 = vunpack.c.l.b16 %v2019
        %v2035 = vunpack.c.l.b16 %v2020
        %v2036 = vpack.c.b16 %v2033, %v2032
        %v2037 = vpack.c.b16 %v2035, %v2034
        %v2041 = vsel %vm813, %v2016, 0
        %2043 = vmatprep.subr.bf16.mxu0 0
        %2044 = vmatpush1.bf16.msra.mxu0 %v2036
        %2045 = vmatprep.subr.bf16.mxu0 0
        %2046 = vmatpush1.bf16.msra.mxu0 %v2037
        %2047 = vmatprep.subr.bf16.mxu0 0
        %2048 = vmatpush1.bf16.msra.mxu0 0
        %2049 = vmatprep.subr.bf16.mxu0 0
        %2050 = vmatpush1.bf16.msra.mxu0 0
        %2051 = vmatprep.subr.bf16.mxu0 0
        %2052 = vmatpush1.bf16.msra.mxu0 0
        %2053 = vmatprep.subr.bf16.mxu0 0
        %2054 = vmatpush1.bf16.msra.mxu0 0
        %2055 = vmatprep.subr.bf16.mxu0 0
        %2056 = vmatpush1.bf16.msra.mxu0 0
        %2057 = vmatprep.subr.bf16.mxu0 0
        %2058 = vmatpush1.bf16.msra.mxu0 0
        %2059 = vmatprep.subr.bf16.mxu0 0
        %2060 = vmatpush1.bf16.msra.mxu0 0
        %2061 = vmatprep.subr.bf16.mxu0 0
        %2062 = vmatpush1.bf16.msra.mxu0 0
        %2063 = vmatprep.subr.bf16.mxu0 0
        %2064 = vmatpush1.bf16.msra.mxu0 0
        %2065 = vmatprep.subr.bf16.mxu0 0
        %2066 = vmatpush1.bf16.msra.mxu0 0
        %2067 = vmatprep.subr.bf16.mxu0 0
        %2068 = vmatpush1.bf16.msra.mxu0 0
        %2069 = vmatprep.subr.bf16.mxu0 0
        %2070 = vmatpush1.bf16.msra.mxu0 0
        %2071 = vmatprep.subr.bf16.mxu0 0
        %2072 = vmatpush1.bf16.msra.mxu0 0
        %2073 = vmatprep.subr.bf16.mxu0 0
        %2074 = vmatpush1.bf16.msra.mxu0 0
        %2075 = vmatprep.mubr.bf16.mxu0 0
        %2076 = vmatmul.mubr.bf16.gmra.mrb[0].mxu0 %v2041
        %v2077 = vpop.f32.mrb[0].mxu0
        %v2078 = vadd.f32 %v2026, %v2077
        %v2079 = vpop.f32.mrb[0].mxu0
        %v2080 = vpop.f32.mrb[0].mxu0
        %v2081 = vpop.f32.mrb[0].mxu0
        %2082 = vdwg.mxu0
        %v2083 = vadd.f32 %v2078, %v1425
        %v2084 = vsel %vm813, %v2083, 0.0
        %2085 = vadd.xlane.f32.xlu0 %v2084
        %v2086 = vpop.xlane.xlu0 %2085
        %v2087 = vmul.f32 %v2086, %v1399
        %v2088 = vsub.f32 %v2083, %v2087
        %v2089 = vmul.f32 %v2088, %v2088
        %v2090 = vsel %vm813, %v2089, 0.0
        %2091 = vadd.xlane.f32.xlu0 %v2090
        %v2092 = vpop.xlane.xlu0 %2091
        %v2093 = vmul.f32 %v2092, %v1399
        %v2094 = vadd.f32 %v2093, 1e-05
        %v2095 = vrsqrt.pop %v2094
        %v2096 = vmul.f32 %v2088, %v2095
        %v2097 = vld [vmem:[%s16] sm:$0x1]
        %v2099 = vlaneseq
        %v2100 = vshrl.u32 %v2099, 7
        %v2101 = vsub.s32 0, %v2100
        %v2102 = vrot.slane %v2097, %v2101
        %v2104 = vmul.f32 %v2096, %v2102
        %v2105 = vld [vmem:[%s17] sm:$0x1]
        %v2107 = vlaneseq
        %v2108 = vshrl.u32 %v2107, 7
        %v2109 = vsub.s32 0, %v2108
        %v2110 = vrot.slane %v2105, %v2109
        %v2112 = vadd.f32 %v2104, %v2110
        %v2113 = vpack.c.bf16 %v2112, %v2112
        %v2114 = vld [vmem:[%s18] sm:$0xf]
        %v2115 = vld [vmem:[%s18 + $0x4] sm:$0xf]
        %v2116 = vld [vmem:[%s18 + $0x8] sm:$0xf]
        %v2117 = vld [vmem:[%s18 + $0xc] sm:$0xf]
        %v2118 = vld [vmem:[%s19] sm:$0x1]
        %v2120 = vlaneseq
        %v2121 = vshrl.u32 %v2120, 7
        %v2122 = vsub.s32 0, %v2121
        %v2123 = vrot.slane %v2118, %v2122
        %v2129 = vunpack.c.l.b16 %v2114
        %v2130 = vunpack.c.l.b16 %v2115
        %v2131 = vunpack.c.l.b16 %v2116
        %v2132 = vunpack.c.l.b16 %v2117
        %v2133 = vpack.c.b16 %v2130, %v2129
        %v2134 = vpack.c.b16 %v2132, %v2131
        %v2138 = vsel %vm813, %v2113, 0
        %2140 = vmatprep.subr.bf16.mxu0 0
        %2141 = vmatpush1.bf16.msra.mxu0 %v2133
        %2142 = vmatprep.subr.bf16.mxu0 0
        %2143 = vmatpush1.bf16.msra.mxu0 %v2134
        %2144 = vmatprep.subr.bf16.mxu0 0
        %2145 = vmatpush1.bf16.msra.mxu0 0
        %2146 = vmatprep.subr.bf16.mxu0 0
        %2147 = vmatpush1.bf16.msra.mxu0 0
        %2148 = vmatprep.subr.bf16.mxu0 0
        %2149 = vmatpush1.bf16.msra.mxu0 0
        %2150 = vmatprep.subr.bf16.mxu0 0
        %2151 = vmatpush1.bf16.msra.mxu0 0
        %2152 = vmatprep.subr.bf16.mxu0 0
        %2153 = vmatpush1.bf16.msra.mxu0 0
        %2154 = vmatprep.subr.bf16.mxu0 0
        %2155 = vmatpush1.bf16.msra.mxu0 0
        %2156 = vmatprep.subr.bf16.mxu0 0
        %2157 = vmatpush1.bf16.msra.mxu0 0
        %2158 = vmatprep.subr.bf16.mxu0 0
        %2159 = vmatpush1.bf16.msra.mxu0 0
        %2160 = vmatprep.subr.bf16.mxu0 0
        %2161 = vmatpush1.bf16.msra.mxu0 0
        %2162 = vmatprep.subr.bf16.mxu0 0
        %2163 = vmatpush1.bf16.msra.mxu0 0
        %2164 = vmatprep.subr.bf16.mxu0 0
        %2165 = vmatpush1.bf16.msra.mxu0 0
        %2166 = vmatprep.subr.bf16.mxu0 0
        %2167 = vmatpush1.bf16.msra.mxu0 0
        %2168 = vmatprep.subr.bf16.mxu0 0
        %2169 = vmatpush1.bf16.msra.mxu0 0
        %2170 = vmatprep.subr.bf16.mxu0 0
        %2171 = vmatpush1.bf16.msra.mxu0 0
        %2172 = vmatprep.mubr.bf16.mxu0 0
        %2173 = vmatmul.mubr.bf16.gmra.mrb[0].mxu0 %v2138
        %v2174 = vpop.f32.mrb[0].mxu0
        %v2175 = vadd.f32 %v2123, %v2174
        %v2176 = vpop.f32.mrb[0].mxu0
        %v2177 = vpop.f32.mrb[0].mxu0
        %v2178 = vpop.f32.mrb[0].mxu0
        %2179 = vdwg.mxu0
        %v2180 = vmax.f32 %v2175, 0.0
        %v2181 = vpack.c.bf16 %v2180, %v2180
        %v2182 = vld [vmem:[%s20] sm:$0xf]
        %v2183 = vld [vmem:[%s20 + $0x4] sm:$0xf]
        %v2184 = vld [vmem:[%s20 + $0x8] sm:$0xf]
        %v2185 = vld [vmem:[%s20 + $0xc] sm:$0xf]
        %v2186 = vld [vmem:[%s20 + $0x10] sm:$0xf]
        %v2187 = vld [vmem:[%s20 + $0x14] sm:$0xf]
        %v2188 = vld [vmem:[%s20 + $0x18] sm:$0xf]
        %v2189 = vld [vmem:[%s20 + $0x1c] sm:$0xf]
        %v2190 = vld [vmem:[%s21] sm:$0x1]
        %v2192 = vlaneseq
        %v2193 = vshrl.u32 %v2192, 7
        %v2194 = vsub.s32 0, %v2193
        %v2195 = vrot.slane %v2190, %v2194
        %v2205 = vunpack.c.l.b16 %v2182
        %v2206 = vunpack.c.l.b16 %v2183
        %v2207 = vunpack.c.l.b16 %v2184
        %v2208 = vunpack.c.l.b16 %v2185
        %v2209 = vunpack.c.l.b16 %v2186
        %v2210 = vunpack.c.l.b16 %v2187
        %v2211 = vunpack.c.l.b16 %v2188
        %v2212 = vunpack.c.l.b16 %v2189
        %v2213 = vpack.c.b16 %v2206, %v2205
        %v2214 = vpack.c.b16 %v2208, %v2207
        %v2215 = vpack.c.b16 %v2210, %v2209
        %v2216 = vpack.c.b16 %v2212, %v2211
        %vm2221 = vcmask 523264
        %v2223 = vsel %vm2221, %v2181, 0
        %2225 = vmatprep.subr.bf16.mxu0 0
        %2226 = vmatpush1.bf16.msra.mxu0 %v2213
        %2227 = vmatprep.subr.bf16.mxu0 0
        %2228 = vmatpush1.bf16.msra.mxu0 %v2214
        %2229 = vmatprep.subr.bf16.mxu0 0
        %2230 = vmatpush1.bf16.msra.mxu0 %v2215
        %2231 = vmatprep.subr.bf16.mxu0 0
        %2232 = vmatpush1.bf16.msra.mxu0 %v2216
        %2233 = vmatprep.subr.bf16.mxu0 0
        %2234 = vmatpush1.bf16.msra.mxu0 0
        %2235 = vmatprep.subr.bf16.mxu0 0
        %2236 = vmatpush1.bf16.msra.mxu0 0
        %2237 = vmatprep.subr.bf16.mxu0 0
        %2238 = vmatpush1.bf16.msra.mxu0 0
        %2239 = vmatprep.subr.bf16.mxu0 0
        %2240 = vmatpush1.bf16.msra.mxu0 0
        %2241 = vmatprep.subr.bf16.mxu0 0
        %2242 = vmatpush1.bf16.msra.mxu0 0
        %2243 = vmatprep.subr.bf16.mxu0 0
        %2244 = vmatpush1.bf16.msra.mxu0 0
        %2245 = vmatprep.subr.bf16.mxu0 0
        %2246 = vmatpush1.bf16.msra.mxu0 0
        %2247 = vmatprep.subr.bf16.mxu0 0
        %2248 = vmatpush1.bf16.msra.mxu0 0
        %2249 = vmatprep.subr.bf16.mxu0 0
        %2250 = vmatpush1.bf16.msra.mxu0 0
        %2251 = vmatprep.subr.bf16.mxu0 0
        %2252 = vmatpush1.bf16.msra.mxu0 0
        %2253 = vmatprep.subr.bf16.mxu0 0
        %2254 = vmatpush1.bf16.msra.mxu0 0
        %2255 = vmatprep.subr.bf16.mxu0 0
        %2256 = vmatpush1.bf16.msra.mxu0 0
        %2257 = vmatprep.mubr.bf16.mxu0 0
        %2258 = vmatmul.mubr.bf16.gmra.mrb[0].mxu0 %v2223
        %v2259 = vpop.f32.mrb[0].mxu0
        %v2260 = vadd.f32 %v2195, %v2259
        %v2261 = vpop.f32.mrb[0].mxu0
        %v2262 = vpop.f32.mrb[0].mxu0
        %v2263 = vpop.f32.mrb[0].mxu0
        %2264 = vdwg.mxu0
        %v2265 = vadd.f32 %v2260, %v2112
        %v2266 = vsel %vm813, %v2265, 0.0
        %2267 = vadd.xlane.f32.xlu0 %v2266
        %v2268 = vpop.xlane.xlu0 %2267
        %v2269 = vmul.f32 %v2268, %v1399
        %v2270 = vsub.f32 %v2265, %v2269
        %v2271 = vmul.f32 %v2270, %v2270
        %v2272 = vsel %vm813, %v2271, 0.0
        %2273 = vadd.xlane.f32.xlu0 %v2272
        %v2274 = vpop.xlane.xlu0 %2273
        %v2275 = vmul.f32 %v2274, %v1399
        %v2276 = vadd.f32 %v2275, 1e-05
        %v2277 = vrsqrt.pop %v2276
        %v2278 = vmul.f32 %v2270, %v2277
        %v2279 = vld [vmem:[%s22] sm:$0x1]
        %v2281 = vlaneseq
        %v2282 = vshrl.u32 %v2281, 7
        %v2283 = vsub.s32 0, %v2282
        %v2284 = vrot.slane %v2279, %v2283
        %v2286 = vmul.f32 %v2278, %v2284
        %v2287 = vld [vmem:[%s23] sm:$0x1]
        %v2289 = vlaneseq
        %v2290 = vshrl.u32 %v2289, 7
        %v2291 = vsub.s32 0, %v2290
        %v2292 = vrot.slane %v2287, %v2291
        %v2294 = vadd.f32 %v2286, %v2292
        %2295 = vst.msk [vmem:[%s767] sm:$0xff] %vm813, %v2294
        %s2296 = sand.u32 %s570, 1
        %s2297 = scalar_lea.sflag [#allocation3], %s2296
        %s2298 = sand.u32 %s570, 1
        %s2299 = smul.addr %s2298, 8
        %s2300 = scalar_lea.vmem [#allocation2], %s2299
        // Predicated region
        $region117: #{decoder_forward.3} parent=115 // pred_check
          %p2301 = pneg %p580
        $region118: #{decoder_forward.3} parent=115 // pred_check_branch
          %2303 = sbr.rel (%p2301) target = $region120
        $region119: #{decoder_forward.3} parent=115 // pred_region
          %s2305 = ssub.s32 128, 128
          %2306 = vsyncadd %s2297, %s2305
          %s2307 = smul.addr %s38, 128
          %s2308 = scalar_lea.hbm %s24, %s2307
          %s2310 = sshll.u32 %s2300, 4
          %s2311 = int_to_ptr.vmem [resolvable:$true] %s2310
          %2313 = dma.vmem_to_hbm [thread:$0]  %s2311, 128, %s2308, %s2297
        $region120: #{decoder_forward.3} parent=115 // pred_fallthru
          _
      $region116: #{decoder_forward.3} parent=5 // pred_fallthru
        _
      %p2314 = scmp.le.s32.totalorder 2, %s33
      // Predicated region
      $region121: #{decoder_forward.3} parent=5 // pred_check
        %p2315 = pneg %p2314
      $region122: #{decoder_forward.3} parent=5 // pred_check_branch
        %2317 = sbr.rel (%p2315) target = $region124
      $region123: #{decoder_forward.3} parent=5 // pred_region
        %s2318 = ssub.s32 %s33, 2
        // Predicated region
        $region125: #{decoder_forward.3} parent=123 // pred_check
          %p2319 = pneg %p586
        $region126: #{decoder_forward.3} parent=123 // pred_check_branch
          %2321 = sbr.rel (%p2319) target = $region128
        $region127: #{decoder_forward.3} parent=123 // pred_region
          %s2322 = sand.u32 %s571, 1
          %s2323 = scalar_lea.sflag [#allocation3], %s2322
          %s2324 = sand.u32 %s571, 1
          %s2325 = smul.addr %s2324, 8
          %s2326 = scalar_lea.vmem [#allocation2], %s2325
          %2327 = dma.done %s2323, 128
        $region128: #{decoder_forward.3} parent=123 // pred_fallthru
          _
      $region124: #{decoder_forward.3} parent=5 // pred_fallthru
        _
    $region6: #{decoder_forward.3} parent=1 // loop_footer
      %s37 = sadd.s32 1, %s33
    $region7: #{decoder_forward.3} parent=1 // loop_footer_branch
      %32 = sbr.rel target = $region3
    $region8: #{decoder_forward.3} parent=1 // loop_exit
      _
    %2328 = vsyncpa [#allocation3], 1
    %s2329 = scalar_lea.sflag [#allocation3], 1
    %2330 = vsyncpa %s2329, 1

</llo_original>
